<compile_context>
chip_gen: v6e
topology: v6e:2x2x1
jax: 0.10.0
libtpu: 0.0.40
codegen_flags: <defaults>
</compile_context>

<pallas_src>
import functools
import math

import jax
import jax.numpy as jnp
import numpy as np
from jax.experimental import pallas as pl
from jax.experimental.pallas import tpu as pltpu


# ----------------------------------------------------------------------------
# The single fused kernel
# ----------------------------------------------------------------------------

def _unet_kernel(*refs, cfg):
    f32, bf16 = jnp.float32, jnp.bfloat16
    out_ref = refs[-1]
    it = iter(refs[:-1])

    def nxt():
        return next(it)

    N = cfg["N"]

    def ratio_map(R, H, W, C):
        # PartialConv2d ratio for the implicit all-ones mask, packed layout:
        # ratio[(n,h), w*C+c] = 9 / (#in-bounds taps at (h,w) + 1e-8)
        # (H, C are powers of two -> mask / shift instead of div / mod)
        L = W * C
        lg_c = C.bit_length() - 1
        row = jax.lax.broadcasted_iota(jnp.int32, (R, L), 0) & (H - 1)
        col = jax.lax.broadcasted_iota(jnp.int32, (R, L), 1) >> lg_c
        rc = 3.0 - (row == 0).astype(f32) - (row == H - 1).astype(f32)
        cc = 3.0 - (col == 0).astype(f32) - (col == W - 1).astype(f32)
        return 9.0 / (rc * cc + 1e-8)

    def conv3x3(xb, w_ref, sdn_ref, sup_ref):
        # xb: (R, W*Cin) bf16; w_ref: (3, W*Cin, W*Cout) block-tridiag weights;
        # sdn/sup: (R, R) 0/1 row-shift matrices (per-sample zero boundary).
        x_dn = jnp.dot(sdn_ref[...], xb, preferred_element_type=f32).astype(bf16)
        x_up = jnp.dot(sup_ref[...], xb, preferred_element_type=f32).astype(bf16)
        y = jnp.dot(x_dn, w_ref[0], preferred_element_type=f32)
        y = y + jnp.dot(xb, w_ref[1], preferred_element_type=f32)
        y = y + jnp.dot(x_up, w_ref[2], preferred_element_type=f32)
        return y

    def batchnorm(y, g_ref, be_ref, C, count):
        # Training-mode BN, single pass: sum & sum-of-squares over rows, then
        # log2(W) lane rolls to reduce + broadcast the per-channel stats.
        L = y.shape[-1]
        s1 = jnp.sum(y, axis=0, keepdims=True)
        s2 = jnp.sum(y * y, axis=0, keepdims=True)
        sh = C
        while sh < L:
            s1 = s1 + pltpu.roll(s1, sh, 1)
            s2 = s2 + pltpu.roll(s2, sh, 1)
            sh *= 2
        mean = s1 * (1.0 / count)
        var = s2 * (1.0 / count) - mean * mean            # biased variance
        return (y - mean) * jax.lax.rsqrt(var + 1e-5) * g_ref[...] + be_ref[...]

    def leaky(v):
        return jnp.where(v >= 0, v, 0.01 * v)

    # ---------------- encoder ----------------
    cur = nxt()[...].astype(bf16)                          # packed (N*H0, W0*Cin)
    skips, shifts = [], []
    for lvl in cfg["down"]:
        H, W, Cout, pool = lvl["H"], lvl["W"], lvl["Cout"], lvl["pool"]
        R, count = N * H, float(N * H * W)
        sdn, sup = nxt(), nxt()
        w1, w2 = nxt(), nxt()
        g1, be1, g2, be2 = nxt(), nxt(), nxt(), nxt()
        shifts.append((sdn, sup))
        ratio = ratio_map(R, H, W, Cout)
        h1 = conv3x3(cur, w1, sdn, sup) * ratio            # bias-free (use_bn)
        h1 = leaky(batchnorm(h1, g1, be1, Cout, count))    # encoder: bn -> act
        h2 = conv3x3(h1.astype(bf16), w2, sdn, sup) * ratio
        h2 = leaky(batchnorm(h2, g2, be2, Cout, count))
        skips.append(h2)
        if pool:                                           # 2x2 max-pool via 0/1 matmuls
            rowA, rowB, laneA, laneB = nxt(), nxt(), nxt(), nxt()
            hb = h2.astype(bf16)
            rmax = jnp.maximum(
                jnp.dot(rowA[...], hb, preferred_element_type=f32),
                jnp.dot(rowB[...], hb, preferred_element_type=f32)).astype(bf16)
            cur = jnp.maximum(
                jnp.dot(rmax, laneA[...], preferred_element_type=f32),
                jnp.dot(rmax, laneB[...], preferred_element_type=f32)).astype(bf16)
        else:
            cur = h2.astype(bf16)

    # ---------------- decoder ----------------
    for j, blk in enumerate(cfg["up"]):
        h, w, Co = blk["h"], blk["w"], blk["Co"]
        Hn, Wn = 2 * h, 2 * w
        Rn, count = N * Hn, float(N * Hn * Wn)
        enc = len(cfg["down"]) - 2 - j
        sdn, sup = shifts[enc]
        skip = skips[enc]
        wu, rh, bu = nxt(), nxt(), nxt()
        w1c, b1, g1, be1 = nxt(), nxt(), nxt(), nxt()
        w2, b2, g2, be2 = nxt(), nxt(), nxt(), nxt()
        # bilinear 2x upsample (align_corners=False) + 1x1 conv, separable:
        # lane side (W-upsample fused with the 1x1 channel mix), then row side.
        t = jnp.dot(cur, wu[...], preferred_element_type=f32)              # (N*h, Wn*Co)
        fu = jnp.dot(rh[...], t.astype(bf16), preferred_element_type=f32)  # (Rn, Wn*Co)
        fu = fu + bu[...]
        # channel-concat(from_up, from_down) == lane concat in packed layout
        cat = jnp.concatenate([fu, skip], axis=1).astype(bf16)             # (Rn, 2*Wn*Co)
        ratio = ratio_map(Rn, Hn, Wn, Co)
        y = conv3x3(cat, w1c, sdn, sup) * ratio + b1[...]
        y = batchnorm(leaky(y), g1, be1, Co, count)                        # decoder: act -> bn
        y = conv3x3(y.astype(bf16), w2, sdn, sup) * ratio + b2[...]
        y = batchnorm(leaky(y), g2, be2, Co, count)
        cur = y.astype(bf16)

    # ---------------- final 1x1 conv (packed (N*H, W*n_classes)) -------------
    wf, bf = nxt(), nxt()
    out_ref[...] = jnp.dot(cur, wf[...], preferred_element_type=f32) + bf[...]


# ----------------------------------------------------------------------------
# Host-side weight packing (all structural matrices precomputed once)
# ----------------------------------------------------------------------------

def _bilinear_1d(n):
    """(2n, n) PyTorch bilinear 2x upsample matrix (align_corners=False)."""
    m = np.zeros((2 * n, n), np.float32)
    for j in range(2 * n):
        src = (j + 0.5) * 0.5 - 0.5
        f = int(np.floor(src))
        t = src - f
        i0 = min(max(f, 0), n - 1)
        i1 = min(max(f + 1, 0), n - 1)
        m[j, i0] += 1.0 - t
        m[j, i1] += t
    return m


def _block_tridiag(w, W):
    """3x3 conv weight (3,3,Cin,Cout) -> (3, W*Cin, W*Cout) per-ky matrices.

    out_row[h] = sum_ky in_row[h+ky-1] @ M[ky] reproduces a same-padded conv in
    the packed (lane = w*C + c) layout: W-padding lives in the block-tridiag
    structure, H-padding in the (R,R) row-shift matrices.
    """
    Cin, Cout = w.shape[2], w.shape[3]
    out = np.zeros((3, W * Cin, W * Cout), np.float32)
    for ky in range(3):
        for kx in range(3):
            for wi in range(W):
                wo = wi - kx + 1
                if 0 <= wo < W:
                    out[ky, wi * Cin:(wi + 1) * Cin,
                        wo * Cout:(wo + 1) * Cout] = w[ky, kx]
    return out


def _shift_mats(N, H):
    sdn = np.kron(np.eye(N, dtype=np.float32), np.eye(H, k=-1, dtype=np.float32))
    sup = np.kron(np.eye(N, dtype=np.float32), np.eye(H, k=1, dtype=np.float32))
    return sdn, sup


def _pool_mats(N, H, W, C):
    ae = np.zeros((H // 2, H), np.float32)
    ao = np.zeros((H // 2, H), np.float32)
    ae[np.arange(H // 2), 2 * np.arange(H // 2)] = 1.0
    ao[np.arange(H // 2), 2 * np.arange(H // 2) + 1] = 1.0
    be = np.zeros((W, W // 2), np.float32)
    bo = np.zeros((W, W // 2), np.float32)
    be[2 * np.arange(W // 2), np.arange(W // 2)] = 1.0
    bo[2 * np.arange(W // 2) + 1, np.arange(W // 2)] = 1.0
    rowA = np.kron(np.eye(N, dtype=np.float32), ae)
    rowB = np.kron(np.eye(N, dtype=np.float32), ao)
    laneA = np.kron(be, np.eye(C, dtype=np.float32))
    laneB = np.kron(bo, np.eye(C, dtype=np.float32))
    return rowA, rowB, laneA, laneB


def _tile_vec(v, W):
    return jnp.asarray(np.tile(np.asarray(v, np.float32), W)[None, :], jnp.float32)


def init_unet(key, *, N, H_in, W_in, in_channels, n_classes, depth, start_filts):
    """Xavier-normal conv weights (biases 0, BN gamma=1 / beta=0), packed."""
    keys = iter(jax.random.split(key, 64))

    def xavier(shape, fan_in, fan_out):
        std = math.sqrt(2.0 / (fan_in + fan_out))
        return np.asarray(std * jax.random.normal(next(keys), shape, dtype=jnp.float32))

    def bf(a):
        return jnp.asarray(a, jnp.bfloat16)

    cfg = {"N": N, "n_classes": n_classes, "down": [], "up": []}
    weights = []

    H, W = H_in, W_in
    outs = in_channels
    for i in range(depth):
        ins = in_channels if i == 0 else outs
        outs = start_filts * (2 ** i)
        pool = i < depth - 1
        cfg["down"].append(dict(H=H, W=W, Cin=ins, Cout=outs, pool=pool))
        sdn, sup = _shift_mats(N, H)
        w1 = xavier((3, 3, ins, outs), ins * 9, outs * 9)
        w2 = xavier((3, 3, outs, outs), outs * 9, outs * 9)
        weights += [bf(sdn), bf(sup),
                    bf(_block_tridiag(w1, W)), bf(_block_tridiag(w2, W)),
                    _tile_vec(np.ones(outs), W), _tile_vec(np.zeros(outs), W),
                    _tile_vec(np.ones(outs), W), _tile_vec(np.zeros(outs), W)]
        if pool:
            weights += [bf(m) for m in _pool_mats(N, H, W, outs)]
            H, W = H // 2, W // 2

    h, w = H, W
    for _ in range(depth - 1):
        ins = outs
        outs = ins // 2
        cfg["up"].append(dict(h=h, w=w, Ci=ins, Co=outs))
        Hn, Wn = 2 * h, 2 * w
        wu = xavier((ins, outs), ins, outs)                 # upconv 1x1 (Ci -> Co)
        w1 = xavier((3, 3, 2 * outs, outs), 2 * outs * 9, outs * 9)
        w2 = xavier((3, 3, outs, outs), outs * 9, outs * 9)
        # 1x1 conv fused with the W-direction bilinear upsample (separable form)
        wu_comb = np.kron(np.eye(w, dtype=np.float32), wu) @ \
                  np.kron(_bilinear_1d(w).T, np.eye(outs, dtype=np.float32))
        rh_big = np.kron(np.eye(N, dtype=np.float32), _bilinear_1d(h))
        w1cat = np.concatenate([_block_tridiag(w1[:, :, :outs, :], Wn),   # from_up half
                                _block_tridiag(w1[:, :, outs:, :], Wn)],  # skip half
                               axis=1)
        weights += [bf(wu_comb), bf(rh_big), _tile_vec(np.zeros(outs), Wn),
                    bf(w1cat), _tile_vec(np.zeros(outs), Wn),
                    _tile_vec(np.ones(outs), Wn), _tile_vec(np.zeros(outs), Wn),
                    bf(_block_tridiag(w2, Wn)), _tile_vec(np.zeros(outs), Wn),
                    _tile_vec(np.ones(outs), Wn), _tile_vec(np.zeros(outs), Wn)]
        h, w = Hn, Wn

    wf = xavier((outs, n_classes), outs, n_classes)
    weights += [bf(np.kron(np.eye(w, dtype=np.float32), wf)),
                _tile_vec(np.zeros(n_classes), w)]
    return cfg, weights


# ----------------------------------------------------------------------------
# pallas_call wrapper
# ----------------------------------------------------------------------------

def _full_spec(shape):
    zeros = (0,) * len(shape)
    return pl.BlockSpec(shape, lambda i, z=zeros: z)


def unet_forward(weights, x_nchw, *, cfg):
    N, ncls = cfg["N"], cfg["n_classes"]
    top = cfg["down"][0]
    H, W, Cin = top["H"], top["W"], top["Cin"]
    # NCHW -> lane-packed (N*H, W*Cin)
    x_p = jnp.transpose(x_nchw, (0, 2, 3, 1)).astype(jnp.float32).reshape(N * H, W * Cin)
    inputs = [x_p] + list(weights)
    out_shape = (N * H, W * ncls)
    out2d = pl.pallas_call(
        functools.partial(_unet_kernel, cfg=cfg),
        out_shape=jax.ShapeDtypeStruct(out_shape, jnp.float32),
        grid=(1,),
        in_specs=[_full_spec(a.shape) for a in inputs],
        out_specs=_full_spec(out_shape),
        compiler_params=pltpu.CompilerParams(dimension_semantics=("arbitrary",)),
    )(*inputs)
    # packed (N*H, W*n_classes) -> NCHW (tiny host-side reshape/transpose)
    return jnp.transpose(out2d.reshape(N, H, W, ncls), (0, 3, 1, 2))


if __name__ == "__main__":
    key = jax.random.PRNGKey(0)
    pkey, xkey = jax.random.split(key)

    N, H, W = 2, 16, 16
    in_channels, n_classes, depth, start_filts = 1, 2, 3, 8

    cfg, weights = init_unet(pkey, N=N, H_in=H, W_in=W, in_channels=in_channels,
                             n_classes=n_classes, depth=depth, start_filts=start_filts)
    x = jax.random.normal(xkey, (N, in_channels, H, W), dtype=jnp.float32)

    fwd = jax.jit(functools.partial(unet_forward, cfg=cfg))
    out = jax.block_until_ready(fwd(weights, x))

    assert out.shape == (N, n_classes, H, W), out.shape
    assert bool(jnp.all(jnp.isfinite(out)))
    print("KERNEL_OK")
</pallas_src>

<mosaic_0001>
module attributes {stable_mosaic.version = 11 : i64} {
  func.func @_unet_kernel(%arg0: i32, %arg1: memref<32x16xf32, #tpu.memory_space<vmem>>, %arg2: memref<32x32xbf16, #tpu.memory_space<vmem>>, %arg3: memref<32x32xbf16, #tpu.memory_space<vmem>>, %arg4: memref<3x16x128xbf16, #tpu.memory_space<vmem>>, %arg5: memref<3x128x128xbf16, #tpu.memory_space<vmem>>, %arg6: memref<1x128xf32, #tpu.memory_space<vmem>>, %arg7: memref<1x128xf32, #tpu.memory_space<vmem>>, %arg8: memref<1x128xf32, #tpu.memory_space<vmem>>, %arg9: memref<1x128xf32, #tpu.memory_space<vmem>>, %arg10: memref<16x32xbf16, #tpu.memory_space<vmem>>, %arg11: memref<16x32xbf16, #tpu.memory_space<vmem>>, %arg12: memref<128x64xbf16, #tpu.memory_space<vmem>>, %arg13: memref<128x64xbf16, #tpu.memory_space<vmem>>, %arg14: memref<16x16xbf16, #tpu.memory_space<vmem>>, %arg15: memref<16x16xbf16, #tpu.memory_space<vmem>>, %arg16: memref<3x64x128xbf16, #tpu.memory_space<vmem>>, %arg17: memref<3x128x128xbf16, #tpu.memory_space<vmem>>, %arg18: memref<1x128xf32, #tpu.memory_space<vmem>>, %arg19: memref<1x128xf32, #tpu.memory_space<vmem>>, %arg20: memref<1x128xf32, #tpu.memory_space<vmem>>, %arg21: memref<1x128xf32, #tpu.memory_space<vmem>>, %arg22: memref<8x16xbf16, #tpu.memory_space<vmem>>, %arg23: memref<8x16xbf16, #tpu.memory_space<vmem>>, %arg24: memref<128x64xbf16, #tpu.memory_space<vmem>>, %arg25: memref<128x64xbf16, #tpu.memory_space<vmem>>, %arg26: memref<8x8xbf16, #tpu.memory_space<vmem>>, %arg27: memref<8x8xbf16, #tpu.memory_space<vmem>>, %arg28: memref<3x64x128xbf16, #tpu.memory_space<vmem>>, %arg29: memref<3x128x128xbf16, #tpu.memory_space<vmem>>, %arg30: memref<1x128xf32, #tpu.memory_space<vmem>>, %arg31: memref<1x128xf32, #tpu.memory_space<vmem>>, %arg32: memref<1x128xf32, #tpu.memory_space<vmem>>, %arg33: memref<1x128xf32, #tpu.memory_space<vmem>>, %arg34: memref<128x128xbf16, #tpu.memory_space<vmem>>, %arg35: memref<16x8xbf16, #tpu.memory_space<vmem>>, %arg36: memref<1x128xf32, #tpu.memory_space<vmem>>, %arg37: memref<3x256x128xbf16, #tpu.memory_space<vmem>>, %arg38: memref<1x128xf32, #tpu.memory_space<vmem>>, %arg39: memref<1x128xf32, #tpu.memory_space<vmem>>, %arg40: memref<1x128xf32, #tpu.memory_space<vmem>>, %arg41: memref<3x128x128xbf16, #tpu.memory_space<vmem>>, %arg42: memref<1x128xf32, #tpu.memory_space<vmem>>, %arg43: memref<1x128xf32, #tpu.memory_space<vmem>>, %arg44: memref<1x128xf32, #tpu.memory_space<vmem>>, %arg45: memref<128x128xbf16, #tpu.memory_space<vmem>>, %arg46: memref<32x16xbf16, #tpu.memory_space<vmem>>, %arg47: memref<1x128xf32, #tpu.memory_space<vmem>>, %arg48: memref<3x256x128xbf16, #tpu.memory_space<vmem>>, %arg49: memref<1x128xf32, #tpu.memory_space<vmem>>, %arg50: memref<1x128xf32, #tpu.memory_space<vmem>>, %arg51: memref<1x128xf32, #tpu.memory_space<vmem>>, %arg52: memref<3x128x128xbf16, #tpu.memory_space<vmem>>, %arg53: memref<1x128xf32, #tpu.memory_space<vmem>>, %arg54: memref<1x128xf32, #tpu.memory_space<vmem>>, %arg55: memref<1x128xf32, #tpu.memory_space<vmem>>, %arg56: memref<128x32xbf16, #tpu.memory_space<vmem>>, %arg57: memref<1x32xf32, #tpu.memory_space<vmem>>, %arg58: memref<32x32xf32, #tpu.memory_space<vmem>>) attributes {dimension_semantics = [#tpu.dimension_semantics<arbitrary>], iteration_bounds = array<i64: 1>, scalar_prefetch = 0 : i64, scratch_operands = 0 : i64, tpu.core_type = #tpu.core_type<tc>, window_params = [{pipeline_mode = #tpu.pipeline_mode<synchronous>, transform_indices = @transform_0, window_bounds = array<i64: 32, 16>}, {pipeline_mode = #tpu.pipeline_mode<synchronous>, transform_indices = @transform_1, window_bounds = array<i64: 32, 32>}, {pipeline_mode = #tpu.pipeline_mode<synchronous>, transform_indices = @transform_2, window_bounds = array<i64: 32, 32>}, {pipeline_mode = #tpu.pipeline_mode<synchronous>, transform_indices = @transform_3, window_bounds = array<i64: 3, 16, 128>}, {pipeline_mode = #tpu.pipeline_mode<synchronous>, transform_indices = @transform_4, window_bounds = array<i64: 3, 128, 128>}, {pipeline_mode = #tpu.pipeline_mode<synchronous>, transform_indices = @transform_5, window_bounds = array<i64: 1, 128>}, {pipeline_mode = #tpu.pipeline_mode<synchronous>, transform_indices = @transform_6, window_bounds = array<i64: 1, 128>}, {pipeline_mode = #tpu.pipeline_mode<synchronous>, transform_indices = @transform_7, window_bounds = array<i64: 1, 128>}, {pipeline_mode = #tpu.pipeline_mode<synchronous>, transform_indices = @transform_8, window_bounds = array<i64: 1, 128>}, {pipeline_mode = #tpu.pipeline_mode<synchronous>, transform_indices = @transform_9, window_bounds = array<i64: 16, 32>}, {pipeline_mode = #tpu.pipeline_mode<synchronous>, transform_indices = @transform_10, window_bounds = array<i64: 16, 32>}, {pipeline_mode = #tpu.pipeline_mode<synchronous>, transform_indices = @transform_11, window_bounds = array<i64: 128, 64>}, {pipeline_mode = #tpu.pipeline_mode<synchronous>, transform_indices = @transform_12, window_bounds = array<i64: 128, 64>}, {pipeline_mode = #tpu.pipeline_mode<synchronous>, transform_indices = @transform_13, window_bounds = array<i64: 16, 16>}, {pipeline_mode = #tpu.pipeline_mode<synchronous>, transform_indices = @transform_14, window_bounds = array<i64: 16, 16>}, {pipeline_mode = #tpu.pipeline_mode<synchronous>, transform_indices = @transform_15, window_bounds = array<i64: 3, 64, 128>}, {pipeline_mode = #tpu.pipeline_mode<synchronous>, transform_indices = @transform_16, window_bounds = array<i64: 3, 128, 128>}, {pipeline_mode = #tpu.pipeline_mode<synchronous>, transform_indices = @transform_17, window_bounds = array<i64: 1, 128>}, {pipeline_mode = #tpu.pipeline_mode<synchronous>, transform_indices = @transform_18, window_bounds = array<i64: 1, 128>}, {pipeline_mode = #tpu.pipeline_mode<synchronous>, transform_indices = @transform_19, window_bounds = array<i64: 1, 128>}, {pipeline_mode = #tpu.pipeline_mode<synchronous>, transform_indices = @transform_20, window_bounds = array<i64: 1, 128>}, {pipeline_mode = #tpu.pipeline_mode<synchronous>, transform_indices = @transform_21, window_bounds = array<i64: 8, 16>}, {pipeline_mode = #tpu.pipeline_mode<synchronous>, transform_indices = @transform_22, window_bounds = array<i64: 8, 16>}, {pipeline_mode = #tpu.pipeline_mode<synchronous>, transform_indices = @transform_23, window_bounds = array<i64: 128, 64>}, {pipeline_mode = #tpu.pipeline_mode<synchronous>, transform_indices = @transform_24, window_bounds = array<i64: 128, 64>}, {pipeline_mode = #tpu.pipeline_mode<synchronous>, transform_indices = @transform_25, window_bounds = array<i64: 8, 8>}, {pipeline_mode = #tpu.pipeline_mode<synchronous>, transform_indices = @transform_26, window_bounds = array<i64: 8, 8>}, {pipeline_mode = #tpu.pipeline_mode<synchronous>, transform_indices = @transform_27, window_bounds = array<i64: 3, 64, 128>}, {pipeline_mode = #tpu.pipeline_mode<synchronous>, transform_indices = @transform_28, window_bounds = array<i64: 3, 128, 128>}, {pipeline_mode = #tpu.pipeline_mode<synchronous>, transform_indices = @transform_29, window_bounds = array<i64: 1, 128>}, {pipeline_mode = #tpu.pipeline_mode<synchronous>, transform_indices = @transform_30, window_bounds = array<i64: 1, 128>}, {pipeline_mode = #tpu.pipeline_mode<synchronous>, transform_indices = @transform_31, window_bounds = array<i64: 1, 128>}, {pipeline_mode = #tpu.pipeline_mode<synchronous>, transform_indices = @transform_32, window_bounds = array<i64: 1, 128>}, {pipeline_mode = #tpu.pipeline_mode<synchronous>, transform_indices = @transform_33, window_bounds = array<i64: 128, 128>}, {pipeline_mode = #tpu.pipeline_mode<synchronous>, transform_indices = @transform_34, window_bounds = array<i64: 16, 8>}, {pipeline_mode = #tpu.pipeline_mode<synchronous>, transform_indices = @transform_35, window_bounds = array<i64: 1, 128>}, {pipeline_mode = #tpu.pipeline_mode<synchronous>, transform_indices = @transform_36, window_bounds = array<i64: 3, 256, 128>}, {pipeline_mode = #tpu.pipeline_mode<synchronous>, transform_indices = @transform_37, window_bounds = array<i64: 1, 128>}, {pipeline_mode = #tpu.pipeline_mode<synchronous>, transform_indices = @transform_38, window_bounds = array<i64: 1, 128>}, {pipeline_mode = #tpu.pipeline_mode<synchronous>, transform_indices = @transform_39, window_bounds = array<i64: 1, 128>}, {pipeline_mode = #tpu.pipeline_mode<synchronous>, transform_indices = @transform_40, window_bounds = array<i64: 3, 128, 128>}, {pipeline_mode = #tpu.pipeline_mode<synchronous>, transform_indices = @transform_41, window_bounds = array<i64: 1, 128>}, {pipeline_mode = #tpu.pipeline_mode<synchronous>, transform_indices = @transform_42, window_bounds = array<i64: 1, 128>}, {pipeline_mode = #tpu.pipeline_mode<synchronous>, transform_indices = @transform_43, window_bounds = array<i64: 1, 128>}, {pipeline_mode = #tpu.pipeline_mode<synchronous>, transform_indices = @transform_44, window_bounds = array<i64: 128, 128>}, {pipeline_mode = #tpu.pipeline_mode<synchronous>, transform_indices = @transform_45, window_bounds = array<i64: 32, 16>}, {pipeline_mode = #tpu.pipeline_mode<synchronous>, transform_indices = @transform_46, window_bounds = array<i64: 1, 128>}, {pipeline_mode = #tpu.pipeline_mode<synchronous>, transform_indices = @transform_47, window_bounds = array<i64: 3, 256, 128>}, {pipeline_mode = #tpu.pipeline_mode<synchronous>, transform_indices = @transform_48, window_bounds = array<i64: 1, 128>}, {pipeline_mode = #tpu.pipeline_mode<synchronous>, transform_indices = @transform_49, window_bounds = array<i64: 1, 128>}, {pipeline_mode = #tpu.pipeline_mode<synchronous>, transform_indices = @transform_50, window_bounds = array<i64: 1, 128>}, {pipeline_mode = #tpu.pipeline_mode<synchronous>, transform_indices = @transform_51, window_bounds = array<i64: 3, 128, 128>}, {pipeline_mode = #tpu.pipeline_mode<synchronous>, transform_indices = @transform_52, window_bounds = array<i64: 1, 128>}, {pipeline_mode = #tpu.pipeline_mode<synchronous>, transform_indices = @transform_53, window_bounds = array<i64: 1, 128>}, {pipeline_mode = #tpu.pipeline_mode<synchronous>, transform_indices = @transform_54, window_bounds = array<i64: 1, 128>}, {pipeline_mode = #tpu.pipeline_mode<synchronous>, transform_indices = @transform_55, window_bounds = array<i64: 128, 32>}, {pipeline_mode = #tpu.pipeline_mode<synchronous>, transform_indices = @transform_56, window_bounds = array<i64: 1, 32>}, {pipeline_mode = #tpu.pipeline_mode<synchronous>, transform_indices = @transform_57, window_bounds = array<i64: 32, 32>}]} {
    %c0 = arith.constant 0 : index
    %c0_0 = arith.constant 0 : index
    %0 = vector.load %arg1[%c0, %c0_0] : memref<32x16xf32, #tpu.memory_space<vmem>>, vector<32x16xf32>
    %1 = arith.truncf %0 : vector<32x16xf32> to vector<32x16xbf16>
    %2 = tpu.iota {dimensions = array<i32: 0>} : vector<32x128xi32>
    %c15_i32 = arith.constant 15 : i32
    %3 = vector.broadcast %c15_i32 : i32 to vector<32x128xi32>
    %4 = arith.andi %2, %3 : vector<32x128xi32>
    %5 = tpu.iota {dimensions = array<i32: 1>} : vector<32x128xi32>
    %c3_i32 = arith.constant 3 : i32
    %6 = vector.broadcast %c3_i32 : i32 to vector<32x128xi32>
    %7 = arith.shrsi %5, %6 : vector<32x128xi32>
    %c0_i32 = arith.constant 0 : i32
    %8 = vector.broadcast %c0_i32 : i32 to vector<32x128xi32>
    %9 = arith.cmpi eq, %4, %8 : vector<32x128xi32>
    %10 = arith.extui %9 : vector<32x128xi1> to vector<32x128xi32>
    %11 = arith.sitofp %10 : vector<32x128xi32> to vector<32x128xf32>
    %cst = arith.constant 3.000000e+00 : f32
    %12 = vector.broadcast %cst : f32 to vector<32x128xf32>
    %13 = arith.subf %12, %11 : vector<32x128xf32>
    %c15_i32_1 = arith.constant 15 : i32
    %14 = vector.broadcast %c15_i32_1 : i32 to vector<32x128xi32>
    %15 = arith.cmpi eq, %4, %14 : vector<32x128xi32>
    %16 = arith.extui %15 : vector<32x128xi1> to vector<32x128xi32>
    %17 = arith.sitofp %16 : vector<32x128xi32> to vector<32x128xf32>
    %18 = arith.subf %13, %17 : vector<32x128xf32>
    %c0_i32_2 = arith.constant 0 : i32
    %19 = vector.broadcast %c0_i32_2 : i32 to vector<32x128xi32>
    %20 = arith.cmpi eq, %7, %19 : vector<32x128xi32>
    %21 = arith.extui %20 : vector<32x128xi1> to vector<32x128xi32>
    %22 = arith.sitofp %21 : vector<32x128xi32> to vector<32x128xf32>
    %cst_3 = arith.constant 3.000000e+00 : f32
    %23 = vector.broadcast %cst_3 : f32 to vector<32x128xf32>
    %24 = arith.subf %23, %22 : vector<32x128xf32>
    %c15_i32_4 = arith.constant 15 : i32
    %25 = vector.broadcast %c15_i32_4 : i32 to vector<32x128xi32>
    %26 = arith.cmpi eq, %7, %25 : vector<32x128xi32>
    %27 = arith.extui %26 : vector<32x128xi1> to vector<32x128xi32>
    %28 = arith.sitofp %27 : vector<32x128xi32> to vector<32x128xf32>
    %29 = arith.subf %24, %28 : vector<32x128xf32>
    %30 = arith.mulf %18, %29 : vector<32x128xf32>
    %cst_5 = arith.constant 9.99999993E-9 : f32
    %31 = vector.broadcast %cst_5 : f32 to vector<32x128xf32>
    %32 = arith.addf %30, %31 : vector<32x128xf32>
    %cst_6 = arith.constant 9.000000e+00 : f32
    %33 = vector.broadcast %cst_6 : f32 to vector<32x128xf32>
    %34 = arith.divf %33, %32 : vector<32x128xf32>
    %c0_7 = arith.constant 0 : index
    %c0_8 = arith.constant 0 : index
    %35 = vector.load %arg2[%c0_7, %c0_8] : memref<32x32xbf16, #tpu.memory_space<vmem>>, vector<32x32xbf16>
    %cst_9 = arith.constant dense<0.000000e+00> : vector<32x16xf32>
    %36 = tpu.matmul %35, %1, %cst_9 {dimension_numbers = #tpu.dot_dimension_numbers<[1], [0], [0], [1], [0, 0, 1, 1], [], []>} : vector<32x32xbf16>, vector<32x16xbf16>, vector<32x16xf32> -> vector<32x16xf32>
    %37 = arith.truncf %36 : vector<32x16xf32> to vector<32x16xbf16>
    %c0_10 = arith.constant 0 : index
    %c0_11 = arith.constant 0 : index
    %38 = vector.load %arg3[%c0_10, %c0_11] : memref<32x32xbf16, #tpu.memory_space<vmem>>, vector<32x32xbf16>
    %cst_12 = arith.constant dense<0.000000e+00> : vector<32x16xf32>
    %39 = tpu.matmul %38, %1, %cst_12 {dimension_numbers = #tpu.dot_dimension_numbers<[1], [0], [0], [1], [0, 0, 1, 1], [], []>} : vector<32x32xbf16>, vector<32x16xbf16>, vector<32x16xf32> -> vector<32x16xf32>
    %40 = arith.truncf %39 : vector<32x16xf32> to vector<32x16xbf16>
    %c0_13 = arith.constant 0 : index
    %c0_14 = arith.constant 0 : index
    %c0_15 = arith.constant 0 : index
    %41 = vector.load %arg4[%c0_13, %c0_14, %c0_15] : memref<3x16x128xbf16, #tpu.memory_space<vmem>>, vector<1x16x128xbf16>
    %42 = vector.shape_cast %41 : vector<1x16x128xbf16> to vector<16x128xbf16>
    %cst_16 = arith.constant dense<0.000000e+00> : vector<32x128xf32>
    %43 = tpu.matmul %37, %42, %cst_16 {dimension_numbers = #tpu.dot_dimension_numbers<[1], [0], [0], [1], [0, 0, 1, 1], [], []>} : vector<32x16xbf16>, vector<16x128xbf16>, vector<32x128xf32> -> vector<32x128xf32>
    %c1 = arith.constant 1 : index
    %c0_17 = arith.constant 0 : index
    %c0_18 = arith.constant 0 : index
    %44 = vector.load %arg4[%c1, %c0_17, %c0_18] : memref<3x16x128xbf16, #tpu.memory_space<vmem>>, vector<1x16x128xbf16>
    %45 = vector.shape_cast %44 : vector<1x16x128xbf16> to vector<16x128xbf16>
    %cst_19 = arith.constant dense<0.000000e+00> : vector<32x128xf32>
    %46 = tpu.matmul %1, %45, %cst_19 {dimension_numbers = #tpu.dot_dimension_numbers<[1], [0], [0], [1], [0, 0, 1, 1], [], []>} : vector<32x16xbf16>, vector<16x128xbf16>, vector<32x128xf32> -> vector<32x128xf32>
    %47 = arith.addf %43, %46 : vector<32x128xf32>
    %c2 = arith.constant 2 : index
    %c0_20 = arith.constant 0 : index
    %c0_21 = arith.constant 0 : index
    %48 = vector.load %arg4[%c2, %c0_20, %c0_21] : memref<3x16x128xbf16, #tpu.memory_space<vmem>>, vector<1x16x128xbf16>
    %49 = vector.shape_cast %48 : vector<1x16x128xbf16> to vector<16x128xbf16>
    %cst_22 = arith.constant dense<0.000000e+00> : vector<32x128xf32>
    %50 = tpu.matmul %40, %49, %cst_22 {dimension_numbers = #tpu.dot_dimension_numbers<[1], [0], [0], [1], [0, 0, 1, 1], [], []>} : vector<32x16xbf16>, vector<16x128xbf16>, vector<32x128xf32> -> vector<32x128xf32>
    %51 = arith.addf %47, %50 : vector<32x128xf32>
    %52 = arith.mulf %51, %34 : vector<32x128xf32>
    %cst_23 = arith.constant dense<0.000000e+00> : vector<128xf32>
    %53 = vector.multi_reduction <add>, %52, %cst_23 [0] : vector<32x128xf32> to vector<128xf32>
    %54 = vector.shape_cast %53 : vector<128xf32> to vector<1x128xf32>
    %55 = arith.mulf %52, %52 : vector<32x128xf32>
    %cst_24 = arith.constant dense<0.000000e+00> : vector<128xf32>
    %56 = vector.multi_reduction <add>, %55, %cst_24 [0] : vector<32x128xf32> to vector<128xf32>
    %57 = vector.shape_cast %56 : vector<128xf32> to vector<1x128xf32>
    %c8_i32 = arith.constant 8 : i32
    %58 = tpu.dynamic_rotate %54 by %c8_i32 dim 1 : vector<1x128xf32>, i32 -> vector<1x128xf32>
    %59 = arith.addf %54, %58 : vector<1x128xf32>
    %c8_i32_25 = arith.constant 8 : i32
    %60 = tpu.dynamic_rotate %57 by %c8_i32_25 dim 1 : vector<1x128xf32>, i32 -> vector<1x128xf32>
    %61 = arith.addf %57, %60 : vector<1x128xf32>
    %c16_i32 = arith.constant 16 : i32
    %62 = tpu.dynamic_rotate %59 by %c16_i32 dim 1 : vector<1x128xf32>, i32 -> vector<1x128xf32>
    %63 = arith.addf %59, %62 : vector<1x128xf32>
    %c16_i32_26 = arith.constant 16 : i32
    %64 = tpu.dynamic_rotate %61 by %c16_i32_26 dim 1 : vector<1x128xf32>, i32 -> vector<1x128xf32>
    %65 = arith.addf %61, %64 : vector<1x128xf32>
    %c32_i32 = arith.constant 32 : i32
    %66 = tpu.dynamic_rotate %63 by %c32_i32 dim 1 : vector<1x128xf32>, i32 -> vector<1x128xf32>
    %67 = arith.addf %63, %66 : vector<1x128xf32>
    %c32_i32_27 = arith.constant 32 : i32
    %68 = tpu.dynamic_rotate %65 by %c32_i32_27 dim 1 : vector<1x128xf32>, i32 -> vector<1x128xf32>
    %69 = arith.addf %65, %68 : vector<1x128xf32>
    %c64_i32 = arith.constant 64 : i32
    %70 = tpu.dynamic_rotate %67 by %c64_i32 dim 1 : vector<1x128xf32>, i32 -> vector<1x128xf32>
    %71 = arith.addf %67, %70 : vector<1x128xf32>
    %c64_i32_28 = arith.constant 64 : i32
    %72 = tpu.dynamic_rotate %69 by %c64_i32_28 dim 1 : vector<1x128xf32>, i32 -> vector<1x128xf32>
    %73 = arith.addf %69, %72 : vector<1x128xf32>
    %cst_29 = arith.constant 0.001953125 : f32
    %74 = vector.broadcast %cst_29 : f32 to vector<1x128xf32>
    %75 = arith.mulf %71, %74 : vector<1x128xf32>
    %cst_30 = arith.constant 0.001953125 : f32
    %76 = vector.broadcast %cst_30 : f32 to vector<1x128xf32>
    %77 = arith.mulf %73, %76 : vector<1x128xf32>
    %78 = arith.mulf %75, %75 : vector<1x128xf32>
    %79 = arith.subf %77, %78 : vector<1x128xf32>
    %80 = vector.broadcast %75 : vector<1x128xf32> to vector<32x128xf32>
    %81 = arith.subf %52, %80 : vector<32x128xf32>
    %cst_31 = arith.constant 9.99999974E-6 : f32
    %82 = vector.broadcast %cst_31 : f32 to vector<1x128xf32>
    %83 = arith.addf %79, %82 : vector<1x128xf32>
    %84 = math.rsqrt %83 : vector<1x128xf32>
    %85 = vector.broadcast %84 : vector<1x128xf32> to vector<32x128xf32>
    %86 = arith.mulf %81, %85 : vector<32x128xf32>
    %c0_32 = arith.constant 0 : index
    %c0_33 = arith.constant 0 : index
    %87 = vector.load %arg6[%c0_32, %c0_33] : memref<1x128xf32, #tpu.memory_space<vmem>>, vector<1x128xf32>
    %88 = vector.broadcast %87 : vector<1x128xf32> to vector<32x128xf32>
    %89 = arith.mulf %86, %88 : vector<32x128xf32>
    %c0_34 = arith.constant 0 : index
    %c0_35 = arith.constant 0 : index
    %90 = vector.load %arg7[%c0_34, %c0_35] : memref<1x128xf32, #tpu.memory_space<vmem>>, vector<1x128xf32>
    %91 = vector.broadcast %90 : vector<1x128xf32> to vector<32x128xf32>
    %92 = arith.addf %89, %91 : vector<32x128xf32>
    %cst_36 = arith.constant 0.000000e+00 : f32
    %93 = vector.broadcast %cst_36 : f32 to vector<32x128xf32>
    %94 = arith.cmpf oge, %92, %93 : vector<32x128xf32>
    %cst_37 = arith.constant 0.00999999977 : f32
    %95 = vector.broadcast %cst_37 : f32 to vector<32x128xf32>
    %96 = arith.mulf %95, %92 : vector<32x128xf32>
    %97 = arith.select %94, %92, %96 : vector<32x128xi1>, vector<32x128xf32>
    %98 = arith.truncf %97 : vector<32x128xf32> to vector<32x128xbf16>
    %c0_38 = arith.constant 0 : index
    %c0_39 = arith.constant 0 : index
    %99 = vector.load %arg2[%c0_38, %c0_39] : memref<32x32xbf16, #tpu.memory_space<vmem>>, vector<32x32xbf16>
    %cst_40 = arith.constant dense<0.000000e+00> : vector<32x128xf32>
    %100 = tpu.matmul %99, %98, %cst_40 {dimension_numbers = #tpu.dot_dimension_numbers<[1], [0], [0], [1], [0, 0, 1, 1], [], []>} : vector<32x32xbf16>, vector<32x128xbf16>, vector<32x128xf32> -> vector<32x128xf32>
    %101 = arith.truncf %100 : vector<32x128xf32> to vector<32x128xbf16>
    %c0_41 = arith.constant 0 : index
    %c0_42 = arith.constant 0 : index
    %102 = vector.load %arg3[%c0_41, %c0_42] : memref<32x32xbf16, #tpu.memory_space<vmem>>, vector<32x32xbf16>
    %cst_43 = arith.constant dense<0.000000e+00> : vector<32x128xf32>
    %103 = tpu.matmul %102, %98, %cst_43 {dimension_numbers = #tpu.dot_dimension_numbers<[1], [0], [0], [1], [0, 0, 1, 1], [], []>} : vector<32x32xbf16>, vector<32x128xbf16>, vector<32x128xf32> -> vector<32x128xf32>
    %104 = arith.truncf %103 : vector<32x128xf32> to vector<32x128xbf16>
    %c0_44 = arith.constant 0 : index
    %c0_45 = arith.constant 0 : index
    %c0_46 = arith.constant 0 : index
    %105 = vector.load %arg5[%c0_44, %c0_45, %c0_46] : memref<3x128x128xbf16, #tpu.memory_space<vmem>>, vector<1x128x128xbf16>
    %106 = vector.shape_cast %105 : vector<1x128x128xbf16> to vector<128x128xbf16>
    %cst_47 = arith.constant dense<0.000000e+00> : vector<32x128xf32>
    %107 = tpu.matmul %101, %106, %cst_47 {dimension_numbers = #tpu.dot_dimension_numbers<[1], [0], [0], [1], [0, 0, 1, 1], [], []>} : vector<32x128xbf16>, vector<128x128xbf16>, vector<32x128xf32> -> vector<32x128xf32>
    %c1_48 = arith.constant 1 : index
    %c0_49 = arith.constant 0 : index
    %c0_50 = arith.constant 0 : index
    %108 = vector.load %arg5[%c1_48, %c0_49, %c0_50] : memref<3x128x128xbf16, #tpu.memory_space<vmem>>, vector<1x128x128xbf16>
    %109 = vector.shape_cast %108 : vector<1x128x128xbf16> to vector<128x128xbf16>
    %cst_51 = arith.constant dense<0.000000e+00> : vector<32x128xf32>
    %110 = tpu.matmul %98, %109, %cst_51 {dimension_numbers = #tpu.dot_dimension_numbers<[1], [0], [0], [1], [0, 0, 1, 1], [], []>} : vector<32x128xbf16>, vector<128x128xbf16>, vector<32x128xf32> -> vector<32x128xf32>
    %111 = arith.addf %107, %110 : vector<32x128xf32>
    %c2_52 = arith.constant 2 : index
    %c0_53 = arith.constant 0 : index
    %c0_54 = arith.constant 0 : index
    %112 = vector.load %arg5[%c2_52, %c0_53, %c0_54] : memref<3x128x128xbf16, #tpu.memory_space<vmem>>, vector<1x128x128xbf16>
    %113 = vector.shape_cast %112 : vector<1x128x128xbf16> to vector<128x128xbf16>
    %cst_55 = arith.constant dense<0.000000e+00> : vector<32x128xf32>
    %114 = tpu.matmul %104, %113, %cst_55 {dimension_numbers = #tpu.dot_dimension_numbers<[1], [0], [0], [1], [0, 0, 1, 1], [], []>} : vector<32x128xbf16>, vector<128x128xbf16>, vector<32x128xf32> -> vector<32x128xf32>
    %115 = arith.addf %111, %114 : vector<32x128xf32>
    %116 = arith.mulf %115, %34 : vector<32x128xf32>
    %cst_56 = arith.constant dense<0.000000e+00> : vector<128xf32>
    %117 = vector.multi_reduction <add>, %116, %cst_56 [0] : vector<32x128xf32> to vector<128xf32>
    %118 = vector.shape_cast %117 : vector<128xf32> to vector<1x128xf32>
    %119 = arith.mulf %116, %116 : vector<32x128xf32>
    %cst_57 = arith.constant dense<0.000000e+00> : vector<128xf32>
    %120 = vector.multi_reduction <add>, %119, %cst_57 [0] : vector<32x128xf32> to vector<128xf32>
    %121 = vector.shape_cast %120 : vector<128xf32> to vector<1x128xf32>
    %c8_i32_58 = arith.constant 8 : i32
    %122 = tpu.dynamic_rotate %118 by %c8_i32_58 dim 1 : vector<1x128xf32>, i32 -> vector<1x128xf32>
    %123 = arith.addf %118, %122 : vector<1x128xf32>
    %c8_i32_59 = arith.constant 8 : i32
    %124 = tpu.dynamic_rotate %121 by %c8_i32_59 dim 1 : vector<1x128xf32>, i32 -> vector<1x128xf32>
    %125 = arith.addf %121, %124 : vector<1x128xf32>
    %c16_i32_60 = arith.constant 16 : i32
    %126 = tpu.dynamic_rotate %123 by %c16_i32_60 dim 1 : vector<1x128xf32>, i32 -> vector<1x128xf32>
    %127 = arith.addf %123, %126 : vector<1x128xf32>
    %c16_i32_61 = arith.constant 16 : i32
    %128 = tpu.dynamic_rotate %125 by %c16_i32_61 dim 1 : vector<1x128xf32>, i32 -> vector<1x128xf32>
    %129 = arith.addf %125, %128 : vector<1x128xf32>
    %c32_i32_62 = arith.constant 32 : i32
    %130 = tpu.dynamic_rotate %127 by %c32_i32_62 dim 1 : vector<1x128xf32>, i32 -> vector<1x128xf32>
    %131 = arith.addf %127, %130 : vector<1x128xf32>
    %c32_i32_63 = arith.constant 32 : i32
    %132 = tpu.dynamic_rotate %129 by %c32_i32_63 dim 1 : vector<1x128xf32>, i32 -> vector<1x128xf32>
    %133 = arith.addf %129, %132 : vector<1x128xf32>
    %c64_i32_64 = arith.constant 64 : i32
    %134 = tpu.dynamic_rotate %131 by %c64_i32_64 dim 1 : vector<1x128xf32>, i32 -> vector<1x128xf32>
    %135 = arith.addf %131, %134 : vector<1x128xf32>
    %c64_i32_65 = arith.constant 64 : i32
    %136 = tpu.dynamic_rotate %133 by %c64_i32_65 dim 1 : vector<1x128xf32>, i32 -> vector<1x128xf32>
    %137 = arith.addf %133, %136 : vector<1x128xf32>
    %cst_66 = arith.constant 0.001953125 : f32
    %138 = vector.broadcast %cst_66 : f32 to vector<1x128xf32>
    %139 = arith.mulf %135, %138 : vector<1x128xf32>
    %cst_67 = arith.constant 0.001953125 : f32
    %140 = vector.broadcast %cst_67 : f32 to vector<1x128xf32>
    %141 = arith.mulf %137, %140 : vector<1x128xf32>
    %142 = arith.mulf %139, %139 : vector<1x128xf32>
    %143 = arith.subf %141, %142 : vector<1x128xf32>
    %144 = vector.broadcast %139 : vector<1x128xf32> to vector<32x128xf32>
    %145 = arith.subf %116, %144 : vector<32x128xf32>
    %cst_68 = arith.constant 9.99999974E-6 : f32
    %146 = vector.broadcast %cst_68 : f32 to vector<1x128xf32>
    %147 = arith.addf %143, %146 : vector<1x128xf32>
    %148 = math.rsqrt %147 : vector<1x128xf32>
    %149 = vector.broadcast %148 : vector<1x128xf32> to vector<32x128xf32>
    %150 = arith.mulf %145, %149 : vector<32x128xf32>
    %c0_69 = arith.constant 0 : index
    %c0_70 = arith.constant 0 : index
    %151 = vector.load %arg8[%c0_69, %c0_70] : memref<1x128xf32, #tpu.memory_space<vmem>>, vector<1x128xf32>
    %152 = vector.broadcast %151 : vector<1x128xf32> to vector<32x128xf32>
    %153 = arith.mulf %150, %152 : vector<32x128xf32>
    %c0_71 = arith.constant 0 : index
    %c0_72 = arith.constant 0 : index
    %154 = vector.load %arg9[%c0_71, %c0_72] : memref<1x128xf32, #tpu.memory_space<vmem>>, vector<1x128xf32>
    %155 = vector.broadcast %154 : vector<1x128xf32> to vector<32x128xf32>
    %156 = arith.addf %153, %155 : vector<32x128xf32>
    %cst_73 = arith.constant 0.000000e+00 : f32
    %157 = vector.broadcast %cst_73 : f32 to vector<32x128xf32>
    %158 = arith.cmpf oge, %156, %157 : vector<32x128xf32>
    %cst_74 = arith.constant 0.00999999977 : f32
    %159 = vector.broadcast %cst_74 : f32 to vector<32x128xf32>
    %160 = arith.mulf %159, %156 : vector<32x128xf32>
    %161 = arith.select %158, %156, %160 : vector<32x128xi1>, vector<32x128xf32>
    %162 = arith.truncf %161 : vector<32x128xf32> to vector<32x128xbf16>
    %c0_75 = arith.constant 0 : index
    %c0_76 = arith.constant 0 : index
    %163 = vector.load %arg10[%c0_75, %c0_76] : memref<16x32xbf16, #tpu.memory_space<vmem>>, vector<16x32xbf16>
    %cst_77 = arith.constant dense<0.000000e+00> : vector<16x128xf32>
    %164 = tpu.matmul %163, %162, %cst_77 {dimension_numbers = #tpu.dot_dimension_numbers<[1], [0], [0], [1], [0, 0, 1, 1], [], []>} : vector<16x32xbf16>, vector<32x128xbf16>, vector<16x128xf32> -> vector<16x128xf32>
    %c0_78 = arith.constant 0 : index
    %c0_79 = arith.constant 0 : index
    %165 = vector.load %arg11[%c0_78, %c0_79] : memref<16x32xbf16, #tpu.memory_space<vmem>>, vector<16x32xbf16>
    %cst_80 = arith.constant dense<0.000000e+00> : vector<16x128xf32>
    %166 = tpu.matmul %165, %162, %cst_80 {dimension_numbers = #tpu.dot_dimension_numbers<[1], [0], [0], [1], [0, 0, 1, 1], [], []>} : vector<16x32xbf16>, vector<32x128xbf16>, vector<16x128xf32> -> vector<16x128xf32>
    %167 = arith.maximumf %164, %166 : vector<16x128xf32>
    %168 = arith.truncf %167 : vector<16x128xf32> to vector<16x128xbf16>
    %c0_81 = arith.constant 0 : index
    %c0_82 = arith.constant 0 : index
    %169 = vector.load %arg12[%c0_81, %c0_82] : memref<128x64xbf16, #tpu.memory_space<vmem>>, vector<128x64xbf16>
    %cst_83 = arith.constant dense<0.000000e+00> : vector<16x64xf32>
    %170 = tpu.matmul %168, %169, %cst_83 {dimension_numbers = #tpu.dot_dimension_numbers<[1], [0], [0], [1], [0, 0, 1, 1], [], []>} : vector<16x128xbf16>, vector<128x64xbf16>, vector<16x64xf32> -> vector<16x64xf32>
    %c0_84 = arith.constant 0 : index
    %c0_85 = arith.constant 0 : index
    %171 = vector.load %arg13[%c0_84, %c0_85] : memref<128x64xbf16, #tpu.memory_space<vmem>>, vector<128x64xbf16>
    %cst_86 = arith.constant dense<0.000000e+00> : vector<16x64xf32>
    %172 = tpu.matmul %168, %171, %cst_86 {dimension_numbers = #tpu.dot_dimension_numbers<[1], [0], [0], [1], [0, 0, 1, 1], [], []>} : vector<16x128xbf16>, vector<128x64xbf16>, vector<16x64xf32> -> vector<16x64xf32>
    %173 = arith.maximumf %170, %172 : vector<16x64xf32>
    %174 = arith.truncf %173 : vector<16x64xf32> to vector<16x64xbf16>
    %175 = tpu.iota {dimensions = array<i32: 0>} : vector<16x128xi32>
    %c7_i32 = arith.constant 7 : i32
    %176 = vector.broadcast %c7_i32 : i32 to vector<16x128xi32>
    %177 = arith.andi %175, %176 : vector<16x128xi32>
    %178 = tpu.iota {dimensions = array<i32: 1>} : vector<16x128xi32>
    %c4_i32 = arith.constant 4 : i32
    %179 = vector.broadcast %c4_i32 : i32 to vector<16x128xi32>
    %180 = arith.shrsi %178, %179 : vector<16x128xi32>
    %c0_i32_87 = arith.constant 0 : i32
    %181 = vector.broadcast %c0_i32_87 : i32 to vector<16x128xi32>
    %182 = arith.cmpi eq, %177, %181 : vector<16x128xi32>
    %183 = arith.extui %182 : vector<16x128xi1> to vector<16x128xi32>
    %184 = arith.sitofp %183 : vector<16x128xi32> to vector<16x128xf32>
    %cst_88 = arith.constant 3.000000e+00 : f32
    %185 = vector.broadcast %cst_88 : f32 to vector<16x128xf32>
    %186 = arith.subf %185, %184 : vector<16x128xf32>
    %c7_i32_89 = arith.constant 7 : i32
    %187 = vector.broadcast %c7_i32_89 : i32 to vector<16x128xi32>
    %188 = arith.cmpi eq, %177, %187 : vector<16x128xi32>
    %189 = arith.extui %188 : vector<16x128xi1> to vector<16x128xi32>
    %190 = arith.sitofp %189 : vector<16x128xi32> to vector<16x128xf32>
    %191 = arith.subf %186, %190 : vector<16x128xf32>
    %c0_i32_90 = arith.constant 0 : i32
    %192 = vector.broadcast %c0_i32_90 : i32 to vector<16x128xi32>
    %193 = arith.cmpi eq, %180, %192 : vector<16x128xi32>
    %194 = arith.extui %193 : vector<16x128xi1> to vector<16x128xi32>
    %195 = arith.sitofp %194 : vector<16x128xi32> to vector<16x128xf32>
    %cst_91 = arith.constant 3.000000e+00 : f32
    %196 = vector.broadcast %cst_91 : f32 to vector<16x128xf32>
    %197 = arith.subf %196, %195 : vector<16x128xf32>
    %c7_i32_92 = arith.constant 7 : i32
    %198 = vector.broadcast %c7_i32_92 : i32 to vector<16x128xi32>
    %199 = arith.cmpi eq, %180, %198 : vector<16x128xi32>
    %200 = arith.extui %199 : vector<16x128xi1> to vector<16x128xi32>
    %201 = arith.sitofp %200 : vector<16x128xi32> to vector<16x128xf32>
    %202 = arith.subf %197, %201 : vector<16x128xf32>
    %203 = arith.mulf %191, %202 : vector<16x128xf32>
    %cst_93 = arith.constant 9.99999993E-9 : f32
    %204 = vector.broadcast %cst_93 : f32 to vector<16x128xf32>
    %205 = arith.addf %203, %204 : vector<16x128xf32>
    %cst_94 = arith.constant 9.000000e+00 : f32
    %206 = vector.broadcast %cst_94 : f32 to vector<16x128xf32>
    %207 = arith.divf %206, %205 : vector<16x128xf32>
    %c0_95 = arith.constant 0 : index
    %c0_96 = arith.constant 0 : index
    %208 = vector.load %arg14[%c0_95, %c0_96] : memref<16x16xbf16, #tpu.memory_space<vmem>>, vector<16x16xbf16>
    %cst_97 = arith.constant dense<0.000000e+00> : vector<16x64xf32>
    %209 = tpu.matmul %208, %174, %cst_97 {dimension_numbers = #tpu.dot_dimension_numbers<[1], [0], [0], [1], [0, 0, 1, 1], [], []>} : vector<16x16xbf16>, vector<16x64xbf16>, vector<16x64xf32> -> vector<16x64xf32>
    %210 = arith.truncf %209 : vector<16x64xf32> to vector<16x64xbf16>
    %c0_98 = arith.constant 0 : index
    %c0_99 = arith.constant 0 : index
    %211 = vector.load %arg15[%c0_98, %c0_99] : memref<16x16xbf16, #tpu.memory_space<vmem>>, vector<16x16xbf16>
    %cst_100 = arith.constant dense<0.000000e+00> : vector<16x64xf32>
    %212 = tpu.matmul %211, %174, %cst_100 {dimension_numbers = #tpu.dot_dimension_numbers<[1], [0], [0], [1], [0, 0, 1, 1], [], []>} : vector<16x16xbf16>, vector<16x64xbf16>, vector<16x64xf32> -> vector<16x64xf32>
    %213 = arith.truncf %212 : vector<16x64xf32> to vector<16x64xbf16>
    %c0_101 = arith.constant 0 : index
    %c0_102 = arith.constant 0 : index
    %c0_103 = arith.constant 0 : index
    %214 = vector.load %arg16[%c0_101, %c0_102, %c0_103] : memref<3x64x128xbf16, #tpu.memory_space<vmem>>, vector<1x64x128xbf16>
    %215 = vector.shape_cast %214 : vector<1x64x128xbf16> to vector<64x128xbf16>
    %cst_104 = arith.constant dense<0.000000e+00> : vector<16x128xf32>
    %216 = tpu.matmul %210, %215, %cst_104 {dimension_numbers = #tpu.dot_dimension_numbers<[1], [0], [0], [1], [0, 0, 1, 1], [], []>} : vector<16x64xbf16>, vector<64x128xbf16>, vector<16x128xf32> -> vector<16x128xf32>
    %c1_105 = arith.constant 1 : index
    %c0_106 = arith.constant 0 : index
    %c0_107 = arith.constant 0 : index
    %217 = vector.load %arg16[%c1_105, %c0_106, %c0_107] : memref<3x64x128xbf16, #tpu.memory_space<vmem>>, vector<1x64x128xbf16>
    %218 = vector.shape_cast %217 : vector<1x64x128xbf16> to vector<64x128xbf16>
    %cst_108 = arith.constant dense<0.000000e+00> : vector<16x128xf32>
    %219 = tpu.matmul %174, %218, %cst_108 {dimension_numbers = #tpu.dot_dimension_numbers<[1], [0], [0], [1], [0, 0, 1, 1], [], []>} : vector<16x64xbf16>, vector<64x128xbf16>, vector<16x128xf32> -> vector<16x128xf32>
    %220 = arith.addf %216, %219 : vector<16x128xf32>
    %c2_109 = arith.constant 2 : index
    %c0_110 = arith.constant 0 : index
    %c0_111 = arith.constant 0 : index
    %221 = vector.load %arg16[%c2_109, %c0_110, %c0_111] : memref<3x64x128xbf16, #tpu.memory_space<vmem>>, vector<1x64x128xbf16>
    %222 = vector.shape_cast %221 : vector<1x64x128xbf16> to vector<64x128xbf16>
    %cst_112 = arith.constant dense<0.000000e+00> : vector<16x128xf32>
    %223 = tpu.matmul %213, %222, %cst_112 {dimension_numbers = #tpu.dot_dimension_numbers<[1], [0], [0], [1], [0, 0, 1, 1], [], []>} : vector<16x64xbf16>, vector<64x128xbf16>, vector<16x128xf32> -> vector<16x128xf32>
    %224 = arith.addf %220, %223 : vector<16x128xf32>
    %225 = arith.mulf %224, %207 : vector<16x128xf32>
    %cst_113 = arith.constant dense<0.000000e+00> : vector<128xf32>
    %226 = vector.multi_reduction <add>, %225, %cst_113 [0] : vector<16x128xf32> to vector<128xf32>
    %227 = vector.shape_cast %226 : vector<128xf32> to vector<1x128xf32>
    %228 = arith.mulf %225, %225 : vector<16x128xf32>
    %cst_114 = arith.constant dense<0.000000e+00> : vector<128xf32>
    %229 = vector.multi_reduction <add>, %228, %cst_114 [0] : vector<16x128xf32> to vector<128xf32>
    %230 = vector.shape_cast %229 : vector<128xf32> to vector<1x128xf32>
    %c16_i32_115 = arith.constant 16 : i32
    %231 = tpu.dynamic_rotate %227 by %c16_i32_115 dim 1 : vector<1x128xf32>, i32 -> vector<1x128xf32>
    %232 = arith.addf %227, %231 : vector<1x128xf32>
    %c16_i32_116 = arith.constant 16 : i32
    %233 = tpu.dynamic_rotate %230 by %c16_i32_116 dim 1 : vector<1x128xf32>, i32 -> vector<1x128xf32>
    %234 = arith.addf %230, %233 : vector<1x128xf32>
    %c32_i32_117 = arith.constant 32 : i32
    %235 = tpu.dynamic_rotate %232 by %c32_i32_117 dim 1 : vector<1x128xf32>, i32 -> vector<1x128xf32>
    %236 = arith.addf %232, %235 : vector<1x128xf32>
    %c32_i32_118 = arith.constant 32 : i32
    %237 = tpu.dynamic_rotate %234 by %c32_i32_118 dim 1 : vector<1x128xf32>, i32 -> vector<1x128xf32>
    %238 = arith.addf %234, %237 : vector<1x128xf32>
    %c64_i32_119 = arith.constant 64 : i32
    %239 = tpu.dynamic_rotate %236 by %c64_i32_119 dim 1 : vector<1x128xf32>, i32 -> vector<1x128xf32>
    %240 = arith.addf %236, %239 : vector<1x128xf32>
    %c64_i32_120 = arith.constant 64 : i32
    %241 = tpu.dynamic_rotate %238 by %c64_i32_120 dim 1 : vector<1x128xf32>, i32 -> vector<1x128xf32>
    %242 = arith.addf %238, %241 : vector<1x128xf32>
    %cst_121 = arith.constant 7.812500e-03 : f32
    %243 = vector.broadcast %cst_121 : f32 to vector<1x128xf32>
    %244 = arith.mulf %240, %243 : vector<1x128xf32>
    %cst_122 = arith.constant 7.812500e-03 : f32
    %245 = vector.broadcast %cst_122 : f32 to vector<1x128xf32>
    %246 = arith.mulf %242, %245 : vector<1x128xf32>
    %247 = arith.mulf %244, %244 : vector<1x128xf32>
    %248 = arith.subf %246, %247 : vector<1x128xf32>
    %249 = vector.broadcast %244 : vector<1x128xf32> to vector<16x128xf32>
    %250 = arith.subf %225, %249 : vector<16x128xf32>
    %cst_123 = arith.constant 9.99999974E-6 : f32
    %251 = vector.broadcast %cst_123 : f32 to vector<1x128xf32>
    %252 = arith.addf %248, %251 : vector<1x128xf32>
    %253 = math.rsqrt %252 : vector<1x128xf32>
    %254 = vector.broadcast %253 : vector<1x128xf32> to vector<16x128xf32>
    %255 = arith.mulf %250, %254 : vector<16x128xf32>
    %c0_124 = arith.constant 0 : index
    %c0_125 = arith.constant 0 : index
    %256 = vector.load %arg18[%c0_124, %c0_125] : memref<1x128xf32, #tpu.memory_space<vmem>>, vector<1x128xf32>
    %257 = vector.broadcast %256 : vector<1x128xf32> to vector<16x128xf32>
    %258 = arith.mulf %255, %257 : vector<16x128xf32>
    %c0_126 = arith.constant 0 : index
    %c0_127 = arith.constant 0 : index
    %259 = vector.load %arg19[%c0_126, %c0_127] : memref<1x128xf32, #tpu.memory_space<vmem>>, vector<1x128xf32>
    %260 = vector.broadcast %259 : vector<1x128xf32> to vector<16x128xf32>
    %261 = arith.addf %258, %260 : vector<16x128xf32>
    %cst_128 = arith.constant 0.000000e+00 : f32
    %262 = vector.broadcast %cst_128 : f32 to vector<16x128xf32>
    %263 = arith.cmpf oge, %261, %262 : vector<16x128xf32>
    %cst_129 = arith.constant 0.00999999977 : f32
    %264 = vector.broadcast %cst_129 : f32 to vector<16x128xf32>
    %265 = arith.mulf %264, %261 : vector<16x128xf32>
    %266 = arith.select %263, %261, %265 : vector<16x128xi1>, vector<16x128xf32>
    %267 = arith.truncf %266 : vector<16x128xf32> to vector<16x128xbf16>
    %c0_130 = arith.constant 0 : index
    %c0_131 = arith.constant 0 : index
    %268 = vector.load %arg14[%c0_130, %c0_131] : memref<16x16xbf16, #tpu.memory_space<vmem>>, vector<16x16xbf16>
    %cst_132 = arith.constant dense<0.000000e+00> : vector<16x128xf32>
    %269 = tpu.matmul %268, %267, %cst_132 {dimension_numbers = #tpu.dot_dimension_numbers<[1], [0], [0], [1], [0, 0, 1, 1], [], []>} : vector<16x16xbf16>, vector<16x128xbf16>, vector<16x128xf32> -> vector<16x128xf32>
    %270 = arith.truncf %269 : vector<16x128xf32> to vector<16x128xbf16>
    %c0_133 = arith.constant 0 : index
    %c0_134 = arith.constant 0 : index
    %271 = vector.load %arg15[%c0_133, %c0_134] : memref<16x16xbf16, #tpu.memory_space<vmem>>, vector<16x16xbf16>
    %cst_135 = arith.constant dense<0.000000e+00> : vector<16x128xf32>
    %272 = tpu.matmul %271, %267, %cst_135 {dimension_numbers = #tpu.dot_dimension_numbers<[1], [0], [0], [1], [0, 0, 1, 1], [], []>} : vector<16x16xbf16>, vector<16x128xbf16>, vector<16x128xf32> -> vector<16x128xf32>
    %273 = arith.truncf %272 : vector<16x128xf32> to vector<16x128xbf16>
    %c0_136 = arith.constant 0 : index
    %c0_137 = arith.constant 0 : index
    %c0_138 = arith.constant 0 : index
    %274 = vector.load %arg17[%c0_136, %c0_137, %c0_138] : memref<3x128x128xbf16, #tpu.memory_space<vmem>>, vector<1x128x128xbf16>
    %275 = vector.shape_cast %274 : vector<1x128x128xbf16> to vector<128x128xbf16>
    %cst_139 = arith.constant dense<0.000000e+00> : vector<16x128xf32>
    %276 = tpu.matmul %270, %275, %cst_139 {dimension_numbers = #tpu.dot_dimension_numbers<[1], [0], [0], [1], [0, 0, 1, 1], [], []>} : vector<16x128xbf16>, vector<128x128xbf16>, vector<16x128xf32> -> vector<16x128xf32>
    %c1_140 = arith.constant 1 : index
    %c0_141 = arith.constant 0 : index
    %c0_142 = arith.constant 0 : index
    %277 = vector.load %arg17[%c1_140, %c0_141, %c0_142] : memref<3x128x128xbf16, #tpu.memory_space<vmem>>, vector<1x128x128xbf16>
    %278 = vector.shape_cast %277 : vector<1x128x128xbf16> to vector<128x128xbf16>
    %cst_143 = arith.constant dense<0.000000e+00> : vector<16x128xf32>
    %279 = tpu.matmul %267, %278, %cst_143 {dimension_numbers = #tpu.dot_dimension_numbers<[1], [0], [0], [1], [0, 0, 1, 1], [], []>} : vector<16x128xbf16>, vector<128x128xbf16>, vector<16x128xf32> -> vector<16x128xf32>
    %280 = arith.addf %276, %279 : vector<16x128xf32>
    %c2_144 = arith.constant 2 : index
    %c0_145 = arith.constant 0 : index
    %c0_146 = arith.constant 0 : index
    %281 = vector.load %arg17[%c2_144, %c0_145, %c0_146] : memref<3x128x128xbf16, #tpu.memory_space<vmem>>, vector<1x128x128xbf16>
    %282 = vector.shape_cast %281 : vector<1x128x128xbf16> to vector<128x128xbf16>
    %cst_147 = arith.constant dense<0.000000e+00> : vector<16x128xf32>
    %283 = tpu.matmul %273, %282, %cst_147 {dimension_numbers = #tpu.dot_dimension_numbers<[1], [0], [0], [1], [0, 0, 1, 1], [], []>} : vector<16x128xbf16>, vector<128x128xbf16>, vector<16x128xf32> -> vector<16x128xf32>
    %284 = arith.addf %280, %283 : vector<16x128xf32>
    %285 = arith.mulf %284, %207 : vector<16x128xf32>
    %cst_148 = arith.constant dense<0.000000e+00> : vector<128xf32>
    %286 = vector.multi_reduction <add>, %285, %cst_148 [0] : vector<16x128xf32> to vector<128xf32>
    %287 = vector.shape_cast %286 : vector<128xf32> to vector<1x128xf32>
    %288 = arith.mulf %285, %285 : vector<16x128xf32>
    %cst_149 = arith.constant dense<0.000000e+00> : vector<128xf32>
    %289 = vector.multi_reduction <add>, %288, %cst_149 [0] : vector<16x128xf32> to vector<128xf32>
    %290 = vector.shape_cast %289 : vector<128xf32> to vector<1x128xf32>
    %c16_i32_150 = arith.constant 16 : i32
    %291 = tpu.dynamic_rotate %287 by %c16_i32_150 dim 1 : vector<1x128xf32>, i32 -> vector<1x128xf32>
    %292 = arith.addf %287, %291 : vector<1x128xf32>
    %c16_i32_151 = arith.constant 16 : i32
    %293 = tpu.dynamic_rotate %290 by %c16_i32_151 dim 1 : vector<1x128xf32>, i32 -> vector<1x128xf32>
    %294 = arith.addf %290, %293 : vector<1x128xf32>
    %c32_i32_152 = arith.constant 32 : i32
    %295 = tpu.dynamic_rotate %292 by %c32_i32_152 dim 1 : vector<1x128xf32>, i32 -> vector<1x128xf32>
    %296 = arith.addf %292, %295 : vector<1x128xf32>
    %c32_i32_153 = arith.constant 32 : i32
    %297 = tpu.dynamic_rotate %294 by %c32_i32_153 dim 1 : vector<1x128xf32>, i32 -> vector<1x128xf32>
    %298 = arith.addf %294, %297 : vector<1x128xf32>
    %c64_i32_154 = arith.constant 64 : i32
    %299 = tpu.dynamic_rotate %296 by %c64_i32_154 dim 1 : vector<1x128xf32>, i32 -> vector<1x128xf32>
    %300 = arith.addf %296, %299 : vector<1x128xf32>
    %c64_i32_155 = arith.constant 64 : i32
    %301 = tpu.dynamic_rotate %298 by %c64_i32_155 dim 1 : vector<1x128xf32>, i32 -> vector<1x128xf32>
    %302 = arith.addf %298, %301 : vector<1x128xf32>
    %cst_156 = arith.constant 7.812500e-03 : f32
    %303 = vector.broadcast %cst_156 : f32 to vector<1x128xf32>
    %304 = arith.mulf %300, %303 : vector<1x128xf32>
    %cst_157 = arith.constant 7.812500e-03 : f32
    %305 = vector.broadcast %cst_157 : f32 to vector<1x128xf32>
    %306 = arith.mulf %302, %305 : vector<1x128xf32>
    %307 = arith.mulf %304, %304 : vector<1x128xf32>
    %308 = arith.subf %306, %307 : vector<1x128xf32>
    %309 = vector.broadcast %304 : vector<1x128xf32> to vector<16x128xf32>
    %310 = arith.subf %285, %309 : vector<16x128xf32>
    %cst_158 = arith.constant 9.99999974E-6 : f32
    %311 = vector.broadcast %cst_158 : f32 to vector<1x128xf32>
    %312 = arith.addf %308, %311 : vector<1x128xf32>
    %313 = math.rsqrt %312 : vector<1x128xf32>
    %314 = vector.broadcast %313 : vector<1x128xf32> to vector<16x128xf32>
    %315 = arith.mulf %310, %314 : vector<16x128xf32>
    %c0_159 = arith.constant 0 : index
    %c0_160 = arith.constant 0 : index
    %316 = vector.load %arg20[%c0_159, %c0_160] : memref<1x128xf32, #tpu.memory_space<vmem>>, vector<1x128xf32>
    %317 = vector.broadcast %316 : vector<1x128xf32> to vector<16x128xf32>
    %318 = arith.mulf %315, %317 : vector<16x128xf32>
    %c0_161 = arith.constant 0 : index
    %c0_162 = arith.constant 0 : index
    %319 = vector.load %arg21[%c0_161, %c0_162] : memref<1x128xf32, #tpu.memory_space<vmem>>, vector<1x128xf32>
    %320 = vector.broadcast %319 : vector<1x128xf32> to vector<16x128xf32>
    %321 = arith.addf %318, %320 : vector<16x128xf32>
    %cst_163 = arith.constant 0.000000e+00 : f32
    %322 = vector.broadcast %cst_163 : f32 to vector<16x128xf32>
    %323 = arith.cmpf oge, %321, %322 : vector<16x128xf32>
    %cst_164 = arith.constant 0.00999999977 : f32
    %324 = vector.broadcast %cst_164 : f32 to vector<16x128xf32>
    %325 = arith.mulf %324, %321 : vector<16x128xf32>
    %326 = arith.select %323, %321, %325 : vector<16x128xi1>, vector<16x128xf32>
    %327 = arith.truncf %326 : vector<16x128xf32> to vector<16x128xbf16>
    %c0_165 = arith.constant 0 : index
    %c0_166 = arith.constant 0 : index
    %328 = vector.load %arg22[%c0_165, %c0_166] : memref<8x16xbf16, #tpu.memory_space<vmem>>, vector<8x16xbf16>
    %cst_167 = arith.constant dense<0.000000e+00> : vector<8x128xf32>
    %329 = tpu.matmul %328, %327, %cst_167 {dimension_numbers = #tpu.dot_dimension_numbers<[1], [0], [0], [1], [0, 0, 1, 1], [], []>} : vector<8x16xbf16>, vector<16x128xbf16>, vector<8x128xf32> -> vector<8x128xf32>
    %c0_168 = arith.constant 0 : index
    %c0_169 = arith.constant 0 : index
    %330 = vector.load %arg23[%c0_168, %c0_169] : memref<8x16xbf16, #tpu.memory_space<vmem>>, vector<8x16xbf16>
    %cst_170 = arith.constant dense<0.000000e+00> : vector<8x128xf32>
    %331 = tpu.matmul %330, %327, %cst_170 {dimension_numbers = #tpu.dot_dimension_numbers<[1], [0], [0], [1], [0, 0, 1, 1], [], []>} : vector<8x16xbf16>, vector<16x128xbf16>, vector<8x128xf32> -> vector<8x128xf32>
    %332 = arith.maximumf %329, %331 : vector<8x128xf32>
    %333 = arith.truncf %332 : vector<8x128xf32> to vector<8x128xbf16>
    %c0_171 = arith.constant 0 : index
    %c0_172 = arith.constant 0 : index
    %334 = vector.load %arg24[%c0_171, %c0_172] : memref<128x64xbf16, #tpu.memory_space<vmem>>, vector<128x64xbf16>
    %cst_173 = arith.constant dense<0.000000e+00> : vector<8x64xf32>
    %335 = tpu.matmul %333, %334, %cst_173 {dimension_numbers = #tpu.dot_dimension_numbers<[1], [0], [0], [1], [0, 0, 1, 1], [], []>} : vector<8x128xbf16>, vector<128x64xbf16>, vector<8x64xf32> -> vector<8x64xf32>
    %c0_174 = arith.constant 0 : index
    %c0_175 = arith.constant 0 : index
    %336 = vector.load %arg25[%c0_174, %c0_175] : memref<128x64xbf16, #tpu.memory_space<vmem>>, vector<128x64xbf16>
    %cst_176 = arith.constant dense<0.000000e+00> : vector<8x64xf32>
    %337 = tpu.matmul %333, %336, %cst_176 {dimension_numbers = #tpu.dot_dimension_numbers<[1], [0], [0], [1], [0, 0, 1, 1], [], []>} : vector<8x128xbf16>, vector<128x64xbf16>, vector<8x64xf32> -> vector<8x64xf32>
    %338 = arith.maximumf %335, %337 : vector<8x64xf32>
    %339 = arith.truncf %338 : vector<8x64xf32> to vector<8x64xbf16>
    %340 = tpu.iota {dimensions = array<i32: 0>} : vector<8x128xi32>
    %c3_i32_177 = arith.constant 3 : i32
    %341 = vector.broadcast %c3_i32_177 : i32 to vector<8x128xi32>
    %342 = arith.andi %340, %341 : vector<8x128xi32>
    %343 = tpu.iota {dimensions = array<i32: 1>} : vector<8x128xi32>
    %c5_i32 = arith.constant 5 : i32
    %344 = vector.broadcast %c5_i32 : i32 to vector<8x128xi32>
    %345 = arith.shrsi %343, %344 : vector<8x128xi32>
    %c0_i32_178 = arith.constant 0 : i32
    %346 = vector.broadcast %c0_i32_178 : i32 to vector<8x128xi32>
    %347 = arith.cmpi eq, %342, %346 : vector<8x128xi32>
    %348 = arith.extui %347 : vector<8x128xi1> to vector<8x128xi32>
    %349 = arith.sitofp %348 : vector<8x128xi32> to vector<8x128xf32>
    %cst_179 = arith.constant 3.000000e+00 : f32
    %350 = vector.broadcast %cst_179 : f32 to vector<8x128xf32>
    %351 = arith.subf %350, %349 : vector<8x128xf32>
    %c3_i32_180 = arith.constant 3 : i32
    %352 = vector.broadcast %c3_i32_180 : i32 to vector<8x128xi32>
    %353 = arith.cmpi eq, %342, %352 : vector<8x128xi32>
    %354 = arith.extui %353 : vector<8x128xi1> to vector<8x128xi32>
    %355 = arith.sitofp %354 : vector<8x128xi32> to vector<8x128xf32>
    %356 = arith.subf %351, %355 : vector<8x128xf32>
    %c0_i32_181 = arith.constant 0 : i32
    %357 = vector.broadcast %c0_i32_181 : i32 to vector<8x128xi32>
    %358 = arith.cmpi eq, %345, %357 : vector<8x128xi32>
    %359 = arith.extui %358 : vector<8x128xi1> to vector<8x128xi32>
    %360 = arith.sitofp %359 : vector<8x128xi32> to vector<8x128xf32>
    %cst_182 = arith.constant 3.000000e+00 : f32
    %361 = vector.broadcast %cst_182 : f32 to vector<8x128xf32>
    %362 = arith.subf %361, %360 : vector<8x128xf32>
    %c3_i32_183 = arith.constant 3 : i32
    %363 = vector.broadcast %c3_i32_183 : i32 to vector<8x128xi32>
    %364 = arith.cmpi eq, %345, %363 : vector<8x128xi32>
    %365 = arith.extui %364 : vector<8x128xi1> to vector<8x128xi32>
    %366 = arith.sitofp %365 : vector<8x128xi32> to vector<8x128xf32>
    %367 = arith.subf %362, %366 : vector<8x128xf32>
    %368 = arith.mulf %356, %367 : vector<8x128xf32>
    %cst_184 = arith.constant 9.99999993E-9 : f32
    %369 = vector.broadcast %cst_184 : f32 to vector<8x128xf32>
    %370 = arith.addf %368, %369 : vector<8x128xf32>
    %cst_185 = arith.constant 9.000000e+00 : f32
    %371 = vector.broadcast %cst_185 : f32 to vector<8x128xf32>
    %372 = arith.divf %371, %370 : vector<8x128xf32>
    %c0_186 = arith.constant 0 : index
    %c0_187 = arith.constant 0 : index
    %373 = vector.load %arg26[%c0_186, %c0_187] : memref<8x8xbf16, #tpu.memory_space<vmem>>, vector<8x8xbf16>
    %cst_188 = arith.constant dense<0.000000e+00> : vector<8x64xf32>
    %374 = tpu.matmul %373, %339, %cst_188 {dimension_numbers = #tpu.dot_dimension_numbers<[1], [0], [0], [1], [0, 0, 1, 1], [], []>} : vector<8x8xbf16>, vector<8x64xbf16>, vector<8x64xf32> -> vector<8x64xf32>
    %375 = arith.truncf %374 : vector<8x64xf32> to vector<8x64xbf16>
    %c0_189 = arith.constant 0 : index
    %c0_190 = arith.constant 0 : index
    %376 = vector.load %arg27[%c0_189, %c0_190] : memref<8x8xbf16, #tpu.memory_space<vmem>>, vector<8x8xbf16>
    %cst_191 = arith.constant dense<0.000000e+00> : vector<8x64xf32>
    %377 = tpu.matmul %376, %339, %cst_191 {dimension_numbers = #tpu.dot_dimension_numbers<[1], [0], [0], [1], [0, 0, 1, 1], [], []>} : vector<8x8xbf16>, vector<8x64xbf16>, vector<8x64xf32> -> vector<8x64xf32>
    %378 = arith.truncf %377 : vector<8x64xf32> to vector<8x64xbf16>
    %c0_192 = arith.constant 0 : index
    %c0_193 = arith.constant 0 : index
    %c0_194 = arith.constant 0 : index
    %379 = vector.load %arg28[%c0_192, %c0_193, %c0_194] : memref<3x64x128xbf16, #tpu.memory_space<vmem>>, vector<1x64x128xbf16>
    %380 = vector.shape_cast %379 : vector<1x64x128xbf16> to vector<64x128xbf16>
    %cst_195 = arith.constant dense<0.000000e+00> : vector<8x128xf32>
    %381 = tpu.matmul %375, %380, %cst_195 {dimension_numbers = #tpu.dot_dimension_numbers<[1], [0], [0], [1], [0, 0, 1, 1], [], []>} : vector<8x64xbf16>, vector<64x128xbf16>, vector<8x128xf32> -> vector<8x128xf32>
    %c1_196 = arith.constant 1 : index
    %c0_197 = arith.constant 0 : index
    %c0_198 = arith.constant 0 : index
    %382 = vector.load %arg28[%c1_196, %c0_197, %c0_198] : memref<3x64x128xbf16, #tpu.memory_space<vmem>>, vector<1x64x128xbf16>
    %383 = vector.shape_cast %382 : vector<1x64x128xbf16> to vector<64x128xbf16>
    %cst_199 = arith.constant dense<0.000000e+00> : vector<8x128xf32>
    %384 = tpu.matmul %339, %383, %cst_199 {dimension_numbers = #tpu.dot_dimension_numbers<[1], [0], [0], [1], [0, 0, 1, 1], [], []>} : vector<8x64xbf16>, vector<64x128xbf16>, vector<8x128xf32> -> vector<8x128xf32>
    %385 = arith.addf %381, %384 : vector<8x128xf32>
    %c2_200 = arith.constant 2 : index
    %c0_201 = arith.constant 0 : index
    %c0_202 = arith.constant 0 : index
    %386 = vector.load %arg28[%c2_200, %c0_201, %c0_202] : memref<3x64x128xbf16, #tpu.memory_space<vmem>>, vector<1x64x128xbf16>
    %387 = vector.shape_cast %386 : vector<1x64x128xbf16> to vector<64x128xbf16>
    %cst_203 = arith.constant dense<0.000000e+00> : vector<8x128xf32>
    %388 = tpu.matmul %378, %387, %cst_203 {dimension_numbers = #tpu.dot_dimension_numbers<[1], [0], [0], [1], [0, 0, 1, 1], [], []>} : vector<8x64xbf16>, vector<64x128xbf16>, vector<8x128xf32> -> vector<8x128xf32>
    %389 = arith.addf %385, %388 : vector<8x128xf32>
    %390 = arith.mulf %389, %372 : vector<8x128xf32>
    %cst_204 = arith.constant dense<0.000000e+00> : vector<128xf32>
    %391 = vector.multi_reduction <add>, %390, %cst_204 [0] : vector<8x128xf32> to vector<128xf32>
    %392 = vector.shape_cast %391 : vector<128xf32> to vector<1x128xf32>
    %393 = arith.mulf %390, %390 : vector<8x128xf32>
    %cst_205 = arith.constant dense<0.000000e+00> : vector<128xf32>
    %394 = vector.multi_reduction <add>, %393, %cst_205 [0] : vector<8x128xf32> to vector<128xf32>
    %395 = vector.shape_cast %394 : vector<128xf32> to vector<1x128xf32>
    %c32_i32_206 = arith.constant 32 : i32
    %396 = tpu.dynamic_rotate %392 by %c32_i32_206 dim 1 : vector<1x128xf32>, i32 -> vector<1x128xf32>
    %397 = arith.addf %392, %396 : vector<1x128xf32>
    %c32_i32_207 = arith.constant 32 : i32
    %398 = tpu.dynamic_rotate %395 by %c32_i32_207 dim 1 : vector<1x128xf32>, i32 -> vector<1x128xf32>
    %399 = arith.addf %395, %398 : vector<1x128xf32>
    %c64_i32_208 = arith.constant 64 : i32
    %400 = tpu.dynamic_rotate %397 by %c64_i32_208 dim 1 : vector<1x128xf32>, i32 -> vector<1x128xf32>
    %401 = arith.addf %397, %400 : vector<1x128xf32>
    %c64_i32_209 = arith.constant 64 : i32
    %402 = tpu.dynamic_rotate %399 by %c64_i32_209 dim 1 : vector<1x128xf32>, i32 -> vector<1x128xf32>
    %403 = arith.addf %399, %402 : vector<1x128xf32>
    %cst_210 = arith.constant 3.125000e-02 : f32
    %404 = vector.broadcast %cst_210 : f32 to vector<1x128xf32>
    %405 = arith.mulf %401, %404 : vector<1x128xf32>
    %cst_211 = arith.constant 3.125000e-02 : f32
    %406 = vector.broadcast %cst_211 : f32 to vector<1x128xf32>
    %407 = arith.mulf %403, %406 : vector<1x128xf32>
    %408 = arith.mulf %405, %405 : vector<1x128xf32>
    %409 = arith.subf %407, %408 : vector<1x128xf32>
    %410 = vector.broadcast %405 : vector<1x128xf32> to vector<8x128xf32>
    %411 = arith.subf %390, %410 : vector<8x128xf32>
    %cst_212 = arith.constant 9.99999974E-6 : f32
    %412 = vector.broadcast %cst_212 : f32 to vector<1x128xf32>
    %413 = arith.addf %409, %412 : vector<1x128xf32>
    %414 = math.rsqrt %413 : vector<1x128xf32>
    %415 = vector.broadcast %414 : vector<1x128xf32> to vector<8x128xf32>
    %416 = arith.mulf %411, %415 : vector<8x128xf32>
    %c0_213 = arith.constant 0 : index
    %c0_214 = arith.constant 0 : index
    %417 = vector.load %arg30[%c0_213, %c0_214] : memref<1x128xf32, #tpu.memory_space<vmem>>, vector<1x128xf32>
    %418 = vector.broadcast %417 : vector<1x128xf32> to vector<8x128xf32>
    %419 = arith.mulf %416, %418 : vector<8x128xf32>
    %c0_215 = arith.constant 0 : index
    %c0_216 = arith.constant 0 : index
    %420 = vector.load %arg31[%c0_215, %c0_216] : memref<1x128xf32, #tpu.memory_space<vmem>>, vector<1x128xf32>
    %421 = vector.broadcast %420 : vector<1x128xf32> to vector<8x128xf32>
    %422 = arith.addf %419, %421 : vector<8x128xf32>
    %cst_217 = arith.constant 0.000000e+00 : f32
    %423 = vector.broadcast %cst_217 : f32 to vector<8x128xf32>
    %424 = arith.cmpf oge, %422, %423 : vector<8x128xf32>
    %cst_218 = arith.constant 0.00999999977 : f32
    %425 = vector.broadcast %cst_218 : f32 to vector<8x128xf32>
    %426 = arith.mulf %425, %422 : vector<8x128xf32>
    %427 = arith.select %424, %422, %426 : vector<8x128xi1>, vector<8x128xf32>
    %428 = arith.truncf %427 : vector<8x128xf32> to vector<8x128xbf16>
    %c0_219 = arith.constant 0 : index
    %c0_220 = arith.constant 0 : index
    %429 = vector.load %arg26[%c0_219, %c0_220] : memref<8x8xbf16, #tpu.memory_space<vmem>>, vector<8x8xbf16>
    %cst_221 = arith.constant dense<0.000000e+00> : vector<8x128xf32>
    %430 = tpu.matmul %429, %428, %cst_221 {dimension_numbers = #tpu.dot_dimension_numbers<[1], [0], [0], [1], [0, 0, 1, 1], [], []>} : vector<8x8xbf16>, vector<8x128xbf16>, vector<8x128xf32> -> vector<8x128xf32>
    %431 = arith.truncf %430 : vector<8x128xf32> to vector<8x128xbf16>
    %c0_222 = arith.constant 0 : index
    %c0_223 = arith.constant 0 : index
    %432 = vector.load %arg27[%c0_222, %c0_223] : memref<8x8xbf16, #tpu.memory_space<vmem>>, vector<8x8xbf16>
    %cst_224 = arith.constant dense<0.000000e+00> : vector<8x128xf32>
    %433 = tpu.matmul %432, %428, %cst_224 {dimension_numbers = #tpu.dot_dimension_numbers<[1], [0], [0], [1], [0, 0, 1, 1], [], []>} : vector<8x8xbf16>, vector<8x128xbf16>, vector<8x128xf32> -> vector<8x128xf32>
    %434 = arith.truncf %433 : vector<8x128xf32> to vector<8x128xbf16>
    %c0_225 = arith.constant 0 : index
    %c0_226 = arith.constant 0 : index
    %c0_227 = arith.constant 0 : index
    %435 = vector.load %arg29[%c0_225, %c0_226, %c0_227] : memref<3x128x128xbf16, #tpu.memory_space<vmem>>, vector<1x128x128xbf16>
    %436 = vector.shape_cast %435 : vector<1x128x128xbf16> to vector<128x128xbf16>
    %cst_228 = arith.constant dense<0.000000e+00> : vector<8x128xf32>
    %437 = tpu.matmul %431, %436, %cst_228 {dimension_numbers = #tpu.dot_dimension_numbers<[1], [0], [0], [1], [0, 0, 1, 1], [], []>} : vector<8x128xbf16>, vector<128x128xbf16>, vector<8x128xf32> -> vector<8x128xf32>
    %c1_229 = arith.constant 1 : index
    %c0_230 = arith.constant 0 : index
    %c0_231 = arith.constant 0 : index
    %438 = vector.load %arg29[%c1_229, %c0_230, %c0_231] : memref<3x128x128xbf16, #tpu.memory_space<vmem>>, vector<1x128x128xbf16>
    %439 = vector.shape_cast %438 : vector<1x128x128xbf16> to vector<128x128xbf16>
    %cst_232 = arith.constant dense<0.000000e+00> : vector<8x128xf32>
    %440 = tpu.matmul %428, %439, %cst_232 {dimension_numbers = #tpu.dot_dimension_numbers<[1], [0], [0], [1], [0, 0, 1, 1], [], []>} : vector<8x128xbf16>, vector<128x128xbf16>, vector<8x128xf32> -> vector<8x128xf32>
    %441 = arith.addf %437, %440 : vector<8x128xf32>
    %c2_233 = arith.constant 2 : index
    %c0_234 = arith.constant 0 : index
    %c0_235 = arith.constant 0 : index
    %442 = vector.load %arg29[%c2_233, %c0_234, %c0_235] : memref<3x128x128xbf16, #tpu.memory_space<vmem>>, vector<1x128x128xbf16>
    %443 = vector.shape_cast %442 : vector<1x128x128xbf16> to vector<128x128xbf16>
    %cst_236 = arith.constant dense<0.000000e+00> : vector<8x128xf32>
    %444 = tpu.matmul %434, %443, %cst_236 {dimension_numbers = #tpu.dot_dimension_numbers<[1], [0], [0], [1], [0, 0, 1, 1], [], []>} : vector<8x128xbf16>, vector<128x128xbf16>, vector<8x128xf32> -> vector<8x128xf32>
    %445 = arith.addf %441, %444 : vector<8x128xf32>
    %446 = arith.mulf %445, %372 : vector<8x128xf32>
    %cst_237 = arith.constant dense<0.000000e+00> : vector<128xf32>
    %447 = vector.multi_reduction <add>, %446, %cst_237 [0] : vector<8x128xf32> to vector<128xf32>
    %448 = vector.shape_cast %447 : vector<128xf32> to vector<1x128xf32>
    %449 = arith.mulf %446, %446 : vector<8x128xf32>
    %cst_238 = arith.constant dense<0.000000e+00> : vector<128xf32>
    %450 = vector.multi_reduction <add>, %449, %cst_238 [0] : vector<8x128xf32> to vector<128xf32>
    %451 = vector.shape_cast %450 : vector<128xf32> to vector<1x128xf32>
    %c32_i32_239 = arith.constant 32 : i32
    %452 = tpu.dynamic_rotate %448 by %c32_i32_239 dim 1 : vector<1x128xf32>, i32 -> vector<1x128xf32>
    %453 = arith.addf %448, %452 : vector<1x128xf32>
    %c32_i32_240 = arith.constant 32 : i32
    %454 = tpu.dynamic_rotate %451 by %c32_i32_240 dim 1 : vector<1x128xf32>, i32 -> vector<1x128xf32>
    %455 = arith.addf %451, %454 : vector<1x128xf32>
    %c64_i32_241 = arith.constant 64 : i32
    %456 = tpu.dynamic_rotate %453 by %c64_i32_241 dim 1 : vector<1x128xf32>, i32 -> vector<1x128xf32>
    %457 = arith.addf %453, %456 : vector<1x128xf32>
    %c64_i32_242 = arith.constant 64 : i32
    %458 = tpu.dynamic_rotate %455 by %c64_i32_242 dim 1 : vector<1x128xf32>, i32 -> vector<1x128xf32>
    %459 = arith.addf %455, %458 : vector<1x128xf32>
    %cst_243 = arith.constant 3.125000e-02 : f32
    %460 = vector.broadcast %cst_243 : f32 to vector<1x128xf32>
    %461 = arith.mulf %457, %460 : vector<1x128xf32>
    %cst_244 = arith.constant 3.125000e-02 : f32
    %462 = vector.broadcast %cst_244 : f32 to vector<1x128xf32>
    %463 = arith.mulf %459, %462 : vector<1x128xf32>
    %464 = arith.mulf %461, %461 : vector<1x128xf32>
    %465 = arith.subf %463, %464 : vector<1x128xf32>
    %466 = vector.broadcast %461 : vector<1x128xf32> to vector<8x128xf32>
    %467 = arith.subf %446, %466 : vector<8x128xf32>
    %cst_245 = arith.constant 9.99999974E-6 : f32
    %468 = vector.broadcast %cst_245 : f32 to vector<1x128xf32>
    %469 = arith.addf %465, %468 : vector<1x128xf32>
    %470 = math.rsqrt %469 : vector<1x128xf32>
    %471 = vector.broadcast %470 : vector<1x128xf32> to vector<8x128xf32>
    %472 = arith.mulf %467, %471 : vector<8x128xf32>
    %c0_246 = arith.constant 0 : index
    %c0_247 = arith.constant 0 : index
    %473 = vector.load %arg32[%c0_246, %c0_247] : memref<1x128xf32, #tpu.memory_space<vmem>>, vector<1x128xf32>
    %474 = vector.broadcast %473 : vector<1x128xf32> to vector<8x128xf32>
    %475 = arith.mulf %472, %474 : vector<8x128xf32>
    %c0_248 = arith.constant 0 : index
    %c0_249 = arith.constant 0 : index
    %476 = vector.load %arg33[%c0_248, %c0_249] : memref<1x128xf32, #tpu.memory_space<vmem>>, vector<1x128xf32>
    %477 = vector.broadcast %476 : vector<1x128xf32> to vector<8x128xf32>
    %478 = arith.addf %475, %477 : vector<8x128xf32>
    %cst_250 = arith.constant 0.000000e+00 : f32
    %479 = vector.broadcast %cst_250 : f32 to vector<8x128xf32>
    %480 = arith.cmpf oge, %478, %479 : vector<8x128xf32>
    %cst_251 = arith.constant 0.00999999977 : f32
    %481 = vector.broadcast %cst_251 : f32 to vector<8x128xf32>
    %482 = arith.mulf %481, %478 : vector<8x128xf32>
    %483 = arith.select %480, %478, %482 : vector<8x128xi1>, vector<8x128xf32>
    %484 = arith.truncf %483 : vector<8x128xf32> to vector<8x128xbf16>
    %c0_252 = arith.constant 0 : index
    %c0_253 = arith.constant 0 : index
    %485 = vector.load %arg34[%c0_252, %c0_253] : memref<128x128xbf16, #tpu.memory_space<vmem>>, vector<128x128xbf16>
    %cst_254 = arith.constant dense<0.000000e+00> : vector<8x128xf32>
    %486 = tpu.matmul %484, %485, %cst_254 {dimension_numbers = #tpu.dot_dimension_numbers<[1], [0], [0], [1], [0, 0, 1, 1], [], []>} : vector<8x128xbf16>, vector<128x128xbf16>, vector<8x128xf32> -> vector<8x128xf32>
    %c0_255 = arith.constant 0 : index
    %c0_256 = arith.constant 0 : index
    %487 = vector.load %arg35[%c0_255, %c0_256] : memref<16x8xbf16, #tpu.memory_space<vmem>>, vector<16x8xbf16>
    %488 = arith.truncf %486 : vector<8x128xf32> to vector<8x128xbf16>
    %cst_257 = arith.constant dense<0.000000e+00> : vector<16x128xf32>
    %489 = tpu.matmul %487, %488, %cst_257 {dimension_numbers = #tpu.dot_dimension_numbers<[1], [0], [0], [1], [0, 0, 1, 1], [], []>} : vector<16x8xbf16>, vector<8x128xbf16>, vector<16x128xf32> -> vector<16x128xf32>
    %c0_258 = arith.constant 0 : index
    %c0_259 = arith.constant 0 : index
    %490 = vector.load %arg36[%c0_258, %c0_259] : memref<1x128xf32, #tpu.memory_space<vmem>>, vector<1x128xf32>
    %491 = vector.broadcast %490 : vector<1x128xf32> to vector<16x128xf32>
    %492 = arith.addf %489, %491 : vector<16x128xf32>
    %493 = tpu.concatenate %492, %326 in 1 : vector<16x128xf32>, vector<16x128xf32> -> vector<16x256xf32>
    %494 = arith.truncf %493 : vector<16x256xf32> to vector<16x256xbf16>
    %495 = tpu.iota {dimensions = array<i32: 0>} : vector<16x128xi32>
    %c7_i32_260 = arith.constant 7 : i32
    %496 = vector.broadcast %c7_i32_260 : i32 to vector<16x128xi32>
    %497 = arith.andi %495, %496 : vector<16x128xi32>
    %498 = tpu.iota {dimensions = array<i32: 1>} : vector<16x128xi32>
    %c4_i32_261 = arith.constant 4 : i32
    %499 = vector.broadcast %c4_i32_261 : i32 to vector<16x128xi32>
    %500 = arith.shrsi %498, %499 : vector<16x128xi32>
    %c0_i32_262 = arith.constant 0 : i32
    %501 = vector.broadcast %c0_i32_262 : i32 to vector<16x128xi32>
    %502 = arith.cmpi eq, %497, %501 : vector<16x128xi32>
    %503 = arith.extui %502 : vector<16x128xi1> to vector<16x128xi32>
    %504 = arith.sitofp %503 : vector<16x128xi32> to vector<16x128xf32>
    %cst_263 = arith.constant 3.000000e+00 : f32
    %505 = vector.broadcast %cst_263 : f32 to vector<16x128xf32>
    %506 = arith.subf %505, %504 : vector<16x128xf32>
    %c7_i32_264 = arith.constant 7 : i32
    %507 = vector.broadcast %c7_i32_264 : i32 to vector<16x128xi32>
    %508 = arith.cmpi eq, %497, %507 : vector<16x128xi32>
    %509 = arith.extui %508 : vector<16x128xi1> to vector<16x128xi32>
    %510 = arith.sitofp %509 : vector<16x128xi32> to vector<16x128xf32>
    %511 = arith.subf %506, %510 : vector<16x128xf32>
    %c0_i32_265 = arith.constant 0 : i32
    %512 = vector.broadcast %c0_i32_265 : i32 to vector<16x128xi32>
    %513 = arith.cmpi eq, %500, %512 : vector<16x128xi32>
    %514 = arith.extui %513 : vector<16x128xi1> to vector<16x128xi32>
    %515 = arith.sitofp %514 : vector<16x128xi32> to vector<16x128xf32>
    %cst_266 = arith.constant 3.000000e+00 : f32
    %516 = vector.broadcast %cst_266 : f32 to vector<16x128xf32>
    %517 = arith.subf %516, %515 : vector<16x128xf32>
    %c7_i32_267 = arith.constant 7 : i32
    %518 = vector.broadcast %c7_i32_267 : i32 to vector<16x128xi32>
    %519 = arith.cmpi eq, %500, %518 : vector<16x128xi32>
    %520 = arith.extui %519 : vector<16x128xi1> to vector<16x128xi32>
    %521 = arith.sitofp %520 : vector<16x128xi32> to vector<16x128xf32>
    %522 = arith.subf %517, %521 : vector<16x128xf32>
    %523 = arith.mulf %511, %522 : vector<16x128xf32>
    %cst_268 = arith.constant 9.99999993E-9 : f32
    %524 = vector.broadcast %cst_268 : f32 to vector<16x128xf32>
    %525 = arith.addf %523, %524 : vector<16x128xf32>
    %cst_269 = arith.constant 9.000000e+00 : f32
    %526 = vector.broadcast %cst_269 : f32 to vector<16x128xf32>
    %527 = arith.divf %526, %525 : vector<16x128xf32>
    %c0_270 = arith.constant 0 : index
    %c0_271 = arith.constant 0 : index
    %528 = vector.load %arg14[%c0_270, %c0_271] : memref<16x16xbf16, #tpu.memory_space<vmem>>, vector<16x16xbf16>
    %cst_272 = arith.constant dense<0.000000e+00> : vector<16x256xf32>
    %529 = tpu.matmul %528, %494, %cst_272 {dimension_numbers = #tpu.dot_dimension_numbers<[1], [0], [0], [1], [0, 0, 1, 1], [], []>} : vector<16x16xbf16>, vector<16x256xbf16>, vector<16x256xf32> -> vector<16x256xf32>
    %530 = arith.truncf %529 : vector<16x256xf32> to vector<16x256xbf16>
    %c0_273 = arith.constant 0 : index
    %c0_274 = arith.constant 0 : index
    %531 = vector.load %arg15[%c0_273, %c0_274] : memref<16x16xbf16, #tpu.memory_space<vmem>>, vector<16x16xbf16>
    %cst_275 = arith.constant dense<0.000000e+00> : vector<16x256xf32>
    %532 = tpu.matmul %531, %494, %cst_275 {dimension_numbers = #tpu.dot_dimension_numbers<[1], [0], [0], [1], [0, 0, 1, 1], [], []>} : vector<16x16xbf16>, vector<16x256xbf16>, vector<16x256xf32> -> vector<16x256xf32>
    %533 = arith.truncf %532 : vector<16x256xf32> to vector<16x256xbf16>
    %c0_276 = arith.constant 0 : index
    %c0_277 = arith.constant 0 : index
    %c0_278 = arith.constant 0 : index
    %534 = vector.load %arg37[%c0_276, %c0_277, %c0_278] : memref<3x256x128xbf16, #tpu.memory_space<vmem>>, vector<1x256x128xbf16>
    %535 = vector.shape_cast %534 : vector<1x256x128xbf16> to vector<256x128xbf16>
    %cst_279 = arith.constant dense<0.000000e+00> : vector<16x128xf32>
    %536 = tpu.matmul %530, %535, %cst_279 {dimension_numbers = #tpu.dot_dimension_numbers<[1], [0], [0], [1], [0, 0, 1, 1], [], []>} : vector<16x256xbf16>, vector<256x128xbf16>, vector<16x128xf32> -> vector<16x128xf32>
    %c1_280 = arith.constant 1 : index
    %c0_281 = arith.constant 0 : index
    %c0_282 = arith.constant 0 : index
    %537 = vector.load %arg37[%c1_280, %c0_281, %c0_282] : memref<3x256x128xbf16, #tpu.memory_space<vmem>>, vector<1x256x128xbf16>
    %538 = vector.shape_cast %537 : vector<1x256x128xbf16> to vector<256x128xbf16>
    %cst_283 = arith.constant dense<0.000000e+00> : vector<16x128xf32>
    %539 = tpu.matmul %494, %538, %cst_283 {dimension_numbers = #tpu.dot_dimension_numbers<[1], [0], [0], [1], [0, 0, 1, 1], [], []>} : vector<16x256xbf16>, vector<256x128xbf16>, vector<16x128xf32> -> vector<16x128xf32>
    %540 = arith.addf %536, %539 : vector<16x128xf32>
    %c2_284 = arith.constant 2 : index
    %c0_285 = arith.constant 0 : index
    %c0_286 = arith.constant 0 : index
    %541 = vector.load %arg37[%c2_284, %c0_285, %c0_286] : memref<3x256x128xbf16, #tpu.memory_space<vmem>>, vector<1x256x128xbf16>
    %542 = vector.shape_cast %541 : vector<1x256x128xbf16> to vector<256x128xbf16>
    %cst_287 = arith.constant dense<0.000000e+00> : vector<16x128xf32>
    %543 = tpu.matmul %533, %542, %cst_287 {dimension_numbers = #tpu.dot_dimension_numbers<[1], [0], [0], [1], [0, 0, 1, 1], [], []>} : vector<16x256xbf16>, vector<256x128xbf16>, vector<16x128xf32> -> vector<16x128xf32>
    %544 = arith.addf %540, %543 : vector<16x128xf32>
    %545 = arith.mulf %544, %527 : vector<16x128xf32>
    %c0_288 = arith.constant 0 : index
    %c0_289 = arith.constant 0 : index
    %546 = vector.load %arg38[%c0_288, %c0_289] : memref<1x128xf32, #tpu.memory_space<vmem>>, vector<1x128xf32>
    %547 = vector.broadcast %546 : vector<1x128xf32> to vector<16x128xf32>
    %548 = arith.addf %545, %547 : vector<16x128xf32>
    %cst_290 = arith.constant 0.000000e+00 : f32
    %549 = vector.broadcast %cst_290 : f32 to vector<16x128xf32>
    %550 = arith.cmpf oge, %548, %549 : vector<16x128xf32>
    %cst_291 = arith.constant 0.00999999977 : f32
    %551 = vector.broadcast %cst_291 : f32 to vector<16x128xf32>
    %552 = arith.mulf %551, %548 : vector<16x128xf32>
    %553 = arith.select %550, %548, %552 : vector<16x128xi1>, vector<16x128xf32>
    %cst_292 = arith.constant dense<0.000000e+00> : vector<128xf32>
    %554 = vector.multi_reduction <add>, %553, %cst_292 [0] : vector<16x128xf32> to vector<128xf32>
    %555 = vector.shape_cast %554 : vector<128xf32> to vector<1x128xf32>
    %556 = arith.mulf %553, %553 : vector<16x128xf32>
    %cst_293 = arith.constant dense<0.000000e+00> : vector<128xf32>
    %557 = vector.multi_reduction <add>, %556, %cst_293 [0] : vector<16x128xf32> to vector<128xf32>
    %558 = vector.shape_cast %557 : vector<128xf32> to vector<1x128xf32>
    %c16_i32_294 = arith.constant 16 : i32
    %559 = tpu.dynamic_rotate %555 by %c16_i32_294 dim 1 : vector<1x128xf32>, i32 -> vector<1x128xf32>
    %560 = arith.addf %555, %559 : vector<1x128xf32>
    %c16_i32_295 = arith.constant 16 : i32
    %561 = tpu.dynamic_rotate %558 by %c16_i32_295 dim 1 : vector<1x128xf32>, i32 -> vector<1x128xf32>
    %562 = arith.addf %558, %561 : vector<1x128xf32>
    %c32_i32_296 = arith.constant 32 : i32
    %563 = tpu.dynamic_rotate %560 by %c32_i32_296 dim 1 : vector<1x128xf32>, i32 -> vector<1x128xf32>
    %564 = arith.addf %560, %563 : vector<1x128xf32>
    %c32_i32_297 = arith.constant 32 : i32
    %565 = tpu.dynamic_rotate %562 by %c32_i32_297 dim 1 : vector<1x128xf32>, i32 -> vector<1x128xf32>
    %566 = arith.addf %562, %565 : vector<1x128xf32>
    %c64_i32_298 = arith.constant 64 : i32
    %567 = tpu.dynamic_rotate %564 by %c64_i32_298 dim 1 : vector<1x128xf32>, i32 -> vector<1x128xf32>
    %568 = arith.addf %564, %567 : vector<1x128xf32>
    %c64_i32_299 = arith.constant 64 : i32
    %569 = tpu.dynamic_rotate %566 by %c64_i32_299 dim 1 : vector<1x128xf32>, i32 -> vector<1x128xf32>
    %570 = arith.addf %566, %569 : vector<1x128xf32>
    %cst_300 = arith.constant 7.812500e-03 : f32
    %571 = vector.broadcast %cst_300 : f32 to vector<1x128xf32>
    %572 = arith.mulf %568, %571 : vector<1x128xf32>
    %cst_301 = arith.constant 7.812500e-03 : f32
    %573 = vector.broadcast %cst_301 : f32 to vector<1x128xf32>
    %574 = arith.mulf %570, %573 : vector<1x128xf32>
    %575 = arith.mulf %572, %572 : vector<1x128xf32>
    %576 = arith.subf %574, %575 : vector<1x128xf32>
    %577 = vector.broadcast %572 : vector<1x128xf32> to vector<16x128xf32>
    %578 = arith.subf %553, %577 : vector<16x128xf32>
    %cst_302 = arith.constant 9.99999974E-6 : f32
    %579 = vector.broadcast %cst_302 : f32 to vector<1x128xf32>
    %580 = arith.addf %576, %579 : vector<1x128xf32>
    %581 = math.rsqrt %580 : vector<1x128xf32>
    %582 = vector.broadcast %581 : vector<1x128xf32> to vector<16x128xf32>
    %583 = arith.mulf %578, %582 : vector<16x128xf32>
    %c0_303 = arith.constant 0 : index
    %c0_304 = arith.constant 0 : index
    %584 = vector.load %arg39[%c0_303, %c0_304] : memref<1x128xf32, #tpu.memory_space<vmem>>, vector<1x128xf32>
    %585 = vector.broadcast %584 : vector<1x128xf32> to vector<16x128xf32>
    %586 = arith.mulf %583, %585 : vector<16x128xf32>
    %c0_305 = arith.constant 0 : index
    %c0_306 = arith.constant 0 : index
    %587 = vector.load %arg40[%c0_305, %c0_306] : memref<1x128xf32, #tpu.memory_space<vmem>>, vector<1x128xf32>
    %588 = vector.broadcast %587 : vector<1x128xf32> to vector<16x128xf32>
    %589 = arith.addf %586, %588 : vector<16x128xf32>
    %590 = arith.truncf %589 : vector<16x128xf32> to vector<16x128xbf16>
    %c0_307 = arith.constant 0 : index
    %c0_308 = arith.constant 0 : index
    %591 = vector.load %arg14[%c0_307, %c0_308] : memref<16x16xbf16, #tpu.memory_space<vmem>>, vector<16x16xbf16>
    %cst_309 = arith.constant dense<0.000000e+00> : vector<16x128xf32>
    %592 = tpu.matmul %591, %590, %cst_309 {dimension_numbers = #tpu.dot_dimension_numbers<[1], [0], [0], [1], [0, 0, 1, 1], [], []>} : vector<16x16xbf16>, vector<16x128xbf16>, vector<16x128xf32> -> vector<16x128xf32>
    %593 = arith.truncf %592 : vector<16x128xf32> to vector<16x128xbf16>
    %c0_310 = arith.constant 0 : index
    %c0_311 = arith.constant 0 : index
    %594 = vector.load %arg15[%c0_310, %c0_311] : memref<16x16xbf16, #tpu.memory_space<vmem>>, vector<16x16xbf16>
    %cst_312 = arith.constant dense<0.000000e+00> : vector<16x128xf32>
    %595 = tpu.matmul %594, %590, %cst_312 {dimension_numbers = #tpu.dot_dimension_numbers<[1], [0], [0], [1], [0, 0, 1, 1], [], []>} : vector<16x16xbf16>, vector<16x128xbf16>, vector<16x128xf32> -> vector<16x128xf32>
    %596 = arith.truncf %595 : vector<16x128xf32> to vector<16x128xbf16>
    %c0_313 = arith.constant 0 : index
    %c0_314 = arith.constant 0 : index
    %c0_315 = arith.constant 0 : index
    %597 = vector.load %arg41[%c0_313, %c0_314, %c0_315] : memref<3x128x128xbf16, #tpu.memory_space<vmem>>, vector<1x128x128xbf16>
    %598 = vector.shape_cast %597 : vector<1x128x128xbf16> to vector<128x128xbf16>
    %cst_316 = arith.constant dense<0.000000e+00> : vector<16x128xf32>
    %599 = tpu.matmul %593, %598, %cst_316 {dimension_numbers = #tpu.dot_dimension_numbers<[1], [0], [0], [1], [0, 0, 1, 1], [], []>} : vector<16x128xbf16>, vector<128x128xbf16>, vector<16x128xf32> -> vector<16x128xf32>
    %c1_317 = arith.constant 1 : index
    %c0_318 = arith.constant 0 : index
    %c0_319 = arith.constant 0 : index
    %600 = vector.load %arg41[%c1_317, %c0_318, %c0_319] : memref<3x128x128xbf16, #tpu.memory_space<vmem>>, vector<1x128x128xbf16>
    %601 = vector.shape_cast %600 : vector<1x128x128xbf16> to vector<128x128xbf16>
    %cst_320 = arith.constant dense<0.000000e+00> : vector<16x128xf32>
    %602 = tpu.matmul %590, %601, %cst_320 {dimension_numbers = #tpu.dot_dimension_numbers<[1], [0], [0], [1], [0, 0, 1, 1], [], []>} : vector<16x128xbf16>, vector<128x128xbf16>, vector<16x128xf32> -> vector<16x128xf32>
    %603 = arith.addf %599, %602 : vector<16x128xf32>
    %c2_321 = arith.constant 2 : index
    %c0_322 = arith.constant 0 : index
    %c0_323 = arith.constant 0 : index
    %604 = vector.load %arg41[%c2_321, %c0_322, %c0_323] : memref<3x128x128xbf16, #tpu.memory_space<vmem>>, vector<1x128x128xbf16>
    %605 = vector.shape_cast %604 : vector<1x128x128xbf16> to vector<128x128xbf16>
    %cst_324 = arith.constant dense<0.000000e+00> : vector<16x128xf32>
    %606 = tpu.matmul %596, %605, %cst_324 {dimension_numbers = #tpu.dot_dimension_numbers<[1], [0], [0], [1], [0, 0, 1, 1], [], []>} : vector<16x128xbf16>, vector<128x128xbf16>, vector<16x128xf32> -> vector<16x128xf32>
    %607 = arith.addf %603, %606 : vector<16x128xf32>
    %608 = arith.mulf %607, %527 : vector<16x128xf32>
    %c0_325 = arith.constant 0 : index
    %c0_326 = arith.constant 0 : index
    %609 = vector.load %arg42[%c0_325, %c0_326] : memref<1x128xf32, #tpu.memory_space<vmem>>, vector<1x128xf32>
    %610 = vector.broadcast %609 : vector<1x128xf32> to vector<16x128xf32>
    %611 = arith.addf %608, %610 : vector<16x128xf32>
    %cst_327 = arith.constant 0.000000e+00 : f32
    %612 = vector.broadcast %cst_327 : f32 to vector<16x128xf32>
    %613 = arith.cmpf oge, %611, %612 : vector<16x128xf32>
    %cst_328 = arith.constant 0.00999999977 : f32
    %614 = vector.broadcast %cst_328 : f32 to vector<16x128xf32>
    %615 = arith.mulf %614, %611 : vector<16x128xf32>
    %616 = arith.select %613, %611, %615 : vector<16x128xi1>, vector<16x128xf32>
    %cst_329 = arith.constant dense<0.000000e+00> : vector<128xf32>
    %617 = vector.multi_reduction <add>, %616, %cst_329 [0] : vector<16x128xf32> to vector<128xf32>
    %618 = vector.shape_cast %617 : vector<128xf32> to vector<1x128xf32>
    %619 = arith.mulf %616, %616 : vector<16x128xf32>
    %cst_330 = arith.constant dense<0.000000e+00> : vector<128xf32>
    %620 = vector.multi_reduction <add>, %619, %cst_330 [0] : vector<16x128xf32> to vector<128xf32>
    %621 = vector.shape_cast %620 : vector<128xf32> to vector<1x128xf32>
    %c16_i32_331 = arith.constant 16 : i32
    %622 = tpu.dynamic_rotate %618 by %c16_i32_331 dim 1 : vector<1x128xf32>, i32 -> vector<1x128xf32>
    %623 = arith.addf %618, %622 : vector<1x128xf32>
    %c16_i32_332 = arith.constant 16 : i32
    %624 = tpu.dynamic_rotate %621 by %c16_i32_332 dim 1 : vector<1x128xf32>, i32 -> vector<1x128xf32>
    %625 = arith.addf %621, %624 : vector<1x128xf32>
    %c32_i32_333 = arith.constant 32 : i32
    %626 = tpu.dynamic_rotate %623 by %c32_i32_333 dim 1 : vector<1x128xf32>, i32 -> vector<1x128xf32>
    %627 = arith.addf %623, %626 : vector<1x128xf32>
    %c32_i32_334 = arith.constant 32 : i32
    %628 = tpu.dynamic_rotate %625 by %c32_i32_334 dim 1 : vector<1x128xf32>, i32 -> vector<1x128xf32>
    %629 = arith.addf %625, %628 : vector<1x128xf32>
    %c64_i32_335 = arith.constant 64 : i32
    %630 = tpu.dynamic_rotate %627 by %c64_i32_335 dim 1 : vector<1x128xf32>, i32 -> vector<1x128xf32>
    %631 = arith.addf %627, %630 : vector<1x128xf32>
    %c64_i32_336 = arith.constant 64 : i32
    %632 = tpu.dynamic_rotate %629 by %c64_i32_336 dim 1 : vector<1x128xf32>, i32 -> vector<1x128xf32>
    %633 = arith.addf %629, %632 : vector<1x128xf32>
    %cst_337 = arith.constant 7.812500e-03 : f32
    %634 = vector.broadcast %cst_337 : f32 to vector<1x128xf32>
    %635 = arith.mulf %631, %634 : vector<1x128xf32>
    %cst_338 = arith.constant 7.812500e-03 : f32
    %636 = vector.broadcast %cst_338 : f32 to vector<1x128xf32>
    %637 = arith.mulf %633, %636 : vector<1x128xf32>
    %638 = arith.mulf %635, %635 : vector<1x128xf32>
    %639 = arith.subf %637, %638 : vector<1x128xf32>
    %640 = vector.broadcast %635 : vector<1x128xf32> to vector<16x128xf32>
    %641 = arith.subf %616, %640 : vector<16x128xf32>
    %cst_339 = arith.constant 9.99999974E-6 : f32
    %642 = vector.broadcast %cst_339 : f32 to vector<1x128xf32>
    %643 = arith.addf %639, %642 : vector<1x128xf32>
    %644 = math.rsqrt %643 : vector<1x128xf32>
    %645 = vector.broadcast %644 : vector<1x128xf32> to vector<16x128xf32>
    %646 = arith.mulf %641, %645 : vector<16x128xf32>
    %c0_340 = arith.constant 0 : index
    %c0_341 = arith.constant 0 : index
    %647 = vector.load %arg43[%c0_340, %c0_341] : memref<1x128xf32, #tpu.memory_space<vmem>>, vector<1x128xf32>
    %648 = vector.broadcast %647 : vector<1x128xf32> to vector<16x128xf32>
    %649 = arith.mulf %646, %648 : vector<16x128xf32>
    %c0_342 = arith.constant 0 : index
    %c0_343 = arith.constant 0 : index
    %650 = vector.load %arg44[%c0_342, %c0_343] : memref<1x128xf32, #tpu.memory_space<vmem>>, vector<1x128xf32>
    %651 = vector.broadcast %650 : vector<1x128xf32> to vector<16x128xf32>
    %652 = arith.addf %649, %651 : vector<16x128xf32>
    %653 = arith.truncf %652 : vector<16x128xf32> to vector<16x128xbf16>
    %c0_344 = arith.constant 0 : index
    %c0_345 = arith.constant 0 : index
    %654 = vector.load %arg45[%c0_344, %c0_345] : memref<128x128xbf16, #tpu.memory_space<vmem>>, vector<128x128xbf16>
    %cst_346 = arith.constant dense<0.000000e+00> : vector<16x128xf32>
    %655 = tpu.matmul %653, %654, %cst_346 {dimension_numbers = #tpu.dot_dimension_numbers<[1], [0], [0], [1], [0, 0, 1, 1], [], []>} : vector<16x128xbf16>, vector<128x128xbf16>, vector<16x128xf32> -> vector<16x128xf32>
    %c0_347 = arith.constant 0 : index
    %c0_348 = arith.constant 0 : index
    %656 = vector.load %arg46[%c0_347, %c0_348] : memref<32x16xbf16, #tpu.memory_space<vmem>>, vector<32x16xbf16>
    %657 = arith.truncf %655 : vector<16x128xf32> to vector<16x128xbf16>
    %cst_349 = arith.constant dense<0.000000e+00> : vector<32x128xf32>
    %658 = tpu.matmul %656, %657, %cst_349 {dimension_numbers = #tpu.dot_dimension_numbers<[1], [0], [0], [1], [0, 0, 1, 1], [], []>} : vector<32x16xbf16>, vector<16x128xbf16>, vector<32x128xf32> -> vector<32x128xf32>
    %c0_350 = arith.constant 0 : index
    %c0_351 = arith.constant 0 : index
    %659 = vector.load %arg47[%c0_350, %c0_351] : memref<1x128xf32, #tpu.memory_space<vmem>>, vector<1x128xf32>
    %660 = vector.broadcast %659 : vector<1x128xf32> to vector<32x128xf32>
    %661 = arith.addf %658, %660 : vector<32x128xf32>
    %662 = tpu.concatenate %661, %161 in 1 : vector<32x128xf32>, vector<32x128xf32> -> vector<32x256xf32>
    %663 = arith.truncf %662 : vector<32x256xf32> to vector<32x256xbf16>
    %664 = tpu.iota {dimensions = array<i32: 0>} : vector<32x128xi32>
    %c15_i32_352 = arith.constant 15 : i32
    %665 = vector.broadcast %c15_i32_352 : i32 to vector<32x128xi32>
    %666 = arith.andi %664, %665 : vector<32x128xi32>
    %667 = tpu.iota {dimensions = array<i32: 1>} : vector<32x128xi32>
    %c3_i32_353 = arith.constant 3 : i32
    %668 = vector.broadcast %c3_i32_353 : i32 to vector<32x128xi32>
    %669 = arith.shrsi %667, %668 : vector<32x128xi32>
    %c0_i32_354 = arith.constant 0 : i32
    %670 = vector.broadcast %c0_i32_354 : i32 to vector<32x128xi32>
    %671 = arith.cmpi eq, %666, %670 : vector<32x128xi32>
    %672 = arith.extui %671 : vector<32x128xi1> to vector<32x128xi32>
    %673 = arith.sitofp %672 : vector<32x128xi32> to vector<32x128xf32>
    %cst_355 = arith.constant 3.000000e+00 : f32
    %674 = vector.broadcast %cst_355 : f32 to vector<32x128xf32>
    %675 = arith.subf %674, %673 : vector<32x128xf32>
    %c15_i32_356 = arith.constant 15 : i32
    %676 = vector.broadcast %c15_i32_356 : i32 to vector<32x128xi32>
    %677 = arith.cmpi eq, %666, %676 : vector<32x128xi32>
    %678 = arith.extui %677 : vector<32x128xi1> to vector<32x128xi32>
    %679 = arith.sitofp %678 : vector<32x128xi32> to vector<32x128xf32>
    %680 = arith.subf %675, %679 : vector<32x128xf32>
    %c0_i32_357 = arith.constant 0 : i32
    %681 = vector.broadcast %c0_i32_357 : i32 to vector<32x128xi32>
    %682 = arith.cmpi eq, %669, %681 : vector<32x128xi32>
    %683 = arith.extui %682 : vector<32x128xi1> to vector<32x128xi32>
    %684 = arith.sitofp %683 : vector<32x128xi32> to vector<32x128xf32>
    %cst_358 = arith.constant 3.000000e+00 : f32
    %685 = vector.broadcast %cst_358 : f32 to vector<32x128xf32>
    %686 = arith.subf %685, %684 : vector<32x128xf32>
    %c15_i32_359 = arith.constant 15 : i32
    %687 = vector.broadcast %c15_i32_359 : i32 to vector<32x128xi32>
    %688 = arith.cmpi eq, %669, %687 : vector<32x128xi32>
    %689 = arith.extui %688 : vector<32x128xi1> to vector<32x128xi32>
    %690 = arith.sitofp %689 : vector<32x128xi32> to vector<32x128xf32>
    %691 = arith.subf %686, %690 : vector<32x128xf32>
    %692 = arith.mulf %680, %691 : vector<32x128xf32>
    %cst_360 = arith.constant 9.99999993E-9 : f32
    %693 = vector.broadcast %cst_360 : f32 to vector<32x128xf32>
    %694 = arith.addf %692, %693 : vector<32x128xf32>
    %cst_361 = arith.constant 9.000000e+00 : f32
    %695 = vector.broadcast %cst_361 : f32 to vector<32x128xf32>
    %696 = arith.divf %695, %694 : vector<32x128xf32>
    %c0_362 = arith.constant 0 : index
    %c0_363 = arith.constant 0 : index
    %697 = vector.load %arg2[%c0_362, %c0_363] : memref<32x32xbf16, #tpu.memory_space<vmem>>, vector<32x32xbf16>
    %cst_364 = arith.constant dense<0.000000e+00> : vector<32x256xf32>
    %698 = tpu.matmul %697, %663, %cst_364 {dimension_numbers = #tpu.dot_dimension_numbers<[1], [0], [0], [1], [0, 0, 1, 1], [], []>} : vector<32x32xbf16>, vector<32x256xbf16>, vector<32x256xf32> -> vector<32x256xf32>
    %699 = arith.truncf %698 : vector<32x256xf32> to vector<32x256xbf16>
    %c0_365 = arith.constant 0 : index
    %c0_366 = arith.constant 0 : index
    %700 = vector.load %arg3[%c0_365, %c0_366] : memref<32x32xbf16, #tpu.memory_space<vmem>>, vector<32x32xbf16>
    %cst_367 = arith.constant dense<0.000000e+00> : vector<32x256xf32>
    %701 = tpu.matmul %700, %663, %cst_367 {dimension_numbers = #tpu.dot_dimension_numbers<[1], [0], [0], [1], [0, 0, 1, 1], [], []>} : vector<32x32xbf16>, vector<32x256xbf16>, vector<32x256xf32> -> vector<32x256xf32>
    %702 = arith.truncf %701 : vector<32x256xf32> to vector<32x256xbf16>
    %c0_368 = arith.constant 0 : index
    %c0_369 = arith.constant 0 : index
    %c0_370 = arith.constant 0 : index
    %703 = vector.load %arg48[%c0_368, %c0_369, %c0_370] : memref<3x256x128xbf16, #tpu.memory_space<vmem>>, vector<1x256x128xbf16>
    %704 = vector.shape_cast %703 : vector<1x256x128xbf16> to vector<256x128xbf16>
    %cst_371 = arith.constant dense<0.000000e+00> : vector<32x128xf32>
    %705 = tpu.matmul %699, %704, %cst_371 {dimension_numbers = #tpu.dot_dimension_numbers<[1], [0], [0], [1], [0, 0, 1, 1], [], []>} : vector<32x256xbf16>, vector<256x128xbf16>, vector<32x128xf32> -> vector<32x128xf32>
    %c1_372 = arith.constant 1 : index
    %c0_373 = arith.constant 0 : index
    %c0_374 = arith.constant 0 : index
    %706 = vector.load %arg48[%c1_372, %c0_373, %c0_374] : memref<3x256x128xbf16, #tpu.memory_space<vmem>>, vector<1x256x128xbf16>
    %707 = vector.shape_cast %706 : vector<1x256x128xbf16> to vector<256x128xbf16>
    %cst_375 = arith.constant dense<0.000000e+00> : vector<32x128xf32>
    %708 = tpu.matmul %663, %707, %cst_375 {dimension_numbers = #tpu.dot_dimension_numbers<[1], [0], [0], [1], [0, 0, 1, 1], [], []>} : vector<32x256xbf16>, vector<256x128xbf16>, vector<32x128xf32> -> vector<32x128xf32>
    %709 = arith.addf %705, %708 : vector<32x128xf32>
    %c2_376 = arith.constant 2 : index
    %c0_377 = arith.constant 0 : index
    %c0_378 = arith.constant 0 : index
    %710 = vector.load %arg48[%c2_376, %c0_377, %c0_378] : memref<3x256x128xbf16, #tpu.memory_space<vmem>>, vector<1x256x128xbf16>
    %711 = vector.shape_cast %710 : vector<1x256x128xbf16> to vector<256x128xbf16>
    %cst_379 = arith.constant dense<0.000000e+00> : vector<32x128xf32>
    %712 = tpu.matmul %702, %711, %cst_379 {dimension_numbers = #tpu.dot_dimension_numbers<[1], [0], [0], [1], [0, 0, 1, 1], [], []>} : vector<32x256xbf16>, vector<256x128xbf16>, vector<32x128xf32> -> vector<32x128xf32>
    %713 = arith.addf %709, %712 : vector<32x128xf32>
    %714 = arith.mulf %713, %696 : vector<32x128xf32>
    %c0_380 = arith.constant 0 : index
    %c0_381 = arith.constant 0 : index
    %715 = vector.load %arg49[%c0_380, %c0_381] : memref<1x128xf32, #tpu.memory_space<vmem>>, vector<1x128xf32>
    %716 = vector.broadcast %715 : vector<1x128xf32> to vector<32x128xf32>
    %717 = arith.addf %714, %716 : vector<32x128xf32>
    %cst_382 = arith.constant 0.000000e+00 : f32
    %718 = vector.broadcast %cst_382 : f32 to vector<32x128xf32>
    %719 = arith.cmpf oge, %717, %718 : vector<32x128xf32>
    %cst_383 = arith.constant 0.00999999977 : f32
    %720 = vector.broadcast %cst_383 : f32 to vector<32x128xf32>
    %721 = arith.mulf %720, %717 : vector<32x128xf32>
    %722 = arith.select %719, %717, %721 : vector<32x128xi1>, vector<32x128xf32>
    %cst_384 = arith.constant dense<0.000000e+00> : vector<128xf32>
    %723 = vector.multi_reduction <add>, %722, %cst_384 [0] : vector<32x128xf32> to vector<128xf32>
    %724 = vector.shape_cast %723 : vector<128xf32> to vector<1x128xf32>
    %725 = arith.mulf %722, %722 : vector<32x128xf32>
    %cst_385 = arith.constant dense<0.000000e+00> : vector<128xf32>
    %726 = vector.multi_reduction <add>, %725, %cst_385 [0] : vector<32x128xf32> to vector<128xf32>
    %727 = vector.shape_cast %726 : vector<128xf32> to vector<1x128xf32>
    %c8_i32_386 = arith.constant 8 : i32
    %728 = tpu.dynamic_rotate %724 by %c8_i32_386 dim 1 : vector<1x128xf32>, i32 -> vector<1x128xf32>
    %729 = arith.addf %724, %728 : vector<1x128xf32>
    %c8_i32_387 = arith.constant 8 : i32
    %730 = tpu.dynamic_rotate %727 by %c8_i32_387 dim 1 : vector<1x128xf32>, i32 -> vector<1x128xf32>
    %731 = arith.addf %727, %730 : vector<1x128xf32>
    %c16_i32_388 = arith.constant 16 : i32
    %732 = tpu.dynamic_rotate %729 by %c16_i32_388 dim 1 : vector<1x128xf32>, i32 -> vector<1x128xf32>
    %733 = arith.addf %729, %732 : vector<1x128xf32>
    %c16_i32_389 = arith.constant 16 : i32
    %734 = tpu.dynamic_rotate %731 by %c16_i32_389 dim 1 : vector<1x128xf32>, i32 -> vector<1x128xf32>
    %735 = arith.addf %731, %734 : vector<1x128xf32>
    %c32_i32_390 = arith.constant 32 : i32
    %736 = tpu.dynamic_rotate %733 by %c32_i32_390 dim 1 : vector<1x128xf32>, i32 -> vector<1x128xf32>
    %737 = arith.addf %733, %736 : vector<1x128xf32>
    %c32_i32_391 = arith.constant 32 : i32
    %738 = tpu.dynamic_rotate %735 by %c32_i32_391 dim 1 : vector<1x128xf32>, i32 -> vector<1x128xf32>
    %739 = arith.addf %735, %738 : vector<1x128xf32>
    %c64_i32_392 = arith.constant 64 : i32
    %740 = tpu.dynamic_rotate %737 by %c64_i32_392 dim 1 : vector<1x128xf32>, i32 -> vector<1x128xf32>
    %741 = arith.addf %737, %740 : vector<1x128xf32>
    %c64_i32_393 = arith.constant 64 : i32
    %742 = tpu.dynamic_rotate %739 by %c64_i32_393 dim 1 : vector<1x128xf32>, i32 -> vector<1x128xf32>
    %743 = arith.addf %739, %742 : vector<1x128xf32>
    %cst_394 = arith.constant 0.001953125 : f32
    %744 = vector.broadcast %cst_394 : f32 to vector<1x128xf32>
    %745 = arith.mulf %741, %744 : vector<1x128xf32>
    %cst_395 = arith.constant 0.001953125 : f32
    %746 = vector.broadcast %cst_395 : f32 to vector<1x128xf32>
    %747 = arith.mulf %743, %746 : vector<1x128xf32>
    %748 = arith.mulf %745, %745 : vector<1x128xf32>
    %749 = arith.subf %747, %748 : vector<1x128xf32>
    %750 = vector.broadcast %745 : vector<1x128xf32> to vector<32x128xf32>
    %751 = arith.subf %722, %750 : vector<32x128xf32>
    %cst_396 = arith.constant 9.99999974E-6 : f32
    %752 = vector.broadcast %cst_396 : f32 to vector<1x128xf32>
    %753 = arith.addf %749, %752 : vector<1x128xf32>
    %754 = math.rsqrt %753 : vector<1x128xf32>
    %755 = vector.broadcast %754 : vector<1x128xf32> to vector<32x128xf32>
    %756 = arith.mulf %751, %755 : vector<32x128xf32>
    %c0_397 = arith.constant 0 : index
    %c0_398 = arith.constant 0 : index
    %757 = vector.load %arg50[%c0_397, %c0_398] : memref<1x128xf32, #tpu.memory_space<vmem>>, vector<1x128xf32>
    %758 = vector.broadcast %757 : vector<1x128xf32> to vector<32x128xf32>
    %759 = arith.mulf %756, %758 : vector<32x128xf32>
    %c0_399 = arith.constant 0 : index
    %c0_400 = arith.constant 0 : index
    %760 = vector.load %arg51[%c0_399, %c0_400] : memref<1x128xf32, #tpu.memory_space<vmem>>, vector<1x128xf32>
    %761 = vector.broadcast %760 : vector<1x128xf32> to vector<32x128xf32>
    %762 = arith.addf %759, %761 : vector<32x128xf32>
    %763 = arith.truncf %762 : vector<32x128xf32> to vector<32x128xbf16>
    %c0_401 = arith.constant 0 : index
    %c0_402 = arith.constant 0 : index
    %764 = vector.load %arg2[%c0_401, %c0_402] : memref<32x32xbf16, #tpu.memory_space<vmem>>, vector<32x32xbf16>
    %cst_403 = arith.constant dense<0.000000e+00> : vector<32x128xf32>
    %765 = tpu.matmul %764, %763, %cst_403 {dimension_numbers = #tpu.dot_dimension_numbers<[1], [0], [0], [1], [0, 0, 1, 1], [], []>} : vector<32x32xbf16>, vector<32x128xbf16>, vector<32x128xf32> -> vector<32x128xf32>
    %766 = arith.truncf %765 : vector<32x128xf32> to vector<32x128xbf16>
    %c0_404 = arith.constant 0 : index
    %c0_405 = arith.constant 0 : index
    %767 = vector.load %arg3[%c0_404, %c0_405] : memref<32x32xbf16, #tpu.memory_space<vmem>>, vector<32x32xbf16>
    %cst_406 = arith.constant dense<0.000000e+00> : vector<32x128xf32>
    %768 = tpu.matmul %767, %763, %cst_406 {dimension_numbers = #tpu.dot_dimension_numbers<[1], [0], [0], [1], [0, 0, 1, 1], [], []>} : vector<32x32xbf16>, vector<32x128xbf16>, vector<32x128xf32> -> vector<32x128xf32>
    %769 = arith.truncf %768 : vector<32x128xf32> to vector<32x128xbf16>
    %c0_407 = arith.constant 0 : index
    %c0_408 = arith.constant 0 : index
    %c0_409 = arith.constant 0 : index
    %770 = vector.load %arg52[%c0_407, %c0_408, %c0_409] : memref<3x128x128xbf16, #tpu.memory_space<vmem>>, vector<1x128x128xbf16>
    %771 = vector.shape_cast %770 : vector<1x128x128xbf16> to vector<128x128xbf16>
    %cst_410 = arith.constant dense<0.000000e+00> : vector<32x128xf32>
    %772 = tpu.matmul %766, %771, %cst_410 {dimension_numbers = #tpu.dot_dimension_numbers<[1], [0], [0], [1], [0, 0, 1, 1], [], []>} : vector<32x128xbf16>, vector<128x128xbf16>, vector<32x128xf32> -> vector<32x128xf32>
    %c1_411 = arith.constant 1 : index
    %c0_412 = arith.constant 0 : index
    %c0_413 = arith.constant 0 : index
    %773 = vector.load %arg52[%c1_411, %c0_412, %c0_413] : memref<3x128x128xbf16, #tpu.memory_space<vmem>>, vector<1x128x128xbf16>
    %774 = vector.shape_cast %773 : vector<1x128x128xbf16> to vector<128x128xbf16>
    %cst_414 = arith.constant dense<0.000000e+00> : vector<32x128xf32>
    %775 = tpu.matmul %763, %774, %cst_414 {dimension_numbers = #tpu.dot_dimension_numbers<[1], [0], [0], [1], [0, 0, 1, 1], [], []>} : vector<32x128xbf16>, vector<128x128xbf16>, vector<32x128xf32> -> vector<32x128xf32>
    %776 = arith.addf %772, %775 : vector<32x128xf32>
    %c2_415 = arith.constant 2 : index
    %c0_416 = arith.constant 0 : index
    %c0_417 = arith.constant 0 : index
    %777 = vector.load %arg52[%c2_415, %c0_416, %c0_417] : memref<3x128x128xbf16, #tpu.memory_space<vmem>>, vector<1x128x128xbf16>
    %778 = vector.shape_cast %777 : vector<1x128x128xbf16> to vector<128x128xbf16>
    %cst_418 = arith.constant dense<0.000000e+00> : vector<32x128xf32>
    %779 = tpu.matmul %769, %778, %cst_418 {dimension_numbers = #tpu.dot_dimension_numbers<[1], [0], [0], [1], [0, 0, 1, 1], [], []>} : vector<32x128xbf16>, vector<128x128xbf16>, vector<32x128xf32> -> vector<32x128xf32>
    %780 = arith.addf %776, %779 : vector<32x128xf32>
    %781 = arith.mulf %780, %696 : vector<32x128xf32>
    %c0_419 = arith.constant 0 : index
    %c0_420 = arith.constant 0 : index
    %782 = vector.load %arg53[%c0_419, %c0_420] : memref<1x128xf32, #tpu.memory_space<vmem>>, vector<1x128xf32>
    %783 = vector.broadcast %782 : vector<1x128xf32> to vector<32x128xf32>
    %784 = arith.addf %781, %783 : vector<32x128xf32>
    %cst_421 = arith.constant 0.000000e+00 : f32
    %785 = vector.broadcast %cst_421 : f32 to vector<32x128xf32>
    %786 = arith.cmpf oge, %784, %785 : vector<32x128xf32>
    %cst_422 = arith.constant 0.00999999977 : f32
    %787 = vector.broadcast %cst_422 : f32 to vector<32x128xf32>
    %788 = arith.mulf %787, %784 : vector<32x128xf32>
    %789 = arith.select %786, %784, %788 : vector<32x128xi1>, vector<32x128xf32>
    %cst_423 = arith.constant dense<0.000000e+00> : vector<128xf32>
    %790 = vector.multi_reduction <add>, %789, %cst_423 [0] : vector<32x128xf32> to vector<128xf32>
    %791 = vector.shape_cast %790 : vector<128xf32> to vector<1x128xf32>
    %792 = arith.mulf %789, %789 : vector<32x128xf32>
    %cst_424 = arith.constant dense<0.000000e+00> : vector<128xf32>
    %793 = vector.multi_reduction <add>, %792, %cst_424 [0] : vector<32x128xf32> to vector<128xf32>
    %794 = vector.shape_cast %793 : vector<128xf32> to vector<1x128xf32>
    %c8_i32_425 = arith.constant 8 : i32
    %795 = tpu.dynamic_rotate %791 by %c8_i32_425 dim 1 : vector<1x128xf32>, i32 -> vector<1x128xf32>
    %796 = arith.addf %791, %795 : vector<1x128xf32>
    %c8_i32_426 = arith.constant 8 : i32
    %797 = tpu.dynamic_rotate %794 by %c8_i32_426 dim 1 : vector<1x128xf32>, i32 -> vector<1x128xf32>
    %798 = arith.addf %794, %797 : vector<1x128xf32>
    %c16_i32_427 = arith.constant 16 : i32
    %799 = tpu.dynamic_rotate %796 by %c16_i32_427 dim 1 : vector<1x128xf32>, i32 -> vector<1x128xf32>
    %800 = arith.addf %796, %799 : vector<1x128xf32>
    %c16_i32_428 = arith.constant 16 : i32
    %801 = tpu.dynamic_rotate %798 by %c16_i32_428 dim 1 : vector<1x128xf32>, i32 -> vector<1x128xf32>
    %802 = arith.addf %798, %801 : vector<1x128xf32>
    %c32_i32_429 = arith.constant 32 : i32
    %803 = tpu.dynamic_rotate %800 by %c32_i32_429 dim 1 : vector<1x128xf32>, i32 -> vector<1x128xf32>
    %804 = arith.addf %800, %803 : vector<1x128xf32>
    %c32_i32_430 = arith.constant 32 : i32
    %805 = tpu.dynamic_rotate %802 by %c32_i32_430 dim 1 : vector<1x128xf32>, i32 -> vector<1x128xf32>
    %806 = arith.addf %802, %805 : vector<1x128xf32>
    %c64_i32_431 = arith.constant 64 : i32
    %807 = tpu.dynamic_rotate %804 by %c64_i32_431 dim 1 : vector<1x128xf32>, i32 -> vector<1x128xf32>
    %808 = arith.addf %804, %807 : vector<1x128xf32>
    %c64_i32_432 = arith.constant 64 : i32
    %809 = tpu.dynamic_rotate %806 by %c64_i32_432 dim 1 : vector<1x128xf32>, i32 -> vector<1x128xf32>
    %810 = arith.addf %806, %809 : vector<1x128xf32>
    %cst_433 = arith.constant 0.001953125 : f32
    %811 = vector.broadcast %cst_433 : f32 to vector<1x128xf32>
    %812 = arith.mulf %808, %811 : vector<1x128xf32>
    %cst_434 = arith.constant 0.001953125 : f32
    %813 = vector.broadcast %cst_434 : f32 to vector<1x128xf32>
    %814 = arith.mulf %810, %813 : vector<1x128xf32>
    %815 = arith.mulf %812, %812 : vector<1x128xf32>
    %816 = arith.subf %814, %815 : vector<1x128xf32>
    %817 = vector.broadcast %812 : vector<1x128xf32> to vector<32x128xf32>
    %818 = arith.subf %789, %817 : vector<32x128xf32>
    %cst_435 = arith.constant 9.99999974E-6 : f32
    %819 = vector.broadcast %cst_435 : f32 to vector<1x128xf32>
    %820 = arith.addf %816, %819 : vector<1x128xf32>
    %821 = math.rsqrt %820 : vector<1x128xf32>
    %822 = vector.broadcast %821 : vector<1x128xf32> to vector<32x128xf32>
    %823 = arith.mulf %818, %822 : vector<32x128xf32>
    %c0_436 = arith.constant 0 : index
    %c0_437 = arith.constant 0 : index
    %824 = vector.load %arg54[%c0_436, %c0_437] : memref<1x128xf32, #tpu.memory_space<vmem>>, vector<1x128xf32>
    %825 = vector.broadcast %824 : vector<1x128xf32> to vector<32x128xf32>
    %826 = arith.mulf %823, %825 : vector<32x128xf32>
    %c0_438 = arith.constant 0 : index
    %c0_439 = arith.constant 0 : index
    %827 = vector.load %arg55[%c0_438, %c0_439] : memref<1x128xf32, #tpu.memory_space<vmem>>, vector<1x128xf32>
    %828 = vector.broadcast %827 : vector<1x128xf32> to vector<32x128xf32>
    %829 = arith.addf %826, %828 : vector<32x128xf32>
    %830 = arith.truncf %829 : vector<32x128xf32> to vector<32x128xbf16>
    %c0_440 = arith.constant 0 : index
    %c0_441 = arith.constant 0 : index
    %831 = vector.load %arg56[%c0_440, %c0_441] : memref<128x32xbf16, #tpu.memory_space<vmem>>, vector<128x32xbf16>
    %cst_442 = arith.constant dense<0.000000e+00> : vector<32x32xf32>
    %832 = tpu.matmul %830, %831, %cst_442 {dimension_numbers = #tpu.dot_dimension_numbers<[1], [0], [0], [1], [0, 0, 1, 1], [], []>} : vector<32x128xbf16>, vector<128x32xbf16>, vector<32x32xf32> -> vector<32x32xf32>
    %c0_443 = arith.constant 0 : index
    %c0_444 = arith.constant 0 : index
    %833 = vector.load %arg57[%c0_443, %c0_444] : memref<1x32xf32, #tpu.memory_space<vmem>>, vector<1x32xf32>
    %834 = vector.broadcast %833 : vector<1x32xf32> to vector<32x32xf32>
    %835 = arith.addf %832, %834 : vector<32x32xf32>
    %c0_445 = arith.constant 0 : index
    %c0_446 = arith.constant 0 : index
    %836 = vector.load %arg58[%c0_445, %c0_446] : memref<32x32xf32, #tpu.memory_space<vmem>>, vector<32x32xf32>
    tpu.vector_store %arg58[%c0_445, %c0_446], %835 {strides = array<i32>} : memref<32x32xf32, #tpu.memory_space<vmem>>, vector<32x32xf32>,
    return
  }
  func.func @transform_0(%arg0: i32) -> (i32, i32) {
    %c0_i32 = arith.constant 0 : i32
    %c0_i32_0 = arith.constant 0 : i32
    %c0_i32_1 = arith.constant 0 : i32
    return %c0_i32, %c0_i32_0 : i32, i32
  }
  func.func @transform_1(%arg0: i32) -> (i32, i32) {
    %c0_i32 = arith.constant 0 : i32
    %c0_i32_0 = arith.constant 0 : i32
    %c0_i32_1 = arith.constant 0 : i32
    return %c0_i32, %c0_i32_0 : i32, i32
  }
  func.func @transform_2(%arg0: i32) -> (i32, i32) {
    %c0_i32 = arith.constant 0 : i32
    %c0_i32_0 = arith.constant 0 : i32
    %c0_i32_1 = arith.constant 0 : i32
    return %c0_i32, %c0_i32_0 : i32, i32
  }
  func.func @transform_3(%arg0: i32) -> (i32, i32, i32) {
    %c0_i32 = arith.constant 0 : i32
    %c0_i32_0 = arith.constant 0 : i32
    %c0_i32_1 = arith.constant 0 : i32
    %c0_i32_2 = arith.constant 0 : i32
    return %c0_i32, %c0_i32_0, %c0_i32_1 : i32, i32, i32
  }
  func.func @transform_4(%arg0: i32) -> (i32, i32, i32) {
    %c0_i32 = arith.constant 0 : i32
    %c0_i32_0 = arith.constant 0 : i32
    %c0_i32_1 = arith.constant 0 : i32
    %c0_i32_2 = arith.constant 0 : i32
    return %c0_i32, %c0_i32_0, %c0_i32_1 : i32, i32, i32
  }
  func.func @transform_5(%arg0: i32) -> (i32, i32) {
    %c0_i32 = arith.constant 0 : i32
    %c0_i32_0 = arith.constant 0 : i32
    %c0_i32_1 = arith.constant 0 : i32
    return %c0_i32, %c0_i32_0 : i32, i32
  }
  func.func @transform_6(%arg0: i32) -> (i32, i32) {
    %c0_i32 = arith.constant 0 : i32
    %c0_i32_0 = arith.constant 0 : i32
    %c0_i32_1 = arith.constant 0 : i32
    return %c0_i32, %c0_i32_0 : i32, i32
  }
  func.func @transform_7(%arg0: i32) -> (i32, i32) {
    %c0_i32 = arith.constant 0 : i32
    %c0_i32_0 = arith.constant 0 : i32
    %c0_i32_1 = arith.constant 0 : i32
    return %c0_i32, %c0_i32_0 : i32, i32
  }
  func.func @transform_8(%arg0: i32) -> (i32, i32) {
    %c0_i32 = arith.constant 0 : i32
    %c0_i32_0 = arith.constant 0 : i32
    %c0_i32_1 = arith.constant 0 : i32
    return %c0_i32, %c0_i32_0 : i32, i32
  }
  func.func @transform_9(%arg0: i32) -> (i32, i32) {
    %c0_i32 = arith.constant 0 : i32
    %c0_i32_0 = arith.constant 0 : i32
    %c0_i32_1 = arith.constant 0 : i32
    return %c0_i32, %c0_i32_0 : i32, i32
  }
  func.func @transform_10(%arg0: i32) -> (i32, i32) {
    %c0_i32 = arith.constant 0 : i32
    %c0_i32_0 = arith.constant 0 : i32
    %c0_i32_1 = arith.constant 0 : i32
    return %c0_i32, %c0_i32_0 : i32, i32
  }
  func.func @transform_11(%arg0: i32) -> (i32, i32) {
    %c0_i32 = arith.constant 0 : i32
    %c0_i32_0 = arith.constant 0 : i32
    %c0_i32_1 = arith.constant 0 : i32
    return %c0_i32, %c0_i32_0 : i32, i32
  }
  func.func @transform_12(%arg0: i32) -> (i32, i32) {
    %c0_i32 = arith.constant 0 : i32
    %c0_i32_0 = arith.constant 0 : i32
    %c0_i32_1 = arith.constant 0 : i32
    return %c0_i32, %c0_i32_0 : i32, i32
  }
  func.func @transform_13(%arg0: i32) -> (i32, i32) {
    %c0_i32 = arith.constant 0 : i32
    %c0_i32_0 = arith.constant 0 : i32
    %c0_i32_1 = arith.constant 0 : i32
    return %c0_i32, %c0_i32_0 : i32, i32
  }
  func.func @transform_14(%arg0: i32) -> (i32, i32) {
    %c0_i32 = arith.constant 0 : i32
    %c0_i32_0 = arith.constant 0 : i32
    %c0_i32_1 = arith.constant 0 : i32
    return %c0_i32, %c0_i32_0 : i32, i32
  }
  func.func @transform_15(%arg0: i32) -> (i32, i32, i32) {
    %c0_i32 = arith.constant 0 : i32
    %c0_i32_0 = arith.constant 0 : i32
    %c0_i32_1 = arith.constant 0 : i32
    %c0_i32_2 = arith.constant 0 : i32
    return %c0_i32, %c0_i32_0, %c0_i32_1 : i32, i32, i32
  }
  func.func @transform_16(%arg0: i32) -> (i32, i32, i32) {
    %c0_i32 = arith.constant 0 : i32
    %c0_i32_0 = arith.constant 0 : i32
    %c0_i32_1 = arith.constant 0 : i32
    %c0_i32_2 = arith.constant 0 : i32
    return %c0_i32, %c0_i32_0, %c0_i32_1 : i32, i32, i32
  }
  func.func @transform_17(%arg0: i32) -> (i32, i32) {
    %c0_i32 = arith.constant 0 : i32
    %c0_i32_0 = arith.constant 0 : i32
    %c0_i32_1 = arith.constant 0 : i32
    return %c0_i32, %c0_i32_0 : i32, i32
  }
  func.func @transform_18(%arg0: i32) -> (i32, i32) {
    %c0_i32 = arith.constant 0 : i32
    %c0_i32_0 = arith.constant 0 : i32
    %c0_i32_1 = arith.constant 0 : i32
    return %c0_i32, %c0_i32_0 : i32, i32
  }
  func.func @transform_19(%arg0: i32) -> (i32, i32) {
    %c0_i32 = arith.constant 0 : i32
    %c0_i32_0 = arith.constant 0 : i32
    %c0_i32_1 = arith.constant 0 : i32
    return %c0_i32, %c0_i32_0 : i32, i32
  }
  func.func @transform_20(%arg0: i32) -> (i32, i32) {
    %c0_i32 = arith.constant 0 : i32
    %c0_i32_0 = arith.constant 0 : i32
    %c0_i32_1 = arith.constant 0 : i32
    return %c0_i32, %c0_i32_0 : i32, i32
  }
  func.func @transform_21(%arg0: i32) -> (i32, i32) {
    %c0_i32 = arith.constant 0 : i32
    %c0_i32_0 = arith.constant 0 : i32
    %c0_i32_1 = arith.constant 0 : i32
    return %c0_i32, %c0_i32_0 : i32, i32
  }
  func.func @transform_22(%arg0: i32) -> (i32, i32) {
    %c0_i32 = arith.constant 0 : i32
    %c0_i32_0 = arith.constant 0 : i32
    %c0_i32_1 = arith.constant 0 : i32
    return %c0_i32, %c0_i32_0 : i32, i32
  }
  func.func @transform_23(%arg0: i32) -> (i32, i32) {
    %c0_i32 = arith.constant 0 : i32
    %c0_i32_0 = arith.constant 0 : i32
    %c0_i32_1 = arith.constant 0 : i32
    return %c0_i32, %c0_i32_0 : i32, i32
  }
  func.func @transform_24(%arg0: i32) -> (i32, i32) {
    %c0_i32 = arith.constant 0 : i32
    %c0_i32_0 = arith.constant 0 : i32
    %c0_i32_1 = arith.constant 0 : i32
    return %c0_i32, %c0_i32_0 : i32, i32
  }
  func.func @transform_25(%arg0: i32) -> (i32, i32) {
    %c0_i32 = arith.constant 0 : i32
    %c0_i32_0 = arith.constant 0 : i32
    %c0_i32_1 = arith.constant 0 : i32
    return %c0_i32, %c0_i32_0 : i32, i32
  }
  func.func @transform_26(%arg0: i32) -> (i32, i32) {
    %c0_i32 = arith.constant 0 : i32
    %c0_i32_0 = arith.constant 0 : i32
    %c0_i32_1 = arith.constant 0 : i32
    return %c0_i32, %c0_i32_0 : i32, i32
  }
  func.func @transform_27(%arg0: i32) -> (i32, i32, i32) {
    %c0_i32 = arith.constant 0 : i32
    %c0_i32_0 = arith.constant 0 : i32
    %c0_i32_1 = arith.constant 0 : i32
    %c0_i32_2 = arith.constant 0 : i32
    return %c0_i32, %c0_i32_0, %c0_i32_1 : i32, i32, i32
  }
  func.func @transform_28(%arg0: i32) -> (i32, i32, i32) {
    %c0_i32 = arith.constant 0 : i32
    %c0_i32_0 = arith.constant 0 : i32
    %c0_i32_1 = arith.constant 0 : i32
    %c0_i32_2 = arith.constant 0 : i32
    return %c0_i32, %c0_i32_0, %c0_i32_1 : i32, i32, i32
  }
  func.func @transform_29(%arg0: i32) -> (i32, i32) {
    %c0_i32 = arith.constant 0 : i32
    %c0_i32_0 = arith.constant 0 : i32
    %c0_i32_1 = arith.constant 0 : i32
    return %c0_i32, %c0_i32_0 : i32, i32
  }
  func.func @transform_30(%arg0: i32) -> (i32, i32) {
    %c0_i32 = arith.constant 0 : i32
    %c0_i32_0 = arith.constant 0 : i32
    %c0_i32_1 = arith.constant 0 : i32
    return %c0_i32, %c0_i32_0 : i32, i32
  }
  func.func @transform_31(%arg0: i32) -> (i32, i32) {
    %c0_i32 = arith.constant 0 : i32
    %c0_i32_0 = arith.constant 0 : i32
    %c0_i32_1 = arith.constant 0 : i32
    return %c0_i32, %c0_i32_0 : i32, i32
  }
  func.func @transform_32(%arg0: i32) -> (i32, i32) {
    %c0_i32 = arith.constant 0 : i32
    %c0_i32_0 = arith.constant 0 : i32
    %c0_i32_1 = arith.constant 0 : i32
    return %c0_i32, %c0_i32_0 : i32, i32
  }
  func.func @transform_33(%arg0: i32) -> (i32, i32) {
    %c0_i32 = arith.constant 0 : i32
    %c0_i32_0 = arith.constant 0 : i32
    %c0_i32_1 = arith.constant 0 : i32
    return %c0_i32, %c0_i32_0 : i32, i32
  }
  func.func @transform_34(%arg0: i32) -> (i32, i32) {
    %c0_i32 = arith.constant 0 : i32
    %c0_i32_0 = arith.constant 0 : i32
    %c0_i32_1 = arith.constant 0 : i32
    return %c0_i32, %c0_i32_0 : i32, i32
  }
  func.func @transform_35(%arg0: i32) -> (i32, i32) {
    %c0_i32 = arith.constant 0 : i32
    %c0_i32_0 = arith.constant 0 : i32
    %c0_i32_1 = arith.constant 0 : i32
    return %c0_i32, %c0_i32_0 : i32, i32
  }
  func.func @transform_36(%arg0: i32) -> (i32, i32, i32) {
    %c0_i32 = arith.constant 0 : i32
    %c0_i32_0 = arith.constant 0 : i32
    %c0_i32_1 = arith.constant 0 : i32
    %c0_i32_2 = arith.constant 0 : i32
    return %c0_i32, %c0_i32_0, %c0_i32_1 : i32, i32, i32
  }
  func.func @transform_37(%arg0: i32) -> (i32, i32) {
    %c0_i32 = arith.constant 0 : i32
    %c0_i32_0 = arith.constant 0 : i32
    %c0_i32_1 = arith.constant 0 : i32
    return %c0_i32, %c0_i32_0 : i32, i32
  }
  func.func @transform_38(%arg0: i32) -> (i32, i32) {
    %c0_i32 = arith.constant 0 : i32
    %c0_i32_0 = arith.constant 0 : i32
    %c0_i32_1 = arith.constant 0 : i32
    return %c0_i32, %c0_i32_0 : i32, i32
  }
  func.func @transform_39(%arg0: i32) -> (i32, i32) {
    %c0_i32 = arith.constant 0 : i32
    %c0_i32_0 = arith.constant 0 : i32
    %c0_i32_1 = arith.constant 0 : i32
    return %c0_i32, %c0_i32_0 : i32, i32
  }
  func.func @transform_40(%arg0: i32) -> (i32, i32, i32) {
    %c0_i32 = arith.constant 0 : i32
    %c0_i32_0 = arith.constant 0 : i32
    %c0_i32_1 = arith.constant 0 : i32
    %c0_i32_2 = arith.constant 0 : i32
    return %c0_i32, %c0_i32_0, %c0_i32_1 : i32, i32, i32
  }
  func.func @transform_41(%arg0: i32) -> (i32, i32) {
    %c0_i32 = arith.constant 0 : i32
    %c0_i32_0 = arith.constant 0 : i32
    %c0_i32_1 = arith.constant 0 : i32
    return %c0_i32, %c0_i32_0 : i32, i32
  }
  func.func @transform_42(%arg0: i32) -> (i32, i32) {
    %c0_i32 = arith.constant 0 : i32
    %c0_i32_0 = arith.constant 0 : i32
    %c0_i32_1 = arith.constant 0 : i32
    return %c0_i32, %c0_i32_0 : i32, i32
  }
  func.func @transform_43(%arg0: i32) -> (i32, i32) {
    %c0_i32 = arith.constant 0 : i32
    %c0_i32_0 = arith.constant 0 : i32
    %c0_i32_1 = arith.constant 0 : i32
    return %c0_i32, %c0_i32_0 : i32, i32
  }
  func.func @transform_44(%arg0: i32) -> (i32, i32) {
    %c0_i32 = arith.constant 0 : i32
    %c0_i32_0 = arith.constant 0 : i32
    %c0_i32_1 = arith.constant 0 : i32
    return %c0_i32, %c0_i32_0 : i32, i32
  }
  func.func @transform_45(%arg0: i32) -> (i32, i32) {
    %c0_i32 = arith.constant 0 : i32
    %c0_i32_0 = arith.constant 0 : i32
    %c0_i32_1 = arith.constant 0 : i32
    return %c0_i32, %c0_i32_0 : i32, i32
  }
  func.func @transform_46(%arg0: i32) -> (i32, i32) {
    %c0_i32 = arith.constant 0 : i32
    %c0_i32_0 = arith.constant 0 : i32
    %c0_i32_1 = arith.constant 0 : i32
    return %c0_i32, %c0_i32_0 : i32, i32
  }
  func.func @transform_47(%arg0: i32) -> (i32, i32, i32) {
    %c0_i32 = arith.constant 0 : i32
    %c0_i32_0 = arith.constant 0 : i32
    %c0_i32_1 = arith.constant 0 : i32
    %c0_i32_2 = arith.constant 0 : i32
    return %c0_i32, %c0_i32_0, %c0_i32_1 : i32, i32, i32
  }
  func.func @transform_48(%arg0: i32) -> (i32, i32) {
    %c0_i32 = arith.constant 0 : i32
    %c0_i32_0 = arith.constant 0 : i32
    %c0_i32_1 = arith.constant 0 : i32
    return %c0_i32, %c0_i32_0 : i32, i32
  }
  func.func @transform_49(%arg0: i32) -> (i32, i32) {
    %c0_i32 = arith.constant 0 : i32
    %c0_i32_0 = arith.constant 0 : i32
    %c0_i32_1 = arith.constant 0 : i32
    return %c0_i32, %c0_i32_0 : i32, i32
  }
  func.func @transform_50(%arg0: i32) -> (i32, i32) {
    %c0_i32 = arith.constant 0 : i32
    %c0_i32_0 = arith.constant 0 : i32
    %c0_i32_1 = arith.constant 0 : i32
    return %c0_i32, %c0_i32_0 : i32, i32
  }
  func.func @transform_51(%arg0: i32) -> (i32, i32, i32) {
    %c0_i32 = arith.constant 0 : i32
    %c0_i32_0 = arith.constant 0 : i32
    %c0_i32_1 = arith.constant 0 : i32
    %c0_i32_2 = arith.constant 0 : i32
    return %c0_i32, %c0_i32_0, %c0_i32_1 : i32, i32, i32
  }
  func.func @transform_52(%arg0: i32) -> (i32, i32) {
    %c0_i32 = arith.constant 0 : i32
    %c0_i32_0 = arith.constant 0 : i32
    %c0_i32_1 = arith.constant 0 : i32
    return %c0_i32, %c0_i32_0 : i32, i32
  }
  func.func @transform_53(%arg0: i32) -> (i32, i32) {
    %c0_i32 = arith.constant 0 : i32
    %c0_i32_0 = arith.constant 0 : i32
    %c0_i32_1 = arith.constant 0 : i32
    return %c0_i32, %c0_i32_0 : i32, i32
  }
  func.func @transform_54(%arg0: i32) -> (i32, i32) {
    %c0_i32 = arith.constant 0 : i32
    %c0_i32_0 = arith.constant 0 : i32
    %c0_i32_1 = arith.constant 0 : i32
    return %c0_i32, %c0_i32_0 : i32, i32
  }
  func.func @transform_55(%arg0: i32) -> (i32, i32) {
    %c0_i32 = arith.constant 0 : i32
    %c0_i32_0 = arith.constant 0 : i32
    %c0_i32_1 = arith.constant 0 : i32
    return %c0_i32, %c0_i32_0 : i32, i32
  }
  func.func @transform_56(%arg0: i32) -> (i32, i32) {
    %c0_i32 = arith.constant 0 : i32
    %c0_i32_0 = arith.constant 0 : i32
    %c0_i32_1 = arith.constant 0 : i32
    return %c0_i32, %c0_i32_0 : i32, i32
  }
  func.func @transform_57(%arg0: i32) -> (i32, i32) {
    %c0_i32 = arith.constant 0 : i32
    %c0_i32_0 = arith.constant 0 : i32
    %c0_i32_1 = arith.constant 0 : i32
    return %c0_i32, %c0_i32_0 : i32, i32
  }
}

</mosaic_0001>

<llo_original>
// kernel: unet_forward.1
$region0: #{unet_forward.1}
  #allocation0 [shape = 'u32[]', space=smem, size = 0x4, offset = 0x4, fixed_abs, tag = 'smem constant byte address 0x4 - core index']
  #allocation1 [shape = 'u32[144,128]{1,0:T(1,128)}', space=vmem, size = 0x12000, scoped, tag = 'internal scratch']
  %s0 = inlined_call_operand.smem [shape: u32[58], index: -1, kind: input, shape index: {}]
  %s1 = sld [smem:[%s0]]
  %s2 = scalar_lea.smem %s0, 1
  %s3 = sld [smem:[%s2]]
  %s4 = scalar_lea.smem %s0, 2
  %s5 = sld [smem:[%s4]]
  %s6 = scalar_lea.smem %s0, 3
  %s7 = sld [smem:[%s6]]
  %s8 = scalar_lea.smem %s0, 4
  %s9 = sld [smem:[%s8]]
  %s10 = scalar_lea.smem %s0, 5
  %s11 = sld [smem:[%s10]]
  %s12 = scalar_lea.smem %s0, 6
  %s13 = sld [smem:[%s12]]
  %s14 = scalar_lea.smem %s0, 7
  %s15 = sld [smem:[%s14]]
  %s16 = scalar_lea.smem %s0, 8
  %s17 = sld [smem:[%s16]]
  %s18 = scalar_lea.smem %s0, 9
  %s19 = sld [smem:[%s18]]
  %s20 = scalar_lea.smem %s0, 10
  %s21 = sld [smem:[%s20]]
  %s22 = scalar_lea.smem %s0, 11
  %s23 = sld [smem:[%s22]]
  %s24 = scalar_lea.smem %s0, 12
  %s25 = sld [smem:[%s24]]
  %s26 = scalar_lea.smem %s0, 13
  %s27 = sld [smem:[%s26]]
  %s28 = scalar_lea.smem %s0, 14
  %s29 = sld [smem:[%s28]]
  %s30 = scalar_lea.smem %s0, 15
  %s31 = sld [smem:[%s30]]
  %s32 = scalar_lea.smem %s0, 16
  %s33 = sld [smem:[%s32]]
  %s34 = scalar_lea.smem %s0, 17
  %s35 = sld [smem:[%s34]]
  %s36 = scalar_lea.smem %s0, 18
  %s37 = sld [smem:[%s36]]
  %s38 = scalar_lea.smem %s0, 19
  %s39 = sld [smem:[%s38]]
  %s40 = scalar_lea.smem %s0, 20
  %s41 = sld [smem:[%s40]]
  %s42 = scalar_lea.smem %s0, 21
  %s43 = sld [smem:[%s42]]
  %s44 = scalar_lea.smem %s0, 22
  %s45 = sld [smem:[%s44]]
  %s46 = scalar_lea.smem %s0, 23
  %s47 = sld [smem:[%s46]]
  %s48 = scalar_lea.smem %s0, 24
  %s49 = sld [smem:[%s48]]
  %s50 = scalar_lea.smem %s0, 25
  %s51 = sld [smem:[%s50]]
  %s52 = scalar_lea.smem %s0, 26
  %s53 = sld [smem:[%s52]]
  %s54 = scalar_lea.smem %s0, 27
  %s55 = sld [smem:[%s54]]
  %s56 = scalar_lea.smem %s0, 28
  %s57 = sld [smem:[%s56]]
  %s58 = scalar_lea.smem %s0, 29
  %s59 = sld [smem:[%s58]]
  %s60 = scalar_lea.smem %s0, 30
  %s61 = sld [smem:[%s60]]
  %s62 = scalar_lea.smem %s0, 31
  %s63 = sld [smem:[%s62]]
  %s64 = scalar_lea.smem %s0, 32
  %s65 = sld [smem:[%s64]]
  %s66 = scalar_lea.smem %s0, 33
  %s67 = sld [smem:[%s66]]
  %s68 = scalar_lea.smem %s0, 34
  %s69 = sld [smem:[%s68]]
  %s70 = scalar_lea.smem %s0, 35
  %s71 = sld [smem:[%s70]]
  %s72 = scalar_lea.smem %s0, 36
  %s73 = sld [smem:[%s72]]
  %s74 = scalar_lea.smem %s0, 37
  %s75 = sld [smem:[%s74]]
  %s76 = scalar_lea.smem %s0, 38
  %s77 = sld [smem:[%s76]]
  %s78 = scalar_lea.smem %s0, 39
  %s79 = sld [smem:[%s78]]
  %s80 = scalar_lea.smem %s0, 40
  %s81 = sld [smem:[%s80]]
  %s82 = scalar_lea.smem %s0, 41
  %s83 = sld [smem:[%s82]]
  %s84 = scalar_lea.smem %s0, 42
  %s85 = sld [smem:[%s84]]
  %s86 = scalar_lea.smem %s0, 43
  %s87 = sld [smem:[%s86]]
  %s88 = scalar_lea.smem %s0, 44
  %s89 = sld [smem:[%s88]]
  %s90 = scalar_lea.smem %s0, 45
  %s91 = sld [smem:[%s90]]
  %s92 = scalar_lea.smem %s0, 46
  %s93 = sld [smem:[%s92]]
  %s94 = scalar_lea.smem %s0, 47
  %s95 = sld [smem:[%s94]]
  %s96 = scalar_lea.smem %s0, 48
  %s97 = sld [smem:[%s96]]
  %s98 = scalar_lea.smem %s0, 49
  %s99 = sld [smem:[%s98]]
  %s100 = scalar_lea.smem %s0, 50
  %s101 = sld [smem:[%s100]]
  %s102 = scalar_lea.smem %s0, 51
  %s103 = sld [smem:[%s102]]
  %s104 = scalar_lea.smem %s0, 52
  %s105 = sld [smem:[%s104]]
  %s106 = scalar_lea.smem %s0, 53
  %s107 = sld [smem:[%s106]]
  %s108 = scalar_lea.smem %s0, 54
  %s109 = sld [smem:[%s108]]
  %s110 = scalar_lea.smem %s0, 55
  %s111 = sld [smem:[%s110]]
  %s112 = scalar_lea.smem %s0, 56
  %s113 = sld [smem:[%s112]]
  %s114 = scalar_lea.smem %s0, 57
  %s115 = sld [smem:[%s114]]
  %s116 = sld [smem:[#allocation0]]
  $region414: #{unet_forward.1} parent=0
    _
  %s118 = ssub.s32 1, %s116
  %s119 = scalar_select 0, %s118, %s116
  $region1: #{unet_forward.1} parent=0
    #allocation2 [shape = 'u8[16384]{0}', space=vmem, size = 0x4000, scoped, tag = 'input window, operand 0, single buffered']
    #allocation3 [shape = 's32[1]{0}', space=sflag, size = 0x4, scoped, tag = 'scoped memory for unet_forward.1']
    #allocation4 [shape = 'u8[8192]{0}', space=vmem, size = 0x2000, scoped, tag = 'input window, operand 1, single buffered']
    #allocation5 [shape = 's32[1]{0}', space=sflag, size = 0x4, scoped, tag = 'scoped memory for unet_forward.1']
    #allocation6 [shape = 'u8[8192]{0}', space=vmem, size = 0x2000, scoped, tag = 'input window, operand 2, single buffered']
    #allocation7 [shape = 'u8[12288]{0}', space=vmem, size = 0x3000, scoped, tag = 'input window, operand 3, single buffered']
    #allocation8 [shape = 's32[1]{0}', space=sflag, size = 0x4, scoped, tag = 'scoped memory for unet_forward.1']
    #allocation9 [shape = 'u8[98304]{0}', space=vmem, size = 0x18000, scoped, tag = 'input window, operand 4, single buffered']
    #allocation10 [shape = 'u8[512]{0}', space=vmem, size = 0x400, scoped, tag = 'input window, operand 6, single buffered']
    #allocation11 [shape = 's32[1]{0}', space=sflag, size = 0x4, scoped, tag = 'scoped memory for unet_forward.1']
    #allocation12 [shape = 'u8[512]{0}', space=vmem, size = 0x400, scoped, tag = 'input window, operand 7, single buffered']
    #allocation13 [shape = 'u8[512]{0}', space=vmem, size = 0x400, scoped, tag = 'input window, operand 8, single buffered']
    #allocation14 [shape = 's32[1]{0}', space=sflag, size = 0x4, scoped, tag = 'scoped memory for unet_forward.1']
    #allocation15 [shape = 'u8[4096]{0}', space=vmem, size = 0x1000, scoped, tag = 'input window, operand 9, single buffered']
    #allocation16 [shape = 'u8[4096]{0}', space=vmem, size = 0x1000, scoped, tag = 'input window, operand 10, single buffered']
    #allocation17 [shape = 's32[1]{0}', space=sflag, size = 0x4, scoped, tag = 'scoped memory for unet_forward.1']
    #allocation18 [shape = 'u8[4096]{0}', space=vmem, size = 0x1000, scoped, tag = 'input window, operand 13, single buffered']
    #allocation19 [shape = 'u8[4096]{0}', space=vmem, size = 0x1000, scoped, tag = 'input window, operand 14, single buffered']
    #allocation20 [shape = 's32[1]{0}', space=sflag, size = 0x4, scoped, tag = 'scoped memory for unet_forward.1']
    #allocation21 [shape = 'u8[49152]{0}', space=vmem, size = 0xc000, scoped, tag = 'input window, operand 15, single buffered']
    #allocation22 [shape = 'u8[98304]{0}', space=vmem, size = 0x18000, scoped, tag = 'input window, operand 16, single buffered']
    #allocation23 [shape = 's32[1]{0}', space=sflag, size = 0x4, scoped, tag = 'scoped memory for unet_forward.1']
    #allocation24 [shape = 'u8[512]{0}', space=vmem, size = 0x400, scoped, tag = 'input window, operand 17, single buffered']
    #allocation25 [shape = 'u8[512]{0}', space=vmem, size = 0x400, scoped, tag = 'input window, operand 18, single buffered']
    #allocation26 [shape = 's32[1]{0}', space=sflag, size = 0x4, scoped, tag = 'scoped memory for unet_forward.1']
    #allocation27 [shape = 'u8[512]{0}', space=vmem, size = 0x400, scoped, tag = 'input window, operand 19, single buffered']
    #allocation28 [shape = 'u8[512]{0}', space=vmem, size = 0x400, scoped, tag = 'input window, operand 20, single buffered']
    #allocation29 [shape = 's32[1]{0}', space=sflag, size = 0x4, scoped, tag = 'scoped memory for unet_forward.1']
    #allocation30 [shape = 'u8[2048]{0}', space=vmem, size = 0x800, scoped, tag = 'input window, operand 21, single buffered']
    #allocation31 [shape = 'u8[2048]{0}', space=vmem, size = 0x800, scoped, tag = 'input window, operand 22, single buffered']
    #allocation32 [shape = 's32[1]{0}', space=sflag, size = 0x4, scoped, tag = 'scoped memory for unet_forward.1']
    #allocation33 [shape = 'u8[2048]{0}', space=vmem, size = 0x800, scoped, tag = 'input window, operand 25, single buffered']
    #allocation34 [shape = 'u8[2048]{0}', space=vmem, size = 0x800, scoped, tag = 'input window, operand 26, single buffered']
    #allocation35 [shape = 's32[1]{0}', space=sflag, size = 0x4, scoped, tag = 'scoped memory for unet_forward.1']
    #allocation36 [shape = 'u8[49152]{0}', space=vmem, size = 0xc000, scoped, tag = 'input window, operand 27, single buffered']
    #allocation37 [shape = 'u8[98304]{0}', space=vmem, size = 0x18000, scoped, tag = 'input window, operand 28, single buffered']
    #allocation38 [shape = 's32[1]{0}', space=sflag, size = 0x4, scoped, tag = 'scoped memory for unet_forward.1']
    #allocation39 [shape = 'u8[512]{0}', space=vmem, size = 0x400, scoped, tag = 'input window, operand 29, single buffered']
    #allocation40 [shape = 'u8[512]{0}', space=vmem, size = 0x400, scoped, tag = 'input window, operand 30, single buffered']
    #allocation41 [shape = 's32[1]{0}', space=sflag, size = 0x4, scoped, tag = 'scoped memory for unet_forward.1']
    #allocation42 [shape = 'u8[512]{0}', space=vmem, size = 0x400, scoped, tag = 'input window, operand 31, single buffered']
    #allocation43 [shape = 'u8[512]{0}', space=vmem, size = 0x400, scoped, tag = 'input window, operand 32, single buffered']
    #allocation44 [shape = 's32[1]{0}', space=sflag, size = 0x4, scoped, tag = 'scoped memory for unet_forward.1']
    #allocation45 [shape = 'u8[32768]{0}', space=vmem, size = 0x8000, scoped, tag = 'input window, operand 33, single buffered']
    #allocation46 [shape = 'u8[512]{0}', space=vmem, size = 0x400, scoped, tag = 'input window, operand 35, single buffered']
    #allocation47 [shape = 's32[1]{0}', space=sflag, size = 0x4, scoped, tag = 'scoped memory for unet_forward.1']
    #allocation48 [shape = 'u8[512]{0}', space=vmem, size = 0x400, scoped, tag = 'input window, operand 37, single buffered']
    #allocation49 [shape = 'u8[512]{0}', space=vmem, size = 0x400, scoped, tag = 'input window, operand 38, single buffered']
    #allocation50 [shape = 's32[1]{0}', space=sflag, size = 0x4, scoped, tag = 'scoped memory for unet_forward.1']
    #allocation51 [shape = 'u8[512]{0}', space=vmem, size = 0x400, scoped, tag = 'input window, operand 39, single buffered']
    #allocation52 [shape = 'u8[98304]{0}', space=vmem, size = 0x18000, scoped, tag = 'input window, operand 40, single buffered']
    #allocation53 [shape = 's32[1]{0}', space=sflag, size = 0x4, scoped, tag = 'scoped memory for unet_forward.1']
    #allocation54 [shape = 'u8[512]{0}', space=vmem, size = 0x400, scoped, tag = 'input window, operand 41, single buffered']
    #allocation55 [shape = 'u8[512]{0}', space=vmem, size = 0x400, scoped, tag = 'input window, operand 42, single buffered']
    #allocation56 [shape = 's32[1]{0}', space=sflag, size = 0x4, scoped, tag = 'scoped memory for unet_forward.1']
    #allocation57 [shape = 'u8[512]{0}', space=vmem, size = 0x400, scoped, tag = 'input window, operand 43, single buffered']
    #allocation58 [shape = 'u8[32768]{0}', space=vmem, size = 0x8000, scoped, tag = 'input window, operand 44, single buffered']
    #allocation59 [shape = 's32[1]{0}', space=sflag, size = 0x4, scoped, tag = 'scoped memory for unet_forward.1']
    #allocation60 [shape = 'u8[512]{0}', space=vmem, size = 0x400, scoped, tag = 'input window, operand 46, single buffered']
    #allocation61 [shape = 'u8[196608]{0}', space=vmem, size = 0x30000, scoped, tag = 'input window, operand 47, single buffered']
    #allocation62 [shape = 's32[1]{0}', space=sflag, size = 0x4, scoped, tag = 'scoped memory for unet_forward.1']
    #allocation63 [shape = 'u8[512]{0}', space=vmem, size = 0x400, scoped, tag = 'input window, operand 48, single buffered']
    #allocation64 [shape = 'u8[512]{0}', space=vmem, size = 0x400, scoped, tag = 'input window, operand 49, single buffered']
    #allocation65 [shape = 's32[1]{0}', space=sflag, size = 0x4, scoped, tag = 'scoped memory for unet_forward.1']
    #allocation66 [shape = 'u8[512]{0}', space=vmem, size = 0x400, scoped, tag = 'input window, operand 50, single buffered']
    #allocation67 [shape = 'u8[512]{0}', space=vmem, size = 0x400, scoped, tag = 'input window, operand 54, single buffered']
    #allocation68 [shape = 's32[1]{0}', space=sflag, size = 0x4, scoped, tag = 'scoped memory for unet_forward.1']
    %120 = vsyncpa [#allocation3], 0
    %121 = vsyncpa [#allocation5], 0
    %122 = vsyncpa [#allocation8], 0
    %123 = vsyncpa [#allocation11], 0
    %124 = vsyncpa [#allocation14], 0
    %125 = vsyncpa [#allocation17], 0
    %126 = vsyncpa [#allocation20], 0
    %127 = vsyncpa [#allocation23], 0
    %128 = vsyncpa [#allocation26], 0
    %129 = vsyncpa [#allocation29], 0
    %130 = vsyncpa [#allocation32], 0
    %131 = vsyncpa [#allocation35], 0
    %132 = vsyncpa [#allocation38], 0
    %133 = vsyncpa [#allocation41], 0
    %134 = vsyncpa [#allocation44], 0
    %135 = vsyncpa [#allocation47], 0
    %136 = vsyncpa [#allocation50], 0
    %137 = vsyncpa [#allocation53], 0
    %138 = vsyncpa [#allocation56], 0
    %139 = vsyncpa [#allocation59], 0
    %140 = vsyncpa [#allocation62], 0
    %141 = vsyncpa [#allocation65], 0
    %142 = vsyncpa [#allocation68], 0
    // Predicated region
    $region2: #{unet_forward.1} parent=1 // pred_check
      _
    $region3: #{unet_forward.1} parent=1 // pred_check_branch
      %144 = sbr.rel (0) target = $region5
    $region4: #{unet_forward.1} parent=1 // pred_region
      %s146 = ssub.s32 512, 512
      %147 = vsyncadd [#allocation3], %s146
      %s148 = sshll.u32 [#allocation2], 4
      %s149 = int_to_ptr.vmem [resolvable:$true] %s148
      %154 = dma.hbm_to_vmem [thread:$0]  %s1, 512, %s149, [#allocation3], 128, 128, 8
    $region5: #{unet_forward.1} parent=1 // pred_fallthru
      _
    // Predicated region
    $region6: #{unet_forward.1} parent=1 // pred_check
      _
    $region7: #{unet_forward.1} parent=1 // pred_check_branch
      %156 = sbr.rel (0) target = $region9
    $region8: #{unet_forward.1} parent=1 // pred_region
      %s158 = ssub.s32 256, 256
      %159 = vsyncadd [#allocation5], %s158
      %s160 = sshll.u32 [#allocation4], 4
      %s161 = int_to_ptr.vmem [resolvable:$true] %s160
      %166 = dma.hbm_to_vmem [thread:$0]  %s3, 256, %s161, [#allocation5], 64, 64, 4
    $region9: #{unet_forward.1} parent=1 // pred_fallthru
      _
    // Predicated region
    $region10: #{unet_forward.1} parent=1 // pred_check
      _
    $region11: #{unet_forward.1} parent=1 // pred_check_branch
      %168 = sbr.rel (0) target = $region13
    $region12: #{unet_forward.1} parent=1 // pred_region
      %s170 = ssub.s32 256, 256
      %171 = vsyncadd [#allocation5], %s170
      %s172 = sshll.u32 [#allocation6], 4
      %s173 = int_to_ptr.vmem [resolvable:$true] %s172
      %178 = dma.hbm_to_vmem [thread:$0]  %s5, 256, %s173, [#allocation5], 64, 64, 4
    $region13: #{unet_forward.1} parent=1 // pred_fallthru
      _
    // Predicated region
    $region14: #{unet_forward.1} parent=1 // pred_check
      _
    $region15: #{unet_forward.1} parent=1 // pred_check_branch
      %180 = sbr.rel (0) target = $region17
    $region16: #{unet_forward.1} parent=1 // pred_region
      %s182 = ssub.s32 384, 384
      %183 = vsyncadd [#allocation8], %s182
      %s184 = sshll.u32 [#allocation7], 4
      %s185 = int_to_ptr.vmem [resolvable:$true] %s184
      %190 = dma.hbm_to_vmem [thread:$0]  %s7, 384, %s185, [#allocation8], 64, 64, 4
    $region17: #{unet_forward.1} parent=1 // pred_fallthru
      _
    // Predicated region
    $region18: #{unet_forward.1} parent=1 // pred_check
      _
    $region19: #{unet_forward.1} parent=1 // pred_check_branch
      %192 = sbr.rel (0) target = $region21
    $region20: #{unet_forward.1} parent=1 // pred_region
      %s194 = ssub.s32 3072, 3072
      %195 = vsyncadd [#allocation8], %s194
      %s196 = sshll.u32 [#allocation9], 4
      %s197 = int_to_ptr.vmem [resolvable:$true] %s196
      %202 = dma.hbm_to_vmem [thread:$0]  %s9, 3072, %s197, [#allocation8], 64, 64, 4
    $region21: #{unet_forward.1} parent=1 // pred_fallthru
      _
    // Predicated region
    $region22: #{unet_forward.1} parent=1 // pred_check
      _
    $region23: #{unet_forward.1} parent=1 // pred_check_branch
      %204 = sbr.rel (0) target = $region25
    $region24: #{unet_forward.1} parent=1 // pred_region
      _
    $region25: #{unet_forward.1} parent=1 // pred_fallthru
      _
    // Predicated region
    $region26: #{unet_forward.1} parent=1 // pred_check
      _
    $region27: #{unet_forward.1} parent=1 // pred_check_branch
      %206 = sbr.rel (0) target = $region29
    $region28: #{unet_forward.1} parent=1 // pred_region
      %s208 = ssub.s32 16, 16
      %209 = vsyncadd [#allocation11], %s208
      %s211 = sshll.u32 [#allocation10], 4
      %s212 = int_to_ptr.vmem [resolvable:$true] %s211
      %214 = dma.hbm_to_vmem [thread:$0]  %s13, 16, %s212, [#allocation11]
    $region29: #{unet_forward.1} parent=1 // pred_fallthru
      _
    // Predicated region
    $region30: #{unet_forward.1} parent=1 // pred_check
      _
    $region31: #{unet_forward.1} parent=1 // pred_check_branch
      %216 = sbr.rel (0) target = $region33
    $region32: #{unet_forward.1} parent=1 // pred_region
      %s218 = ssub.s32 16, 16
      %219 = vsyncadd [#allocation11], %s218
      %s221 = sshll.u32 [#allocation12], 4
      %s222 = int_to_ptr.vmem [resolvable:$true] %s221
      %224 = dma.hbm_to_vmem [thread:$0]  %s15, 16, %s222, [#allocation11]
    $region33: #{unet_forward.1} parent=1 // pred_fallthru
      _
    // Predicated region
    $region34: #{unet_forward.1} parent=1 // pred_check
      _
    $region35: #{unet_forward.1} parent=1 // pred_check_branch
      %226 = sbr.rel (0) target = $region37
    $region36: #{unet_forward.1} parent=1 // pred_region
      %s228 = ssub.s32 16, 16
      %229 = vsyncadd [#allocation14], %s228
      %s231 = sshll.u32 [#allocation13], 4
      %s232 = int_to_ptr.vmem [resolvable:$true] %s231
      %234 = dma.hbm_to_vmem [thread:$0]  %s17, 16, %s232, [#allocation14]
    $region37: #{unet_forward.1} parent=1 // pred_fallthru
      _
    // Predicated region
    $region38: #{unet_forward.1} parent=1 // pred_check
      _
    $region39: #{unet_forward.1} parent=1 // pred_check_branch
      %236 = sbr.rel (0) target = $region41
    $region40: #{unet_forward.1} parent=1 // pred_region
      %s238 = ssub.s32 128, 128
      %239 = vsyncadd [#allocation14], %s238
      %s240 = sshll.u32 [#allocation15], 4
      %s241 = int_to_ptr.vmem [resolvable:$true] %s240
      %246 = dma.hbm_to_vmem [thread:$0]  %s19, 128, %s241, [#allocation14], 64, 64, 4
    $region41: #{unet_forward.1} parent=1 // pred_fallthru
      _
    // Predicated region
    $region42: #{unet_forward.1} parent=1 // pred_check
      _
    $region43: #{unet_forward.1} parent=1 // pred_check_branch
      %248 = sbr.rel (0) target = $region45
    $region44: #{unet_forward.1} parent=1 // pred_region
      %s250 = ssub.s32 128, 128
      %251 = vsyncadd [#allocation17], %s250
      %s252 = sshll.u32 [#allocation16], 4
      %s253 = int_to_ptr.vmem [resolvable:$true] %s252
      %258 = dma.hbm_to_vmem [thread:$0]  %s21, 128, %s253, [#allocation17], 64, 64, 4
    $region45: #{unet_forward.1} parent=1 // pred_fallthru
      _
    // Predicated region
    $region46: #{unet_forward.1} parent=1 // pred_check
      _
    $region47: #{unet_forward.1} parent=1 // pred_check_branch
      %260 = sbr.rel (0) target = $region49
    $region48: #{unet_forward.1} parent=1 // pred_region
      _
    $region49: #{unet_forward.1} parent=1 // pred_fallthru
      _
    // Predicated region
    $region50: #{unet_forward.1} parent=1 // pred_check
      _
    $region51: #{unet_forward.1} parent=1 // pred_check_branch
      %262 = sbr.rel (0) target = $region53
    $region52: #{unet_forward.1} parent=1 // pred_region
      _
    $region53: #{unet_forward.1} parent=1 // pred_fallthru
      _
    // Predicated region
    $region54: #{unet_forward.1} parent=1 // pred_check
      _
    $region55: #{unet_forward.1} parent=1 // pred_check_branch
      %264 = sbr.rel (0) target = $region57
    $region56: #{unet_forward.1} parent=1 // pred_region
      %s266 = ssub.s32 128, 128
      %267 = vsyncadd [#allocation17], %s266
      %s268 = sshll.u32 [#allocation18], 4
      %s269 = int_to_ptr.vmem [resolvable:$true] %s268
      %274 = dma.hbm_to_vmem [thread:$0]  %s27, 128, %s269, [#allocation17], 64, 64, 4
    $region57: #{unet_forward.1} parent=1 // pred_fallthru
      _
    // Predicated region
    $region58: #{unet_forward.1} parent=1 // pred_check
      _
    $region59: #{unet_forward.1} parent=1 // pred_check_branch
      %276 = sbr.rel (0) target = $region61
    $region60: #{unet_forward.1} parent=1 // pred_region
      %s278 = ssub.s32 128, 128
      %279 = vsyncadd [#allocation20], %s278
      %s280 = sshll.u32 [#allocation19], 4
      %s281 = int_to_ptr.vmem [resolvable:$true] %s280
      %286 = dma.hbm_to_vmem [thread:$0]  %s29, 128, %s281, [#allocation20], 64, 64, 4
    $region61: #{unet_forward.1} parent=1 // pred_fallthru
      _
    // Predicated region
    $region62: #{unet_forward.1} parent=1 // pred_check
      _
    $region63: #{unet_forward.1} parent=1 // pred_check_branch
      %288 = sbr.rel (0) target = $region65
    $region64: #{unet_forward.1} parent=1 // pred_region
      %s290 = ssub.s32 1536, 1536
      %291 = vsyncadd [#allocation20], %s290
      %s292 = sshll.u32 [#allocation21], 4
      %s293 = int_to_ptr.vmem [resolvable:$true] %s292
      %298 = dma.hbm_to_vmem [thread:$0]  %s31, 1536, %s293, [#allocation20], 64, 64, 4
    $region65: #{unet_forward.1} parent=1 // pred_fallthru
      _
    // Predicated region
    $region66: #{unet_forward.1} parent=1 // pred_check
      _
    $region67: #{unet_forward.1} parent=1 // pred_check_branch
      %300 = sbr.rel (0) target = $region69
    $region68: #{unet_forward.1} parent=1 // pred_region
      %s302 = ssub.s32 3072, 3072
      %303 = vsyncadd [#allocation23], %s302
      %s304 = sshll.u32 [#allocation22], 4
      %s305 = int_to_ptr.vmem [resolvable:$true] %s304
      %310 = dma.hbm_to_vmem [thread:$0]  %s33, 3072, %s305, [#allocation23], 64, 64, 4
    $region69: #{unet_forward.1} parent=1 // pred_fallthru
      _
    // Predicated region
    $region70: #{unet_forward.1} parent=1 // pred_check
      _
    $region71: #{unet_forward.1} parent=1 // pred_check_branch
      %312 = sbr.rel (0) target = $region73
    $region72: #{unet_forward.1} parent=1 // pred_region
      %s314 = ssub.s32 16, 16
      %315 = vsyncadd [#allocation23], %s314
      %s317 = sshll.u32 [#allocation24], 4
      %s318 = int_to_ptr.vmem [resolvable:$true] %s317
      %320 = dma.hbm_to_vmem [thread:$0]  %s35, 16, %s318, [#allocation23]
    $region73: #{unet_forward.1} parent=1 // pred_fallthru
      _
    // Predicated region
    $region74: #{unet_forward.1} parent=1 // pred_check
      _
    $region75: #{unet_forward.1} parent=1 // pred_check_branch
      %322 = sbr.rel (0) target = $region77
    $region76: #{unet_forward.1} parent=1 // pred_region
      %s324 = ssub.s32 16, 16
      %325 = vsyncadd [#allocation26], %s324
      %s327 = sshll.u32 [#allocation25], 4
      %s328 = int_to_ptr.vmem [resolvable:$true] %s327
      %330 = dma.hbm_to_vmem [thread:$0]  %s37, 16, %s328, [#allocation26]
    $region77: #{unet_forward.1} parent=1 // pred_fallthru
      _
    // Predicated region
    $region78: #{unet_forward.1} parent=1 // pred_check
      _
    $region79: #{unet_forward.1} parent=1 // pred_check_branch
      %332 = sbr.rel (0) target = $region81
    $region80: #{unet_forward.1} parent=1 // pred_region
      %s334 = ssub.s32 16, 16
      %335 = vsyncadd [#allocation26], %s334
      %s337 = sshll.u32 [#allocation27], 4
      %s338 = int_to_ptr.vmem [resolvable:$true] %s337
      %340 = dma.hbm_to_vmem [thread:$0]  %s39, 16, %s338, [#allocation26]
    $region81: #{unet_forward.1} parent=1 // pred_fallthru
      _
    // Predicated region
    $region82: #{unet_forward.1} parent=1 // pred_check
      _
    $region83: #{unet_forward.1} parent=1 // pred_check_branch
      %342 = sbr.rel (0) target = $region85
    $region84: #{unet_forward.1} parent=1 // pred_region
      %s344 = ssub.s32 16, 16
      %345 = vsyncadd [#allocation29], %s344
      %s347 = sshll.u32 [#allocation28], 4
      %s348 = int_to_ptr.vmem [resolvable:$true] %s347
      %350 = dma.hbm_to_vmem [thread:$0]  %s41, 16, %s348, [#allocation29]
    $region85: #{unet_forward.1} parent=1 // pred_fallthru
      _
    // Predicated region
    $region86: #{unet_forward.1} parent=1 // pred_check
      _
    $region87: #{unet_forward.1} parent=1 // pred_check_branch
      %352 = sbr.rel (0) target = $region89
    $region88: #{unet_forward.1} parent=1 // pred_region
      %s354 = ssub.s32 64, 64
      %355 = vsyncadd [#allocation29], %s354
      %s357 = sshll.u32 [#allocation30], 4
      %s358 = int_to_ptr.vmem [resolvable:$true] %s357
      %360 = dma.hbm_to_vmem [thread:$0]  %s43, 64, %s358, [#allocation29]
    $region89: #{unet_forward.1} parent=1 // pred_fallthru
      _
    // Predicated region
    $region90: #{unet_forward.1} parent=1 // pred_check
      _
    $region91: #{unet_forward.1} parent=1 // pred_check_branch
      %362 = sbr.rel (0) target = $region93
    $region92: #{unet_forward.1} parent=1 // pred_region
      %s364 = ssub.s32 64, 64
      %365 = vsyncadd [#allocation32], %s364
      %s367 = sshll.u32 [#allocation31], 4
      %s368 = int_to_ptr.vmem [resolvable:$true] %s367
      %370 = dma.hbm_to_vmem [thread:$0]  %s45, 64, %s368, [#allocation32]
    $region93: #{unet_forward.1} parent=1 // pred_fallthru
      _
    // Predicated region
    $region94: #{unet_forward.1} parent=1 // pred_check
      _
    $region95: #{unet_forward.1} parent=1 // pred_check_branch
      %372 = sbr.rel (0) target = $region97
    $region96: #{unet_forward.1} parent=1 // pred_region
      _
    $region97: #{unet_forward.1} parent=1 // pred_fallthru
      _
    // Predicated region
    $region98: #{unet_forward.1} parent=1 // pred_check
      _
    $region99: #{unet_forward.1} parent=1 // pred_check_branch
      %374 = sbr.rel (0) target = $region101
    $region100: #{unet_forward.1} parent=1 // pred_region
      _
    $region101: #{unet_forward.1} parent=1 // pred_fallthru
      _
    // Predicated region
    $region102: #{unet_forward.1} parent=1 // pred_check
      _
    $region103: #{unet_forward.1} parent=1 // pred_check_branch
      %376 = sbr.rel (0) target = $region105
    $region104: #{unet_forward.1} parent=1 // pred_region
      %s378 = ssub.s32 64, 64
      %379 = vsyncadd [#allocation32], %s378
      %s381 = sshll.u32 [#allocation33], 4
      %s382 = int_to_ptr.vmem [resolvable:$true] %s381
      %384 = dma.hbm_to_vmem [thread:$0]  %s51, 64, %s382, [#allocation32]
    $region105: #{unet_forward.1} parent=1 // pred_fallthru
      _
    // Predicated region
    $region106: #{unet_forward.1} parent=1 // pred_check
      _
    $region107: #{unet_forward.1} parent=1 // pred_check_branch
      %386 = sbr.rel (0) target = $region109
    $region108: #{unet_forward.1} parent=1 // pred_region
      %s388 = ssub.s32 64, 64
      %389 = vsyncadd [#allocation35], %s388
      %s391 = sshll.u32 [#allocation34], 4
      %s392 = int_to_ptr.vmem [resolvable:$true] %s391
      %394 = dma.hbm_to_vmem [thread:$0]  %s53, 64, %s392, [#allocation35]
    $region109: #{unet_forward.1} parent=1 // pred_fallthru
      _
    // Predicated region
    $region110: #{unet_forward.1} parent=1 // pred_check
      _
    $region111: #{unet_forward.1} parent=1 // pred_check_branch
      %396 = sbr.rel (0) target = $region113
    $region112: #{unet_forward.1} parent=1 // pred_region
      %s398 = ssub.s32 1536, 1536
      %399 = vsyncadd [#allocation35], %s398
      %s400 = sshll.u32 [#allocation36], 4
      %s401 = int_to_ptr.vmem [resolvable:$true] %s400
      %406 = dma.hbm_to_vmem [thread:$0]  %s55, 1536, %s401, [#allocation35], 64, 64, 4
    $region113: #{unet_forward.1} parent=1 // pred_fallthru
      _
    // Predicated region
    $region114: #{unet_forward.1} parent=1 // pred_check
      _
    $region115: #{unet_forward.1} parent=1 // pred_check_branch
      %408 = sbr.rel (0) target = $region117
    $region116: #{unet_forward.1} parent=1 // pred_region
      %s410 = ssub.s32 3072, 3072
      %411 = vsyncadd [#allocation38], %s410
      %s412 = sshll.u32 [#allocation37], 4
      %s413 = int_to_ptr.vmem [resolvable:$true] %s412
      %418 = dma.hbm_to_vmem [thread:$0]  %s57, 3072, %s413, [#allocation38], 64, 64, 4
    $region117: #{unet_forward.1} parent=1 // pred_fallthru
      _
    // Predicated region
    $region118: #{unet_forward.1} parent=1 // pred_check
      _
    $region119: #{unet_forward.1} parent=1 // pred_check_branch
      %420 = sbr.rel (0) target = $region121
    $region120: #{unet_forward.1} parent=1 // pred_region
      %s422 = ssub.s32 16, 16
      %423 = vsyncadd [#allocation38], %s422
      %s425 = sshll.u32 [#allocation39], 4
      %s426 = int_to_ptr.vmem [resolvable:$true] %s425
      %428 = dma.hbm_to_vmem [thread:$0]  %s59, 16, %s426, [#allocation38]
    $region121: #{unet_forward.1} parent=1 // pred_fallthru
      _
    // Predicated region
    $region122: #{unet_forward.1} parent=1 // pred_check
      _
    $region123: #{unet_forward.1} parent=1 // pred_check_branch
      %430 = sbr.rel (0) target = $region125
    $region124: #{unet_forward.1} parent=1 // pred_region
      %s432 = ssub.s32 16, 16
      %433 = vsyncadd [#allocation41], %s432
      %s435 = sshll.u32 [#allocation40], 4
      %s436 = int_to_ptr.vmem [resolvable:$true] %s435
      %438 = dma.hbm_to_vmem [thread:$0]  %s61, 16, %s436, [#allocation41]
    $region125: #{unet_forward.1} parent=1 // pred_fallthru
      _
    // Predicated region
    $region126: #{unet_forward.1} parent=1 // pred_check
      _
    $region127: #{unet_forward.1} parent=1 // pred_check_branch
      %440 = sbr.rel (0) target = $region129
    $region128: #{unet_forward.1} parent=1 // pred_region
      %s442 = ssub.s32 16, 16
      %443 = vsyncadd [#allocation41], %s442
      %s445 = sshll.u32 [#allocation42], 4
      %s446 = int_to_ptr.vmem [resolvable:$true] %s445
      %448 = dma.hbm_to_vmem [thread:$0]  %s63, 16, %s446, [#allocation41]
    $region129: #{unet_forward.1} parent=1 // pred_fallthru
      _
    // Predicated region
    $region130: #{unet_forward.1} parent=1 // pred_check
      _
    $region131: #{unet_forward.1} parent=1 // pred_check_branch
      %450 = sbr.rel (0) target = $region133
    $region132: #{unet_forward.1} parent=1 // pred_region
      %s452 = ssub.s32 16, 16
      %453 = vsyncadd [#allocation44], %s452
      %s455 = sshll.u32 [#allocation43], 4
      %s456 = int_to_ptr.vmem [resolvable:$true] %s455
      %458 = dma.hbm_to_vmem [thread:$0]  %s65, 16, %s456, [#allocation44]
    $region133: #{unet_forward.1} parent=1 // pred_fallthru
      _
    // Predicated region
    $region134: #{unet_forward.1} parent=1 // pred_check
      _
    $region135: #{unet_forward.1} parent=1 // pred_check_branch
      %460 = sbr.rel (0) target = $region137
    $region136: #{unet_forward.1} parent=1 // pred_region
      %s462 = ssub.s32 1024, 1024
      %463 = vsyncadd [#allocation44], %s462
      %s464 = sshll.u32 [#allocation45], 4
      %s465 = int_to_ptr.vmem [resolvable:$true] %s464
      %470 = dma.hbm_to_vmem [thread:$0]  %s67, 1024, %s465, [#allocation44], 64, 64, 4
    $region137: #{unet_forward.1} parent=1 // pred_fallthru
      _
    // Predicated region
    $region138: #{unet_forward.1} parent=1 // pred_check
      _
    $region139: #{unet_forward.1} parent=1 // pred_check_branch
      %472 = sbr.rel (0) target = $region141
    $region140: #{unet_forward.1} parent=1 // pred_region
      _
    $region141: #{unet_forward.1} parent=1 // pred_fallthru
      _
    // Predicated region
    $region142: #{unet_forward.1} parent=1 // pred_check
      _
    $region143: #{unet_forward.1} parent=1 // pred_check_branch
      %474 = sbr.rel (0) target = $region145
    $region144: #{unet_forward.1} parent=1 // pred_region
      %s476 = ssub.s32 16, 16
      %477 = vsyncadd [#allocation47], %s476
      %s479 = sshll.u32 [#allocation46], 4
      %s480 = int_to_ptr.vmem [resolvable:$true] %s479
      %482 = dma.hbm_to_vmem [thread:$0]  %s71, 16, %s480, [#allocation47]
    $region145: #{unet_forward.1} parent=1 // pred_fallthru
      _
    // Predicated region
    $region146: #{unet_forward.1} parent=1 // pred_check
      _
    $region147: #{unet_forward.1} parent=1 // pred_check_branch
      %484 = sbr.rel (0) target = $region149
    $region148: #{unet_forward.1} parent=1 // pred_region
      _
    $region149: #{unet_forward.1} parent=1 // pred_fallthru
      _
    // Predicated region
    $region150: #{unet_forward.1} parent=1 // pred_check
      _
    $region151: #{unet_forward.1} parent=1 // pred_check_branch
      %486 = sbr.rel (0) target = $region153
    $region152: #{unet_forward.1} parent=1 // pred_region
      %s488 = ssub.s32 16, 16
      %489 = vsyncadd [#allocation47], %s488
      %s491 = sshll.u32 [#allocation48], 4
      %s492 = int_to_ptr.vmem [resolvable:$true] %s491
      %494 = dma.hbm_to_vmem [thread:$0]  %s75, 16, %s492, [#allocation47]
    $region153: #{unet_forward.1} parent=1 // pred_fallthru
      _
    // Predicated region
    $region154: #{unet_forward.1} parent=1 // pred_check
      _
    $region155: #{unet_forward.1} parent=1 // pred_check_branch
      %496 = sbr.rel (0) target = $region157
    $region156: #{unet_forward.1} parent=1 // pred_region
      %s498 = ssub.s32 16, 16
      %499 = vsyncadd [#allocation50], %s498
      %s501 = sshll.u32 [#allocation49], 4
      %s502 = int_to_ptr.vmem [resolvable:$true] %s501
      %504 = dma.hbm_to_vmem [thread:$0]  %s77, 16, %s502, [#allocation50]
    $region157: #{unet_forward.1} parent=1 // pred_fallthru
      _
    // Predicated region
    $region158: #{unet_forward.1} parent=1 // pred_check
      _
    $region159: #{unet_forward.1} parent=1 // pred_check_branch
      %506 = sbr.rel (0) target = $region161
    $region160: #{unet_forward.1} parent=1 // pred_region
      %s508 = ssub.s32 16, 16
      %509 = vsyncadd [#allocation50], %s508
      %s511 = sshll.u32 [#allocation51], 4
      %s512 = int_to_ptr.vmem [resolvable:$true] %s511
      %514 = dma.hbm_to_vmem [thread:$0]  %s79, 16, %s512, [#allocation50]
    $region161: #{unet_forward.1} parent=1 // pred_fallthru
      _
    // Predicated region
    $region162: #{unet_forward.1} parent=1 // pred_check
      _
    $region163: #{unet_forward.1} parent=1 // pred_check_branch
      %516 = sbr.rel (0) target = $region165
    $region164: #{unet_forward.1} parent=1 // pred_region
      %s518 = ssub.s32 3072, 3072
      %519 = vsyncadd [#allocation53], %s518
      %s520 = sshll.u32 [#allocation52], 4
      %s521 = int_to_ptr.vmem [resolvable:$true] %s520
      %526 = dma.hbm_to_vmem [thread:$0]  %s81, 3072, %s521, [#allocation53], 64, 64, 4
    $region165: #{unet_forward.1} parent=1 // pred_fallthru
      _
    // Predicated region
    $region166: #{unet_forward.1} parent=1 // pred_check
      _
    $region167: #{unet_forward.1} parent=1 // pred_check_branch
      %528 = sbr.rel (0) target = $region169
    $region168: #{unet_forward.1} parent=1 // pred_region
      %s530 = ssub.s32 16, 16
      %531 = vsyncadd [#allocation53], %s530
      %s533 = sshll.u32 [#allocation54], 4
      %s534 = int_to_ptr.vmem [resolvable:$true] %s533
      %536 = dma.hbm_to_vmem [thread:$0]  %s83, 16, %s534, [#allocation53]
    $region169: #{unet_forward.1} parent=1 // pred_fallthru
      _
    // Predicated region
    $region170: #{unet_forward.1} parent=1 // pred_check
      _
    $region171: #{unet_forward.1} parent=1 // pred_check_branch
      %538 = sbr.rel (0) target = $region173
    $region172: #{unet_forward.1} parent=1 // pred_region
      %s540 = ssub.s32 16, 16
      %541 = vsyncadd [#allocation56], %s540
      %s543 = sshll.u32 [#allocation55], 4
      %s544 = int_to_ptr.vmem [resolvable:$true] %s543
      %546 = dma.hbm_to_vmem [thread:$0]  %s85, 16, %s544, [#allocation56]
    $region173: #{unet_forward.1} parent=1 // pred_fallthru
      _
    // Predicated region
    $region174: #{unet_forward.1} parent=1 // pred_check
      _
    $region175: #{unet_forward.1} parent=1 // pred_check_branch
      %548 = sbr.rel (0) target = $region177
    $region176: #{unet_forward.1} parent=1 // pred_region
      %s550 = ssub.s32 16, 16
      %551 = vsyncadd [#allocation56], %s550
      %s553 = sshll.u32 [#allocation57], 4
      %s554 = int_to_ptr.vmem [resolvable:$true] %s553
      %556 = dma.hbm_to_vmem [thread:$0]  %s87, 16, %s554, [#allocation56]
    $region177: #{unet_forward.1} parent=1 // pred_fallthru
      _
    // Predicated region
    $region178: #{unet_forward.1} parent=1 // pred_check
      _
    $region179: #{unet_forward.1} parent=1 // pred_check_branch
      %558 = sbr.rel (0) target = $region181
    $region180: #{unet_forward.1} parent=1 // pred_region
      %s560 = ssub.s32 1024, 1024
      %561 = vsyncadd [#allocation59], %s560
      %s562 = sshll.u32 [#allocation58], 4
      %s563 = int_to_ptr.vmem [resolvable:$true] %s562
      %568 = dma.hbm_to_vmem [thread:$0]  %s89, 1024, %s563, [#allocation59], 64, 64, 4
    $region181: #{unet_forward.1} parent=1 // pred_fallthru
      _
    // Predicated region
    $region182: #{unet_forward.1} parent=1 // pred_check
      _
    $region183: #{unet_forward.1} parent=1 // pred_check_branch
      %570 = sbr.rel (0) target = $region185
    $region184: #{unet_forward.1} parent=1 // pred_region
      _
    $region185: #{unet_forward.1} parent=1 // pred_fallthru
      _
    // Predicated region
    $region186: #{unet_forward.1} parent=1 // pred_check
      _
    $region187: #{unet_forward.1} parent=1 // pred_check_branch
      %572 = sbr.rel (0) target = $region189
    $region188: #{unet_forward.1} parent=1 // pred_region
      %s574 = ssub.s32 16, 16
      %575 = vsyncadd [#allocation59], %s574
      %s577 = sshll.u32 [#allocation60], 4
      %s578 = int_to_ptr.vmem [resolvable:$true] %s577
      %580 = dma.hbm_to_vmem [thread:$0]  %s93, 16, %s578, [#allocation59]
    $region189: #{unet_forward.1} parent=1 // pred_fallthru
      _
    // Predicated region
    $region190: #{unet_forward.1} parent=1 // pred_check
      _
    $region191: #{unet_forward.1} parent=1 // pred_check_branch
      %582 = sbr.rel (0) target = $region193
    $region192: #{unet_forward.1} parent=1 // pred_region
      %s584 = ssub.s32 6144, 6144
      %585 = vsyncadd [#allocation62], %s584
      %s586 = sshll.u32 [#allocation61], 4
      %s587 = int_to_ptr.vmem [resolvable:$true] %s586
      %592 = dma.hbm_to_vmem [thread:$0]  %s95, 6144, %s587, [#allocation62], 64, 64, 4
    $region193: #{unet_forward.1} parent=1 // pred_fallthru
      _
    // Predicated region
    $region194: #{unet_forward.1} parent=1 // pred_check
      _
    $region195: #{unet_forward.1} parent=1 // pred_check_branch
      %594 = sbr.rel (0) target = $region197
    $region196: #{unet_forward.1} parent=1 // pred_region
      %s596 = ssub.s32 16, 16
      %597 = vsyncadd [#allocation62], %s596
      %s599 = sshll.u32 [#allocation63], 4
      %s600 = int_to_ptr.vmem [resolvable:$true] %s599
      %602 = dma.hbm_to_vmem [thread:$0]  %s97, 16, %s600, [#allocation62]
    $region197: #{unet_forward.1} parent=1 // pred_fallthru
      _
    // Predicated region
    $region198: #{unet_forward.1} parent=1 // pred_check
      _
    $region199: #{unet_forward.1} parent=1 // pred_check_branch
      %604 = sbr.rel (0) target = $region201
    $region200: #{unet_forward.1} parent=1 // pred_region
      %s606 = ssub.s32 16, 16
      %607 = vsyncadd [#allocation65], %s606
      %s609 = sshll.u32 [#allocation64], 4
      %s610 = int_to_ptr.vmem [resolvable:$true] %s609
      %612 = dma.hbm_to_vmem [thread:$0]  %s99, 16, %s610, [#allocation65]
    $region201: #{unet_forward.1} parent=1 // pred_fallthru
      _
    // Predicated region
    $region202: #{unet_forward.1} parent=1 // pred_check
      _
    $region203: #{unet_forward.1} parent=1 // pred_check_branch
      %614 = sbr.rel (0) target = $region205
    $region204: #{unet_forward.1} parent=1 // pred_region
      %s616 = ssub.s32 16, 16
      %617 = vsyncadd [#allocation65], %s616
      %s619 = sshll.u32 [#allocation66], 4
      %s620 = int_to_ptr.vmem [resolvable:$true] %s619
      %622 = dma.hbm_to_vmem [thread:$0]  %s101, 16, %s620, [#allocation65]
    $region205: #{unet_forward.1} parent=1 // pred_fallthru
      _
    // Predicated region
    $region206: #{unet_forward.1} parent=1 // pred_check
      _
    $region207: #{unet_forward.1} parent=1 // pred_check_branch
      %624 = sbr.rel (0) target = $region209
    $region208: #{unet_forward.1} parent=1 // pred_region
      _
    $region209: #{unet_forward.1} parent=1 // pred_fallthru
      _
    // Predicated region
    $region210: #{unet_forward.1} parent=1 // pred_check
      _
    $region211: #{unet_forward.1} parent=1 // pred_check_branch
      %626 = sbr.rel (0) target = $region213
    $region212: #{unet_forward.1} parent=1 // pred_region
      _
    $region213: #{unet_forward.1} parent=1 // pred_fallthru
      _
    // Predicated region
    $region214: #{unet_forward.1} parent=1 // pred_check
      _
    $region215: #{unet_forward.1} parent=1 // pred_check_branch
      %628 = sbr.rel (0) target = $region217
    $region216: #{unet_forward.1} parent=1 // pred_region
      _
    $region217: #{unet_forward.1} parent=1 // pred_fallthru
      _
    // Predicated region
    $region218: #{unet_forward.1} parent=1 // pred_check
      _
    $region219: #{unet_forward.1} parent=1 // pred_check_branch
      %630 = sbr.rel (0) target = $region221
    $region220: #{unet_forward.1} parent=1 // pred_region
      %s632 = ssub.s32 16, 16
      %633 = vsyncadd [#allocation68], %s632
      %s635 = sshll.u32 [#allocation67], 4
      %s636 = int_to_ptr.vmem [resolvable:$true] %s635
      %638 = dma.hbm_to_vmem [thread:$0]  %s109, 16, %s636, [#allocation68]
    $region221: #{unet_forward.1} parent=1 // pred_fallthru
      _
    // Predicated region
    $region222: #{unet_forward.1} parent=1 // pred_check
      _
    $region223: #{unet_forward.1} parent=1 // pred_check_branch
      %640 = sbr.rel (0) target = $region225
    $region224: #{unet_forward.1} parent=1 // pred_region
      _
    $region225: #{unet_forward.1} parent=1 // pred_fallthru
      _
    // Predicated region
    $region226: #{unet_forward.1} parent=1 // pred_check
      _
    $region227: #{unet_forward.1} parent=1 // pred_check_branch
      %642 = sbr.rel (0) target = $region229
    $region228: #{unet_forward.1} parent=1 // pred_region
      _
    $region229: #{unet_forward.1} parent=1 // pred_fallthru
      _
    // Predicated region
    $region230: #{unet_forward.1} parent=1 // pred_check
      _
    $region231: #{unet_forward.1} parent=1 // pred_check_branch
      %644 = sbr.rel (0) target = $region233
    $region232: #{unet_forward.1} parent=1 // pred_region
      %645 = dma.done [#allocation3], 512
    $region233: #{unet_forward.1} parent=1 // pred_fallthru
      _
    // Predicated region
    $region234: #{unet_forward.1} parent=1 // pred_check
      _
    $region235: #{unet_forward.1} parent=1 // pred_check_branch
      %647 = sbr.rel (0) target = $region237
    $region236: #{unet_forward.1} parent=1 // pred_region
      %648 = dma.done [#allocation5], 256
    $region237: #{unet_forward.1} parent=1 // pred_fallthru
      _
    // Predicated region
    $region238: #{unet_forward.1} parent=1 // pred_check
      _
    $region239: #{unet_forward.1} parent=1 // pred_check_branch
      %650 = sbr.rel (0) target = $region241
    $region240: #{unet_forward.1} parent=1 // pred_region
      %651 = dma.done [#allocation5], 256
    $region241: #{unet_forward.1} parent=1 // pred_fallthru
      _
    // Predicated region
    $region242: #{unet_forward.1} parent=1 // pred_check
      _
    $region243: #{unet_forward.1} parent=1 // pred_check_branch
      %653 = sbr.rel (0) target = $region245
    $region244: #{unet_forward.1} parent=1 // pred_region
      %654 = dma.done [#allocation8], 384
    $region245: #{unet_forward.1} parent=1 // pred_fallthru
      _
    // Predicated region
    $region246: #{unet_forward.1} parent=1 // pred_check
      _
    $region247: #{unet_forward.1} parent=1 // pred_check_branch
      %656 = sbr.rel (0) target = $region249
    $region248: #{unet_forward.1} parent=1 // pred_region
      %657 = dma.done [#allocation8], 3072
    $region249: #{unet_forward.1} parent=1 // pred_fallthru
      _
    // Predicated region
    $region250: #{unet_forward.1} parent=1 // pred_check
      _
    $region251: #{unet_forward.1} parent=1 // pred_check_branch
      %659 = sbr.rel (0) target = $region253
    $region252: #{unet_forward.1} parent=1 // pred_region
      %660 = dma.done [#allocation11], 16
    $region253: #{unet_forward.1} parent=1 // pred_fallthru
      _
    // Predicated region
    $region254: #{unet_forward.1} parent=1 // pred_check
      _
    $region255: #{unet_forward.1} parent=1 // pred_check_branch
      %662 = sbr.rel (0) target = $region257
    $region256: #{unet_forward.1} parent=1 // pred_region
      %663 = dma.done [#allocation11], 16
    $region257: #{unet_forward.1} parent=1 // pred_fallthru
      _
    // Predicated region
    $region258: #{unet_forward.1} parent=1 // pred_check
      _
    $region259: #{unet_forward.1} parent=1 // pred_check_branch
      %665 = sbr.rel (0) target = $region261
    $region260: #{unet_forward.1} parent=1 // pred_region
      %666 = dma.done [#allocation14], 16
    $region261: #{unet_forward.1} parent=1 // pred_fallthru
      _
    // Predicated region
    $region262: #{unet_forward.1} parent=1 // pred_check
      _
    $region263: #{unet_forward.1} parent=1 // pred_check_branch
      %668 = sbr.rel (0) target = $region265
    $region264: #{unet_forward.1} parent=1 // pred_region
      %669 = dma.done [#allocation14], 128
    $region265: #{unet_forward.1} parent=1 // pred_fallthru
      _
    // Predicated region
    $region266: #{unet_forward.1} parent=1 // pred_check
      _
    $region267: #{unet_forward.1} parent=1 // pred_check_branch
      %671 = sbr.rel (0) target = $region269
    $region268: #{unet_forward.1} parent=1 // pred_region
      %672 = dma.done [#allocation17], 128
    $region269: #{unet_forward.1} parent=1 // pred_fallthru
      _
    // Predicated region
    $region270: #{unet_forward.1} parent=1 // pred_check
      _
    $region271: #{unet_forward.1} parent=1 // pred_check_branch
      %674 = sbr.rel (0) target = $region273
    $region272: #{unet_forward.1} parent=1 // pred_region
      %675 = dma.done [#allocation17], 128
    $region273: #{unet_forward.1} parent=1 // pred_fallthru
      _
    // Predicated region
    $region274: #{unet_forward.1} parent=1 // pred_check
      _
    $region275: #{unet_forward.1} parent=1 // pred_check_branch
      %677 = sbr.rel (0) target = $region277
    $region276: #{unet_forward.1} parent=1 // pred_region
      %678 = dma.done [#allocation20], 128
    $region277: #{unet_forward.1} parent=1 // pred_fallthru
      _
    // Predicated region
    $region278: #{unet_forward.1} parent=1 // pred_check
      _
    $region279: #{unet_forward.1} parent=1 // pred_check_branch
      %680 = sbr.rel (0) target = $region281
    $region280: #{unet_forward.1} parent=1 // pred_region
      %681 = dma.done [#allocation20], 1536
    $region281: #{unet_forward.1} parent=1 // pred_fallthru
      _
    // Predicated region
    $region282: #{unet_forward.1} parent=1 // pred_check
      _
    $region283: #{unet_forward.1} parent=1 // pred_check_branch
      %683 = sbr.rel (0) target = $region285
    $region284: #{unet_forward.1} parent=1 // pred_region
      %684 = dma.done [#allocation23], 3072
    $region285: #{unet_forward.1} parent=1 // pred_fallthru
      _
    // Predicated region
    $region286: #{unet_forward.1} parent=1 // pred_check
      _
    $region287: #{unet_forward.1} parent=1 // pred_check_branch
      %686 = sbr.rel (0) target = $region289
    $region288: #{unet_forward.1} parent=1 // pred_region
      %687 = dma.done [#allocation23], 16
    $region289: #{unet_forward.1} parent=1 // pred_fallthru
      _
    // Predicated region
    $region290: #{unet_forward.1} parent=1 // pred_check
      _
    $region291: #{unet_forward.1} parent=1 // pred_check_branch
      %689 = sbr.rel (0) target = $region293
    $region292: #{unet_forward.1} parent=1 // pred_region
      %690 = dma.done [#allocation26], 16
    $region293: #{unet_forward.1} parent=1 // pred_fallthru
      _
    // Predicated region
    $region294: #{unet_forward.1} parent=1 // pred_check
      _
    $region295: #{unet_forward.1} parent=1 // pred_check_branch
      %692 = sbr.rel (0) target = $region297
    $region296: #{unet_forward.1} parent=1 // pred_region
      %693 = dma.done [#allocation26], 16
    $region297: #{unet_forward.1} parent=1 // pred_fallthru
      _
    // Predicated region
    $region298: #{unet_forward.1} parent=1 // pred_check
      _
    $region299: #{unet_forward.1} parent=1 // pred_check_branch
      %695 = sbr.rel (0) target = $region301
    $region300: #{unet_forward.1} parent=1 // pred_region
      %696 = dma.done [#allocation29], 16
    $region301: #{unet_forward.1} parent=1 // pred_fallthru
      _
    // Predicated region
    $region302: #{unet_forward.1} parent=1 // pred_check
      _
    $region303: #{unet_forward.1} parent=1 // pred_check_branch
      %698 = sbr.rel (0) target = $region305
    $region304: #{unet_forward.1} parent=1 // pred_region
      %699 = dma.done [#allocation29], 64
    $region305: #{unet_forward.1} parent=1 // pred_fallthru
      _
    // Predicated region
    $region306: #{unet_forward.1} parent=1 // pred_check
      _
    $region307: #{unet_forward.1} parent=1 // pred_check_branch
      %701 = sbr.rel (0) target = $region309
    $region308: #{unet_forward.1} parent=1 // pred_region
      %702 = dma.done [#allocation32], 64
    $region309: #{unet_forward.1} parent=1 // pred_fallthru
      _
    // Predicated region
    $region310: #{unet_forward.1} parent=1 // pred_check
      _
    $region311: #{unet_forward.1} parent=1 // pred_check_branch
      %704 = sbr.rel (0) target = $region313
    $region312: #{unet_forward.1} parent=1 // pred_region
      %705 = dma.done [#allocation32], 64
    $region313: #{unet_forward.1} parent=1 // pred_fallthru
      _
    // Predicated region
    $region314: #{unet_forward.1} parent=1 // pred_check
      _
    $region315: #{unet_forward.1} parent=1 // pred_check_branch
      %707 = sbr.rel (0) target = $region317
    $region316: #{unet_forward.1} parent=1 // pred_region
      %708 = dma.done [#allocation35], 64
    $region317: #{unet_forward.1} parent=1 // pred_fallthru
      _
    // Predicated region
    $region318: #{unet_forward.1} parent=1 // pred_check
      _
    $region319: #{unet_forward.1} parent=1 // pred_check_branch
      %710 = sbr.rel (0) target = $region321
    $region320: #{unet_forward.1} parent=1 // pred_region
      %711 = dma.done [#allocation35], 1536
    $region321: #{unet_forward.1} parent=1 // pred_fallthru
      _
    // Predicated region
    $region322: #{unet_forward.1} parent=1 // pred_check
      _
    $region323: #{unet_forward.1} parent=1 // pred_check_branch
      %713 = sbr.rel (0) target = $region325
    $region324: #{unet_forward.1} parent=1 // pred_region
      %714 = dma.done [#allocation38], 3072
    $region325: #{unet_forward.1} parent=1 // pred_fallthru
      _
    // Predicated region
    $region326: #{unet_forward.1} parent=1 // pred_check
      _
    $region327: #{unet_forward.1} parent=1 // pred_check_branch
      %716 = sbr.rel (0) target = $region329
    $region328: #{unet_forward.1} parent=1 // pred_region
      %717 = dma.done [#allocation38], 16
    $region329: #{unet_forward.1} parent=1 // pred_fallthru
      _
    // Predicated region
    $region330: #{unet_forward.1} parent=1 // pred_check
      _
    $region331: #{unet_forward.1} parent=1 // pred_check_branch
      %719 = sbr.rel (0) target = $region333
    $region332: #{unet_forward.1} parent=1 // pred_region
      %720 = dma.done [#allocation41], 16
    $region333: #{unet_forward.1} parent=1 // pred_fallthru
      _
    // Predicated region
    $region334: #{unet_forward.1} parent=1 // pred_check
      _
    $region335: #{unet_forward.1} parent=1 // pred_check_branch
      %722 = sbr.rel (0) target = $region337
    $region336: #{unet_forward.1} parent=1 // pred_region
      %723 = dma.done [#allocation41], 16
    $region337: #{unet_forward.1} parent=1 // pred_fallthru
      _
    // Predicated region
    $region338: #{unet_forward.1} parent=1 // pred_check
      _
    $region339: #{unet_forward.1} parent=1 // pred_check_branch
      %725 = sbr.rel (0) target = $region341
    $region340: #{unet_forward.1} parent=1 // pred_region
      %726 = dma.done [#allocation44], 16
    $region341: #{unet_forward.1} parent=1 // pred_fallthru
      _
    // Predicated region
    $region342: #{unet_forward.1} parent=1 // pred_check
      _
    $region343: #{unet_forward.1} parent=1 // pred_check_branch
      %728 = sbr.rel (0) target = $region345
    $region344: #{unet_forward.1} parent=1 // pred_region
      %729 = dma.done [#allocation44], 1024
    $region345: #{unet_forward.1} parent=1 // pred_fallthru
      _
    // Predicated region
    $region346: #{unet_forward.1} parent=1 // pred_check
      _
    $region347: #{unet_forward.1} parent=1 // pred_check_branch
      %731 = sbr.rel (0) target = $region349
    $region348: #{unet_forward.1} parent=1 // pred_region
      %732 = dma.done [#allocation47], 16
    $region349: #{unet_forward.1} parent=1 // pred_fallthru
      _
    // Predicated region
    $region350: #{unet_forward.1} parent=1 // pred_check
      _
    $region351: #{unet_forward.1} parent=1 // pred_check_branch
      %734 = sbr.rel (0) target = $region353
    $region352: #{unet_forward.1} parent=1 // pred_region
      %735 = dma.done [#allocation47], 16
    $region353: #{unet_forward.1} parent=1 // pred_fallthru
      _
    // Predicated region
    $region354: #{unet_forward.1} parent=1 // pred_check
      _
    $region355: #{unet_forward.1} parent=1 // pred_check_branch
      %737 = sbr.rel (0) target = $region357
    $region356: #{unet_forward.1} parent=1 // pred_region
      %738 = dma.done [#allocation50], 16
    $region357: #{unet_forward.1} parent=1 // pred_fallthru
      _
    // Predicated region
    $region358: #{unet_forward.1} parent=1 // pred_check
      _
    $region359: #{unet_forward.1} parent=1 // pred_check_branch
      %740 = sbr.rel (0) target = $region361
    $region360: #{unet_forward.1} parent=1 // pred_region
      %741 = dma.done [#allocation50], 16
    $region361: #{unet_forward.1} parent=1 // pred_fallthru
      _
    // Predicated region
    $region362: #{unet_forward.1} parent=1 // pred_check
      _
    $region363: #{unet_forward.1} parent=1 // pred_check_branch
      %743 = sbr.rel (0) target = $region365
    $region364: #{unet_forward.1} parent=1 // pred_region
      %744 = dma.done [#allocation53], 3072
    $region365: #{unet_forward.1} parent=1 // pred_fallthru
      _
    // Predicated region
    $region366: #{unet_forward.1} parent=1 // pred_check
      _
    $region367: #{unet_forward.1} parent=1 // pred_check_branch
      %746 = sbr.rel (0) target = $region369
    $region368: #{unet_forward.1} parent=1 // pred_region
      %747 = dma.done [#allocation53], 16
    $region369: #{unet_forward.1} parent=1 // pred_fallthru
      _
    // Predicated region
    $region370: #{unet_forward.1} parent=1 // pred_check
      _
    $region371: #{unet_forward.1} parent=1 // pred_check_branch
      %749 = sbr.rel (0) target = $region373
    $region372: #{unet_forward.1} parent=1 // pred_region
      %750 = dma.done [#allocation56], 16
    $region373: #{unet_forward.1} parent=1 // pred_fallthru
      _
    // Predicated region
    $region374: #{unet_forward.1} parent=1 // pred_check
      _
    $region375: #{unet_forward.1} parent=1 // pred_check_branch
      %752 = sbr.rel (0) target = $region377
    $region376: #{unet_forward.1} parent=1 // pred_region
      %753 = dma.done [#allocation56], 16
    $region377: #{unet_forward.1} parent=1 // pred_fallthru
      _
    // Predicated region
    $region378: #{unet_forward.1} parent=1 // pred_check
      _
    $region379: #{unet_forward.1} parent=1 // pred_check_branch
      %755 = sbr.rel (0) target = $region381
    $region380: #{unet_forward.1} parent=1 // pred_region
      %756 = dma.done [#allocation59], 1024
    $region381: #{unet_forward.1} parent=1 // pred_fallthru
      _
    // Predicated region
    $region382: #{unet_forward.1} parent=1 // pred_check
      _
    $region383: #{unet_forward.1} parent=1 // pred_check_branch
      %758 = sbr.rel (0) target = $region385
    $region384: #{unet_forward.1} parent=1 // pred_region
      %759 = dma.done [#allocation59], 16
    $region385: #{unet_forward.1} parent=1 // pred_fallthru
      _
    // Predicated region
    $region386: #{unet_forward.1} parent=1 // pred_check
      _
    $region387: #{unet_forward.1} parent=1 // pred_check_branch
      %761 = sbr.rel (0) target = $region389
    $region388: #{unet_forward.1} parent=1 // pred_region
      %762 = dma.done [#allocation62], 6144
    $region389: #{unet_forward.1} parent=1 // pred_fallthru
      _
    // Predicated region
    $region390: #{unet_forward.1} parent=1 // pred_check
      _
    $region391: #{unet_forward.1} parent=1 // pred_check_branch
      %764 = sbr.rel (0) target = $region393
    $region392: #{unet_forward.1} parent=1 // pred_region
      %765 = dma.done [#allocation62], 16
    $region393: #{unet_forward.1} parent=1 // pred_fallthru
      _
    // Predicated region
    $region394: #{unet_forward.1} parent=1 // pred_check
      _
    $region395: #{unet_forward.1} parent=1 // pred_check_branch
      %767 = sbr.rel (0) target = $region397
    $region396: #{unet_forward.1} parent=1 // pred_region
      %768 = dma.done [#allocation65], 16
    $region397: #{unet_forward.1} parent=1 // pred_fallthru
      _
    // Predicated region
    $region398: #{unet_forward.1} parent=1 // pred_check
      _
    $region399: #{unet_forward.1} parent=1 // pred_check_branch
      %770 = sbr.rel (0) target = $region401
    $region400: #{unet_forward.1} parent=1 // pred_region
      %771 = dma.done [#allocation65], 16
    $region401: #{unet_forward.1} parent=1 // pred_fallthru
      _
    // Predicated region
    $region402: #{unet_forward.1} parent=1 // pred_check
      _
    $region403: #{unet_forward.1} parent=1 // pred_check_branch
      %773 = sbr.rel (0) target = $region405
    $region404: #{unet_forward.1} parent=1 // pred_region
      %774 = dma.done [#allocation68], 16
    $region405: #{unet_forward.1} parent=1 // pred_fallthru
      _
    %v776 = vld [vmem:[#allocation2] sm:$0xff]
    %v777 = vld [vmem:[#allocation2 + $0x8] sm:$0xff]
    %v778 = vld [vmem:[#allocation2 + $0x10] sm:$0xff]
    %v779 = vld [vmem:[#allocation2 + $0x18] sm:$0xff]
    %v780 = vpack.c.bf16 %v777, %v776
    %v781 = vpack.c.bf16 %v779, %v778
    %v782 = vlaneseq
    %v783 = vshrl.u32 %v782, 7
    %v784 = vadd.s32 %v783, 8
    %v785 = vadd.s32 %v783, 16
    %v786 = vadd.s32 %v783, 24
    %v787 = vand.u32 %v783, 15
    %v788 = vand.u32 %v784, 15
    %v789 = vand.u32 %v785, 15
    %v790 = vand.u32 %v786, 15
    %v791 = vlaneseq
    %v792 = vand.u32 %v791, 127
    %v793 = vshra.s32 %v792, 3
    %vm794 = vcmp.eq.s32.totalorder %v787, 0
    %vm795 = vcmp.eq.s32.totalorder %v788, 0
    %vm796 = vcmp.eq.s32.totalorder %v789, 0
    %vm797 = vcmp.eq.s32.totalorder %v790, 0
    %v798 = vsel %vm794, 1, 0
    %v799 = vsel %vm795, 1, 0
    %v800 = vsel %vm796, 1, 0
    %v801 = vsel %vm797, 1, 0
    %v802 = vcvt.s32.f32 %v798
    %v803 = vcvt.s32.f32 %v799
    %v804 = vcvt.s32.f32 %v800
    %v805 = vcvt.s32.f32 %v801
    %v806 = vsub.f32 3.0, %v802
    %v807 = vsub.f32 3.0, %v803
    %v808 = vsub.f32 3.0, %v804
    %v809 = vsub.f32 3.0, %v805
    %vm810 = vcmp.eq.s32.totalorder %v787, 15
    %vm811 = vcmp.eq.s32.totalorder %v788, 15
    %vm812 = vcmp.eq.s32.totalorder %v789, 15
    %vm813 = vcmp.eq.s32.totalorder %v790, 15
    %v814 = vsel %vm810, 1, 0
    %v815 = vsel %vm811, 1, 0
    %v816 = vsel %vm812, 1, 0
    %v817 = vsel %vm813, 1, 0
    %v818 = vcvt.s32.f32 %v814
    %v819 = vcvt.s32.f32 %v815
    %v820 = vcvt.s32.f32 %v816
    %v821 = vcvt.s32.f32 %v817
    %v822 = vsub.f32 %v806, %v818
    %v823 = vsub.f32 %v807, %v819
    %v824 = vsub.f32 %v808, %v820
    %v825 = vsub.f32 %v809, %v821
    %vm826 = vcmp.eq.s32.totalorder %v793, 0
    %v827 = vsel %vm826, 1, 0
    %v828 = vcvt.s32.f32 %v827
    %v829 = vsub.f32 3.0, %v828
    %vm830 = vcmp.eq.s32.totalorder %v793, 15
    %v831 = vsel %vm830, 1, 0
    %v832 = vcvt.s32.f32 %v831
    %v833 = vsub.f32 %v829, %v832
    %v834 = vmul.f32 %v822, %v833
    %v835 = vmul.f32 %v823, %v833
    %v836 = vmul.f32 %v824, %v833
    %v837 = vmul.f32 %v825, %v833
    %v838 = vadd.f32 %v834, 1e-08
    %v839 = vadd.f32 %v835, 1e-08
    %v840 = vadd.f32 %v836, 1e-08
    %v841 = vadd.f32 %v837, 1e-08
    %v842 = vrcp.pop %v838
    %v843 = vmul.f32 9.0, %v842
    %v844 = vrcp.pop %v839
    %v845 = vmul.f32 9.0, %v844
    %v846 = vrcp.pop %v840
    %v847 = vmul.f32 9.0, %v846
    %v848 = vrcp.pop %v841
    %v849 = vmul.f32 9.0, %v848
    %v850 = vld [vmem:[#allocation4] sm:$0xf]
    %v851 = vld [vmem:[#allocation4 + $0x4] sm:$0xf]
    %v852 = vld [vmem:[#allocation4 + $0x8] sm:$0xf]
    %v853 = vld [vmem:[#allocation4 + $0xc] sm:$0xf]
    %v858 = vunpack.c.l.b16 %v850
    %v859 = vunpack.c.l.b16 %v851
    %v860 = vunpack.c.l.b16 %v852
    %v861 = vunpack.c.l.b16 %v853
    %v862 = vpack.c.b16 %v859, %v858
    %v863 = vpack.c.b16 %v861, %v860
    %vm864 = vcmask 261120
    %v866 = vsel %vm864, %v862, 0
    %v869 = vsel %vm864, %v863, 0
    %871 = vmatprep.subr.bf16.mxu0 0
    %872 = vmatpush1.bf16.msra.mxu0 0
    %873 = vmatprep.subr.bf16.mxu0 0
    %874 = vmatpush1.bf16.msra.mxu0 0
    %875 = vmatprep.subr.bf16.mxu0 0
    %876 = vmatpush1.bf16.msra.mxu0 0
    %877 = vmatprep.subr.bf16.mxu0 0
    %878 = vmatpush1.bf16.msra.mxu0 0
    %879 = vmatprep.subr.bf16.mxu0 0
    %880 = vmatpush1.bf16.msra.mxu0 0
    %881 = vmatprep.subr.bf16.mxu0 0
    %882 = vmatpush1.bf16.msra.mxu0 0
    %883 = vmatprep.subr.bf16.mxu0 0
    %884 = vmatpush1.bf16.msra.mxu0 %v781
    %885 = vmatprep.subr.bf16.mxu0 0
    %886 = vmatpush1.bf16.msra.mxu0 %v780
    %887 = vmatprep.subr.bf16.mxu0 0
    %888 = vmatpush2.bf16.msra.mxu0 0
    %889 = vmatprep.subr.bf16.mxu0 0
    %890 = vmatpush2.bf16.msra.mxu0 0
    %891 = vmatprep.subr.bf16.mxu0 0
    %892 = vmatpush2.bf16.msra.mxu0 0
    %893 = vmatprep.subr.bf16.mxu0 0
    %894 = vmatpush2.bf16.msra.mxu0 0
    %895 = vmatprep.subr.bf16.mxu0 0
    %896 = vmatpush2.bf16.msra.mxu0 0
    %897 = vmatprep.subr.bf16.mxu0 0
    %898 = vmatpush2.bf16.msra.mxu0 0
    %899 = vmatprep.subr.bf16.mxu0 0
    %900 = vmatpush2.bf16.msra.mxu0 0
    %901 = vmatprep.subr.bf16.mxu0 0
    %902 = vmatpush2.bf16.msra.mxu0 0
    %903 = vmatprep.mubr.bf16.mxu0 0
    %904 = vmatmul.mubr.bf16.gmra.mxu0 %v866
    %v905 = vpop.f32.mrf.mxu0
    %v906 = vadd.f32 0.0, %v905
    %v907 = vpop.f32.mrf.mxu0
    %v908 = vpop.f32.mrf.mxu0
    %v909 = vadd.f32 0.0, %v908
    %v910 = vpop.f32.mrf.mxu0
    %911 = vmatprep.mubr.bf16.mxu0 0
    %912 = vmatmul.mubr.bf16.gmra.mxu0 %v869
    %v913 = vpop.f32.mrf.mxu0
    %v914 = vadd.f32 0.0, %v913
    %v915 = vpop.f32.mrf.mxu0
    %v916 = vpop.f32.mrf.mxu0
    %v917 = vadd.f32 0.0, %v916
    %v918 = vpop.f32.mrf.mxu0
    %919 = vdwg.mxu0
    %v920 = vpack.c.bf16 %v909, %v906
    %v921 = vpack.c.bf16 %v917, %v914
    %v922 = vld [vmem:[#allocation6] sm:$0xf]
    %v923 = vld [vmem:[#allocation6 + $0x4] sm:$0xf]
    %v924 = vld [vmem:[#allocation6 + $0x8] sm:$0xf]
    %v925 = vld [vmem:[#allocation6 + $0xc] sm:$0xf]
    %v930 = vunpack.c.l.b16 %v922
    %v931 = vunpack.c.l.b16 %v923
    %v932 = vunpack.c.l.b16 %v924
    %v933 = vunpack.c.l.b16 %v925
    %v934 = vpack.c.b16 %v931, %v930
    %v935 = vpack.c.b16 %v933, %v932
    %v937 = vsel %vm864, %v934, 0
    %v940 = vsel %vm864, %v935, 0
    %942 = vmatprep.subr.bf16.mxu0 0
    %943 = vmatpush1.bf16.msra.mxu0 0
    %944 = vmatprep.subr.bf16.mxu0 0
    %945 = vmatpush1.bf16.msra.mxu0 0
    %946 = vmatprep.subr.bf16.mxu0 0
    %947 = vmatpush1.bf16.msra.mxu0 0
    %948 = vmatprep.subr.bf16.mxu0 0
    %949 = vmatpush1.bf16.msra.mxu0 0
    %950 = vmatprep.subr.bf16.mxu0 0
    %951 = vmatpush1.bf16.msra.mxu0 0
    %952 = vmatprep.subr.bf16.mxu0 0
    %953 = vmatpush1.bf16.msra.mxu0 0
    %954 = vmatprep.subr.bf16.mxu0 0
    %955 = vmatpush1.bf16.msra.mxu0 %v781
    %956 = vmatprep.subr.bf16.mxu0 0
    %957 = vmatpush1.bf16.msra.mxu0 %v780
    %958 = vmatprep.subr.bf16.mxu0 0
    %959 = vmatpush2.bf16.msra.mxu0 0
    %960 = vmatprep.subr.bf16.mxu0 0
    %961 = vmatpush2.bf16.msra.mxu0 0
    %962 = vmatprep.subr.bf16.mxu0 0
    %963 = vmatpush2.bf16.msra.mxu0 0
    %964 = vmatprep.subr.bf16.mxu0 0
    %965 = vmatpush2.bf16.msra.mxu0 0
    %966 = vmatprep.subr.bf16.mxu0 0
    %967 = vmatpush2.bf16.msra.mxu0 0
    %968 = vmatprep.subr.bf16.mxu0 0
    %969 = vmatpush2.bf16.msra.mxu0 0
    %970 = vmatprep.subr.bf16.mxu0 0
    %971 = vmatpush2.bf16.msra.mxu0 0
    %972 = vmatprep.subr.bf16.mxu0 0
    %973 = vmatpush2.bf16.msra.mxu0 0
    %974 = vmatprep.mubr.bf16.mxu0 0
    %975 = vmatmul.mubr.bf16.gmra.mxu0 %v937
    %v976 = vpop.f32.mrf.mxu0
    %v977 = vadd.f32 0.0, %v976
    %v978 = vpop.f32.mrf.mxu0
    %v979 = vpop.f32.mrf.mxu0
    %v980 = vadd.f32 0.0, %v979
    %v981 = vpop.f32.mrf.mxu0
    %982 = vmatprep.mubr.bf16.mxu0 0
    %983 = vmatmul.mubr.bf16.gmra.mxu0 %v940
    %v984 = vpop.f32.mrf.mxu0
    %v985 = vadd.f32 0.0, %v984
    %v986 = vpop.f32.mrf.mxu0
    %v987 = vpop.f32.mrf.mxu0
    %v988 = vadd.f32 0.0, %v987
    %v989 = vpop.f32.mrf.mxu0
    %990 = vdwg.mxu0
    %v991 = vpack.c.bf16 %v980, %v977
    %v992 = vpack.c.bf16 %v988, %v985
    %v993 = vld [vmem:[#allocation7] sm:$0xf]
    %v994 = vld [vmem:[#allocation7 + $0x4] sm:$0xf]
    %s995 = scalar_lea.vmem [#allocation7], 8
    %v996 = vld [vmem:[%s995] sm:$0xf]
    %v997 = vld [vmem:[%s995 + $0x4] sm:$0xf]
    %v1000 = vunpack.c.l.b16 %v996
    %v1001 = vunpack.c.l.b16 %v997
    %v1002 = vpack.c.b16 %v1001, %v1000
    %vm1004 = vcmask 130048
    %v1006 = vsel %vm1004, %v780, 0
    %v1009 = vsel %vm1004, %v781, 0
    %1011 = vmatprep.subr.bf16.mxu0 0
    %1012 = vmatpush1.bf16.msra.mxu0 0
    %1013 = vmatprep.subr.bf16.mxu0 0
    %1014 = vmatpush1.bf16.msra.mxu0 0
    %1015 = vmatprep.subr.bf16.mxu0 0
    %1016 = vmatpush1.bf16.msra.mxu0 0
    %1017 = vmatprep.subr.bf16.mxu0 0
    %1018 = vmatpush1.bf16.msra.mxu0 0
    %1019 = vmatprep.subr.bf16.mxu0 0
    %1020 = vmatpush1.bf16.msra.mxu0 0
    %1021 = vmatprep.subr.bf16.mxu0 0
    %1022 = vmatpush1.bf16.msra.mxu0 0
    %1023 = vmatprep.subr.bf16.mxu0 0
    %1024 = vmatpush1.bf16.msra.mxu0 0
    %1025 = vmatprep.subr.bf16.mxu0 0
    %1026 = vmatpush1.bf16.msra.mxu0 %v1002
    %1027 = vmatprep.subr.bf16.mxu0 0
    %1028 = vmatpush2.bf16.msra.mxu0 0
    %1029 = vmatprep.subr.bf16.mxu0 0
    %1030 = vmatpush2.bf16.msra.mxu0 0
    %1031 = vmatprep.subr.bf16.mxu0 0
    %1032 = vmatpush2.bf16.msra.mxu0 0
    %1033 = vmatprep.subr.bf16.mxu0 0
    %1034 = vmatpush2.bf16.msra.mxu0 0
    %1035 = vmatprep.subr.bf16.mxu0 0
    %1036 = vmatpush2.bf16.msra.mxu0 0
    %1037 = vmatprep.subr.bf16.mxu0 0
    %1038 = vmatpush2.bf16.msra.mxu0 0
    %1039 = vmatprep.subr.bf16.mxu0 0
    %1040 = vmatpush2.bf16.msra.mxu0 0
    %1041 = vmatprep.subr.bf16.mxu0 0
    %1042 = vmatpush2.bf16.msra.mxu0 0
    %1043 = vmatprep.mubr.bf16.mxu0 0
    %1044 = vmatmul.mubr.bf16.gmra.mxu0 %v1006
    %v1045 = vpop.f32.mrf.mxu0
    %v1046 = vadd.f32 0.0, %v1045
    %v1047 = vpop.f32.mrf.mxu0
    %v1048 = vpop.f32.mrf.mxu0
    %v1049 = vadd.f32 0.0, %v1048
    %v1050 = vpop.f32.mrf.mxu0
    %1051 = vmatprep.mubr.bf16.mxu0 0
    %1052 = vmatmul.mubr.bf16.gmra.mxu0 %v1009
    %v1053 = vpop.f32.mrf.mxu0
    %v1054 = vadd.f32 0.0, %v1053
    %v1055 = vpop.f32.mrf.mxu0
    %v1056 = vpop.f32.mrf.mxu0
    %v1057 = vadd.f32 0.0, %v1056
    %v1058 = vpop.f32.mrf.mxu0
    %1059 = vdwg.mxu0
    %v1062 = vunpack.c.l.b16 %v993
    %v1063 = vunpack.c.l.b16 %v994
    %v1064 = vpack.c.b16 %v1063, %v1062
    %v1067 = vsel %vm1004, %v920, 0
    %v1070 = vsel %vm1004, %v921, 0
    %1072 = vmatprep.subr.bf16.mxu0 0
    %1073 = vmatpush1.bf16.msra.mxu0 0
    %1074 = vmatprep.subr.bf16.mxu0 0
    %1075 = vmatpush1.bf16.msra.mxu0 0
    %1076 = vmatprep.subr.bf16.mxu0 0
    %1077 = vmatpush1.bf16.msra.mxu0 0
    %1078 = vmatprep.subr.bf16.mxu0 0
    %1079 = vmatpush1.bf16.msra.mxu0 0
    %1080 = vmatprep.subr.bf16.mxu0 0
    %1081 = vmatpush1.bf16.msra.mxu0 0
    %1082 = vmatprep.subr.bf16.mxu0 0
    %1083 = vmatpush1.bf16.msra.mxu0 0
    %1084 = vmatprep.subr.bf16.mxu0 0
    %1085 = vmatpush1.bf16.msra.mxu0 0
    %1086 = vmatprep.subr.bf16.mxu0 0
    %1087 = vmatpush1.bf16.msra.mxu0 %v1064
    %1088 = vmatprep.subr.bf16.mxu0 0
    %1089 = vmatpush2.bf16.msra.mxu0 0
    %1090 = vmatprep.subr.bf16.mxu0 0
    %1091 = vmatpush2.bf16.msra.mxu0 0
    %1092 = vmatprep.subr.bf16.mxu0 0
    %1093 = vmatpush2.bf16.msra.mxu0 0
    %1094 = vmatprep.subr.bf16.mxu0 0
    %1095 = vmatpush2.bf16.msra.mxu0 0
    %1096 = vmatprep.subr.bf16.mxu0 0
    %1097 = vmatpush2.bf16.msra.mxu0 0
    %1098 = vmatprep.subr.bf16.mxu0 0
    %1099 = vmatpush2.bf16.msra.mxu0 0
    %1100 = vmatprep.subr.bf16.mxu0 0
    %1101 = vmatpush2.bf16.msra.mxu0 0
    %1102 = vmatprep.subr.bf16.mxu0 0
    %1103 = vmatpush2.bf16.msra.mxu0 0
    %1104 = vmatprep.mubr.bf16.mxu0 0
    %1105 = vmatmul.mubr.bf16.gmra.mxu0 %v1067
    %v1106 = vpop.f32.mrf.mxu0
    %v1107 = vadd.f32 %v1046, %v1106
    %v1108 = vpop.f32.mrf.mxu0
    %v1109 = vpop.f32.mrf.mxu0
    %v1110 = vadd.f32 %v1049, %v1109
    %v1111 = vpop.f32.mrf.mxu0
    %1112 = vmatprep.mubr.bf16.mxu0 0
    %1113 = vmatmul.mubr.bf16.gmra.mxu0 %v1070
    %v1114 = vpop.f32.mrf.mxu0
    %v1115 = vadd.f32 %v1054, %v1114
    %v1116 = vpop.f32.mrf.mxu0
    %v1117 = vpop.f32.mrf.mxu0
    %v1118 = vadd.f32 %v1057, %v1117
    %v1119 = vpop.f32.mrf.mxu0
    %1120 = vdwg.mxu0
    %s1121 = scalar_lea.vmem [#allocation7], 16
    %v1122 = vld [vmem:[%s1121] sm:$0xf]
    %v1123 = vld [vmem:[%s1121 + $0x4] sm:$0xf]
    %v1126 = vunpack.c.l.b16 %v1122
    %v1127 = vunpack.c.l.b16 %v1123
    %v1128 = vpack.c.b16 %v1127, %v1126
    %v1131 = vsel %vm1004, %v991, 0
    %v1134 = vsel %vm1004, %v992, 0
    %1136 = vmatprep.subr.bf16.mxu0 0
    %1137 = vmatpush1.bf16.msra.mxu0 0
    %1138 = vmatprep.subr.bf16.mxu0 0
    %1139 = vmatpush1.bf16.msra.mxu0 0
    %1140 = vmatprep.subr.bf16.mxu0 0
    %1141 = vmatpush1.bf16.msra.mxu0 0
    %1142 = vmatprep.subr.bf16.mxu0 0
    %1143 = vmatpush1.bf16.msra.mxu0 0
    %1144 = vmatprep.subr.bf16.mxu0 0
    %1145 = vmatpush1.bf16.msra.mxu0 0
    %1146 = vmatprep.subr.bf16.mxu0 0
    %1147 = vmatpush1.bf16.msra.mxu0 0
    %1148 = vmatprep.subr.bf16.mxu0 0
    %1149 = vmatpush1.bf16.msra.mxu0 0
    %1150 = vmatprep.subr.bf16.mxu0 0
    %1151 = vmatpush1.bf16.msra.mxu0 %v1128
    %1152 = vmatprep.subr.bf16.mxu0 0
    %1153 = vmatpush2.bf16.msra.mxu0 0
    %1154 = vmatprep.subr.bf16.mxu0 0
    %1155 = vmatpush2.bf16.msra.mxu0 0
    %1156 = vmatprep.subr.bf16.mxu0 0
    %1157 = vmatpush2.bf16.msra.mxu0 0
    %1158 = vmatprep.subr.bf16.mxu0 0
    %1159 = vmatpush2.bf16.msra.mxu0 0
    %1160 = vmatprep.subr.bf16.mxu0 0
    %1161 = vmatpush2.bf16.msra.mxu0 0
    %1162 = vmatprep.subr.bf16.mxu0 0
    %1163 = vmatpush2.bf16.msra.mxu0 0
    %1164 = vmatprep.subr.bf16.mxu0 0
    %1165 = vmatpush2.bf16.msra.mxu0 0
    %1166 = vmatprep.subr.bf16.mxu0 0
    %1167 = vmatpush2.bf16.msra.mxu0 0
    %1168 = vmatprep.mubr.bf16.mxu0 0
    %1169 = vmatmul.mubr.bf16.gmra.mxu0 %v1131
    %v1170 = vpop.f32.mrf.mxu0
    %v1171 = vadd.f32 0.0, %v1170
    %v1172 = vpop.f32.mrf.mxu0
    %v1173 = vpop.f32.mrf.mxu0
    %v1174 = vadd.f32 0.0, %v1173
    %v1175 = vpop.f32.mrf.mxu0
    %1176 = vmatprep.mubr.bf16.mxu0 0
    %1177 = vmatmul.mubr.bf16.gmra.mxu0 %v1134
    %v1178 = vpop.f32.mrf.mxu0
    %v1179 = vadd.f32 0.0, %v1178
    %v1180 = vpop.f32.mrf.mxu0
    %v1181 = vpop.f32.mrf.mxu0
    %v1182 = vadd.f32 0.0, %v1181
    %v1183 = vpop.f32.mrf.mxu0
    %1184 = vdwg.mxu0
    %v1185 = vadd.f32 %v1107, %v1171
    %v1186 = vadd.f32 %v1110, %v1174
    %v1187 = vadd.f32 %v1115, %v1179
    %v1188 = vadd.f32 %v1118, %v1182
    %v1189 = vmul.f32 %v1185, %v843
    %v1190 = vmul.f32 %v1186, %v845
    %v1191 = vmul.f32 %v1187, %v847
    %v1192 = vmul.f32 %v1188, %v849
    %v1193 = vadd.f32 %v1189, %v1190
    %v1194 = vadd.f32 %v1193, %v1191
    %v1195 = vadd.f32 %v1194, %v1192
    %v1196 = vrot.slane %v1195, 4
    %v1197 = vadd.f32 %v1195, %v1196
    %v1198 = vrot.slane %v1197, 2
    %v1199 = vadd.f32 %v1197, %v1198
    %v1200 = vrot.slane %v1199, 1
    %v1201 = vadd.f32 %v1199, %v1200
    %v1202 = vmul.f32 %v1189, %v1189
    %v1203 = vmul.f32 %v1190, %v1190
    %v1204 = vmul.f32 %v1191, %v1191
    %v1205 = vmul.f32 %v1192, %v1192
    %v1206 = vadd.f32 %v1202, %v1203
    %v1207 = vadd.f32 %v1206, %v1204
    %v1208 = vadd.f32 %v1207, %v1205
    %v1209 = vrot.slane %v1208, 4
    %v1210 = vadd.f32 %v1208, %v1209
    %v1211 = vrot.slane %v1210, 2
    %v1212 = vadd.f32 %v1210, %v1211
    %v1213 = vrot.slane %v1212, 1
    %v1214 = vadd.f32 %v1212, %v1213
    %1215 = vrot.lane.b32.xlu0 %v1201, 8
    %v1216 = vpop.permute.xlu0 %1215
    %v1217 = vadd.f32 %v1201, %v1216
    %1218 = vrot.lane.b32.xlu0 %v1214, 8
    %v1219 = vpop.permute.xlu0 %1218
    %v1220 = vadd.f32 %v1214, %v1219
    %1221 = vrot.lane.b32.xlu0 %v1217, 16
    %v1222 = vpop.permute.xlu0 %1221
    %v1223 = vadd.f32 %v1217, %v1222
    %1224 = vrot.lane.b32.xlu0 %v1220, 16
    %v1225 = vpop.permute.xlu0 %1224
    %v1226 = vadd.f32 %v1220, %v1225
    %1227 = vrot.lane.b32.xlu0 %v1223, 32
    %v1228 = vpop.permute.xlu0 %1227
    %v1229 = vadd.f32 %v1223, %v1228
    %1230 = vrot.lane.b32.xlu0 %v1226, 32
    %v1231 = vpop.permute.xlu0 %1230
    %v1232 = vadd.f32 %v1226, %v1231
    %1233 = vrot.lane.b32.xlu0 %v1229, 64
    %v1234 = vpop.permute.xlu0 %1233
    %v1235 = vadd.f32 %v1229, %v1234
    %1236 = vrot.lane.b32.xlu0 %v1232, 64
    %v1237 = vpop.permute.xlu0 %1236
    %v1238 = vadd.f32 %v1232, %v1237
    %v1239 = vmul.f32 %v1235, 0.001953125
    %v1240 = vmul.f32 %v1238, 0.001953125
    %v1241 = vmul.f32 %v1239, %v1239
    %v1242 = vsub.f32 %v1240, %v1241
    %v1243 = vlaneseq
    %v1244 = vshrl.u32 %v1243, 7
    %v1245 = vsub.s32 0, %v1244
    %v1246 = vrot.slane %v1239, %v1245
    %v1247 = vsub.f32 %v1189, %v1246
    %v1248 = vsub.f32 %v1190, %v1246
    %v1249 = vsub.f32 %v1191, %v1246
    %v1250 = vsub.f32 %v1192, %v1246
    %v1251 = vadd.f32 %v1242, 1e-05
    %v1252 = vrsqrt.pop %v1251
    %v1253 = vlaneseq
    %v1254 = vshrl.u32 %v1253, 7
    %v1255 = vsub.s32 0, %v1254
    %v1256 = vrot.slane %v1252, %v1255
    %v1257 = vmul.f32 %v1247, %v1256
    %v1258 = vmul.f32 %v1248, %v1256
    %v1259 = vmul.f32 %v1249, %v1256
    %v1260 = vmul.f32 %v1250, %v1256
    %v1261 = vld [vmem:[%s11] sm:$0x1]
    %v1263 = vlaneseq
    %v1264 = vshrl.u32 %v1263, 7
    %v1265 = vsub.s32 0, %v1264
    %v1266 = vrot.slane %v1261, %v1265
    %v1268 = vmul.f32 %v1257, %v1266
    %v1269 = vmul.f32 %v1258, %v1266
    %v1270 = vmul.f32 %v1259, %v1266
    %v1271 = vmul.f32 %v1260, %v1266
    %v1272 = vld [vmem:[#allocation10] sm:$0x1]
    %v1274 = vlaneseq
    %v1275 = vshrl.u32 %v1274, 7
    %v1276 = vsub.s32 0, %v1275
    %v1277 = vrot.slane %v1272, %v1276
    %v1279 = vadd.f32 %v1268, %v1277
    %v1280 = vadd.f32 %v1269, %v1277
    %v1281 = vadd.f32 %v1270, %v1277
    %v1282 = vadd.f32 %v1271, %v1277
    %vm1283 = vcmp.ge.f32.partialorder %v1279, 0.0
    %vm1284 = vcmp.ge.f32.partialorder %v1280, 0.0
    %vm1285 = vcmp.ge.f32.partialorder %v1281, 0.0
    %vm1286 = vcmp.ge.f32.partialorder %v1282, 0.0
    %v1287 = vmul.f32 %v1279, 0.01
    %v1288 = vmul.f32 %v1280, 0.01
    %v1289 = vmul.f32 %v1281, 0.01
    %v1290 = vmul.f32 %v1282, 0.01
    %v1291 = vsel %vm1283, %v1279, %v1287
    %v1292 = vsel %vm1284, %v1280, %v1288
    %v1293 = vsel %vm1285, %v1281, %v1289
    %v1294 = vsel %vm1286, %v1282, %v1290
    %v1295 = vpack.c.bf16 %v1292, %v1291
    %v1296 = vpack.c.bf16 %v1294, %v1293
    %1297 = vmatprep.subr.bf16.mxu0 0
    %1298 = vmatpush1.bf16.msra.mxu0 0
    %1299 = vmatprep.subr.bf16.mxu0 0
    %1300 = vmatpush1.bf16.msra.mxu0 0
    %1301 = vmatprep.subr.bf16.mxu0 0
    %1302 = vmatpush1.bf16.msra.mxu0 0
    %1303 = vmatprep.subr.bf16.mxu0 0
    %1304 = vmatpush1.bf16.msra.mxu0 0
    %1305 = vmatprep.subr.bf16.mxu0 0
    %1306 = vmatpush1.bf16.msra.mxu0 0
    %1307 = vmatprep.subr.bf16.mxu0 0
    %1308 = vmatpush1.bf16.msra.mxu0 0
    %1309 = vmatprep.subr.bf16.mxu0 0
    %1310 = vmatpush1.bf16.msra.mxu0 %v1296
    %1311 = vmatprep.subr.bf16.mxu0 0
    %1312 = vmatpush1.bf16.msra.mxu0 %v1295
    %1313 = vmatprep.subr.bf16.mxu0 0
    %1314 = vmatpush2.bf16.msra.mxu0 0
    %1315 = vmatprep.subr.bf16.mxu0 0
    %1316 = vmatpush2.bf16.msra.mxu0 0
    %1317 = vmatprep.subr.bf16.mxu0 0
    %1318 = vmatpush2.bf16.msra.mxu0 0
    %1319 = vmatprep.subr.bf16.mxu0 0
    %1320 = vmatpush2.bf16.msra.mxu0 0
    %1321 = vmatprep.subr.bf16.mxu0 0
    %1322 = vmatpush2.bf16.msra.mxu0 0
    %1323 = vmatprep.subr.bf16.mxu0 0
    %1324 = vmatpush2.bf16.msra.mxu0 0
    %1325 = vmatprep.subr.bf16.mxu0 0
    %1326 = vmatpush2.bf16.msra.mxu0 0
    %1327 = vmatprep.subr.bf16.mxu0 0
    %1328 = vmatpush2.bf16.msra.mxu0 0
    %1329 = vmatprep.mubr.bf16.mxu0 0
    %1330 = vmatmul.mubr.bf16.gmra.mxu0 %v866
    %v1331 = vpop.f32.mrf.mxu0
    %v1332 = vadd.f32 0.0, %v1331
    %v1333 = vpop.f32.mrf.mxu0
    %v1334 = vpop.f32.mrf.mxu0
    %v1335 = vadd.f32 0.0, %v1334
    %v1336 = vpop.f32.mrf.mxu0
    %1337 = vmatprep.mubr.bf16.mxu0 0
    %1338 = vmatmul.mubr.bf16.gmra.mxu0 %v869
    %v1339 = vpop.f32.mrf.mxu0
    %v1340 = vadd.f32 0.0, %v1339
    %v1341 = vpop.f32.mrf.mxu0
    %v1342 = vpop.f32.mrf.mxu0
    %v1343 = vadd.f32 0.0, %v1342
    %v1344 = vpop.f32.mrf.mxu0
    %1345 = vdwg.mxu0
    %v1346 = vpack.c.bf16 %v1335, %v1332
    %v1347 = vpack.c.bf16 %v1343, %v1340
    %1348 = vmatprep.subr.bf16.mxu0 0
    %1349 = vmatpush1.bf16.msra.mxu0 0
    %1350 = vmatprep.subr.bf16.mxu0 0
    %1351 = vmatpush1.bf16.msra.mxu0 0
    %1352 = vmatprep.subr.bf16.mxu0 0
    %1353 = vmatpush1.bf16.msra.mxu0 0
    %1354 = vmatprep.subr.bf16.mxu0 0
    %1355 = vmatpush1.bf16.msra.mxu0 0
    %1356 = vmatprep.subr.bf16.mxu0 0
    %1357 = vmatpush1.bf16.msra.mxu0 0
    %1358 = vmatprep.subr.bf16.mxu0 0
    %1359 = vmatpush1.bf16.msra.mxu0 0
    %1360 = vmatprep.subr.bf16.mxu0 0
    %1361 = vmatpush1.bf16.msra.mxu0 %v1296
    %1362 = vmatprep.subr.bf16.mxu0 0
    %1363 = vmatpush1.bf16.msra.mxu0 %v1295
    %1364 = vmatprep.subr.bf16.mxu0 0
    %1365 = vmatpush2.bf16.msra.mxu0 0
    %1366 = vmatprep.subr.bf16.mxu0 0
    %1367 = vmatpush2.bf16.msra.mxu0 0
    %1368 = vmatprep.subr.bf16.mxu0 0
    %1369 = vmatpush2.bf16.msra.mxu0 0
    %1370 = vmatprep.subr.bf16.mxu0 0
    %1371 = vmatpush2.bf16.msra.mxu0 0
    %1372 = vmatprep.subr.bf16.mxu0 0
    %1373 = vmatpush2.bf16.msra.mxu0 0
    %1374 = vmatprep.subr.bf16.mxu0 0
    %1375 = vmatpush2.bf16.msra.mxu0 0
    %1376 = vmatprep.subr.bf16.mxu0 0
    %1377 = vmatpush2.bf16.msra.mxu0 0
    %1378 = vmatprep.subr.bf16.mxu0 0
    %1379 = vmatpush2.bf16.msra.mxu0 0
    %1380 = vmatprep.mubr.bf16.mxu0 0
    %1381 = vmatmul.mubr.bf16.gmra.mxu0 %v937
    %v1382 = vpop.f32.mrf.mxu0
    %v1383 = vadd.f32 0.0, %v1382
    %v1384 = vpop.f32.mrf.mxu0
    %v1385 = vpop.f32.mrf.mxu0
    %v1386 = vadd.f32 0.0, %v1385
    %v1387 = vpop.f32.mrf.mxu0
    %1388 = vmatprep.mubr.bf16.mxu0 0
    %1389 = vmatmul.mubr.bf16.gmra.mxu0 %v940
    %v1390 = vpop.f32.mrf.mxu0
    %v1391 = vadd.f32 0.0, %v1390
    %v1392 = vpop.f32.mrf.mxu0
    %v1393 = vpop.f32.mrf.mxu0
    %v1394 = vadd.f32 0.0, %v1393
    %v1395 = vpop.f32.mrf.mxu0
    %1396 = vdwg.mxu0
    %v1397 = vpack.c.bf16 %v1386, %v1383
    %v1398 = vpack.c.bf16 %v1394, %v1391
    %v1399 = vld [vmem:[#allocation9] sm:$0xf]
    %v1400 = vld [vmem:[#allocation9 + $0x4] sm:$0xf]
    %v1401 = vld [vmem:[#allocation9 + $0x8] sm:$0xf]
    %v1402 = vld [vmem:[#allocation9 + $0xc] sm:$0xf]
    %v1403 = vld [vmem:[#allocation9 + $0x10] sm:$0xf]
    %v1404 = vld [vmem:[#allocation9 + $0x14] sm:$0xf]
    %v1405 = vld [vmem:[#allocation9 + $0x18] sm:$0xf]
    %v1406 = vld [vmem:[#allocation9 + $0x1c] sm:$0xf]
    %v1407 = vld [vmem:[#allocation9 + $0x20] sm:$0xf]
    %v1408 = vld [vmem:[#allocation9 + $0x24] sm:$0xf]
    %v1409 = vld [vmem:[#allocation9 + $0x28] sm:$0xf]
    %v1410 = vld [vmem:[#allocation9 + $0x2c] sm:$0xf]
    %v1411 = vld [vmem:[#allocation9 + $0x30] sm:$0xf]
    %v1412 = vld [vmem:[#allocation9 + $0x34] sm:$0xf]
    %v1413 = vld [vmem:[#allocation9 + $0x38] sm:$0xf]
    %v1414 = vld [vmem:[#allocation9 + $0x3c] sm:$0xf]
    %s1415 = scalar_lea.vmem [#allocation9], 64
    %v1416 = vld [vmem:[%s1415] sm:$0xf]
    %v1417 = vld [vmem:[%s1415 + $0x4] sm:$0xf]
    %v1418 = vld [vmem:[%s1415 + $0x8] sm:$0xf]
    %v1419 = vld [vmem:[%s1415 + $0xc] sm:$0xf]
    %v1420 = vld [vmem:[%s1415 + $0x10] sm:$0xf]
    %v1421 = vld [vmem:[%s1415 + $0x14] sm:$0xf]
    %v1422 = vld [vmem:[%s1415 + $0x18] sm:$0xf]
    %v1423 = vld [vmem:[%s1415 + $0x1c] sm:$0xf]
    %v1424 = vld [vmem:[%s1415 + $0x20] sm:$0xf]
    %v1425 = vld [vmem:[%s1415 + $0x24] sm:$0xf]
    %v1426 = vld [vmem:[%s1415 + $0x28] sm:$0xf]
    %v1427 = vld [vmem:[%s1415 + $0x2c] sm:$0xf]
    %v1428 = vld [vmem:[%s1415 + $0x30] sm:$0xf]
    %v1429 = vld [vmem:[%s1415 + $0x34] sm:$0xf]
    %v1430 = vld [vmem:[%s1415 + $0x38] sm:$0xf]
    %v1431 = vld [vmem:[%s1415 + $0x3c] sm:$0xf]
    %v1448 = vunpack.c.l.b16 %v1416
    %v1449 = vunpack.c.l.b16 %v1417
    %v1450 = vunpack.c.l.b16 %v1418
    %v1451 = vunpack.c.l.b16 %v1419
    %v1452 = vunpack.c.l.b16 %v1420
    %v1453 = vunpack.c.l.b16 %v1421
    %v1454 = vunpack.c.l.b16 %v1422
    %v1455 = vunpack.c.l.b16 %v1423
    %v1456 = vunpack.c.l.b16 %v1424
    %v1457 = vunpack.c.l.b16 %v1425
    %v1458 = vunpack.c.l.b16 %v1426
    %v1459 = vunpack.c.l.b16 %v1427
    %v1460 = vunpack.c.l.b16 %v1428
    %v1461 = vunpack.c.l.b16 %v1429
    %v1462 = vunpack.c.l.b16 %v1430
    %v1463 = vunpack.c.l.b16 %v1431
    %v1464 = vpack.c.b16 %v1449, %v1448
    %v1465 = vpack.c.b16 %v1451, %v1450
    %v1466 = vpack.c.b16 %v1453, %v1452
    %v1467 = vpack.c.b16 %v1455, %v1454
    %v1468 = vpack.c.b16 %v1457, %v1456
    %v1469 = vpack.c.b16 %v1459, %v1458
    %v1470 = vpack.c.b16 %v1461, %v1460
    %v1471 = vpack.c.b16 %v1463, %v1462
    %1480 = vmatprep.subr.bf16.mxu0 0
    %1481 = vmatpush1.bf16.msra.mxu0 %v1471
    %1482 = vmatprep.subr.bf16.mxu0 0
    %1483 = vmatpush1.bf16.msra.mxu0 %v1470
    %1484 = vmatprep.subr.bf16.mxu0 0
    %1485 = vmatpush1.bf16.msra.mxu0 %v1469
    %1486 = vmatprep.subr.bf16.mxu0 0
    %1487 = vmatpush1.bf16.msra.mxu0 %v1468
    %1488 = vmatprep.subr.bf16.mxu0 0
    %1489 = vmatpush1.bf16.msra.mxu0 %v1467
    %1490 = vmatprep.subr.bf16.mxu0 0
    %1491 = vmatpush1.bf16.msra.mxu0 %v1466
    %1492 = vmatprep.subr.bf16.mxu0 0
    %1493 = vmatpush1.bf16.msra.mxu0 %v1465
    %1494 = vmatprep.subr.bf16.mxu0 0
    %1495 = vmatpush1.bf16.msra.mxu0 %v1464
    %1496 = vmatprep.subr.bf16.mxu0 0
    %1497 = vmatpush2.bf16.msra.mxu0 0
    %1498 = vmatprep.subr.bf16.mxu0 0
    %1499 = vmatpush2.bf16.msra.mxu0 0
    %1500 = vmatprep.subr.bf16.mxu0 0
    %1501 = vmatpush2.bf16.msra.mxu0 0
    %1502 = vmatprep.subr.bf16.mxu0 0
    %1503 = vmatpush2.bf16.msra.mxu0 0
    %1504 = vmatprep.subr.bf16.mxu0 0
    %1505 = vmatpush2.bf16.msra.mxu0 0
    %1506 = vmatprep.subr.bf16.mxu0 0
    %1507 = vmatpush2.bf16.msra.mxu0 0
    %1508 = vmatprep.subr.bf16.mxu0 0
    %1509 = vmatpush2.bf16.msra.mxu0 0
    %1510 = vmatprep.subr.bf16.mxu0 0
    %1511 = vmatpush2.bf16.msra.mxu0 0
    %1512 = vmatprep.mubr.bf16.mxu0 0
    %1513 = vmatmul.mubr.bf16.gmra.mxu0 %v1295
    %v1514 = vpop.f32.mrf.mxu0
    %v1515 = vadd.f32 0.0, %v1514
    %v1516 = vpop.f32.mrf.mxu0
    %v1517 = vpop.f32.mrf.mxu0
    %v1518 = vadd.f32 0.0, %v1517
    %v1519 = vpop.f32.mrf.mxu0
    %1520 = vmatprep.mubr.bf16.mxu0 0
    %1521 = vmatmul.mubr.bf16.gmra.mxu0 %v1296
    %v1522 = vpop.f32.mrf.mxu0
    %v1523 = vadd.f32 0.0, %v1522
    %v1524 = vpop.f32.mrf.mxu0
    %v1525 = vpop.f32.mrf.mxu0
    %v1526 = vadd.f32 0.0, %v1525
    %v1527 = vpop.f32.mrf.mxu0
    %1528 = vdwg.mxu0
    %v1545 = vunpack.c.l.b16 %v1399
    %v1546 = vunpack.c.l.b16 %v1400
    %v1547 = vunpack.c.l.b16 %v1401
    %v1548 = vunpack.c.l.b16 %v1402
    %v1549 = vunpack.c.l.b16 %v1403
    %v1550 = vunpack.c.l.b16 %v1404
    %v1551 = vunpack.c.l.b16 %v1405
    %v1552 = vunpack.c.l.b16 %v1406
    %v1553 = vunpack.c.l.b16 %v1407
    %v1554 = vunpack.c.l.b16 %v1408
    %v1555 = vunpack.c.l.b16 %v1409
    %v1556 = vunpack.c.l.b16 %v1410
    %v1557 = vunpack.c.l.b16 %v1411
    %v1558 = vunpack.c.l.b16 %v1412
    %v1559 = vunpack.c.l.b16 %v1413
    %v1560 = vunpack.c.l.b16 %v1414
    %v1561 = vpack.c.b16 %v1546, %v1545
    %v1562 = vpack.c.b16 %v1548, %v1547
    %v1563 = vpack.c.b16 %v1550, %v1549
    %v1564 = vpack.c.b16 %v1552, %v1551
    %v1565 = vpack.c.b16 %v1554, %v1553
    %v1566 = vpack.c.b16 %v1556, %v1555
    %v1567 = vpack.c.b16 %v1558, %v1557
    %v1568 = vpack.c.b16 %v1560, %v1559
    %1577 = vmatprep.subr.bf16.mxu0 0
    %1578 = vmatpush1.bf16.msra.mxu0 %v1568
    %1579 = vmatprep.subr.bf16.mxu0 0
    %1580 = vmatpush1.bf16.msra.mxu0 %v1567
    %1581 = vmatprep.subr.bf16.mxu0 0
    %1582 = vmatpush1.bf16.msra.mxu0 %v1566
    %1583 = vmatprep.subr.bf16.mxu0 0
    %1584 = vmatpush1.bf16.msra.mxu0 %v1565
    %1585 = vmatprep.subr.bf16.mxu0 0
    %1586 = vmatpush1.bf16.msra.mxu0 %v1564
    %1587 = vmatprep.subr.bf16.mxu0 0
    %1588 = vmatpush1.bf16.msra.mxu0 %v1563
    %1589 = vmatprep.subr.bf16.mxu0 0
    %1590 = vmatpush1.bf16.msra.mxu0 %v1562
    %1591 = vmatprep.subr.bf16.mxu0 0
    %1592 = vmatpush1.bf16.msra.mxu0 %v1561
    %1593 = vmatprep.subr.bf16.mxu0 0
    %1594 = vmatpush2.bf16.msra.mxu0 0
    %1595 = vmatprep.subr.bf16.mxu0 0
    %1596 = vmatpush2.bf16.msra.mxu0 0
    %1597 = vmatprep.subr.bf16.mxu0 0
    %1598 = vmatpush2.bf16.msra.mxu0 0
    %1599 = vmatprep.subr.bf16.mxu0 0
    %1600 = vmatpush2.bf16.msra.mxu0 0
    %1601 = vmatprep.subr.bf16.mxu0 0
    %1602 = vmatpush2.bf16.msra.mxu0 0
    %1603 = vmatprep.subr.bf16.mxu0 0
    %1604 = vmatpush2.bf16.msra.mxu0 0
    %1605 = vmatprep.subr.bf16.mxu0 0
    %1606 = vmatpush2.bf16.msra.mxu0 0
    %1607 = vmatprep.subr.bf16.mxu0 0
    %1608 = vmatpush2.bf16.msra.mxu0 0
    %1609 = vmatprep.mubr.bf16.mxu0 0
    %1610 = vmatmul.mubr.bf16.gmra.mxu0 %v1346
    %v1611 = vpop.f32.mrf.mxu0
    %v1612 = vadd.f32 %v1515, %v1611
    %v1613 = vpop.f32.mrf.mxu0
    %v1614 = vpop.f32.mrf.mxu0
    %v1615 = vadd.f32 %v1518, %v1614
    %v1616 = vpop.f32.mrf.mxu0
    %1617 = vmatprep.mubr.bf16.mxu0 0
    %1618 = vmatmul.mubr.bf16.gmra.mxu0 %v1347
    %v1619 = vpop.f32.mrf.mxu0
    %v1620 = vadd.f32 %v1523, %v1619
    %v1621 = vpop.f32.mrf.mxu0
    %v1622 = vpop.f32.mrf.mxu0
    %v1623 = vadd.f32 %v1526, %v1622
    %v1624 = vpop.f32.mrf.mxu0
    %1625 = vdwg.mxu0
    %s1626 = scalar_lea.vmem [#allocation9], 128
    %v1627 = vld [vmem:[%s1626] sm:$0xf]
    %v1628 = vld [vmem:[%s1626 + $0x4] sm:$0xf]
    %v1629 = vld [vmem:[%s1626 + $0x8] sm:$0xf]
    %v1630 = vld [vmem:[%s1626 + $0xc] sm:$0xf]
    %v1631 = vld [vmem:[%s1626 + $0x10] sm:$0xf]
    %v1632 = vld [vmem:[%s1626 + $0x14] sm:$0xf]
    %v1633 = vld [vmem:[%s1626 + $0x18] sm:$0xf]
    %v1634 = vld [vmem:[%s1626 + $0x1c] sm:$0xf]
    %v1635 = vld [vmem:[%s1626 + $0x20] sm:$0xf]
    %v1636 = vld [vmem:[%s1626 + $0x24] sm:$0xf]
    %v1637 = vld [vmem:[%s1626 + $0x28] sm:$0xf]
    %v1638 = vld [vmem:[%s1626 + $0x2c] sm:$0xf]
    %v1639 = vld [vmem:[%s1626 + $0x30] sm:$0xf]
    %v1640 = vld [vmem:[%s1626 + $0x34] sm:$0xf]
    %v1641 = vld [vmem:[%s1626 + $0x38] sm:$0xf]
    %v1642 = vld [vmem:[%s1626 + $0x3c] sm:$0xf]
    %v1659 = vunpack.c.l.b16 %v1627
    %v1660 = vunpack.c.l.b16 %v1628
    %v1661 = vunpack.c.l.b16 %v1629
    %v1662 = vunpack.c.l.b16 %v1630
    %v1663 = vunpack.c.l.b16 %v1631
    %v1664 = vunpack.c.l.b16 %v1632
    %v1665 = vunpack.c.l.b16 %v1633
    %v1666 = vunpack.c.l.b16 %v1634
    %v1667 = vunpack.c.l.b16 %v1635
    %v1668 = vunpack.c.l.b16 %v1636
    %v1669 = vunpack.c.l.b16 %v1637
    %v1670 = vunpack.c.l.b16 %v1638
    %v1671 = vunpack.c.l.b16 %v1639
    %v1672 = vunpack.c.l.b16 %v1640
    %v1673 = vunpack.c.l.b16 %v1641
    %v1674 = vunpack.c.l.b16 %v1642
    %v1675 = vpack.c.b16 %v1660, %v1659
    %v1676 = vpack.c.b16 %v1662, %v1661
    %v1677 = vpack.c.b16 %v1664, %v1663
    %v1678 = vpack.c.b16 %v1666, %v1665
    %v1679 = vpack.c.b16 %v1668, %v1667
    %v1680 = vpack.c.b16 %v1670, %v1669
    %v1681 = vpack.c.b16 %v1672, %v1671
    %v1682 = vpack.c.b16 %v1674, %v1673
    %1691 = vmatprep.subr.bf16.mxu0 0
    %1692 = vmatpush1.bf16.msra.mxu0 %v1682
    %1693 = vmatprep.subr.bf16.mxu0 0
    %1694 = vmatpush1.bf16.msra.mxu0 %v1681
    %1695 = vmatprep.subr.bf16.mxu0 0
    %1696 = vmatpush1.bf16.msra.mxu0 %v1680
    %1697 = vmatprep.subr.bf16.mxu0 0
    %1698 = vmatpush1.bf16.msra.mxu0 %v1679
    %1699 = vmatprep.subr.bf16.mxu0 0
    %1700 = vmatpush1.bf16.msra.mxu0 %v1678
    %1701 = vmatprep.subr.bf16.mxu0 0
    %1702 = vmatpush1.bf16.msra.mxu0 %v1677
    %1703 = vmatprep.subr.bf16.mxu0 0
    %1704 = vmatpush1.bf16.msra.mxu0 %v1676
    %1705 = vmatprep.subr.bf16.mxu0 0
    %1706 = vmatpush1.bf16.msra.mxu0 %v1675
    %1707 = vmatprep.subr.bf16.mxu0 0
    %1708 = vmatpush2.bf16.msra.mxu0 0
    %1709 = vmatprep.subr.bf16.mxu0 0
    %1710 = vmatpush2.bf16.msra.mxu0 0
    %1711 = vmatprep.subr.bf16.mxu0 0
    %1712 = vmatpush2.bf16.msra.mxu0 0
    %1713 = vmatprep.subr.bf16.mxu0 0
    %1714 = vmatpush2.bf16.msra.mxu0 0
    %1715 = vmatprep.subr.bf16.mxu0 0
    %1716 = vmatpush2.bf16.msra.mxu0 0
    %1717 = vmatprep.subr.bf16.mxu0 0
    %1718 = vmatpush2.bf16.msra.mxu0 0
    %1719 = vmatprep.subr.bf16.mxu0 0
    %1720 = vmatpush2.bf16.msra.mxu0 0
    %1721 = vmatprep.subr.bf16.mxu0 0
    %1722 = vmatpush2.bf16.msra.mxu0 0
    %1723 = vmatprep.mubr.bf16.mxu0 0
    %1724 = vmatmul.mubr.bf16.gmra.mxu0 %v1397
    %v1725 = vpop.f32.mrf.mxu0
    %v1726 = vadd.f32 0.0, %v1725
    %v1727 = vpop.f32.mrf.mxu0
    %v1728 = vpop.f32.mrf.mxu0
    %v1729 = vadd.f32 0.0, %v1728
    %v1730 = vpop.f32.mrf.mxu0
    %1731 = vmatprep.mubr.bf16.mxu0 0
    %1732 = vmatmul.mubr.bf16.gmra.mxu0 %v1398
    %v1733 = vpop.f32.mrf.mxu0
    %v1734 = vadd.f32 0.0, %v1733
    %v1735 = vpop.f32.mrf.mxu0
    %v1736 = vpop.f32.mrf.mxu0
    %v1737 = vadd.f32 0.0, %v1736
    %v1738 = vpop.f32.mrf.mxu0
    %1739 = vdwg.mxu0
    %v1740 = vadd.f32 %v1612, %v1726
    %v1741 = vadd.f32 %v1615, %v1729
    %v1742 = vadd.f32 %v1620, %v1734
    %v1743 = vadd.f32 %v1623, %v1737
    %v1744 = vmul.f32 %v1740, %v843
    %v1745 = vmul.f32 %v1741, %v845
    %v1746 = vmul.f32 %v1742, %v847
    %v1747 = vmul.f32 %v1743, %v849
    %v1748 = vadd.f32 %v1744, %v1745
    %v1749 = vadd.f32 %v1748, %v1746
    %v1750 = vadd.f32 %v1749, %v1747
    %v1751 = vrot.slane %v1750, 4
    %v1752 = vadd.f32 %v1750, %v1751
    %v1753 = vrot.slane %v1752, 2
    %v1754 = vadd.f32 %v1752, %v1753
    %v1755 = vrot.slane %v1754, 1
    %v1756 = vadd.f32 %v1754, %v1755
    %v1757 = vmul.f32 %v1744, %v1744
    %v1758 = vmul.f32 %v1745, %v1745
    %v1759 = vmul.f32 %v1746, %v1746
    %v1760 = vmul.f32 %v1747, %v1747
    %v1761 = vadd.f32 %v1757, %v1758
    %v1762 = vadd.f32 %v1761, %v1759
    %v1763 = vadd.f32 %v1762, %v1760
    %v1764 = vrot.slane %v1763, 4
    %v1765 = vadd.f32 %v1763, %v1764
    %v1766 = vrot.slane %v1765, 2
    %v1767 = vadd.f32 %v1765, %v1766
    %v1768 = vrot.slane %v1767, 1
    %v1769 = vadd.f32 %v1767, %v1768
    %1770 = vrot.lane.b32.xlu0 %v1756, 8
    %v1771 = vpop.permute.xlu0 %1770
    %v1772 = vadd.f32 %v1756, %v1771
    %1773 = vrot.lane.b32.xlu0 %v1769, 8
    %v1774 = vpop.permute.xlu0 %1773
    %v1775 = vadd.f32 %v1769, %v1774
    %1776 = vrot.lane.b32.xlu0 %v1772, 16
    %v1777 = vpop.permute.xlu0 %1776
    %v1778 = vadd.f32 %v1772, %v1777
    %1779 = vrot.lane.b32.xlu0 %v1775, 16
    %v1780 = vpop.permute.xlu0 %1779
    %v1781 = vadd.f32 %v1775, %v1780
    %1782 = vrot.lane.b32.xlu0 %v1778, 32
    %v1783 = vpop.permute.xlu0 %1782
    %v1784 = vadd.f32 %v1778, %v1783
    %1785 = vrot.lane.b32.xlu0 %v1781, 32
    %v1786 = vpop.permute.xlu0 %1785
    %v1787 = vadd.f32 %v1781, %v1786
    %1788 = vrot.lane.b32.xlu0 %v1784, 64
    %v1789 = vpop.permute.xlu0 %1788
    %v1790 = vadd.f32 %v1784, %v1789
    %1791 = vrot.lane.b32.xlu0 %v1787, 64
    %v1792 = vpop.permute.xlu0 %1791
    %v1793 = vadd.f32 %v1787, %v1792
    %v1794 = vmul.f32 %v1790, 0.001953125
    %v1795 = vmul.f32 %v1793, 0.001953125
    %v1796 = vmul.f32 %v1794, %v1794
    %v1797 = vsub.f32 %v1795, %v1796
    %v1798 = vlaneseq
    %v1799 = vshrl.u32 %v1798, 7
    %v1800 = vsub.s32 0, %v1799
    %v1801 = vrot.slane %v1794, %v1800
    %v1802 = vsub.f32 %v1744, %v1801
    %v1803 = vsub.f32 %v1745, %v1801
    %v1804 = vsub.f32 %v1746, %v1801
    %v1805 = vsub.f32 %v1747, %v1801
    %v1806 = vadd.f32 %v1797, 1e-05
    %v1807 = vrsqrt.pop %v1806
    %v1808 = vlaneseq
    %v1809 = vshrl.u32 %v1808, 7
    %v1810 = vsub.s32 0, %v1809
    %v1811 = vrot.slane %v1807, %v1810
    %v1812 = vmul.f32 %v1802, %v1811
    %v1813 = vmul.f32 %v1803, %v1811
    %v1814 = vmul.f32 %v1804, %v1811
    %v1815 = vmul.f32 %v1805, %v1811
    %v1816 = vld [vmem:[#allocation12] sm:$0x1]
    %v1818 = vlaneseq
    %v1819 = vshrl.u32 %v1818, 7
    %v1820 = vsub.s32 0, %v1819
    %v1821 = vrot.slane %v1816, %v1820
    %v1823 = vmul.f32 %v1812, %v1821
    %v1824 = vmul.f32 %v1813, %v1821
    %v1825 = vmul.f32 %v1814, %v1821
    %v1826 = vmul.f32 %v1815, %v1821
    %v1827 = vld [vmem:[#allocation13] sm:$0x1]
    %v1829 = vlaneseq
    %v1830 = vshrl.u32 %v1829, 7
    %v1831 = vsub.s32 0, %v1830
    %v1832 = vrot.slane %v1827, %v1831
    %v1834 = vadd.f32 %v1823, %v1832
    %v1835 = vadd.f32 %v1824, %v1832
    %v1836 = vadd.f32 %v1825, %v1832
    %v1837 = vadd.f32 %v1826, %v1832
    %vm1838 = vcmp.ge.f32.partialorder %v1834, 0.0
    %vm1839 = vcmp.ge.f32.partialorder %v1835, 0.0
    %vm1840 = vcmp.ge.f32.partialorder %v1836, 0.0
    %vm1841 = vcmp.ge.f32.partialorder %v1837, 0.0
    %v1842 = vmul.f32 %v1834, 0.01
    %v1843 = vmul.f32 %v1835, 0.01
    %v1844 = vmul.f32 %v1836, 0.01
    %v1845 = vmul.f32 %v1837, 0.01
    %v1846 = vsel %vm1838, %v1834, %v1842
    %v1847 = vsel %vm1839, %v1835, %v1843
    %v1848 = vsel %vm1840, %v1836, %v1844
    %v1849 = vsel %vm1841, %v1837, %v1845
    %v1850 = vpack.c.bf16 %v1847, %v1846
    %v1851 = vpack.c.bf16 %v1849, %v1848
    %v1852 = vld [vmem:[#allocation15] sm:$0xf]
    %v1853 = vld [vmem:[#allocation15 + $0x4] sm:$0xf]
    %v1856 = vunpack.c.l.b16 %v1852
    %v1857 = vunpack.c.l.b16 %v1853
    %v1858 = vpack.c.b16 %v1857, %v1856
    %v1860 = vsel %vm864, %v1858, 0
    %1862 = vmatprep.subr.bf16.mxu0 0
    %1863 = vmatpush1.bf16.msra.mxu0 0
    %1864 = vmatprep.subr.bf16.mxu0 0
    %1865 = vmatpush1.bf16.msra.mxu0 0
    %1866 = vmatprep.subr.bf16.mxu0 0
    %1867 = vmatpush1.bf16.msra.mxu0 0
    %1868 = vmatprep.subr.bf16.mxu0 0
    %1869 = vmatpush1.bf16.msra.mxu0 0
    %1870 = vmatprep.subr.bf16.mxu0 0
    %1871 = vmatpush1.bf16.msra.mxu0 0
    %1872 = vmatprep.subr.bf16.mxu0 0
    %1873 = vmatpush1.bf16.msra.mxu0 0
    %1874 = vmatprep.subr.bf16.mxu0 0
    %1875 = vmatpush1.bf16.msra.mxu0 %v1851
    %1876 = vmatprep.subr.bf16.mxu0 0
    %1877 = vmatpush1.bf16.msra.mxu0 %v1850
    %1878 = vmatprep.subr.bf16.mxu0 0
    %1879 = vmatpush2.bf16.msra.mxu0 0
    %1880 = vmatprep.subr.bf16.mxu0 0
    %1881 = vmatpush2.bf16.msra.mxu0 0
    %1882 = vmatprep.subr.bf16.mxu0 0
    %1883 = vmatpush2.bf16.msra.mxu0 0
    %1884 = vmatprep.subr.bf16.mxu0 0
    %1885 = vmatpush2.bf16.msra.mxu0 0
    %1886 = vmatprep.subr.bf16.mxu0 0
    %1887 = vmatpush2.bf16.msra.mxu0 0
    %1888 = vmatprep.subr.bf16.mxu0 0
    %1889 = vmatpush2.bf16.msra.mxu0 0
    %1890 = vmatprep.subr.bf16.mxu0 0
    %1891 = vmatpush2.bf16.msra.mxu0 0
    %1892 = vmatprep.subr.bf16.mxu0 0
    %1893 = vmatpush2.bf16.msra.mxu0 0
    %1894 = vmatprep.mubr.bf16.mxu0 0
    %1895 = vmatmul.mubr.bf16.gmra.mxu0 %v1860
    %v1896 = vpop.f32.mrf.mxu0
    %v1897 = vadd.f32 0.0, %v1896
    %v1898 = vpop.f32.mrf.mxu0
    %v1899 = vpop.f32.mrf.mxu0
    %v1900 = vadd.f32 0.0, %v1899
    %v1901 = vpop.f32.mrf.mxu0
    %1902 = vdwg.mxu0
    %v1903 = vld [vmem:[#allocation16] sm:$0xf]
    %v1904 = vld [vmem:[#allocation16 + $0x4] sm:$0xf]
    %v1907 = vunpack.c.l.b16 %v1903
    %v1908 = vunpack.c.l.b16 %v1904
    %v1909 = vpack.c.b16 %v1908, %v1907
    %v1911 = vsel %vm864, %v1909, 0
    %1913 = vmatprep.subr.bf16.mxu0 0
    %1914 = vmatpush1.bf16.msra.mxu0 0
    %1915 = vmatprep.subr.bf16.mxu0 0
    %1916 = vmatpush1.bf16.msra.mxu0 0
    %1917 = vmatprep.subr.bf16.mxu0 0
    %1918 = vmatpush1.bf16.msra.mxu0 0
    %1919 = vmatprep.subr.bf16.mxu0 0
    %1920 = vmatpush1.bf16.msra.mxu0 0
    %1921 = vmatprep.subr.bf16.mxu0 0
    %1922 = vmatpush1.bf16.msra.mxu0 0
    %1923 = vmatprep.subr.bf16.mxu0 0
    %1924 = vmatpush1.bf16.msra.mxu0 0
    %1925 = vmatprep.subr.bf16.mxu0 0
    %1926 = vmatpush1.bf16.msra.mxu0 %v1851
    %1927 = vmatprep.subr.bf16.mxu0 0
    %1928 = vmatpush1.bf16.msra.mxu0 %v1850
    %1929 = vmatprep.subr.bf16.mxu0 0
    %1930 = vmatpush2.bf16.msra.mxu0 0
    %1931 = vmatprep.subr.bf16.mxu0 0
    %1932 = vmatpush2.bf16.msra.mxu0 0
    %1933 = vmatprep.subr.bf16.mxu0 0
    %1934 = vmatpush2.bf16.msra.mxu0 0
    %1935 = vmatprep.subr.bf16.mxu0 0
    %1936 = vmatpush2.bf16.msra.mxu0 0
    %1937 = vmatprep.subr.bf16.mxu0 0
    %1938 = vmatpush2.bf16.msra.mxu0 0
    %1939 = vmatprep.subr.bf16.mxu0 0
    %1940 = vmatpush2.bf16.msra.mxu0 0
    %1941 = vmatprep.subr.bf16.mxu0 0
    %1942 = vmatpush2.bf16.msra.mxu0 0
    %1943 = vmatprep.subr.bf16.mxu0 0
    %1944 = vmatpush2.bf16.msra.mxu0 0
    %1945 = vmatprep.mubr.bf16.mxu0 0
    %1946 = vmatmul.mubr.bf16.gmra.mxu0 %v1911
    %v1947 = vpop.f32.mrf.mxu0
    %v1948 = vadd.f32 0.0, %v1947
    %v1949 = vpop.f32.mrf.mxu0
    %v1950 = vpop.f32.mrf.mxu0
    %v1951 = vadd.f32 0.0, %v1950
    %v1952 = vpop.f32.mrf.mxu0
    %1953 = vdwg.mxu0
    %v1954 = vmax.f32 %v1897, %v1948
    %v1955 = vmax.f32 %v1900, %v1951
    %v1956 = vpack.c.bf16 %v1955, %v1954
    %v1957 = vld [vmem:[%s23] sm:$0xf]
    %v1958 = vld [vmem:[%s23 + $0x4] sm:$0xf]
    %v1959 = vld [vmem:[%s23 + $0x8] sm:$0xf]
    %v1960 = vld [vmem:[%s23 + $0xc] sm:$0xf]
    %v1961 = vld [vmem:[%s23 + $0x10] sm:$0xf]
    %v1962 = vld [vmem:[%s23 + $0x14] sm:$0xf]
    %v1963 = vld [vmem:[%s23 + $0x18] sm:$0xf]
    %v1964 = vld [vmem:[%s23 + $0x1c] sm:$0xf]
    %v1965 = vld [vmem:[%s23 + $0x20] sm:$0xf]
    %v1966 = vld [vmem:[%s23 + $0x24] sm:$0xf]
    %v1967 = vld [vmem:[%s23 + $0x28] sm:$0xf]
    %v1968 = vld [vmem:[%s23 + $0x2c] sm:$0xf]
    %v1969 = vld [vmem:[%s23 + $0x30] sm:$0xf]
    %v1970 = vld [vmem:[%s23 + $0x34] sm:$0xf]
    %v1971 = vld [vmem:[%s23 + $0x38] sm:$0xf]
    %v1972 = vld [vmem:[%s23 + $0x3c] sm:$0xf]
    %v1989 = vunpack.c.l.b16 %v1957
    %v1990 = vunpack.c.l.b16 %v1958
    %v1991 = vunpack.c.l.b16 %v1959
    %v1992 = vunpack.c.l.b16 %v1960
    %v1993 = vunpack.c.l.b16 %v1961
    %v1994 = vunpack.c.l.b16 %v1962
    %v1995 = vunpack.c.l.b16 %v1963
    %v1996 = vunpack.c.l.b16 %v1964
    %v1997 = vunpack.c.l.b16 %v1965
    %v1998 = vunpack.c.l.b16 %v1966
    %v1999 = vunpack.c.l.b16 %v1967
    %v2000 = vunpack.c.l.b16 %v1968
    %v2001 = vunpack.c.l.b16 %v1969
    %v2002 = vunpack.c.l.b16 %v1970
    %v2003 = vunpack.c.l.b16 %v1971
    %v2004 = vunpack.c.l.b16 %v1972
    %v2005 = vpack.c.b16 %v1990, %v1989
    %v2006 = vpack.c.b16 %v1992, %v1991
    %v2007 = vpack.c.b16 %v1994, %v1993
    %v2008 = vpack.c.b16 %v1996, %v1995
    %v2009 = vpack.c.b16 %v1998, %v1997
    %v2010 = vpack.c.b16 %v2000, %v1999
    %v2011 = vpack.c.b16 %v2002, %v2001
    %v2012 = vpack.c.b16 %v2004, %v2003
    %2021 = vmatprep.subr.bf16.mxu0 0
    %2022 = vmatpush1.bf16.msra.mxu0 %v2012
    %2023 = vmatprep.subr.bf16.mxu0 0
    %2024 = vmatpush1.bf16.msra.mxu0 %v2011
    %2025 = vmatprep.subr.bf16.mxu0 0
    %2026 = vmatpush1.bf16.msra.mxu0 %v2010
    %2027 = vmatprep.subr.bf16.mxu0 0
    %2028 = vmatpush1.bf16.msra.mxu0 %v2009
    %2029 = vmatprep.subr.bf16.mxu0 0
    %2030 = vmatpush1.bf16.msra.mxu0 %v2008
    %2031 = vmatprep.subr.bf16.mxu0 0
    %2032 = vmatpush1.bf16.msra.mxu0 %v2007
    %2033 = vmatprep.subr.bf16.mxu0 0
    %2034 = vmatpush1.bf16.msra.mxu0 %v2006
    %2035 = vmatprep.subr.bf16.mxu0 0
    %2036 = vmatpush1.bf16.msra.mxu0 %v2005
    %2037 = vmatprep.subr.bf16.mxu0 0
    %2038 = vmatpush2.bf16.msra.mxu0 0
    %2039 = vmatprep.subr.bf16.mxu0 0
    %2040 = vmatpush2.bf16.msra.mxu0 0
    %2041 = vmatprep.subr.bf16.mxu0 0
    %2042 = vmatpush2.bf16.msra.mxu0 0
    %2043 = vmatprep.subr.bf16.mxu0 0
    %2044 = vmatpush2.bf16.msra.mxu0 0
    %2045 = vmatprep.subr.bf16.mxu0 0
    %2046 = vmatpush2.bf16.msra.mxu0 0
    %2047 = vmatprep.subr.bf16.mxu0 0
    %2048 = vmatpush2.bf16.msra.mxu0 0
    %2049 = vmatprep.subr.bf16.mxu0 0
    %2050 = vmatpush2.bf16.msra.mxu0 0
    %2051 = vmatprep.subr.bf16.mxu0 0
    %2052 = vmatpush2.bf16.msra.mxu0 0
    %2053 = vmatprep.mubr.bf16.mxu0 0
    %2054 = vmatmul.mubr.bf16.gmra.mxu0 %v1956
    %v2055 = vpop.f32.mrf.mxu0
    %v2056 = vadd.f32 0.0, %v2055
    %v2057 = vpop.f32.mrf.mxu0
    %v2058 = vpop.f32.mrf.mxu0
    %v2059 = vadd.f32 0.0, %v2058
    %v2060 = vpop.f32.mrf.mxu0
    %2061 = vdwg.mxu0
    %v2062 = vld [vmem:[%s25] sm:$0xf]
    %v2063 = vld [vmem:[%s25 + $0x4] sm:$0xf]
    %v2064 = vld [vmem:[%s25 + $0x8] sm:$0xf]
    %v2065 = vld [vmem:[%s25 + $0xc] sm:$0xf]
    %v2066 = vld [vmem:[%s25 + $0x10] sm:$0xf]
    %v2067 = vld [vmem:[%s25 + $0x14] sm:$0xf]
    %v2068 = vld [vmem:[%s25 + $0x18] sm:$0xf]
    %v2069 = vld [vmem:[%s25 + $0x1c] sm:$0xf]
    %v2070 = vld [vmem:[%s25 + $0x20] sm:$0xf]
    %v2071 = vld [vmem:[%s25 + $0x24] sm:$0xf]
    %v2072 = vld [vmem:[%s25 + $0x28] sm:$0xf]
    %v2073 = vld [vmem:[%s25 + $0x2c] sm:$0xf]
    %v2074 = vld [vmem:[%s25 + $0x30] sm:$0xf]
    %v2075 = vld [vmem:[%s25 + $0x34] sm:$0xf]
    %v2076 = vld [vmem:[%s25 + $0x38] sm:$0xf]
    %v2077 = vld [vmem:[%s25 + $0x3c] sm:$0xf]
    %v2094 = vunpack.c.l.b16 %v2062
    %v2095 = vunpack.c.l.b16 %v2063
    %v2096 = vunpack.c.l.b16 %v2064
    %v2097 = vunpack.c.l.b16 %v2065
    %v2098 = vunpack.c.l.b16 %v2066
    %v2099 = vunpack.c.l.b16 %v2067
    %v2100 = vunpack.c.l.b16 %v2068
    %v2101 = vunpack.c.l.b16 %v2069
    %v2102 = vunpack.c.l.b16 %v2070
    %v2103 = vunpack.c.l.b16 %v2071
    %v2104 = vunpack.c.l.b16 %v2072
    %v2105 = vunpack.c.l.b16 %v2073
    %v2106 = vunpack.c.l.b16 %v2074
    %v2107 = vunpack.c.l.b16 %v2075
    %v2108 = vunpack.c.l.b16 %v2076
    %v2109 = vunpack.c.l.b16 %v2077
    %v2110 = vpack.c.b16 %v2095, %v2094
    %v2111 = vpack.c.b16 %v2097, %v2096
    %v2112 = vpack.c.b16 %v2099, %v2098
    %v2113 = vpack.c.b16 %v2101, %v2100
    %v2114 = vpack.c.b16 %v2103, %v2102
    %v2115 = vpack.c.b16 %v2105, %v2104
    %v2116 = vpack.c.b16 %v2107, %v2106
    %v2117 = vpack.c.b16 %v2109, %v2108
    %2126 = vmatprep.subr.bf16.mxu0 0
    %2127 = vmatpush1.bf16.msra.mxu0 %v2117
    %2128 = vmatprep.subr.bf16.mxu0 0
    %2129 = vmatpush1.bf16.msra.mxu0 %v2116
    %2130 = vmatprep.subr.bf16.mxu0 0
    %2131 = vmatpush1.bf16.msra.mxu0 %v2115
    %2132 = vmatprep.subr.bf16.mxu0 0
    %2133 = vmatpush1.bf16.msra.mxu0 %v2114
    %2134 = vmatprep.subr.bf16.mxu0 0
    %2135 = vmatpush1.bf16.msra.mxu0 %v2113
    %2136 = vmatprep.subr.bf16.mxu0 0
    %2137 = vmatpush1.bf16.msra.mxu0 %v2112
    %2138 = vmatprep.subr.bf16.mxu0 0
    %2139 = vmatpush1.bf16.msra.mxu0 %v2111
    %2140 = vmatprep.subr.bf16.mxu0 0
    %2141 = vmatpush1.bf16.msra.mxu0 %v2110
    %2142 = vmatprep.subr.bf16.mxu0 0
    %2143 = vmatpush2.bf16.msra.mxu0 0
    %2144 = vmatprep.subr.bf16.mxu0 0
    %2145 = vmatpush2.bf16.msra.mxu0 0
    %2146 = vmatprep.subr.bf16.mxu0 0
    %2147 = vmatpush2.bf16.msra.mxu0 0
    %2148 = vmatprep.subr.bf16.mxu0 0
    %2149 = vmatpush2.bf16.msra.mxu0 0
    %2150 = vmatprep.subr.bf16.mxu0 0
    %2151 = vmatpush2.bf16.msra.mxu0 0
    %2152 = vmatprep.subr.bf16.mxu0 0
    %2153 = vmatpush2.bf16.msra.mxu0 0
    %2154 = vmatprep.subr.bf16.mxu0 0
    %2155 = vmatpush2.bf16.msra.mxu0 0
    %2156 = vmatprep.subr.bf16.mxu0 0
    %2157 = vmatpush2.bf16.msra.mxu0 0
    %2158 = vmatprep.mubr.bf16.mxu0 0
    %2159 = vmatmul.mubr.bf16.gmra.mxu0 %v1956
    %v2160 = vpop.f32.mrf.mxu0
    %v2161 = vadd.f32 0.0, %v2160
    %v2162 = vpop.f32.mrf.mxu0
    %v2163 = vpop.f32.mrf.mxu0
    %v2164 = vadd.f32 0.0, %v2163
    %v2165 = vpop.f32.mrf.mxu0
    %2166 = vdwg.mxu0
    %v2167 = vmax.f32 %v2056, %v2161
    %v2168 = vmax.f32 %v2059, %v2164
    %v2169 = vpack.c.bf16 %v2168, %v2167
    %v2170 = vand.u32 %v783, 7
    %v2171 = vand.u32 %v784, 7
    %v2172 = vshra.s32 %v792, 4
    %vm2173 = vcmp.eq.s32.totalorder %v2170, 0
    %vm2174 = vcmp.eq.s32.totalorder %v2171, 0
    %v2175 = vsel %vm2173, 1, 0
    %v2176 = vsel %vm2174, 1, 0
    %v2177 = vcvt.s32.f32 %v2175
    %v2178 = vcvt.s32.f32 %v2176
    %v2179 = vsub.f32 3.0, %v2177
    %v2180 = vsub.f32 3.0, %v2178
    %vm2181 = vcmp.eq.s32.totalorder %v2170, 7
    %vm2182 = vcmp.eq.s32.totalorder %v2171, 7
    %v2183 = vsel %vm2181, 1, 0
    %v2184 = vsel %vm2182, 1, 0
    %v2185 = vcvt.s32.f32 %v2183
    %v2186 = vcvt.s32.f32 %v2184
    %v2187 = vsub.f32 %v2179, %v2185
    %v2188 = vsub.f32 %v2180, %v2186
    %vm2189 = vcmp.eq.s32.totalorder %v2172, 0
    %v2190 = vsel %vm2189, 1, 0
    %v2191 = vcvt.s32.f32 %v2190
    %v2192 = vsub.f32 3.0, %v2191
    %vm2193 = vcmp.eq.s32.totalorder %v2172, 7
    %v2194 = vsel %vm2193, 1, 0
    %v2195 = vcvt.s32.f32 %v2194
    %v2196 = vsub.f32 %v2192, %v2195
    %v2197 = vmul.f32 %v2187, %v2196
    %v2198 = vmul.f32 %v2188, %v2196
    %v2199 = vadd.f32 %v2197, 1e-08
    %v2200 = vadd.f32 %v2198, 1e-08
    %v2201 = vrcp.pop %v2199
    %v2202 = vmul.f32 9.0, %v2201
    %v2203 = vrcp.pop %v2200
    %v2204 = vmul.f32 9.0, %v2203
    %v2205 = vld [vmem:[#allocation18] sm:$0xf]
    %v2206 = vld [vmem:[#allocation18 + $0x4] sm:$0xf]
    %v2209 = vunpack.c.l.b16 %v2205
    %v2210 = vunpack.c.l.b16 %v2206
    %v2211 = vpack.c.b16 %v2210, %v2209
    %v2213 = vsel %vm1004, %v2211, 0
    %2215 = vmatprep.subr.bf16.mxu0 0
    %2216 = vmatpush1.bf16.msra.mxu0 0
    %2217 = vmatprep.subr.bf16.mxu0 0
    %2218 = vmatpush1.bf16.msra.mxu0 0
    %2219 = vmatprep.subr.bf16.mxu0 0
    %2220 = vmatpush1.bf16.msra.mxu0 0
    %2221 = vmatprep.subr.bf16.mxu0 0
    %2222 = vmatpush1.bf16.msra.mxu0 0
    %2223 = vmatprep.subr.bf16.mxu0 0
    %2224 = vmatpush1.bf16.msra.mxu0 0
    %2225 = vmatprep.subr.bf16.mxu0 0
    %2226 = vmatpush1.bf16.msra.mxu0 0
    %2227 = vmatprep.subr.bf16.mxu0 0
    %2228 = vmatpush1.bf16.msra.mxu0 0
    %2229 = vmatprep.subr.bf16.mxu0 0
    %2230 = vmatpush1.bf16.msra.mxu0 %v2169
    %2231 = vmatprep.subr.bf16.mxu0 0
    %2232 = vmatpush2.bf16.msra.mxu0 0
    %2233 = vmatprep.subr.bf16.mxu0 0
    %2234 = vmatpush2.bf16.msra.mxu0 0
    %2235 = vmatprep.subr.bf16.mxu0 0
    %2236 = vmatpush2.bf16.msra.mxu0 0
    %2237 = vmatprep.subr.bf16.mxu0 0
    %2238 = vmatpush2.bf16.msra.mxu0 0
    %2239 = vmatprep.subr.bf16.mxu0 0
    %2240 = vmatpush2.bf16.msra.mxu0 0
    %2241 = vmatprep.subr.bf16.mxu0 0
    %2242 = vmatpush2.bf16.msra.mxu0 0
    %2243 = vmatprep.subr.bf16.mxu0 0
    %2244 = vmatpush2.bf16.msra.mxu0 0
    %2245 = vmatprep.subr.bf16.mxu0 0
    %2246 = vmatpush2.bf16.msra.mxu0 0
    %2247 = vmatprep.mubr.bf16.mxu0 0
    %2248 = vmatmul.mubr.bf16.gmra.mxu0 %v2213
    %v2249 = vpop.f32.mrf.mxu0
    %v2250 = vadd.f32 0.0, %v2249
    %v2251 = vpop.f32.mrf.mxu0
    %v2252 = vpop.f32.mrf.mxu0
    %v2253 = vadd.f32 0.0, %v2252
    %v2254 = vpop.f32.mrf.mxu0
    %2255 = vdwg.mxu0
    %v2256 = vpack.c.bf16 %v2253, %v2250
    %v2257 = vld [vmem:[#allocation19] sm:$0xf]
    %v2258 = vld [vmem:[#allocation19 + $0x4] sm:$0xf]
    %v2261 = vunpack.c.l.b16 %v2257
    %v2262 = vunpack.c.l.b16 %v2258
    %v2263 = vpack.c.b16 %v2262, %v2261
    %v2265 = vsel %vm1004, %v2263, 0
    %2267 = vmatprep.subr.bf16.mxu0 0
    %2268 = vmatpush1.bf16.msra.mxu0 0
    %2269 = vmatprep.subr.bf16.mxu0 0
    %2270 = vmatpush1.bf16.msra.mxu0 0
    %2271 = vmatprep.subr.bf16.mxu0 0
    %2272 = vmatpush1.bf16.msra.mxu0 0
    %2273 = vmatprep.subr.bf16.mxu0 0
    %2274 = vmatpush1.bf16.msra.mxu0 0
    %2275 = vmatprep.subr.bf16.mxu0 0
    %2276 = vmatpush1.bf16.msra.mxu0 0
    %2277 = vmatprep.subr.bf16.mxu0 0
    %2278 = vmatpush1.bf16.msra.mxu0 0
    %2279 = vmatprep.subr.bf16.mxu0 0
    %2280 = vmatpush1.bf16.msra.mxu0 0
    %2281 = vmatprep.subr.bf16.mxu0 0
    %2282 = vmatpush1.bf16.msra.mxu0 %v2169
    %2283 = vmatprep.subr.bf16.mxu0 0
    %2284 = vmatpush2.bf16.msra.mxu0 0
    %2285 = vmatprep.subr.bf16.mxu0 0
    %2286 = vmatpush2.bf16.msra.mxu0 0
    %2287 = vmatprep.subr.bf16.mxu0 0
    %2288 = vmatpush2.bf16.msra.mxu0 0
    %2289 = vmatprep.subr.bf16.mxu0 0
    %2290 = vmatpush2.bf16.msra.mxu0 0
    %2291 = vmatprep.subr.bf16.mxu0 0
    %2292 = vmatpush2.bf16.msra.mxu0 0
    %2293 = vmatprep.subr.bf16.mxu0 0
    %2294 = vmatpush2.bf16.msra.mxu0 0
    %2295 = vmatprep.subr.bf16.mxu0 0
    %2296 = vmatpush2.bf16.msra.mxu0 0
    %2297 = vmatprep.subr.bf16.mxu0 0
    %2298 = vmatpush2.bf16.msra.mxu0 0
    %2299 = vmatprep.mubr.bf16.mxu0 0
    %2300 = vmatmul.mubr.bf16.gmra.mxu0 %v2265
    %v2301 = vpop.f32.mrf.mxu0
    %v2302 = vadd.f32 0.0, %v2301
    %v2303 = vpop.f32.mrf.mxu0
    %v2304 = vpop.f32.mrf.mxu0
    %v2305 = vadd.f32 0.0, %v2304
    %v2306 = vpop.f32.mrf.mxu0
    %2307 = vdwg.mxu0
    %v2308 = vpack.c.bf16 %v2305, %v2302
    %v2309 = vld [vmem:[#allocation21] sm:$0xf]
    %v2310 = vld [vmem:[#allocation21 + $0x4] sm:$0xf]
    %v2311 = vld [vmem:[#allocation21 + $0x8] sm:$0xf]
    %v2312 = vld [vmem:[#allocation21 + $0xc] sm:$0xf]
    %v2313 = vld [vmem:[#allocation21 + $0x10] sm:$0xf]
    %v2314 = vld [vmem:[#allocation21 + $0x14] sm:$0xf]
    %v2315 = vld [vmem:[#allocation21 + $0x18] sm:$0xf]
    %v2316 = vld [vmem:[#allocation21 + $0x1c] sm:$0xf]
    %s2317 = scalar_lea.vmem [#allocation21], 32
    %v2318 = vld [vmem:[%s2317] sm:$0xf]
    %v2319 = vld [vmem:[%s2317 + $0x4] sm:$0xf]
    %v2320 = vld [vmem:[%s2317 + $0x8] sm:$0xf]
    %v2321 = vld [vmem:[%s2317 + $0xc] sm:$0xf]
    %v2322 = vld [vmem:[%s2317 + $0x10] sm:$0xf]
    %v2323 = vld [vmem:[%s2317 + $0x14] sm:$0xf]
    %v2324 = vld [vmem:[%s2317 + $0x18] sm:$0xf]
    %v2325 = vld [vmem:[%s2317 + $0x1c] sm:$0xf]
    %v2334 = vunpack.c.l.b16 %v2318
    %v2335 = vunpack.c.l.b16 %v2319
    %v2336 = vunpack.c.l.b16 %v2320
    %v2337 = vunpack.c.l.b16 %v2321
    %v2338 = vunpack.c.l.b16 %v2322
    %v2339 = vunpack.c.l.b16 %v2323
    %v2340 = vunpack.c.l.b16 %v2324
    %v2341 = vunpack.c.l.b16 %v2325
    %v2342 = vpack.c.b16 %v2335, %v2334
    %v2343 = vpack.c.b16 %v2337, %v2336
    %v2344 = vpack.c.b16 %v2339, %v2338
    %v2345 = vpack.c.b16 %v2341, %v2340
    %vm2350 = vcmask 523264
    %v2352 = vsel %vm2350, %v2169, 0
    %2354 = vmatprep.subr.bf16.mxu0 0
    %2355 = vmatpush1.bf16.msra.mxu0 0
    %2356 = vmatprep.subr.bf16.mxu0 0
    %2357 = vmatpush1.bf16.msra.mxu0 0
    %2358 = vmatprep.subr.bf16.mxu0 0
    %2359 = vmatpush1.bf16.msra.mxu0 0
    %2360 = vmatprep.subr.bf16.mxu0 0
    %2361 = vmatpush1.bf16.msra.mxu0 0
    %2362 = vmatprep.subr.bf16.mxu0 0
    %2363 = vmatpush1.bf16.msra.mxu0 %v2345
    %2364 = vmatprep.subr.bf16.mxu0 0
    %2365 = vmatpush1.bf16.msra.mxu0 %v2344
    %2366 = vmatprep.subr.bf16.mxu0 0
    %2367 = vmatpush1.bf16.msra.mxu0 %v2343
    %2368 = vmatprep.subr.bf16.mxu0 0
    %2369 = vmatpush1.bf16.msra.mxu0 %v2342
    %2370 = vmatprep.subr.bf16.mxu0 0
    %2371 = vmatpush2.bf16.msra.mxu0 0
    %2372 = vmatprep.subr.bf16.mxu0 0
    %2373 = vmatpush2.bf16.msra.mxu0 0
    %2374 = vmatprep.subr.bf16.mxu0 0
    %2375 = vmatpush2.bf16.msra.mxu0 0
    %2376 = vmatprep.subr.bf16.mxu0 0
    %2377 = vmatpush2.bf16.msra.mxu0 0
    %2378 = vmatprep.subr.bf16.mxu0 0
    %2379 = vmatpush2.bf16.msra.mxu0 0
    %2380 = vmatprep.subr.bf16.mxu0 0
    %2381 = vmatpush2.bf16.msra.mxu0 0
    %2382 = vmatprep.subr.bf16.mxu0 0
    %2383 = vmatpush2.bf16.msra.mxu0 0
    %2384 = vmatprep.subr.bf16.mxu0 0
    %2385 = vmatpush2.bf16.msra.mxu0 0
    %2386 = vmatprep.mubr.bf16.mxu0 0
    %2387 = vmatmul.mubr.bf16.gmra.mxu0 %v2352
    %v2388 = vpop.f32.mrf.mxu0
    %v2389 = vadd.f32 0.0, %v2388
    %v2390 = vpop.f32.mrf.mxu0
    %v2391 = vpop.f32.mrf.mxu0
    %v2392 = vadd.f32 0.0, %v2391
    %v2393 = vpop.f32.mrf.mxu0
    %2394 = vdwg.mxu0
    %v2403 = vunpack.c.l.b16 %v2309
    %v2404 = vunpack.c.l.b16 %v2310
    %v2405 = vunpack.c.l.b16 %v2311
    %v2406 = vunpack.c.l.b16 %v2312
    %v2407 = vunpack.c.l.b16 %v2313
    %v2408 = vunpack.c.l.b16 %v2314
    %v2409 = vunpack.c.l.b16 %v2315
    %v2410 = vunpack.c.l.b16 %v2316
    %v2411 = vpack.c.b16 %v2404, %v2403
    %v2412 = vpack.c.b16 %v2406, %v2405
    %v2413 = vpack.c.b16 %v2408, %v2407
    %v2414 = vpack.c.b16 %v2410, %v2409
    %v2420 = vsel %vm2350, %v2256, 0
    %2422 = vmatprep.subr.bf16.mxu0 0
    %2423 = vmatpush1.bf16.msra.mxu0 0
    %2424 = vmatprep.subr.bf16.mxu0 0
    %2425 = vmatpush1.bf16.msra.mxu0 0
    %2426 = vmatprep.subr.bf16.mxu0 0
    %2427 = vmatpush1.bf16.msra.mxu0 0
    %2428 = vmatprep.subr.bf16.mxu0 0
    %2429 = vmatpush1.bf16.msra.mxu0 0
    %2430 = vmatprep.subr.bf16.mxu0 0
    %2431 = vmatpush1.bf16.msra.mxu0 %v2414
    %2432 = vmatprep.subr.bf16.mxu0 0
    %2433 = vmatpush1.bf16.msra.mxu0 %v2413
    %2434 = vmatprep.subr.bf16.mxu0 0
    %2435 = vmatpush1.bf16.msra.mxu0 %v2412
    %2436 = vmatprep.subr.bf16.mxu0 0
    %2437 = vmatpush1.bf16.msra.mxu0 %v2411
    %2438 = vmatprep.subr.bf16.mxu0 0
    %2439 = vmatpush2.bf16.msra.mxu0 0
    %2440 = vmatprep.subr.bf16.mxu0 0
    %2441 = vmatpush2.bf16.msra.mxu0 0
    %2442 = vmatprep.subr.bf16.mxu0 0
    %2443 = vmatpush2.bf16.msra.mxu0 0
    %2444 = vmatprep.subr.bf16.mxu0 0
    %2445 = vmatpush2.bf16.msra.mxu0 0
    %2446 = vmatprep.subr.bf16.mxu0 0
    %2447 = vmatpush2.bf16.msra.mxu0 0
    %2448 = vmatprep.subr.bf16.mxu0 0
    %2449 = vmatpush2.bf16.msra.mxu0 0
    %2450 = vmatprep.subr.bf16.mxu0 0
    %2451 = vmatpush2.bf16.msra.mxu0 0
    %2452 = vmatprep.subr.bf16.mxu0 0
    %2453 = vmatpush2.bf16.msra.mxu0 0
    %2454 = vmatprep.mubr.bf16.mxu0 0
    %2455 = vmatmul.mubr.bf16.gmra.mxu0 %v2420
    %v2456 = vpop.f32.mrf.mxu0
    %v2457 = vadd.f32 %v2389, %v2456
    %v2458 = vpop.f32.mrf.mxu0
    %v2459 = vpop.f32.mrf.mxu0
    %v2460 = vadd.f32 %v2392, %v2459
    %v2461 = vpop.f32.mrf.mxu0
    %2462 = vdwg.mxu0
    %s2463 = scalar_lea.vmem [#allocation21], 64
    %v2464 = vld [vmem:[%s2463] sm:$0xf]
    %v2465 = vld [vmem:[%s2463 + $0x4] sm:$0xf]
    %v2466 = vld [vmem:[%s2463 + $0x8] sm:$0xf]
    %v2467 = vld [vmem:[%s2463 + $0xc] sm:$0xf]
    %v2468 = vld [vmem:[%s2463 + $0x10] sm:$0xf]
    %v2469 = vld [vmem:[%s2463 + $0x14] sm:$0xf]
    %v2470 = vld [vmem:[%s2463 + $0x18] sm:$0xf]
    %v2471 = vld [vmem:[%s2463 + $0x1c] sm:$0xf]
    %v2480 = vunpack.c.l.b16 %v2464
    %v2481 = vunpack.c.l.b16 %v2465
    %v2482 = vunpack.c.l.b16 %v2466
    %v2483 = vunpack.c.l.b16 %v2467
    %v2484 = vunpack.c.l.b16 %v2468
    %v2485 = vunpack.c.l.b16 %v2469
    %v2486 = vunpack.c.l.b16 %v2470
    %v2487 = vunpack.c.l.b16 %v2471
    %v2488 = vpack.c.b16 %v2481, %v2480
    %v2489 = vpack.c.b16 %v2483, %v2482
    %v2490 = vpack.c.b16 %v2485, %v2484
    %v2491 = vpack.c.b16 %v2487, %v2486
    %v2497 = vsel %vm2350, %v2308, 0
    %2499 = vmatprep.subr.bf16.mxu0 0
    %2500 = vmatpush1.bf16.msra.mxu0 0
    %2501 = vmatprep.subr.bf16.mxu0 0
    %2502 = vmatpush1.bf16.msra.mxu0 0
    %2503 = vmatprep.subr.bf16.mxu0 0
    %2504 = vmatpush1.bf16.msra.mxu0 0
    %2505 = vmatprep.subr.bf16.mxu0 0
    %2506 = vmatpush1.bf16.msra.mxu0 0
    %2507 = vmatprep.subr.bf16.mxu0 0
    %2508 = vmatpush1.bf16.msra.mxu0 %v2491
    %2509 = vmatprep.subr.bf16.mxu0 0
    %2510 = vmatpush1.bf16.msra.mxu0 %v2490
    %2511 = vmatprep.subr.bf16.mxu0 0
    %2512 = vmatpush1.bf16.msra.mxu0 %v2489
    %2513 = vmatprep.subr.bf16.mxu0 0
    %2514 = vmatpush1.bf16.msra.mxu0 %v2488
    %2515 = vmatprep.subr.bf16.mxu0 0
    %2516 = vmatpush2.bf16.msra.mxu0 0
    %2517 = vmatprep.subr.bf16.mxu0 0
    %2518 = vmatpush2.bf16.msra.mxu0 0
    %2519 = vmatprep.subr.bf16.mxu0 0
    %2520 = vmatpush2.bf16.msra.mxu0 0
    %2521 = vmatprep.subr.bf16.mxu0 0
    %2522 = vmatpush2.bf16.msra.mxu0 0
    %2523 = vmatprep.subr.bf16.mxu0 0
    %2524 = vmatpush2.bf16.msra.mxu0 0
    %2525 = vmatprep.subr.bf16.mxu0 0
    %2526 = vmatpush2.bf16.msra.mxu0 0
    %2527 = vmatprep.subr.bf16.mxu0 0
    %2528 = vmatpush2.bf16.msra.mxu0 0
    %2529 = vmatprep.subr.bf16.mxu0 0
    %2530 = vmatpush2.bf16.msra.mxu0 0
    %2531 = vmatprep.mubr.bf16.mxu0 0
    %2532 = vmatmul.mubr.bf16.gmra.mxu0 %v2497
    %v2533 = vpop.f32.mrf.mxu0
    %v2534 = vadd.f32 0.0, %v2533
    %v2535 = vpop.f32.mrf.mxu0
    %v2536 = vpop.f32.mrf.mxu0
    %v2537 = vadd.f32 0.0, %v2536
    %v2538 = vpop.f32.mrf.mxu0
    %2539 = vdwg.mxu0
    %v2540 = vadd.f32 %v2457, %v2534
    %v2541 = vadd.f32 %v2460, %v2537
    %v2542 = vmul.f32 %v2540, %v2202
    %v2543 = vmul.f32 %v2541, %v2204
    %v2544 = vadd.f32 %v2542, %v2543
    %v2545 = vrot.slane %v2544, 4
    %v2546 = vadd.f32 %v2544, %v2545
    %v2547 = vrot.slane %v2546, 2
    %v2548 = vadd.f32 %v2546, %v2547
    %v2549 = vrot.slane %v2548, 1
    %v2550 = vadd.f32 %v2548, %v2549
    %v2551 = vmul.f32 %v2542, %v2542
    %v2552 = vmul.f32 %v2543, %v2543
    %v2553 = vadd.f32 %v2551, %v2552
    %v2554 = vrot.slane %v2553, 4
    %v2555 = vadd.f32 %v2553, %v2554
    %v2556 = vrot.slane %v2555, 2
    %v2557 = vadd.f32 %v2555, %v2556
    %v2558 = vrot.slane %v2557, 1
    %v2559 = vadd.f32 %v2557, %v2558
    %2560 = vrot.lane.b32.xlu0 %v2550, 16
    %v2561 = vpop.permute.xlu0 %2560
    %v2562 = vadd.f32 %v2550, %v2561
    %2563 = vrot.lane.b32.xlu0 %v2559, 16
    %v2564 = vpop.permute.xlu0 %2563
    %v2565 = vadd.f32 %v2559, %v2564
    %2566 = vrot.lane.b32.xlu0 %v2562, 32
    %v2567 = vpop.permute.xlu0 %2566
    %v2568 = vadd.f32 %v2562, %v2567
    %2569 = vrot.lane.b32.xlu0 %v2565, 32
    %v2570 = vpop.permute.xlu0 %2569
    %v2571 = vadd.f32 %v2565, %v2570
    %2572 = vrot.lane.b32.xlu0 %v2568, 64
    %v2573 = vpop.permute.xlu0 %2572
    %v2574 = vadd.f32 %v2568, %v2573
    %2575 = vrot.lane.b32.xlu0 %v2571, 64
    %v2576 = vpop.permute.xlu0 %2575
    %v2577 = vadd.f32 %v2571, %v2576
    %v2578 = vmul.f32 %v2574, 0.0078125
    %v2579 = vmul.f32 %v2577, 0.0078125
    %v2580 = vmul.f32 %v2578, %v2578
    %v2581 = vsub.f32 %v2579, %v2580
    %v2582 = vlaneseq
    %v2583 = vshrl.u32 %v2582, 7
    %v2584 = vsub.s32 0, %v2583
    %v2585 = vrot.slane %v2578, %v2584
    %v2586 = vsub.f32 %v2542, %v2585
    %v2587 = vsub.f32 %v2543, %v2585
    %v2588 = vadd.f32 %v2581, 1e-05
    %v2589 = vrsqrt.pop %v2588
    %v2590 = vlaneseq
    %v2591 = vshrl.u32 %v2590, 7
    %v2592 = vsub.s32 0, %v2591
    %v2593 = vrot.slane %v2589, %v2592
    %v2594 = vmul.f32 %v2586, %v2593
    %v2595 = vmul.f32 %v2587, %v2593
    %v2596 = vld [vmem:[#allocation24] sm:$0x1]
    %v2598 = vlaneseq
    %v2599 = vshrl.u32 %v2598, 7
    %v2600 = vsub.s32 0, %v2599
    %v2601 = vrot.slane %v2596, %v2600
    %v2603 = vmul.f32 %v2594, %v2601
    %v2604 = vmul.f32 %v2595, %v2601
    %v2605 = vld [vmem:[#allocation25] sm:$0x1]
    %v2607 = vlaneseq
    %v2608 = vshrl.u32 %v2607, 7
    %v2609 = vsub.s32 0, %v2608
    %v2610 = vrot.slane %v2605, %v2609
    %v2612 = vadd.f32 %v2603, %v2610
    %v2613 = vadd.f32 %v2604, %v2610
    %vm2614 = vcmp.ge.f32.partialorder %v2612, 0.0
    %vm2615 = vcmp.ge.f32.partialorder %v2613, 0.0
    %v2616 = vmul.f32 %v2612, 0.01
    %v2617 = vmul.f32 %v2613, 0.01
    %v2618 = vsel %vm2614, %v2612, %v2616
    %v2619 = vsel %vm2615, %v2613, %v2617
    %v2620 = vpack.c.bf16 %v2619, %v2618
    %2621 = vmatprep.subr.bf16.mxu0 0
    %2622 = vmatpush1.bf16.msra.mxu0 0
    %2623 = vmatprep.subr.bf16.mxu0 0
    %2624 = vmatpush1.bf16.msra.mxu0 0
    %2625 = vmatprep.subr.bf16.mxu0 0
    %2626 = vmatpush1.bf16.msra.mxu0 0
    %2627 = vmatprep.subr.bf16.mxu0 0
    %2628 = vmatpush1.bf16.msra.mxu0 0
    %2629 = vmatprep.subr.bf16.mxu0 0
    %2630 = vmatpush1.bf16.msra.mxu0 0
    %2631 = vmatprep.subr.bf16.mxu0 0
    %2632 = vmatpush1.bf16.msra.mxu0 0
    %2633 = vmatprep.subr.bf16.mxu0 0
    %2634 = vmatpush1.bf16.msra.mxu0 0
    %2635 = vmatprep.subr.bf16.mxu0 0
    %2636 = vmatpush1.bf16.msra.mxu0 %v2620
    %2637 = vmatprep.subr.bf16.mxu0 0
    %2638 = vmatpush2.bf16.msra.mxu0 0
    %2639 = vmatprep.subr.bf16.mxu0 0
    %2640 = vmatpush2.bf16.msra.mxu0 0
    %2641 = vmatprep.subr.bf16.mxu0 0
    %2642 = vmatpush2.bf16.msra.mxu0 0
    %2643 = vmatprep.subr.bf16.mxu0 0
    %2644 = vmatpush2.bf16.msra.mxu0 0
    %2645 = vmatprep.subr.bf16.mxu0 0
    %2646 = vmatpush2.bf16.msra.mxu0 0
    %2647 = vmatprep.subr.bf16.mxu0 0
    %2648 = vmatpush2.bf16.msra.mxu0 0
    %2649 = vmatprep.subr.bf16.mxu0 0
    %2650 = vmatpush2.bf16.msra.mxu0 0
    %2651 = vmatprep.subr.bf16.mxu0 0
    %2652 = vmatpush2.bf16.msra.mxu0 0
    %2653 = vmatprep.mubr.bf16.mxu0 0
    %2654 = vmatmul.mubr.bf16.gmra.mxu0 %v2213
    %v2655 = vpop.f32.mrf.mxu0
    %v2656 = vadd.f32 0.0, %v2655
    %v2657 = vpop.f32.mrf.mxu0
    %v2658 = vpop.f32.mrf.mxu0
    %v2659 = vadd.f32 0.0, %v2658
    %v2660 = vpop.f32.mrf.mxu0
    %2661 = vdwg.mxu0
    %v2662 = vpack.c.bf16 %v2659, %v2656
    %2663 = vmatprep.subr.bf16.mxu0 0
    %2664 = vmatpush1.bf16.msra.mxu0 0
    %2665 = vmatprep.subr.bf16.mxu0 0
    %2666 = vmatpush1.bf16.msra.mxu0 0
    %2667 = vmatprep.subr.bf16.mxu0 0
    %2668 = vmatpush1.bf16.msra.mxu0 0
    %2669 = vmatprep.subr.bf16.mxu0 0
    %2670 = vmatpush1.bf16.msra.mxu0 0
    %2671 = vmatprep.subr.bf16.mxu0 0
    %2672 = vmatpush1.bf16.msra.mxu0 0
    %2673 = vmatprep.subr.bf16.mxu0 0
    %2674 = vmatpush1.bf16.msra.mxu0 0
    %2675 = vmatprep.subr.bf16.mxu0 0
    %2676 = vmatpush1.bf16.msra.mxu0 0
    %2677 = vmatprep.subr.bf16.mxu0 0
    %2678 = vmatpush1.bf16.msra.mxu0 %v2620
    %2679 = vmatprep.subr.bf16.mxu0 0
    %2680 = vmatpush2.bf16.msra.mxu0 0
    %2681 = vmatprep.subr.bf16.mxu0 0
    %2682 = vmatpush2.bf16.msra.mxu0 0
    %2683 = vmatprep.subr.bf16.mxu0 0
    %2684 = vmatpush2.bf16.msra.mxu0 0
    %2685 = vmatprep.subr.bf16.mxu0 0
    %2686 = vmatpush2.bf16.msra.mxu0 0
    %2687 = vmatprep.subr.bf16.mxu0 0
    %2688 = vmatpush2.bf16.msra.mxu0 0
    %2689 = vmatprep.subr.bf16.mxu0 0
    %2690 = vmatpush2.bf16.msra.mxu0 0
    %2691 = vmatprep.subr.bf16.mxu0 0
    %2692 = vmatpush2.bf16.msra.mxu0 0
    %2693 = vmatprep.subr.bf16.mxu0 0
    %2694 = vmatpush2.bf16.msra.mxu0 0
    %2695 = vmatprep.mubr.bf16.mxu0 0
    %2696 = vmatmul.mubr.bf16.gmra.mxu0 %v2265
    %v2697 = vpop.f32.mrf.mxu0
    %v2698 = vadd.f32 0.0, %v2697
    %v2699 = vpop.f32.mrf.mxu0
    %v2700 = vpop.f32.mrf.mxu0
    %v2701 = vadd.f32 0.0, %v2700
    %v2702 = vpop.f32.mrf.mxu0
    %2703 = vdwg.mxu0
    %v2704 = vpack.c.bf16 %v2701, %v2698
    %v2705 = vld [vmem:[#allocation22] sm:$0xf]
    %v2706 = vld [vmem:[#allocation22 + $0x4] sm:$0xf]
    %v2707 = vld [vmem:[#allocation22 + $0x8] sm:$0xf]
    %v2708 = vld [vmem:[#allocation22 + $0xc] sm:$0xf]
    %v2709 = vld [vmem:[#allocation22 + $0x10] sm:$0xf]
    %v2710 = vld [vmem:[#allocation22 + $0x14] sm:$0xf]
    %v2711 = vld [vmem:[#allocation22 + $0x18] sm:$0xf]
    %v2712 = vld [vmem:[#allocation22 + $0x1c] sm:$0xf]
    %v2713 = vld [vmem:[#allocation22 + $0x20] sm:$0xf]
    %v2714 = vld [vmem:[#allocation22 + $0x24] sm:$0xf]
    %v2715 = vld [vmem:[#allocation22 + $0x28] sm:$0xf]
    %v2716 = vld [vmem:[#allocation22 + $0x2c] sm:$0xf]
    %v2717 = vld [vmem:[#allocation22 + $0x30] sm:$0xf]
    %v2718 = vld [vmem:[#allocation22 + $0x34] sm:$0xf]
    %v2719 = vld [vmem:[#allocation22 + $0x38] sm:$0xf]
    %v2720 = vld [vmem:[#allocation22 + $0x3c] sm:$0xf]
    %s2721 = scalar_lea.vmem [#allocation22], 64
    %v2722 = vld [vmem:[%s2721] sm:$0xf]
    %v2723 = vld [vmem:[%s2721 + $0x4] sm:$0xf]
    %v2724 = vld [vmem:[%s2721 + $0x8] sm:$0xf]
    %v2725 = vld [vmem:[%s2721 + $0xc] sm:$0xf]
    %v2726 = vld [vmem:[%s2721 + $0x10] sm:$0xf]
    %v2727 = vld [vmem:[%s2721 + $0x14] sm:$0xf]
    %v2728 = vld [vmem:[%s2721 + $0x18] sm:$0xf]
    %v2729 = vld [vmem:[%s2721 + $0x1c] sm:$0xf]
    %v2730 = vld [vmem:[%s2721 + $0x20] sm:$0xf]
    %v2731 = vld [vmem:[%s2721 + $0x24] sm:$0xf]
    %v2732 = vld [vmem:[%s2721 + $0x28] sm:$0xf]
    %v2733 = vld [vmem:[%s2721 + $0x2c] sm:$0xf]
    %v2734 = vld [vmem:[%s2721 + $0x30] sm:$0xf]
    %v2735 = vld [vmem:[%s2721 + $0x34] sm:$0xf]
    %v2736 = vld [vmem:[%s2721 + $0x38] sm:$0xf]
    %v2737 = vld [vmem:[%s2721 + $0x3c] sm:$0xf]
    %v2754 = vunpack.c.l.b16 %v2722
    %v2755 = vunpack.c.l.b16 %v2723
    %v2756 = vunpack.c.l.b16 %v2724
    %v2757 = vunpack.c.l.b16 %v2725
    %v2758 = vunpack.c.l.b16 %v2726
    %v2759 = vunpack.c.l.b16 %v2727
    %v2760 = vunpack.c.l.b16 %v2728
    %v2761 = vunpack.c.l.b16 %v2729
    %v2762 = vunpack.c.l.b16 %v2730
    %v2763 = vunpack.c.l.b16 %v2731
    %v2764 = vunpack.c.l.b16 %v2732
    %v2765 = vunpack.c.l.b16 %v2733
    %v2766 = vunpack.c.l.b16 %v2734
    %v2767 = vunpack.c.l.b16 %v2735
    %v2768 = vunpack.c.l.b16 %v2736
    %v2769 = vunpack.c.l.b16 %v2737
    %v2770 = vpack.c.b16 %v2755, %v2754
    %v2771 = vpack.c.b16 %v2757, %v2756
    %v2772 = vpack.c.b16 %v2759, %v2758
    %v2773 = vpack.c.b16 %v2761, %v2760
    %v2774 = vpack.c.b16 %v2763, %v2762
    %v2775 = vpack.c.b16 %v2765, %v2764
    %v2776 = vpack.c.b16 %v2767, %v2766
    %v2777 = vpack.c.b16 %v2769, %v2768
    %2786 = vmatprep.subr.bf16.mxu0 0
    %2787 = vmatpush1.bf16.msra.mxu0 %v2777
    %2788 = vmatprep.subr.bf16.mxu0 0
    %2789 = vmatpush1.bf16.msra.mxu0 %v2776
    %2790 = vmatprep.subr.bf16.mxu0 0
    %2791 = vmatpush1.bf16.msra.mxu0 %v2775
    %2792 = vmatprep.subr.bf16.mxu0 0
    %2793 = vmatpush1.bf16.msra.mxu0 %v2774
    %2794 = vmatprep.subr.bf16.mxu0 0
    %2795 = vmatpush1.bf16.msra.mxu0 %v2773
    %2796 = vmatprep.subr.bf16.mxu0 0
    %2797 = vmatpush1.bf16.msra.mxu0 %v2772
    %2798 = vmatprep.subr.bf16.mxu0 0
    %2799 = vmatpush1.bf16.msra.mxu0 %v2771
    %2800 = vmatprep.subr.bf16.mxu0 0
    %2801 = vmatpush1.bf16.msra.mxu0 %v2770
    %2802 = vmatprep.subr.bf16.mxu0 0
    %2803 = vmatpush2.bf16.msra.mxu0 0
    %2804 = vmatprep.subr.bf16.mxu0 0
    %2805 = vmatpush2.bf16.msra.mxu0 0
    %2806 = vmatprep.subr.bf16.mxu0 0
    %2807 = vmatpush2.bf16.msra.mxu0 0
    %2808 = vmatprep.subr.bf16.mxu0 0
    %2809 = vmatpush2.bf16.msra.mxu0 0
    %2810 = vmatprep.subr.bf16.mxu0 0
    %2811 = vmatpush2.bf16.msra.mxu0 0
    %2812 = vmatprep.subr.bf16.mxu0 0
    %2813 = vmatpush2.bf16.msra.mxu0 0
    %2814 = vmatprep.subr.bf16.mxu0 0
    %2815 = vmatpush2.bf16.msra.mxu0 0
    %2816 = vmatprep.subr.bf16.mxu0 0
    %2817 = vmatpush2.bf16.msra.mxu0 0
    %2818 = vmatprep.mubr.bf16.mxu0 0
    %2819 = vmatmul.mubr.bf16.gmra.mxu0 %v2620
    %v2820 = vpop.f32.mrf.mxu0
    %v2821 = vadd.f32 0.0, %v2820
    %v2822 = vpop.f32.mrf.mxu0
    %v2823 = vpop.f32.mrf.mxu0
    %v2824 = vadd.f32 0.0, %v2823
    %v2825 = vpop.f32.mrf.mxu0
    %2826 = vdwg.mxu0
    %v2843 = vunpack.c.l.b16 %v2705
    %v2844 = vunpack.c.l.b16 %v2706
    %v2845 = vunpack.c.l.b16 %v2707
    %v2846 = vunpack.c.l.b16 %v2708
    %v2847 = vunpack.c.l.b16 %v2709
    %v2848 = vunpack.c.l.b16 %v2710
    %v2849 = vunpack.c.l.b16 %v2711
    %v2850 = vunpack.c.l.b16 %v2712
    %v2851 = vunpack.c.l.b16 %v2713
    %v2852 = vunpack.c.l.b16 %v2714
    %v2853 = vunpack.c.l.b16 %v2715
    %v2854 = vunpack.c.l.b16 %v2716
    %v2855 = vunpack.c.l.b16 %v2717
    %v2856 = vunpack.c.l.b16 %v2718
    %v2857 = vunpack.c.l.b16 %v2719
    %v2858 = vunpack.c.l.b16 %v2720
    %v2859 = vpack.c.b16 %v2844, %v2843
    %v2860 = vpack.c.b16 %v2846, %v2845
    %v2861 = vpack.c.b16 %v2848, %v2847
    %v2862 = vpack.c.b16 %v2850, %v2849
    %v2863 = vpack.c.b16 %v2852, %v2851
    %v2864 = vpack.c.b16 %v2854, %v2853
    %v2865 = vpack.c.b16 %v2856, %v2855
    %v2866 = vpack.c.b16 %v2858, %v2857
    %2875 = vmatprep.subr.bf16.mxu0 0
    %2876 = vmatpush1.bf16.msra.mxu0 %v2866
    %2877 = vmatprep.subr.bf16.mxu0 0
    %2878 = vmatpush1.bf16.msra.mxu0 %v2865
    %2879 = vmatprep.subr.bf16.mxu0 0
    %2880 = vmatpush1.bf16.msra.mxu0 %v2864
    %2881 = vmatprep.subr.bf16.mxu0 0
    %2882 = vmatpush1.bf16.msra.mxu0 %v2863
    %2883 = vmatprep.subr.bf16.mxu0 0
    %2884 = vmatpush1.bf16.msra.mxu0 %v2862
    %2885 = vmatprep.subr.bf16.mxu0 0
    %2886 = vmatpush1.bf16.msra.mxu0 %v2861
    %2887 = vmatprep.subr.bf16.mxu0 0
    %2888 = vmatpush1.bf16.msra.mxu0 %v2860
    %2889 = vmatprep.subr.bf16.mxu0 0
    %2890 = vmatpush1.bf16.msra.mxu0 %v2859
    %2891 = vmatprep.subr.bf16.mxu0 0
    %2892 = vmatpush2.bf16.msra.mxu0 0
    %2893 = vmatprep.subr.bf16.mxu0 0
    %2894 = vmatpush2.bf16.msra.mxu0 0
    %2895 = vmatprep.subr.bf16.mxu0 0
    %2896 = vmatpush2.bf16.msra.mxu0 0
    %2897 = vmatprep.subr.bf16.mxu0 0
    %2898 = vmatpush2.bf16.msra.mxu0 0
    %2899 = vmatprep.subr.bf16.mxu0 0
    %2900 = vmatpush2.bf16.msra.mxu0 0
    %2901 = vmatprep.subr.bf16.mxu0 0
    %2902 = vmatpush2.bf16.msra.mxu0 0
    %2903 = vmatprep.subr.bf16.mxu0 0
    %2904 = vmatpush2.bf16.msra.mxu0 0
    %2905 = vmatprep.subr.bf16.mxu0 0
    %2906 = vmatpush2.bf16.msra.mxu0 0
    %2907 = vmatprep.mubr.bf16.mxu0 0
    %2908 = vmatmul.mubr.bf16.gmra.mxu0 %v2662
    %v2909 = vpop.f32.mrf.mxu0
    %v2910 = vadd.f32 %v2821, %v2909
    %v2911 = vpop.f32.mrf.mxu0
    %v2912 = vpop.f32.mrf.mxu0
    %v2913 = vadd.f32 %v2824, %v2912
    %v2914 = vpop.f32.mrf.mxu0
    %2915 = vdwg.mxu0
    %s2916 = scalar_lea.vmem [#allocation22], 128
    %v2917 = vld [vmem:[%s2916] sm:$0xf]
    %v2918 = vld [vmem:[%s2916 + $0x4] sm:$0xf]
    %v2919 = vld [vmem:[%s2916 + $0x8] sm:$0xf]
    %v2920 = vld [vmem:[%s2916 + $0xc] sm:$0xf]
    %v2921 = vld [vmem:[%s2916 + $0x10] sm:$0xf]
    %v2922 = vld [vmem:[%s2916 + $0x14] sm:$0xf]
    %v2923 = vld [vmem:[%s2916 + $0x18] sm:$0xf]
    %v2924 = vld [vmem:[%s2916 + $0x1c] sm:$0xf]
    %v2925 = vld [vmem:[%s2916 + $0x20] sm:$0xf]
    %v2926 = vld [vmem:[%s2916 + $0x24] sm:$0xf]
    %v2927 = vld [vmem:[%s2916 + $0x28] sm:$0xf]
    %v2928 = vld [vmem:[%s2916 + $0x2c] sm:$0xf]
    %v2929 = vld [vmem:[%s2916 + $0x30] sm:$0xf]
    %v2930 = vld [vmem:[%s2916 + $0x34] sm:$0xf]
    %v2931 = vld [vmem:[%s2916 + $0x38] sm:$0xf]
    %v2932 = vld [vmem:[%s2916 + $0x3c] sm:$0xf]
    %v2949 = vunpack.c.l.b16 %v2917
    %v2950 = vunpack.c.l.b16 %v2918
    %v2951 = vunpack.c.l.b16 %v2919
    %v2952 = vunpack.c.l.b16 %v2920
    %v2953 = vunpack.c.l.b16 %v2921
    %v2954 = vunpack.c.l.b16 %v2922
    %v2955 = vunpack.c.l.b16 %v2923
    %v2956 = vunpack.c.l.b16 %v2924
    %v2957 = vunpack.c.l.b16 %v2925
    %v2958 = vunpack.c.l.b16 %v2926
    %v2959 = vunpack.c.l.b16 %v2927
    %v2960 = vunpack.c.l.b16 %v2928
    %v2961 = vunpack.c.l.b16 %v2929
    %v2962 = vunpack.c.l.b16 %v2930
    %v2963 = vunpack.c.l.b16 %v2931
    %v2964 = vunpack.c.l.b16 %v2932
    %v2965 = vpack.c.b16 %v2950, %v2949
    %v2966 = vpack.c.b16 %v2952, %v2951
    %v2967 = vpack.c.b16 %v2954, %v2953
    %v2968 = vpack.c.b16 %v2956, %v2955
    %v2969 = vpack.c.b16 %v2958, %v2957
    %v2970 = vpack.c.b16 %v2960, %v2959
    %v2971 = vpack.c.b16 %v2962, %v2961
    %v2972 = vpack.c.b16 %v2964, %v2963
    %2981 = vmatprep.subr.bf16.mxu0 0
    %2982 = vmatpush1.bf16.msra.mxu0 %v2972
    %2983 = vmatprep.subr.bf16.mxu0 0
    %2984 = vmatpush1.bf16.msra.mxu0 %v2971
    %2985 = vmatprep.subr.bf16.mxu0 0
    %2986 = vmatpush1.bf16.msra.mxu0 %v2970
    %2987 = vmatprep.subr.bf16.mxu0 0
    %2988 = vmatpush1.bf16.msra.mxu0 %v2969
    %2989 = vmatprep.subr.bf16.mxu0 0
    %2990 = vmatpush1.bf16.msra.mxu0 %v2968
    %2991 = vmatprep.subr.bf16.mxu0 0
    %2992 = vmatpush1.bf16.msra.mxu0 %v2967
    %2993 = vmatprep.subr.bf16.mxu0 0
    %2994 = vmatpush1.bf16.msra.mxu0 %v2966
    %2995 = vmatprep.subr.bf16.mxu0 0
    %2996 = vmatpush1.bf16.msra.mxu0 %v2965
    %2997 = vmatprep.subr.bf16.mxu0 0
    %2998 = vmatpush2.bf16.msra.mxu0 0
    %2999 = vmatprep.subr.bf16.mxu0 0
    %3000 = vmatpush2.bf16.msra.mxu0 0
    %3001 = vmatprep.subr.bf16.mxu0 0
    %3002 = vmatpush2.bf16.msra.mxu0 0
    %3003 = vmatprep.subr.bf16.mxu0 0
    %3004 = vmatpush2.bf16.msra.mxu0 0
    %3005 = vmatprep.subr.bf16.mxu0 0
    %3006 = vmatpush2.bf16.msra.mxu0 0
    %3007 = vmatprep.subr.bf16.mxu0 0
    %3008 = vmatpush2.bf16.msra.mxu0 0
    %3009 = vmatprep.subr.bf16.mxu0 0
    %3010 = vmatpush2.bf16.msra.mxu0 0
    %3011 = vmatprep.subr.bf16.mxu0 0
    %3012 = vmatpush2.bf16.msra.mxu0 0
    %3013 = vmatprep.mubr.bf16.mxu0 0
    %3014 = vmatmul.mubr.bf16.gmra.mxu0 %v2704
    %v3015 = vpop.f32.mrf.mxu0
    %v3016 = vadd.f32 0.0, %v3015
    %v3017 = vpop.f32.mrf.mxu0
    %v3018 = vpop.f32.mrf.mxu0
    %v3019 = vadd.f32 0.0, %v3018
    %v3020 = vpop.f32.mrf.mxu0
    %3021 = vdwg.mxu0
    %v3022 = vadd.f32 %v2910, %v3016
    %v3023 = vadd.f32 %v2913, %v3019
    %v3024 = vmul.f32 %v3022, %v2202
    %v3025 = vmul.f32 %v3023, %v2204
    %v3026 = vadd.f32 %v3024, %v3025
    %v3027 = vrot.slane %v3026, 4
    %v3028 = vadd.f32 %v3026, %v3027
    %v3029 = vrot.slane %v3028, 2
    %v3030 = vadd.f32 %v3028, %v3029
    %v3031 = vrot.slane %v3030, 1
    %v3032 = vadd.f32 %v3030, %v3031
    %v3033 = vmul.f32 %v3024, %v3024
    %v3034 = vmul.f32 %v3025, %v3025
    %v3035 = vadd.f32 %v3033, %v3034
    %v3036 = vrot.slane %v3035, 4
    %v3037 = vadd.f32 %v3035, %v3036
    %v3038 = vrot.slane %v3037, 2
    %v3039 = vadd.f32 %v3037, %v3038
    %v3040 = vrot.slane %v3039, 1
    %v3041 = vadd.f32 %v3039, %v3040
    %3042 = vrot.lane.b32.xlu0 %v3032, 16
    %v3043 = vpop.permute.xlu0 %3042
    %v3044 = vadd.f32 %v3032, %v3043
    %3045 = vrot.lane.b32.xlu0 %v3041, 16
    %v3046 = vpop.permute.xlu0 %3045
    %v3047 = vadd.f32 %v3041, %v3046
    %3048 = vrot.lane.b32.xlu0 %v3044, 32
    %v3049 = vpop.permute.xlu0 %3048
    %v3050 = vadd.f32 %v3044, %v3049
    %3051 = vrot.lane.b32.xlu0 %v3047, 32
    %v3052 = vpop.permute.xlu0 %3051
    %v3053 = vadd.f32 %v3047, %v3052
    %3054 = vrot.lane.b32.xlu0 %v3050, 64
    %v3055 = vpop.permute.xlu0 %3054
    %v3056 = vadd.f32 %v3050, %v3055
    %3057 = vrot.lane.b32.xlu0 %v3053, 64
    %v3058 = vpop.permute.xlu0 %3057
    %v3059 = vadd.f32 %v3053, %v3058
    %v3060 = vmul.f32 %v3056, 0.0078125
    %v3061 = vmul.f32 %v3059, 0.0078125
    %v3062 = vmul.f32 %v3060, %v3060
    %v3063 = vsub.f32 %v3061, %v3062
    %v3064 = vlaneseq
    %v3065 = vshrl.u32 %v3064, 7
    %v3066 = vsub.s32 0, %v3065
    %v3067 = vrot.slane %v3060, %v3066
    %v3068 = vsub.f32 %v3024, %v3067
    %v3069 = vsub.f32 %v3025, %v3067
    %v3070 = vadd.f32 %v3063, 1e-05
    %v3071 = vrsqrt.pop %v3070
    %v3072 = vlaneseq
    %v3073 = vshrl.u32 %v3072, 7
    %v3074 = vsub.s32 0, %v3073
    %v3075 = vrot.slane %v3071, %v3074
    %v3076 = vmul.f32 %v3068, %v3075
    %v3077 = vmul.f32 %v3069, %v3075
    %v3078 = vld [vmem:[#allocation27] sm:$0x1]
    %v3080 = vlaneseq
    %v3081 = vshrl.u32 %v3080, 7
    %v3082 = vsub.s32 0, %v3081
    %v3083 = vrot.slane %v3078, %v3082
    %v3085 = vmul.f32 %v3076, %v3083
    %v3086 = vmul.f32 %v3077, %v3083
    %v3087 = vld [vmem:[#allocation28] sm:$0x1]
    %v3089 = vlaneseq
    %v3090 = vshrl.u32 %v3089, 7
    %v3091 = vsub.s32 0, %v3090
    %v3092 = vrot.slane %v3087, %v3091
    %v3094 = vadd.f32 %v3085, %v3092
    %v3095 = vadd.f32 %v3086, %v3092
    %vm3096 = vcmp.ge.f32.partialorder %v3094, 0.0
    %vm3097 = vcmp.ge.f32.partialorder %v3095, 0.0
    %v3098 = vmul.f32 %v3094, 0.01
    %v3099 = vmul.f32 %v3095, 0.01
    %v3100 = vsel %vm3096, %v3094, %v3098
    %v3101 = vsel %vm3097, %v3095, %v3099
    %v3102 = vpack.c.bf16 %v3101, %v3100
    %v3103 = vld [vmem:[#allocation30] sm:$0xf]
    %v3105 = vsel %vm1004, %v3103, 0
    %3107 = vmatprep.subr.bf16.mxu0 0
    %3108 = vmatpush1.bf16.msra.mxu0 0
    %3109 = vmatprep.subr.bf16.mxu0 0
    %3110 = vmatpush1.bf16.msra.mxu0 0
    %3111 = vmatprep.subr.bf16.mxu0 0
    %3112 = vmatpush1.bf16.msra.mxu0 0
    %3113 = vmatprep.subr.bf16.mxu0 0
    %3114 = vmatpush1.bf16.msra.mxu0 0
    %3115 = vmatprep.subr.bf16.mxu0 0
    %3116 = vmatpush1.bf16.msra.mxu0 0
    %3117 = vmatprep.subr.bf16.mxu0 0
    %3118 = vmatpush1.bf16.msra.mxu0 0
    %3119 = vmatprep.subr.bf16.mxu0 0
    %3120 = vmatpush1.bf16.msra.mxu0 0
    %3121 = vmatprep.subr.bf16.mxu0 0
    %3122 = vmatpush1.bf16.msra.mxu0 %v3102
    %3123 = vmatprep.subr.bf16.mxu0 0
    %3124 = vmatpush2.bf16.msra.mxu0 0
    %3125 = vmatprep.subr.bf16.mxu0 0
    %3126 = vmatpush2.bf16.msra.mxu0 0
    %3127 = vmatprep.subr.bf16.mxu0 0
    %3128 = vmatpush2.bf16.msra.mxu0 0
    %3129 = vmatprep.subr.bf16.mxu0 0
    %3130 = vmatpush2.bf16.msra.mxu0 0
    %3131 = vmatprep.subr.bf16.mxu0 0
    %3132 = vmatpush2.bf16.msra.mxu0 0
    %3133 = vmatprep.subr.bf16.mxu0 0
    %3134 = vmatpush2.bf16.msra.mxu0 0
    %3135 = vmatprep.subr.bf16.mxu0 0
    %3136 = vmatpush2.bf16.msra.mxu0 0
    %3137 = vmatprep.subr.bf16.mxu0 0
    %3138 = vmatpush2.bf16.msra.mxu0 0
    %3139 = vmatprep.mubr.bf16.mxu0 0
    %3140 = vmatmul.mubr.bf16.gmra.mxu0 %v3105
    %v3141 = vpop.f32.mrf.mxu0
    %v3142 = vadd.f32 0.0, %v3141
    %v3143 = vpop.f32.mrf.mxu0
    %v3144 = vpop.f32.mrf.mxu0
    %v3145 = vpop.f32.mrf.mxu0
    %3146 = vdwg.mxu0
    %v3147 = vld [vmem:[#allocation31] sm:$0xf]
    %v3149 = vsel %vm1004, %v3147, 0
    %3151 = vmatprep.subr.bf16.mxu0 0
    %3152 = vmatpush1.bf16.msra.mxu0 0
    %3153 = vmatprep.subr.bf16.mxu0 0
    %3154 = vmatpush1.bf16.msra.mxu0 0
    %3155 = vmatprep.subr.bf16.mxu0 0
    %3156 = vmatpush1.bf16.msra.mxu0 0
    %3157 = vmatprep.subr.bf16.mxu0 0
    %3158 = vmatpush1.bf16.msra.mxu0 0
    %3159 = vmatprep.subr.bf16.mxu0 0
    %3160 = vmatpush1.bf16.msra.mxu0 0
    %3161 = vmatprep.subr.bf16.mxu0 0
    %3162 = vmatpush1.bf16.msra.mxu0 0
    %3163 = vmatprep.subr.bf16.mxu0 0
    %3164 = vmatpush1.bf16.msra.mxu0 0
    %3165 = vmatprep.subr.bf16.mxu0 0
    %3166 = vmatpush1.bf16.msra.mxu0 %v3102
    %3167 = vmatprep.subr.bf16.mxu0 0
    %3168 = vmatpush2.bf16.msra.mxu0 0
    %3169 = vmatprep.subr.bf16.mxu0 0
    %3170 = vmatpush2.bf16.msra.mxu0 0
    %3171 = vmatprep.subr.bf16.mxu0 0
    %3172 = vmatpush2.bf16.msra.mxu0 0
    %3173 = vmatprep.subr.bf16.mxu0 0
    %3174 = vmatpush2.bf16.msra.mxu0 0
    %3175 = vmatprep.subr.bf16.mxu0 0
    %3176 = vmatpush2.bf16.msra.mxu0 0
    %3177 = vmatprep.subr.bf16.mxu0 0
    %3178 = vmatpush2.bf16.msra.mxu0 0
    %3179 = vmatprep.subr.bf16.mxu0 0
    %3180 = vmatpush2.bf16.msra.mxu0 0
    %3181 = vmatprep.subr.bf16.mxu0 0
    %3182 = vmatpush2.bf16.msra.mxu0 0
    %3183 = vmatprep.mubr.bf16.mxu0 0
    %3184 = vmatmul.mubr.bf16.gmra.mxu0 %v3149
    %v3185 = vpop.f32.mrf.mxu0
    %v3186 = vadd.f32 0.0, %v3185
    %v3187 = vpop.f32.mrf.mxu0
    %v3188 = vpop.f32.mrf.mxu0
    %v3189 = vpop.f32.mrf.mxu0
    %3190 = vdwg.mxu0
    %v3191 = vmax.f32 %v3142, %v3186
    %v3192 = vpack.c.bf16 %v3191, %v3191
    %v3193 = vld [vmem:[%s47] sm:$0xf]
    %v3194 = vld [vmem:[%s47 + $0x4] sm:$0xf]
    %v3195 = vld [vmem:[%s47 + $0x8] sm:$0xf]
    %v3196 = vld [vmem:[%s47 + $0xc] sm:$0xf]
    %v3197 = vld [vmem:[%s47 + $0x10] sm:$0xf]
    %v3198 = vld [vmem:[%s47 + $0x14] sm:$0xf]
    %v3199 = vld [vmem:[%s47 + $0x18] sm:$0xf]
    %v3200 = vld [vmem:[%s47 + $0x1c] sm:$0xf]
    %v3201 = vld [vmem:[%s47 + $0x20] sm:$0xf]
    %v3202 = vld [vmem:[%s47 + $0x24] sm:$0xf]
    %v3203 = vld [vmem:[%s47 + $0x28] sm:$0xf]
    %v3204 = vld [vmem:[%s47 + $0x2c] sm:$0xf]
    %v3205 = vld [vmem:[%s47 + $0x30] sm:$0xf]
    %v3206 = vld [vmem:[%s47 + $0x34] sm:$0xf]
    %v3207 = vld [vmem:[%s47 + $0x38] sm:$0xf]
    %v3208 = vld [vmem:[%s47 + $0x3c] sm:$0xf]
    %v3225 = vunpack.c.l.b16 %v3193
    %v3226 = vunpack.c.l.b16 %v3194
    %v3227 = vunpack.c.l.b16 %v3195
    %v3228 = vunpack.c.l.b16 %v3196
    %v3229 = vunpack.c.l.b16 %v3197
    %v3230 = vunpack.c.l.b16 %v3198
    %v3231 = vunpack.c.l.b16 %v3199
    %v3232 = vunpack.c.l.b16 %v3200
    %v3233 = vunpack.c.l.b16 %v3201
    %v3234 = vunpack.c.l.b16 %v3202
    %v3235 = vunpack.c.l.b16 %v3203
    %v3236 = vunpack.c.l.b16 %v3204
    %v3237 = vunpack.c.l.b16 %v3205
    %v3238 = vunpack.c.l.b16 %v3206
    %v3239 = vunpack.c.l.b16 %v3207
    %v3240 = vunpack.c.l.b16 %v3208
    %v3241 = vpack.c.b16 %v3226, %v3225
    %v3242 = vpack.c.b16 %v3228, %v3227
    %v3243 = vpack.c.b16 %v3230, %v3229
    %v3244 = vpack.c.b16 %v3232, %v3231
    %v3245 = vpack.c.b16 %v3234, %v3233
    %v3246 = vpack.c.b16 %v3236, %v3235
    %v3247 = vpack.c.b16 %v3238, %v3237
    %v3248 = vpack.c.b16 %v3240, %v3239
    %3257 = vmatprep.subr.bf16.mxu0 0
    %3258 = vmatpush1.bf16.msra.mxu0 %v3248
    %3259 = vmatprep.subr.bf16.mxu0 0
    %3260 = vmatpush1.bf16.msra.mxu0 %v3247
    %3261 = vmatprep.subr.bf16.mxu0 0
    %3262 = vmatpush1.bf16.msra.mxu0 %v3246
    %3263 = vmatprep.subr.bf16.mxu0 0
    %3264 = vmatpush1.bf16.msra.mxu0 %v3245
    %3265 = vmatprep.subr.bf16.mxu0 0
    %3266 = vmatpush1.bf16.msra.mxu0 %v3244
    %3267 = vmatprep.subr.bf16.mxu0 0
    %3268 = vmatpush1.bf16.msra.mxu0 %v3243
    %3269 = vmatprep.subr.bf16.mxu0 0
    %3270 = vmatpush1.bf16.msra.mxu0 %v3242
    %3271 = vmatprep.subr.bf16.mxu0 0
    %3272 = vmatpush1.bf16.msra.mxu0 %v3241
    %3273 = vmatprep.subr.bf16.mxu0 0
    %3274 = vmatpush2.bf16.msra.mxu0 0
    %3275 = vmatprep.subr.bf16.mxu0 0
    %3276 = vmatpush2.bf16.msra.mxu0 0
    %3277 = vmatprep.subr.bf16.mxu0 0
    %3278 = vmatpush2.bf16.msra.mxu0 0
    %3279 = vmatprep.subr.bf16.mxu0 0
    %3280 = vmatpush2.bf16.msra.mxu0 0
    %3281 = vmatprep.subr.bf16.mxu0 0
    %3282 = vmatpush2.bf16.msra.mxu0 0
    %3283 = vmatprep.subr.bf16.mxu0 0
    %3284 = vmatpush2.bf16.msra.mxu0 0
    %3285 = vmatprep.subr.bf16.mxu0 0
    %3286 = vmatpush2.bf16.msra.mxu0 0
    %3287 = vmatprep.subr.bf16.mxu0 0
    %3288 = vmatpush2.bf16.msra.mxu0 0
    %3289 = vmatprep.mubr.bf16.mxu0 0
    %3290 = vmatmul.mubr.bf16.gmra.mxu0 %v3192
    %v3291 = vpop.f32.mrf.mxu0
    %v3292 = vadd.f32 0.0, %v3291
    %v3293 = vpop.f32.mrf.mxu0
    %v3294 = vpop.f32.mrf.mxu0
    %v3295 = vpop.f32.mrf.mxu0
    %3296 = vdwg.mxu0
    %v3297 = vld [vmem:[%s49] sm:$0xf]
    %v3298 = vld [vmem:[%s49 + $0x4] sm:$0xf]
    %v3299 = vld [vmem:[%s49 + $0x8] sm:$0xf]
    %v3300 = vld [vmem:[%s49 + $0xc] sm:$0xf]
    %v3301 = vld [vmem:[%s49 + $0x10] sm:$0xf]
    %v3302 = vld [vmem:[%s49 + $0x14] sm:$0xf]
    %v3303 = vld [vmem:[%s49 + $0x18] sm:$0xf]
    %v3304 = vld [vmem:[%s49 + $0x1c] sm:$0xf]
    %v3305 = vld [vmem:[%s49 + $0x20] sm:$0xf]
    %v3306 = vld [vmem:[%s49 + $0x24] sm:$0xf]
    %v3307 = vld [vmem:[%s49 + $0x28] sm:$0xf]
    %v3308 = vld [vmem:[%s49 + $0x2c] sm:$0xf]
    %v3309 = vld [vmem:[%s49 + $0x30] sm:$0xf]
    %v3310 = vld [vmem:[%s49 + $0x34] sm:$0xf]
    %v3311 = vld [vmem:[%s49 + $0x38] sm:$0xf]
    %v3312 = vld [vmem:[%s49 + $0x3c] sm:$0xf]
    %v3329 = vunpack.c.l.b16 %v3297
    %v3330 = vunpack.c.l.b16 %v3298
    %v3331 = vunpack.c.l.b16 %v3299
    %v3332 = vunpack.c.l.b16 %v3300
    %v3333 = vunpack.c.l.b16 %v3301
    %v3334 = vunpack.c.l.b16 %v3302
    %v3335 = vunpack.c.l.b16 %v3303
    %v3336 = vunpack.c.l.b16 %v3304
    %v3337 = vunpack.c.l.b16 %v3305
    %v3338 = vunpack.c.l.b16 %v3306
    %v3339 = vunpack.c.l.b16 %v3307
    %v3340 = vunpack.c.l.b16 %v3308
    %v3341 = vunpack.c.l.b16 %v3309
    %v3342 = vunpack.c.l.b16 %v3310
    %v3343 = vunpack.c.l.b16 %v3311
    %v3344 = vunpack.c.l.b16 %v3312
    %v3345 = vpack.c.b16 %v3330, %v3329
    %v3346 = vpack.c.b16 %v3332, %v3331
    %v3347 = vpack.c.b16 %v3334, %v3333
    %v3348 = vpack.c.b16 %v3336, %v3335
    %v3349 = vpack.c.b16 %v3338, %v3337
    %v3350 = vpack.c.b16 %v3340, %v3339
    %v3351 = vpack.c.b16 %v3342, %v3341
    %v3352 = vpack.c.b16 %v3344, %v3343
    %3361 = vmatprep.subr.bf16.mxu0 0
    %3362 = vmatpush1.bf16.msra.mxu0 %v3352
    %3363 = vmatprep.subr.bf16.mxu0 0
    %3364 = vmatpush1.bf16.msra.mxu0 %v3351
    %3365 = vmatprep.subr.bf16.mxu0 0
    %3366 = vmatpush1.bf16.msra.mxu0 %v3350
    %3367 = vmatprep.subr.bf16.mxu0 0
    %3368 = vmatpush1.bf16.msra.mxu0 %v3349
    %3369 = vmatprep.subr.bf16.mxu0 0
    %3370 = vmatpush1.bf16.msra.mxu0 %v3348
    %3371 = vmatprep.subr.bf16.mxu0 0
    %3372 = vmatpush1.bf16.msra.mxu0 %v3347
    %3373 = vmatprep.subr.bf16.mxu0 0
    %3374 = vmatpush1.bf16.msra.mxu0 %v3346
    %3375 = vmatprep.subr.bf16.mxu0 0
    %3376 = vmatpush1.bf16.msra.mxu0 %v3345
    %3377 = vmatprep.subr.bf16.mxu0 0
    %3378 = vmatpush2.bf16.msra.mxu0 0
    %3379 = vmatprep.subr.bf16.mxu0 0
    %3380 = vmatpush2.bf16.msra.mxu0 0
    %3381 = vmatprep.subr.bf16.mxu0 0
    %3382 = vmatpush2.bf16.msra.mxu0 0
    %3383 = vmatprep.subr.bf16.mxu0 0
    %3384 = vmatpush2.bf16.msra.mxu0 0
    %3385 = vmatprep.subr.bf16.mxu0 0
    %3386 = vmatpush2.bf16.msra.mxu0 0
    %3387 = vmatprep.subr.bf16.mxu0 0
    %3388 = vmatpush2.bf16.msra.mxu0 0
    %3389 = vmatprep.subr.bf16.mxu0 0
    %3390 = vmatpush2.bf16.msra.mxu0 0
    %3391 = vmatprep.subr.bf16.mxu0 0
    %3392 = vmatpush2.bf16.msra.mxu0 0
    %3393 = vmatprep.mubr.bf16.mxu0 0
    %3394 = vmatmul.mubr.bf16.gmra.mxu0 %v3192
    %v3395 = vpop.f32.mrf.mxu0
    %v3396 = vadd.f32 0.0, %v3395
    %v3397 = vpop.f32.mrf.mxu0
    %v3398 = vpop.f32.mrf.mxu0
    %v3399 = vpop.f32.mrf.mxu0
    %3400 = vdwg.mxu0
    %v3401 = vmax.f32 %v3292, %v3396
    %v3402 = vpack.c.bf16 %v3401, %v3401
    %v3403 = vand.u32 %v783, 3
    %v3404 = vshra.s32 %v792, 5
    %vm3405 = vcmp.eq.s32.totalorder %v3403, 0
    %v3406 = vsel %vm3405, 1, 0
    %v3407 = vcvt.s32.f32 %v3406
    %v3408 = vsub.f32 3.0, %v3407
    %vm3409 = vcmp.eq.s32.totalorder %v3403, 3
    %v3410 = vsel %vm3409, 1, 0
    %v3411 = vcvt.s32.f32 %v3410
    %v3412 = vsub.f32 %v3408, %v3411
    %vm3413 = vcmp.eq.s32.totalorder %v3404, 0
    %v3414 = vsel %vm3413, 1, 0
    %v3415 = vcvt.s32.f32 %v3414
    %v3416 = vsub.f32 3.0, %v3415
    %vm3417 = vcmp.eq.s32.totalorder %v3404, 3
    %v3418 = vsel %vm3417, 1, 0
    %v3419 = vcvt.s32.f32 %v3418
    %v3420 = vsub.f32 %v3416, %v3419
    %v3421 = vmul.f32 %v3412, %v3420
    %v3422 = vadd.f32 %v3421, 1e-08
    %v3423 = vrcp.pop %v3422
    %v3424 = vmul.f32 9.0, %v3423
    %v3425 = vld [vmem:[#allocation33] sm:$0xf]
    %vm3426 = vcmask 64512
    %v3428 = vsel %vm3426, %v3425, 0
    %vm3430 = vcmask 1043456
    %v3432 = vsel %vm3430, %v3402, 0
    %3434 = vmatprep.subr.bf16.mxu0 0
    %3435 = vmatpush1.bf16.msra.mxu0 0
    %3436 = vmatprep.subr.bf16.mxu0 0
    %3437 = vmatpush1.bf16.msra.mxu0 0
    %3438 = vmatprep.subr.bf16.mxu0 0
    %3439 = vmatpush1.bf16.msra.mxu0 0
    %3440 = vmatprep.subr.bf16.mxu0 0
    %3441 = vmatpush1.bf16.msra.mxu0 0
    %3442 = vmatprep.subr.bf16.mxu0 0
    %3443 = vmatpush1.bf16.msra.mxu0 0
    %3444 = vmatprep.subr.bf16.mxu0 0
    %3445 = vmatpush1.bf16.msra.mxu0 0
    %3446 = vmatprep.subr.bf16.mxu0 0
    %3447 = vmatpush1.bf16.msra.mxu0 0
    %3448 = vmatprep.subr.bf16.mxu0 0
    %3449 = vmatpush1.bf16.msra.mxu0 %v3432
    %3450 = vmatprep.subr.bf16.mxu0 0
    %3451 = vmatpush2.bf16.msra.mxu0 0
    %3452 = vmatprep.subr.bf16.mxu0 0
    %3453 = vmatpush2.bf16.msra.mxu0 0
    %3454 = vmatprep.subr.bf16.mxu0 0
    %3455 = vmatpush2.bf16.msra.mxu0 0
    %3456 = vmatprep.subr.bf16.mxu0 0
    %3457 = vmatpush2.bf16.msra.mxu0 0
    %3458 = vmatprep.subr.bf16.mxu0 0
    %3459 = vmatpush2.bf16.msra.mxu0 0
    %3460 = vmatprep.subr.bf16.mxu0 0
    %3461 = vmatpush2.bf16.msra.mxu0 0
    %3462 = vmatprep.subr.bf16.mxu0 0
    %3463 = vmatpush2.bf16.msra.mxu0 0
    %3464 = vmatprep.subr.bf16.mxu0 0
    %3465 = vmatpush2.bf16.msra.mxu0 0
    %3466 = vmatprep.mubr.bf16.mxu0 0
    %3467 = vmatmul.mubr.bf16.gmra.mxu0 %v3428
    %v3468 = vpop.f32.mrf.mxu0
    %v3469 = vadd.f32 0.0, %v3468
    %v3470 = vpop.f32.mrf.mxu0
    %v3471 = vpop.f32.mrf.mxu0
    %v3472 = vpop.f32.mrf.mxu0
    %3473 = vdwg.mxu0
    %v3474 = vpack.c.bf16 %v3469, %v3469
    %v3475 = vld [vmem:[#allocation34] sm:$0xf]
    %v3477 = vsel %vm3426, %v3475, 0
    %3479 = vmatprep.subr.bf16.mxu0 0
    %3480 = vmatpush1.bf16.msra.mxu0 0
    %3481 = vmatprep.subr.bf16.mxu0 0
    %3482 = vmatpush1.bf16.msra.mxu0 0
    %3483 = vmatprep.subr.bf16.mxu0 0
    %3484 = vmatpush1.bf16.msra.mxu0 0
    %3485 = vmatprep.subr.bf16.mxu0 0
    %3486 = vmatpush1.bf16.msra.mxu0 0
    %3487 = vmatprep.subr.bf16.mxu0 0
    %3488 = vmatpush1.bf16.msra.mxu0 0
    %3489 = vmatprep.subr.bf16.mxu0 0
    %3490 = vmatpush1.bf16.msra.mxu0 0
    %3491 = vmatprep.subr.bf16.mxu0 0
    %3492 = vmatpush1.bf16.msra.mxu0 0
    %3493 = vmatprep.subr.bf16.mxu0 0
    %3494 = vmatpush1.bf16.msra.mxu0 %v3432
    %3495 = vmatprep.subr.bf16.mxu0 0
    %3496 = vmatpush2.bf16.msra.mxu0 0
    %3497 = vmatprep.subr.bf16.mxu0 0
    %3498 = vmatpush2.bf16.msra.mxu0 0
    %3499 = vmatprep.subr.bf16.mxu0 0
    %3500 = vmatpush2.bf16.msra.mxu0 0
    %3501 = vmatprep.subr.bf16.mxu0 0
    %3502 = vmatpush2.bf16.msra.mxu0 0
    %3503 = vmatprep.subr.bf16.mxu0 0
    %3504 = vmatpush2.bf16.msra.mxu0 0
    %3505 = vmatprep.subr.bf16.mxu0 0
    %3506 = vmatpush2.bf16.msra.mxu0 0
    %3507 = vmatprep.subr.bf16.mxu0 0
    %3508 = vmatpush2.bf16.msra.mxu0 0
    %3509 = vmatprep.subr.bf16.mxu0 0
    %3510 = vmatpush2.bf16.msra.mxu0 0
    %3511 = vmatprep.mubr.bf16.mxu0 0
    %3512 = vmatmul.mubr.bf16.gmra.mxu0 %v3477
    %v3513 = vpop.f32.mrf.mxu0
    %v3514 = vadd.f32 0.0, %v3513
    %v3515 = vpop.f32.mrf.mxu0
    %v3516 = vpop.f32.mrf.mxu0
    %v3517 = vpop.f32.mrf.mxu0
    %3518 = vdwg.mxu0
    %v3519 = vpack.c.bf16 %v3514, %v3514
    %v3520 = vld [vmem:[#allocation36] sm:$0xf]
    %v3521 = vld [vmem:[#allocation36 + $0x4] sm:$0xf]
    %v3522 = vld [vmem:[#allocation36 + $0x8] sm:$0xf]
    %v3523 = vld [vmem:[#allocation36 + $0xc] sm:$0xf]
    %v3524 = vld [vmem:[#allocation36 + $0x10] sm:$0xf]
    %v3525 = vld [vmem:[#allocation36 + $0x14] sm:$0xf]
    %v3526 = vld [vmem:[#allocation36 + $0x18] sm:$0xf]
    %v3527 = vld [vmem:[#allocation36 + $0x1c] sm:$0xf]
    %s3528 = scalar_lea.vmem [#allocation36], 32
    %v3529 = vld [vmem:[%s3528] sm:$0xf]
    %v3530 = vld [vmem:[%s3528 + $0x4] sm:$0xf]
    %v3531 = vld [vmem:[%s3528 + $0x8] sm:$0xf]
    %v3532 = vld [vmem:[%s3528 + $0xc] sm:$0xf]
    %v3533 = vld [vmem:[%s3528 + $0x10] sm:$0xf]
    %v3534 = vld [vmem:[%s3528 + $0x14] sm:$0xf]
    %v3535 = vld [vmem:[%s3528 + $0x18] sm:$0xf]
    %v3536 = vld [vmem:[%s3528 + $0x1c] sm:$0xf]
    %v3545 = vunpack.c.l.b16 %v3529
    %v3546 = vunpack.c.l.b16 %v3530
    %v3547 = vunpack.c.l.b16 %v3531
    %v3548 = vunpack.c.l.b16 %v3532
    %v3549 = vunpack.c.l.b16 %v3533
    %v3550 = vunpack.c.l.b16 %v3534
    %v3551 = vunpack.c.l.b16 %v3535
    %v3552 = vunpack.c.l.b16 %v3536
    %v3553 = vpack.c.b16 %v3546, %v3545
    %v3554 = vpack.c.b16 %v3548, %v3547
    %v3555 = vpack.c.b16 %v3550, %v3549
    %v3556 = vpack.c.b16 %v3552, %v3551
    %v3561 = vsel %vm2350, %v3402, 0
    %3563 = vmatprep.subr.bf16.mxu0 0
    %3564 = vmatpush1.bf16.msra.mxu0 0
    %3565 = vmatprep.subr.bf16.mxu0 0
    %3566 = vmatpush1.bf16.msra.mxu0 0
    %3567 = vmatprep.subr.bf16.mxu0 0
    %3568 = vmatpush1.bf16.msra.mxu0 0
    %3569 = vmatprep.subr.bf16.mxu0 0
    %3570 = vmatpush1.bf16.msra.mxu0 0
    %3571 = vmatprep.subr.bf16.mxu0 0
    %3572 = vmatpush1.bf16.msra.mxu0 %v3556
    %3573 = vmatprep.subr.bf16.mxu0 0
    %3574 = vmatpush1.bf16.msra.mxu0 %v3555
    %3575 = vmatprep.subr.bf16.mxu0 0
    %3576 = vmatpush1.bf16.msra.mxu0 %v3554
    %3577 = vmatprep.subr.bf16.mxu0 0
    %3578 = vmatpush1.bf16.msra.mxu0 %v3553
    %3579 = vmatprep.subr.bf16.mxu0 0
    %3580 = vmatpush2.bf16.msra.mxu0 0
    %3581 = vmatprep.subr.bf16.mxu0 0
    %3582 = vmatpush2.bf16.msra.mxu0 0
    %3583 = vmatprep.subr.bf16.mxu0 0
    %3584 = vmatpush2.bf16.msra.mxu0 0
    %3585 = vmatprep.subr.bf16.mxu0 0
    %3586 = vmatpush2.bf16.msra.mxu0 0
    %3587 = vmatprep.subr.bf16.mxu0 0
    %3588 = vmatpush2.bf16.msra.mxu0 0
    %3589 = vmatprep.subr.bf16.mxu0 0
    %3590 = vmatpush2.bf16.msra.mxu0 0
    %3591 = vmatprep.subr.bf16.mxu0 0
    %3592 = vmatpush2.bf16.msra.mxu0 0
    %3593 = vmatprep.subr.bf16.mxu0 0
    %3594 = vmatpush2.bf16.msra.mxu0 0
    %3595 = vmatprep.mubr.bf16.mxu0 0
    %3596 = vmatmul.mubr.bf16.gmra.mxu0 %v3561
    %v3597 = vpop.f32.mrf.mxu0
    %v3598 = vadd.f32 0.0, %v3597
    %v3599 = vpop.f32.mrf.mxu0
    %v3600 = vpop.f32.mrf.mxu0
    %v3601 = vpop.f32.mrf.mxu0
    %3602 = vdwg.mxu0
    %v3611 = vunpack.c.l.b16 %v3520
    %v3612 = vunpack.c.l.b16 %v3521
    %v3613 = vunpack.c.l.b16 %v3522
    %v3614 = vunpack.c.l.b16 %v3523
    %v3615 = vunpack.c.l.b16 %v3524
    %v3616 = vunpack.c.l.b16 %v3525
    %v3617 = vunpack.c.l.b16 %v3526
    %v3618 = vunpack.c.l.b16 %v3527
    %v3619 = vpack.c.b16 %v3612, %v3611
    %v3620 = vpack.c.b16 %v3614, %v3613
    %v3621 = vpack.c.b16 %v3616, %v3615
    %v3622 = vpack.c.b16 %v3618, %v3617
    %v3628 = vsel %vm2350, %v3474, 0
    %3630 = vmatprep.subr.bf16.mxu0 0
    %3631 = vmatpush1.bf16.msra.mxu0 0
    %3632 = vmatprep.subr.bf16.mxu0 0
    %3633 = vmatpush1.bf16.msra.mxu0 0
    %3634 = vmatprep.subr.bf16.mxu0 0
    %3635 = vmatpush1.bf16.msra.mxu0 0
    %3636 = vmatprep.subr.bf16.mxu0 0
    %3637 = vmatpush1.bf16.msra.mxu0 0
    %3638 = vmatprep.subr.bf16.mxu0 0
    %3639 = vmatpush1.bf16.msra.mxu0 %v3622
    %3640 = vmatprep.subr.bf16.mxu0 0
    %3641 = vmatpush1.bf16.msra.mxu0 %v3621
    %3642 = vmatprep.subr.bf16.mxu0 0
    %3643 = vmatpush1.bf16.msra.mxu0 %v3620
    %3644 = vmatprep.subr.bf16.mxu0 0
    %3645 = vmatpush1.bf16.msra.mxu0 %v3619
    %3646 = vmatprep.subr.bf16.mxu0 0
    %3647 = vmatpush2.bf16.msra.mxu0 0
    %3648 = vmatprep.subr.bf16.mxu0 0
    %3649 = vmatpush2.bf16.msra.mxu0 0
    %3650 = vmatprep.subr.bf16.mxu0 0
    %3651 = vmatpush2.bf16.msra.mxu0 0
    %3652 = vmatprep.subr.bf16.mxu0 0
    %3653 = vmatpush2.bf16.msra.mxu0 0
    %3654 = vmatprep.subr.bf16.mxu0 0
    %3655 = vmatpush2.bf16.msra.mxu0 0
    %3656 = vmatprep.subr.bf16.mxu0 0
    %3657 = vmatpush2.bf16.msra.mxu0 0
    %3658 = vmatprep.subr.bf16.mxu0 0
    %3659 = vmatpush2.bf16.msra.mxu0 0
    %3660 = vmatprep.subr.bf16.mxu0 0
    %3661 = vmatpush2.bf16.msra.mxu0 0
    %3662 = vmatprep.mubr.bf16.mxu0 0
    %3663 = vmatmul.mubr.bf16.gmra.mxu0 %v3628
    %v3664 = vpop.f32.mrf.mxu0
    %v3665 = vadd.f32 %v3598, %v3664
    %v3666 = vpop.f32.mrf.mxu0
    %v3667 = vpop.f32.mrf.mxu0
    %v3668 = vpop.f32.mrf.mxu0
    %3669 = vdwg.mxu0
    %s3670 = scalar_lea.vmem [#allocation36], 64
    %v3671 = vld [vmem:[%s3670] sm:$0xf]
    %v3672 = vld [vmem:[%s3670 + $0x4] sm:$0xf]
    %v3673 = vld [vmem:[%s3670 + $0x8] sm:$0xf]
    %v3674 = vld [vmem:[%s3670 + $0xc] sm:$0xf]
    %v3675 = vld [vmem:[%s3670 + $0x10] sm:$0xf]
    %v3676 = vld [vmem:[%s3670 + $0x14] sm:$0xf]
    %v3677 = vld [vmem:[%s3670 + $0x18] sm:$0xf]
    %v3678 = vld [vmem:[%s3670 + $0x1c] sm:$0xf]
    %v3687 = vunpack.c.l.b16 %v3671
    %v3688 = vunpack.c.l.b16 %v3672
    %v3689 = vunpack.c.l.b16 %v3673
    %v3690 = vunpack.c.l.b16 %v3674
    %v3691 = vunpack.c.l.b16 %v3675
    %v3692 = vunpack.c.l.b16 %v3676
    %v3693 = vunpack.c.l.b16 %v3677
    %v3694 = vunpack.c.l.b16 %v3678
    %v3695 = vpack.c.b16 %v3688, %v3687
    %v3696 = vpack.c.b16 %v3690, %v3689
    %v3697 = vpack.c.b16 %v3692, %v3691
    %v3698 = vpack.c.b16 %v3694, %v3693
    %v3704 = vsel %vm2350, %v3519, 0
    %3706 = vmatprep.subr.bf16.mxu0 0
    %3707 = vmatpush1.bf16.msra.mxu0 0
    %3708 = vmatprep.subr.bf16.mxu0 0
    %3709 = vmatpush1.bf16.msra.mxu0 0
    %3710 = vmatprep.subr.bf16.mxu0 0
    %3711 = vmatpush1.bf16.msra.mxu0 0
    %3712 = vmatprep.subr.bf16.mxu0 0
    %3713 = vmatpush1.bf16.msra.mxu0 0
    %3714 = vmatprep.subr.bf16.mxu0 0
    %3715 = vmatpush1.bf16.msra.mxu0 %v3698
    %3716 = vmatprep.subr.bf16.mxu0 0
    %3717 = vmatpush1.bf16.msra.mxu0 %v3697
    %3718 = vmatprep.subr.bf16.mxu0 0
    %3719 = vmatpush1.bf16.msra.mxu0 %v3696
    %3720 = vmatprep.subr.bf16.mxu0 0
    %3721 = vmatpush1.bf16.msra.mxu0 %v3695
    %3722 = vmatprep.subr.bf16.mxu0 0
    %3723 = vmatpush2.bf16.msra.mxu0 0
    %3724 = vmatprep.subr.bf16.mxu0 0
    %3725 = vmatpush2.bf16.msra.mxu0 0
    %3726 = vmatprep.subr.bf16.mxu0 0
    %3727 = vmatpush2.bf16.msra.mxu0 0
    %3728 = vmatprep.subr.bf16.mxu0 0
    %3729 = vmatpush2.bf16.msra.mxu0 0
    %3730 = vmatprep.subr.bf16.mxu0 0
    %3731 = vmatpush2.bf16.msra.mxu0 0
    %3732 = vmatprep.subr.bf16.mxu0 0
    %3733 = vmatpush2.bf16.msra.mxu0 0
    %3734 = vmatprep.subr.bf16.mxu0 0
    %3735 = vmatpush2.bf16.msra.mxu0 0
    %3736 = vmatprep.subr.bf16.mxu0 0
    %3737 = vmatpush2.bf16.msra.mxu0 0
    %3738 = vmatprep.mubr.bf16.mxu0 0
    %3739 = vmatmul.mubr.bf16.gmra.mxu0 %v3704
    %v3740 = vpop.f32.mrf.mxu0
    %v3741 = vadd.f32 0.0, %v3740
    %v3742 = vpop.f32.mrf.mxu0
    %v3743 = vpop.f32.mrf.mxu0
    %v3744 = vpop.f32.mrf.mxu0
    %3745 = vdwg.mxu0
    %v3746 = vadd.f32 %v3665, %v3741
    %v3747 = vmul.f32 %v3746, %v3424
    %v3748 = vrot.slane %v3747, 4
    %v3749 = vadd.f32 %v3747, %v3748
    %v3750 = vrot.slane %v3749, 2
    %v3751 = vadd.f32 %v3749, %v3750
    %v3752 = vrot.slane %v3751, 1
    %v3753 = vadd.f32 %v3751, %v3752
    %v3754 = vmul.f32 %v3747, %v3747
    %v3755 = vrot.slane %v3754, 4
    %v3756 = vadd.f32 %v3754, %v3755
    %v3757 = vrot.slane %v3756, 2
    %v3758 = vadd.f32 %v3756, %v3757
    %v3759 = vrot.slane %v3758, 1
    %v3760 = vadd.f32 %v3758, %v3759
    %3761 = vrot.lane.b32.xlu0 %v3753, 32
    %v3762 = vpop.permute.xlu0 %3761
    %v3763 = vadd.f32 %v3753, %v3762
    %3764 = vrot.lane.b32.xlu0 %v3760, 32
    %v3765 = vpop.permute.xlu0 %3764
    %v3766 = vadd.f32 %v3760, %v3765
    %3767 = vrot.lane.b32.xlu0 %v3763, 64
    %v3768 = vpop.permute.xlu0 %3767
    %v3769 = vadd.f32 %v3763, %v3768
    %3770 = vrot.lane.b32.xlu0 %v3766, 64
    %v3771 = vpop.permute.xlu0 %3770
    %v3772 = vadd.f32 %v3766, %v3771
    %v3773 = vmul.f32 %v3769, 0.03125
    %v3774 = vmul.f32 %v3772, 0.03125
    %v3775 = vmul.f32 %v3773, %v3773
    %v3776 = vsub.f32 %v3774, %v3775
    %v3777 = vlaneseq
    %v3778 = vshrl.u32 %v3777, 7
    %v3779 = vsub.s32 0, %v3778
    %v3780 = vrot.slane %v3773, %v3779
    %v3781 = vsub.f32 %v3747, %v3780
    %v3782 = vadd.f32 %v3776, 1e-05
    %v3783 = vrsqrt.pop %v3782
    %v3784 = vlaneseq
    %v3785 = vshrl.u32 %v3784, 7
    %v3786 = vsub.s32 0, %v3785
    %v3787 = vrot.slane %v3783, %v3786
    %v3788 = vmul.f32 %v3781, %v3787
    %v3789 = vld [vmem:[#allocation39] sm:$0x1]
    %v3791 = vlaneseq
    %v3792 = vshrl.u32 %v3791, 7
    %v3793 = vsub.s32 0, %v3792
    %v3794 = vrot.slane %v3789, %v3793
    %v3796 = vmul.f32 %v3788, %v3794
    %v3797 = vld [vmem:[#allocation40] sm:$0x1]
    %v3799 = vlaneseq
    %v3800 = vshrl.u32 %v3799, 7
    %v3801 = vsub.s32 0, %v3800
    %v3802 = vrot.slane %v3797, %v3801
    %v3804 = vadd.f32 %v3796, %v3802
    %vm3805 = vcmp.ge.f32.partialorder %v3804, 0.0
    %v3806 = vmul.f32 %v3804, 0.01
    %v3807 = vsel %vm3805, %v3804, %v3806
    %v3808 = vpack.c.bf16 %v3807, %v3807
    %v3810 = vsel %vm3430, %v3808, 0
    %3812 = vmatprep.subr.bf16.mxu0 0
    %3813 = vmatpush1.bf16.msra.mxu0 0
    %3814 = vmatprep.subr.bf16.mxu0 0
    %3815 = vmatpush1.bf16.msra.mxu0 0
    %3816 = vmatprep.subr.bf16.mxu0 0
    %3817 = vmatpush1.bf16.msra.mxu0 0
    %3818 = vmatprep.subr.bf16.mxu0 0
    %3819 = vmatpush1.bf16.msra.mxu0 0
    %3820 = vmatprep.subr.bf16.mxu0 0
    %3821 = vmatpush1.bf16.msra.mxu0 0
    %3822 = vmatprep.subr.bf16.mxu0 0
    %3823 = vmatpush1.bf16.msra.mxu0 0
    %3824 = vmatprep.subr.bf16.mxu0 0
    %3825 = vmatpush1.bf16.msra.mxu0 0
    %3826 = vmatprep.subr.bf16.mxu0 0
    %3827 = vmatpush1.bf16.msra.mxu0 %v3810
    %3828 = vmatprep.subr.bf16.mxu0 0
    %3829 = vmatpush2.bf16.msra.mxu0 0
    %3830 = vmatprep.subr.bf16.mxu0 0
    %3831 = vmatpush2.bf16.msra.mxu0 0
    %3832 = vmatprep.subr.bf16.mxu0 0
    %3833 = vmatpush2.bf16.msra.mxu0 0
    %3834 = vmatprep.subr.bf16.mxu0 0
    %3835 = vmatpush2.bf16.msra.mxu0 0
    %3836 = vmatprep.subr.bf16.mxu0 0
    %3837 = vmatpush2.bf16.msra.mxu0 0
    %3838 = vmatprep.subr.bf16.mxu0 0
    %3839 = vmatpush2.bf16.msra.mxu0 0
    %3840 = vmatprep.subr.bf16.mxu0 0
    %3841 = vmatpush2.bf16.msra.mxu0 0
    %3842 = vmatprep.subr.bf16.mxu0 0
    %3843 = vmatpush2.bf16.msra.mxu0 0
    %3844 = vmatprep.mubr.bf16.mxu0 0
    %3845 = vmatmul.mubr.bf16.gmra.mxu0 %v3428
    %v3846 = vpop.f32.mrf.mxu0
    %v3847 = vadd.f32 0.0, %v3846
    %v3848 = vpop.f32.mrf.mxu0
    %v3849 = vpop.f32.mrf.mxu0
    %v3850 = vpop.f32.mrf.mxu0
    %3851 = vdwg.mxu0
    %v3852 = vpack.c.bf16 %v3847, %v3847
    %3853 = vmatprep.subr.bf16.mxu0 0
    %3854 = vmatpush1.bf16.msra.mxu0 0
    %3855 = vmatprep.subr.bf16.mxu0 0
    %3856 = vmatpush1.bf16.msra.mxu0 0
    %3857 = vmatprep.subr.bf16.mxu0 0
    %3858 = vmatpush1.bf16.msra.mxu0 0
    %3859 = vmatprep.subr.bf16.mxu0 0
    %3860 = vmatpush1.bf16.msra.mxu0 0
    %3861 = vmatprep.subr.bf16.mxu0 0
    %3862 = vmatpush1.bf16.msra.mxu0 0
    %3863 = vmatprep.subr.bf16.mxu0 0
    %3864 = vmatpush1.bf16.msra.mxu0 0
    %3865 = vmatprep.subr.bf16.mxu0 0
    %3866 = vmatpush1.bf16.msra.mxu0 0
    %3867 = vmatprep.subr.bf16.mxu0 0
    %3868 = vmatpush1.bf16.msra.mxu0 %v3810
    %3869 = vmatprep.subr.bf16.mxu0 0
    %3870 = vmatpush2.bf16.msra.mxu0 0
    %3871 = vmatprep.subr.bf16.mxu0 0
    %3872 = vmatpush2.bf16.msra.mxu0 0
    %3873 = vmatprep.subr.bf16.mxu0 0
    %3874 = vmatpush2.bf16.msra.mxu0 0
    %3875 = vmatprep.subr.bf16.mxu0 0
    %3876 = vmatpush2.bf16.msra.mxu0 0
    %3877 = vmatprep.subr.bf16.mxu0 0
    %3878 = vmatpush2.bf16.msra.mxu0 0
    %3879 = vmatprep.subr.bf16.mxu0 0
    %3880 = vmatpush2.bf16.msra.mxu0 0
    %3881 = vmatprep.subr.bf16.mxu0 0
    %3882 = vmatpush2.bf16.msra.mxu0 0
    %3883 = vmatprep.subr.bf16.mxu0 0
    %3884 = vmatpush2.bf16.msra.mxu0 0
    %3885 = vmatprep.mubr.bf16.mxu0 0
    %3886 = vmatmul.mubr.bf16.gmra.mxu0 %v3477
    %v3887 = vpop.f32.mrf.mxu0
    %v3888 = vadd.f32 0.0, %v3887
    %v3889 = vpop.f32.mrf.mxu0
    %v3890 = vpop.f32.mrf.mxu0
    %v3891 = vpop.f32.mrf.mxu0
    %3892 = vdwg.mxu0
    %v3893 = vpack.c.bf16 %v3888, %v3888
    %v3894 = vld [vmem:[#allocation37] sm:$0xf]
    %v3895 = vld [vmem:[#allocation37 + $0x4] sm:$0xf]
    %v3896 = vld [vmem:[#allocation37 + $0x8] sm:$0xf]
    %v3897 = vld [vmem:[#allocation37 + $0xc] sm:$0xf]
    %v3898 = vld [vmem:[#allocation37 + $0x10] sm:$0xf]
    %v3899 = vld [vmem:[#allocation37 + $0x14] sm:$0xf]
    %v3900 = vld [vmem:[#allocation37 + $0x18] sm:$0xf]
    %v3901 = vld [vmem:[#allocation37 + $0x1c] sm:$0xf]
    %v3902 = vld [vmem:[#allocation37 + $0x20] sm:$0xf]
    %v3903 = vld [vmem:[#allocation37 + $0x24] sm:$0xf]
    %v3904 = vld [vmem:[#allocation37 + $0x28] sm:$0xf]
    %v3905 = vld [vmem:[#allocation37 + $0x2c] sm:$0xf]
    %v3906 = vld [vmem:[#allocation37 + $0x30] sm:$0xf]
    %v3907 = vld [vmem:[#allocation37 + $0x34] sm:$0xf]
    %v3908 = vld [vmem:[#allocation37 + $0x38] sm:$0xf]
    %v3909 = vld [vmem:[#allocation37 + $0x3c] sm:$0xf]
    %s3910 = scalar_lea.vmem [#allocation37], 64
    %v3911 = vld [vmem:[%s3910] sm:$0xf]
    %v3912 = vld [vmem:[%s3910 + $0x4] sm:$0xf]
    %v3913 = vld [vmem:[%s3910 + $0x8] sm:$0xf]
    %v3914 = vld [vmem:[%s3910 + $0xc] sm:$0xf]
    %v3915 = vld [vmem:[%s3910 + $0x10] sm:$0xf]
    %v3916 = vld [vmem:[%s3910 + $0x14] sm:$0xf]
    %v3917 = vld [vmem:[%s3910 + $0x18] sm:$0xf]
    %v3918 = vld [vmem:[%s3910 + $0x1c] sm:$0xf]
    %v3919 = vld [vmem:[%s3910 + $0x20] sm:$0xf]
    %v3920 = vld [vmem:[%s3910 + $0x24] sm:$0xf]
    %v3921 = vld [vmem:[%s3910 + $0x28] sm:$0xf]
    %v3922 = vld [vmem:[%s3910 + $0x2c] sm:$0xf]
    %v3923 = vld [vmem:[%s3910 + $0x30] sm:$0xf]
    %v3924 = vld [vmem:[%s3910 + $0x34] sm:$0xf]
    %v3925 = vld [vmem:[%s3910 + $0x38] sm:$0xf]
    %v3926 = vld [vmem:[%s3910 + $0x3c] sm:$0xf]
    %v3943 = vunpack.c.l.b16 %v3911
    %v3944 = vunpack.c.l.b16 %v3912
    %v3945 = vunpack.c.l.b16 %v3913
    %v3946 = vunpack.c.l.b16 %v3914
    %v3947 = vunpack.c.l.b16 %v3915
    %v3948 = vunpack.c.l.b16 %v3916
    %v3949 = vunpack.c.l.b16 %v3917
    %v3950 = vunpack.c.l.b16 %v3918
    %v3951 = vunpack.c.l.b16 %v3919
    %v3952 = vunpack.c.l.b16 %v3920
    %v3953 = vunpack.c.l.b16 %v3921
    %v3954 = vunpack.c.l.b16 %v3922
    %v3955 = vunpack.c.l.b16 %v3923
    %v3956 = vunpack.c.l.b16 %v3924
    %v3957 = vunpack.c.l.b16 %v3925
    %v3958 = vunpack.c.l.b16 %v3926
    %v3959 = vpack.c.b16 %v3944, %v3943
    %v3960 = vpack.c.b16 %v3946, %v3945
    %v3961 = vpack.c.b16 %v3948, %v3947
    %v3962 = vpack.c.b16 %v3950, %v3949
    %v3963 = vpack.c.b16 %v3952, %v3951
    %v3964 = vpack.c.b16 %v3954, %v3953
    %v3965 = vpack.c.b16 %v3956, %v3955
    %v3966 = vpack.c.b16 %v3958, %v3957
    %3975 = vmatprep.subr.bf16.mxu0 0
    %3976 = vmatpush1.bf16.msra.mxu0 %v3966
    %3977 = vmatprep.subr.bf16.mxu0 0
    %3978 = vmatpush1.bf16.msra.mxu0 %v3965
    %3979 = vmatprep.subr.bf16.mxu0 0
    %3980 = vmatpush1.bf16.msra.mxu0 %v3964
    %3981 = vmatprep.subr.bf16.mxu0 0
    %3982 = vmatpush1.bf16.msra.mxu0 %v3963
    %3983 = vmatprep.subr.bf16.mxu0 0
    %3984 = vmatpush1.bf16.msra.mxu0 %v3962
    %3985 = vmatprep.subr.bf16.mxu0 0
    %3986 = vmatpush1.bf16.msra.mxu0 %v3961
    %3987 = vmatprep.subr.bf16.mxu0 0
    %3988 = vmatpush1.bf16.msra.mxu0 %v3960
    %3989 = vmatprep.subr.bf16.mxu0 0
    %3990 = vmatpush1.bf16.msra.mxu0 %v3959
    %3991 = vmatprep.subr.bf16.mxu0 0
    %3992 = vmatpush2.bf16.msra.mxu0 0
    %3993 = vmatprep.subr.bf16.mxu0 0
    %3994 = vmatpush2.bf16.msra.mxu0 0
    %3995 = vmatprep.subr.bf16.mxu0 0
    %3996 = vmatpush2.bf16.msra.mxu0 0
    %3997 = vmatprep.subr.bf16.mxu0 0
    %3998 = vmatpush2.bf16.msra.mxu0 0
    %3999 = vmatprep.subr.bf16.mxu0 0
    %4000 = vmatpush2.bf16.msra.mxu0 0
    %4001 = vmatprep.subr.bf16.mxu0 0
    %4002 = vmatpush2.bf16.msra.mxu0 0
    %4003 = vmatprep.subr.bf16.mxu0 0
    %4004 = vmatpush2.bf16.msra.mxu0 0
    %4005 = vmatprep.subr.bf16.mxu0 0
    %4006 = vmatpush2.bf16.msra.mxu0 0
    %4007 = vmatprep.mubr.bf16.mxu0 0
    %4008 = vmatmul.mubr.bf16.gmra.mxu0 %v3808
    %v4009 = vpop.f32.mrf.mxu0
    %v4010 = vadd.f32 0.0, %v4009
    %v4011 = vpop.f32.mrf.mxu0
    %v4012 = vpop.f32.mrf.mxu0
    %v4013 = vpop.f32.mrf.mxu0
    %4014 = vdwg.mxu0
    %v4031 = vunpack.c.l.b16 %v3894
    %v4032 = vunpack.c.l.b16 %v3895
    %v4033 = vunpack.c.l.b16 %v3896
    %v4034 = vunpack.c.l.b16 %v3897
    %v4035 = vunpack.c.l.b16 %v3898
    %v4036 = vunpack.c.l.b16 %v3899
    %v4037 = vunpack.c.l.b16 %v3900
    %v4038 = vunpack.c.l.b16 %v3901
    %v4039 = vunpack.c.l.b16 %v3902
    %v4040 = vunpack.c.l.b16 %v3903
    %v4041 = vunpack.c.l.b16 %v3904
    %v4042 = vunpack.c.l.b16 %v3905
    %v4043 = vunpack.c.l.b16 %v3906
    %v4044 = vunpack.c.l.b16 %v3907
    %v4045 = vunpack.c.l.b16 %v3908
    %v4046 = vunpack.c.l.b16 %v3909
    %v4047 = vpack.c.b16 %v4032, %v4031
    %v4048 = vpack.c.b16 %v4034, %v4033
    %v4049 = vpack.c.b16 %v4036, %v4035
    %v4050 = vpack.c.b16 %v4038, %v4037
    %v4051 = vpack.c.b16 %v4040, %v4039
    %v4052 = vpack.c.b16 %v4042, %v4041
    %v4053 = vpack.c.b16 %v4044, %v4043
    %v4054 = vpack.c.b16 %v4046, %v4045
    %4063 = vmatprep.subr.bf16.mxu0 0
    %4064 = vmatpush1.bf16.msra.mxu0 %v4054
    %4065 = vmatprep.subr.bf16.mxu0 0
    %4066 = vmatpush1.bf16.msra.mxu0 %v4053
    %4067 = vmatprep.subr.bf16.mxu0 0
    %4068 = vmatpush1.bf16.msra.mxu0 %v4052
    %4069 = vmatprep.subr.bf16.mxu0 0
    %4070 = vmatpush1.bf16.msra.mxu0 %v4051
    %4071 = vmatprep.subr.bf16.mxu0 0
    %4072 = vmatpush1.bf16.msra.mxu0 %v4050
    %4073 = vmatprep.subr.bf16.mxu0 0
    %4074 = vmatpush1.bf16.msra.mxu0 %v4049
    %4075 = vmatprep.subr.bf16.mxu0 0
    %4076 = vmatpush1.bf16.msra.mxu0 %v4048
    %4077 = vmatprep.subr.bf16.mxu0 0
    %4078 = vmatpush1.bf16.msra.mxu0 %v4047
    %4079 = vmatprep.subr.bf16.mxu0 0
    %4080 = vmatpush2.bf16.msra.mxu0 0
    %4081 = vmatprep.subr.bf16.mxu0 0
    %4082 = vmatpush2.bf16.msra.mxu0 0
    %4083 = vmatprep.subr.bf16.mxu0 0
    %4084 = vmatpush2.bf16.msra.mxu0 0
    %4085 = vmatprep.subr.bf16.mxu0 0
    %4086 = vmatpush2.bf16.msra.mxu0 0
    %4087 = vmatprep.subr.bf16.mxu0 0
    %4088 = vmatpush2.bf16.msra.mxu0 0
    %4089 = vmatprep.subr.bf16.mxu0 0
    %4090 = vmatpush2.bf16.msra.mxu0 0
    %4091 = vmatprep.subr.bf16.mxu0 0
    %4092 = vmatpush2.bf16.msra.mxu0 0
    %4093 = vmatprep.subr.bf16.mxu0 0
    %4094 = vmatpush2.bf16.msra.mxu0 0
    %4095 = vmatprep.mubr.bf16.mxu0 0
    %4096 = vmatmul.mubr.bf16.gmra.mxu0 %v3852
    %v4097 = vpop.f32.mrf.mxu0
    %v4098 = vadd.f32 %v4010, %v4097
    %v4099 = vpop.f32.mrf.mxu0
    %v4100 = vpop.f32.mrf.mxu0
    %v4101 = vpop.f32.mrf.mxu0
    %4102 = vdwg.mxu0
    %s4103 = scalar_lea.vmem [#allocation37], 128
    %v4104 = vld [vmem:[%s4103] sm:$0xf]
    %v4105 = vld [vmem:[%s4103 + $0x4] sm:$0xf]
    %v4106 = vld [vmem:[%s4103 + $0x8] sm:$0xf]
    %v4107 = vld [vmem:[%s4103 + $0xc] sm:$0xf]
    %v4108 = vld [vmem:[%s4103 + $0x10] sm:$0xf]
    %v4109 = vld [vmem:[%s4103 + $0x14] sm:$0xf]
    %v4110 = vld [vmem:[%s4103 + $0x18] sm:$0xf]
    %v4111 = vld [vmem:[%s4103 + $0x1c] sm:$0xf]
    %v4112 = vld [vmem:[%s4103 + $0x20] sm:$0xf]
    %v4113 = vld [vmem:[%s4103 + $0x24] sm:$0xf]
    %v4114 = vld [vmem:[%s4103 + $0x28] sm:$0xf]
    %v4115 = vld [vmem:[%s4103 + $0x2c] sm:$0xf]
    %v4116 = vld [vmem:[%s4103 + $0x30] sm:$0xf]
    %v4117 = vld [vmem:[%s4103 + $0x34] sm:$0xf]
    %v4118 = vld [vmem:[%s4103 + $0x38] sm:$0xf]
    %v4119 = vld [vmem:[%s4103 + $0x3c] sm:$0xf]
    %v4136 = vunpack.c.l.b16 %v4104
    %v4137 = vunpack.c.l.b16 %v4105
    %v4138 = vunpack.c.l.b16 %v4106
    %v4139 = vunpack.c.l.b16 %v4107
    %v4140 = vunpack.c.l.b16 %v4108
    %v4141 = vunpack.c.l.b16 %v4109
    %v4142 = vunpack.c.l.b16 %v4110
    %v4143 = vunpack.c.l.b16 %v4111
    %v4144 = vunpack.c.l.b16 %v4112
    %v4145 = vunpack.c.l.b16 %v4113
    %v4146 = vunpack.c.l.b16 %v4114
    %v4147 = vunpack.c.l.b16 %v4115
    %v4148 = vunpack.c.l.b16 %v4116
    %v4149 = vunpack.c.l.b16 %v4117
    %v4150 = vunpack.c.l.b16 %v4118
    %v4151 = vunpack.c.l.b16 %v4119
    %v4152 = vpack.c.b16 %v4137, %v4136
    %v4153 = vpack.c.b16 %v4139, %v4138
    %v4154 = vpack.c.b16 %v4141, %v4140
    %v4155 = vpack.c.b16 %v4143, %v4142
    %v4156 = vpack.c.b16 %v4145, %v4144
    %v4157 = vpack.c.b16 %v4147, %v4146
    %v4158 = vpack.c.b16 %v4149, %v4148
    %v4159 = vpack.c.b16 %v4151, %v4150
    %4168 = vmatprep.subr.bf16.mxu0 0
    %4169 = vmatpush1.bf16.msra.mxu0 %v4159
    %4170 = vmatprep.subr.bf16.mxu0 0
    %4171 = vmatpush1.bf16.msra.mxu0 %v4158
    %4172 = vmatprep.subr.bf16.mxu0 0
    %4173 = vmatpush1.bf16.msra.mxu0 %v4157
    %4174 = vmatprep.subr.bf16.mxu0 0
    %4175 = vmatpush1.bf16.msra.mxu0 %v4156
    %4176 = vmatprep.subr.bf16.mxu0 0
    %4177 = vmatpush1.bf16.msra.mxu0 %v4155
    %4178 = vmatprep.subr.bf16.mxu0 0
    %4179 = vmatpush1.bf16.msra.mxu0 %v4154
    %4180 = vmatprep.subr.bf16.mxu0 0
    %4181 = vmatpush1.bf16.msra.mxu0 %v4153
    %4182 = vmatprep.subr.bf16.mxu0 0
    %4183 = vmatpush1.bf16.msra.mxu0 %v4152
    %4184 = vmatprep.subr.bf16.mxu0 0
    %4185 = vmatpush2.bf16.msra.mxu0 0
    %4186 = vmatprep.subr.bf16.mxu0 0
    %4187 = vmatpush2.bf16.msra.mxu0 0
    %4188 = vmatprep.subr.bf16.mxu0 0
    %4189 = vmatpush2.bf16.msra.mxu0 0
    %4190 = vmatprep.subr.bf16.mxu0 0
    %4191 = vmatpush2.bf16.msra.mxu0 0
    %4192 = vmatprep.subr.bf16.mxu0 0
    %4193 = vmatpush2.bf16.msra.mxu0 0
    %4194 = vmatprep.subr.bf16.mxu0 0
    %4195 = vmatpush2.bf16.msra.mxu0 0
    %4196 = vmatprep.subr.bf16.mxu0 0
    %4197 = vmatpush2.bf16.msra.mxu0 0
    %4198 = vmatprep.subr.bf16.mxu0 0
    %4199 = vmatpush2.bf16.msra.mxu0 0
    %4200 = vmatprep.mubr.bf16.mxu0 0
    %4201 = vmatmul.mubr.bf16.gmra.mxu0 %v3893
    %v4202 = vpop.f32.mrf.mxu0
    %v4203 = vadd.f32 0.0, %v4202
    %v4204 = vpop.f32.mrf.mxu0
    %v4205 = vpop.f32.mrf.mxu0
    %v4206 = vpop.f32.mrf.mxu0
    %4207 = vdwg.mxu0
    %v4208 = vadd.f32 %v4098, %v4203
    %v4209 = vmul.f32 %v4208, %v3424
    %v4210 = vrot.slane %v4209, 4
    %v4211 = vadd.f32 %v4209, %v4210
    %v4212 = vrot.slane %v4211, 2
    %v4213 = vadd.f32 %v4211, %v4212
    %v4214 = vrot.slane %v4213, 1
    %v4215 = vadd.f32 %v4213, %v4214
    %v4216 = vmul.f32 %v4209, %v4209
    %v4217 = vrot.slane %v4216, 4
    %v4218 = vadd.f32 %v4216, %v4217
    %v4219 = vrot.slane %v4218, 2
    %v4220 = vadd.f32 %v4218, %v4219
    %v4221 = vrot.slane %v4220, 1
    %v4222 = vadd.f32 %v4220, %v4221
    %4223 = vrot.lane.b32.xlu0 %v4215, 32
    %v4224 = vpop.permute.xlu0 %4223
    %v4225 = vadd.f32 %v4215, %v4224
    %4226 = vrot.lane.b32.xlu0 %v4222, 32
    %v4227 = vpop.permute.xlu0 %4226
    %v4228 = vadd.f32 %v4222, %v4227
    %4229 = vrot.lane.b32.xlu0 %v4225, 64
    %v4230 = vpop.permute.xlu0 %4229
    %v4231 = vadd.f32 %v4225, %v4230
    %4232 = vrot.lane.b32.xlu0 %v4228, 64
    %v4233 = vpop.permute.xlu0 %4232
    %v4234 = vadd.f32 %v4228, %v4233
    %v4235 = vmul.f32 %v4231, 0.03125
    %v4236 = vmul.f32 %v4234, 0.03125
    %v4237 = vmul.f32 %v4235, %v4235
    %v4238 = vsub.f32 %v4236, %v4237
    %v4239 = vlaneseq
    %v4240 = vshrl.u32 %v4239, 7
    %v4241 = vsub.s32 0, %v4240
    %v4242 = vrot.slane %v4235, %v4241
    %v4243 = vsub.f32 %v4209, %v4242
    %v4244 = vadd.f32 %v4238, 1e-05
    %v4245 = vrsqrt.pop %v4244
    %v4246 = vlaneseq
    %v4247 = vshrl.u32 %v4246, 7
    %v4248 = vsub.s32 0, %v4247
    %v4249 = vrot.slane %v4245, %v4248
    %v4250 = vmul.f32 %v4243, %v4249
    %v4251 = vld [vmem:[#allocation42] sm:$0x1]
    %v4253 = vlaneseq
    %v4254 = vshrl.u32 %v4253, 7
    %v4255 = vsub.s32 0, %v4254
    %v4256 = vrot.slane %v4251, %v4255
    %v4258 = vmul.f32 %v4250, %v4256
    %v4259 = vld [vmem:[#allocation43] sm:$0x1]
    %v4261 = vlaneseq
    %v4262 = vshrl.u32 %v4261, 7
    %v4263 = vsub.s32 0, %v4262
    %v4264 = vrot.slane %v4259, %v4263
    %v4266 = vadd.f32 %v4258, %v4264
    %vm4267 = vcmp.ge.f32.partialorder %v4266, 0.0
    %v4268 = vmul.f32 %v4266, 0.01
    %v4269 = vsel %vm4267, %v4266, %v4268
    %v4270 = vpack.c.bf16 %v4269, %v4269
    %v4271 = vld [vmem:[#allocation45] sm:$0xf]
    %v4272 = vld [vmem:[#allocation45 + $0x4] sm:$0xf]
    %v4273 = vld [vmem:[#allocation45 + $0x8] sm:$0xf]
    %v4274 = vld [vmem:[#allocation45 + $0xc] sm:$0xf]
    %v4275 = vld [vmem:[#allocation45 + $0x10] sm:$0xf]
    %v4276 = vld [vmem:[#allocation45 + $0x14] sm:$0xf]
    %v4277 = vld [vmem:[#allocation45 + $0x18] sm:$0xf]
    %v4278 = vld [vmem:[#allocation45 + $0x1c] sm:$0xf]
    %v4279 = vld [vmem:[#allocation45 + $0x20] sm:$0xf]
    %v4280 = vld [vmem:[#allocation45 + $0x24] sm:$0xf]
    %v4281 = vld [vmem:[#allocation45 + $0x28] sm:$0xf]
    %v4282 = vld [vmem:[#allocation45 + $0x2c] sm:$0xf]
    %v4283 = vld [vmem:[#allocation45 + $0x30] sm:$0xf]
    %v4284 = vld [vmem:[#allocation45 + $0x34] sm:$0xf]
    %v4285 = vld [vmem:[#allocation45 + $0x38] sm:$0xf]
    %v4286 = vld [vmem:[#allocation45 + $0x3c] sm:$0xf]
    %v4303 = vunpack.c.l.b16 %v4271
    %v4304 = vunpack.c.l.b16 %v4272
    %v4305 = vunpack.c.l.b16 %v4273
    %v4306 = vunpack.c.l.b16 %v4274
    %v4307 = vunpack.c.l.b16 %v4275
    %v4308 = vunpack.c.l.b16 %v4276
    %v4309 = vunpack.c.l.b16 %v4277
    %v4310 = vunpack.c.l.b16 %v4278
    %v4311 = vunpack.c.l.b16 %v4279
    %v4312 = vunpack.c.l.b16 %v4280
    %v4313 = vunpack.c.l.b16 %v4281
    %v4314 = vunpack.c.l.b16 %v4282
    %v4315 = vunpack.c.l.b16 %v4283
    %v4316 = vunpack.c.l.b16 %v4284
    %v4317 = vunpack.c.l.b16 %v4285
    %v4318 = vunpack.c.l.b16 %v4286
    %v4319 = vpack.c.b16 %v4304, %v4303
    %v4320 = vpack.c.b16 %v4306, %v4305
    %v4321 = vpack.c.b16 %v4308, %v4307
    %v4322 = vpack.c.b16 %v4310, %v4309
    %v4323 = vpack.c.b16 %v4312, %v4311
    %v4324 = vpack.c.b16 %v4314, %v4313
    %v4325 = vpack.c.b16 %v4316, %v4315
    %v4326 = vpack.c.b16 %v4318, %v4317
    %4335 = vmatprep.subr.bf16.mxu0 0
    %4336 = vmatpush1.bf16.msra.mxu0 %v4326
    %4337 = vmatprep.subr.bf16.mxu0 0
    %4338 = vmatpush1.bf16.msra.mxu0 %v4325
    %4339 = vmatprep.subr.bf16.mxu0 0
    %4340 = vmatpush1.bf16.msra.mxu0 %v4324
    %4341 = vmatprep.subr.bf16.mxu0 0
    %4342 = vmatpush1.bf16.msra.mxu0 %v4323
    %4343 = vmatprep.subr.bf16.mxu0 0
    %4344 = vmatpush1.bf16.msra.mxu0 %v4322
    %4345 = vmatprep.subr.bf16.mxu0 0
    %4346 = vmatpush1.bf16.msra.mxu0 %v4321
    %4347 = vmatprep.subr.bf16.mxu0 0
    %4348 = vmatpush1.bf16.msra.mxu0 %v4320
    %4349 = vmatprep.subr.bf16.mxu0 0
    %4350 = vmatpush1.bf16.msra.mxu0 %v4319
    %4351 = vmatprep.subr.bf16.mxu0 0
    %4352 = vmatpush2.bf16.msra.mxu0 0
    %4353 = vmatprep.subr.bf16.mxu0 0
    %4354 = vmatpush2.bf16.msra.mxu0 0
    %4355 = vmatprep.subr.bf16.mxu0 0
    %4356 = vmatpush2.bf16.msra.mxu0 0
    %4357 = vmatprep.subr.bf16.mxu0 0
    %4358 = vmatpush2.bf16.msra.mxu0 0
    %4359 = vmatprep.subr.bf16.mxu0 0
    %4360 = vmatpush2.bf16.msra.mxu0 0
    %4361 = vmatprep.subr.bf16.mxu0 0
    %4362 = vmatpush2.bf16.msra.mxu0 0
    %4363 = vmatprep.subr.bf16.mxu0 0
    %4364 = vmatpush2.bf16.msra.mxu0 0
    %4365 = vmatprep.subr.bf16.mxu0 0
    %4366 = vmatpush2.bf16.msra.mxu0 0
    %4367 = vmatprep.mubr.bf16.mxu0 0
    %4368 = vmatmul.mubr.bf16.gmra.mxu0 %v4270
    %v4369 = vpop.f32.mrf.mxu0
    %v4370 = vadd.f32 0.0, %v4369
    %v4371 = vpop.f32.mrf.mxu0
    %v4372 = vpop.f32.mrf.mxu0
    %v4373 = vpop.f32.mrf.mxu0
    %4374 = vdwg.mxu0
    %v4375 = vld [vmem:[%s69] sm:$0xf]
    %v4376 = vld [vmem:[%s69 + $0x4] sm:$0xf]
    %v4377 = vpack.c.bf16 %v4370, %v4370
    %v4378 = vld [vmem:[#allocation46] sm:$0x1]
    %v4380 = vlaneseq
    %v4381 = vshrl.u32 %v4380, 7
    %v4382 = vsub.s32 0, %v4381
    %v4383 = vrot.slane %v4378, %v4382
    %v4387 = vunpack.c.l.b16 %v4375
    %v4388 = vunpack.c.l.b16 %v4376
    %v4389 = vpack.c.b16 %v4388, %v4387
    %v4391 = vsel %vm3426, %v4389, 0
    %v4394 = vsel %vm3430, %v4377, 0
    %4396 = vmatprep.subr.bf16.mxu0 0
    %4397 = vmatpush1.bf16.msra.mxu0 0
    %4398 = vmatprep.subr.bf16.mxu0 0
    %4399 = vmatpush1.bf16.msra.mxu0 0
    %4400 = vmatprep.subr.bf16.mxu0 0
    %4401 = vmatpush1.bf16.msra.mxu0 0
    %4402 = vmatprep.subr.bf16.mxu0 0
    %4403 = vmatpush1.bf16.msra.mxu0 0
    %4404 = vmatprep.subr.bf16.mxu0 0
    %4405 = vmatpush1.bf16.msra.mxu0 0
    %4406 = vmatprep.subr.bf16.mxu0 0
    %4407 = vmatpush1.bf16.msra.mxu0 0
    %4408 = vmatprep.subr.bf16.mxu0 0
    %4409 = vmatpush1.bf16.msra.mxu0 0
    %4410 = vmatprep.subr.bf16.mxu0 0
    %4411 = vmatpush1.bf16.msra.mxu0 %v4394
    %4412 = vmatprep.subr.bf16.mxu0 0
    %4413 = vmatpush2.bf16.msra.mxu0 0
    %4414 = vmatprep.subr.bf16.mxu0 0
    %4415 = vmatpush2.bf16.msra.mxu0 0
    %4416 = vmatprep.subr.bf16.mxu0 0
    %4417 = vmatpush2.bf16.msra.mxu0 0
    %4418 = vmatprep.subr.bf16.mxu0 0
    %4419 = vmatpush2.bf16.msra.mxu0 0
    %4420 = vmatprep.subr.bf16.mxu0 0
    %4421 = vmatpush2.bf16.msra.mxu0 0
    %4422 = vmatprep.subr.bf16.mxu0 0
    %4423 = vmatpush2.bf16.msra.mxu0 0
    %4424 = vmatprep.subr.bf16.mxu0 0
    %4425 = vmatpush2.bf16.msra.mxu0 0
    %4426 = vmatprep.subr.bf16.mxu0 0
    %4427 = vmatpush2.bf16.msra.mxu0 0
    %4428 = vmatprep.mubr.bf16.mxu0 0
    %4429 = vmatmul.mubr.bf16.gmra.mxu0 %v4391
    %v4430 = vpop.f32.mrf.mxu0
    %v4431 = vadd.f32 %v4383, %v4430
    %v4432 = vpop.f32.mrf.mxu0
    %v4433 = vpop.f32.mrf.mxu0
    %v4434 = vadd.f32 %v4383, %v4433
    %v4435 = vpop.f32.mrf.mxu0
    %4436 = vdwg.mxu0
    %v4437 = vpack.c.bf16 %v4434, %v4431
    %4438 = vmatprep.subr.bf16.mxu0 0
    %4439 = vmatpush1.bf16.msra.mxu0 0
    %4440 = vmatprep.subr.bf16.mxu0 0
    %4441 = vmatpush1.bf16.msra.mxu0 0
    %4442 = vmatprep.subr.bf16.mxu0 0
    %4443 = vmatpush1.bf16.msra.mxu0 0
    %4444 = vmatprep.subr.bf16.mxu0 0
    %4445 = vmatpush1.bf16.msra.mxu0 0
    %4446 = vmatprep.subr.bf16.mxu0 0
    %4447 = vmatpush1.bf16.msra.mxu0 0
    %4448 = vmatprep.subr.bf16.mxu0 0
    %4449 = vmatpush1.bf16.msra.mxu0 0
    %4450 = vmatprep.subr.bf16.mxu0 0
    %4451 = vmatpush1.bf16.msra.mxu0 0
    %4452 = vmatprep.subr.bf16.mxu0 %v3102
    %4453 = vmatpush1.bf16.msra.mxu0 %v4437
    %4454 = vmatprep.subr.bf16.mxu0 0
    %4455 = vmatpush2.bf16.msra.mxu0 0
    %4456 = vmatprep.subr.bf16.mxu0 0
    %4457 = vmatpush2.bf16.msra.mxu0 0
    %4458 = vmatprep.subr.bf16.mxu0 0
    %4459 = vmatpush2.bf16.msra.mxu0 0
    %4460 = vmatprep.subr.bf16.mxu0 0
    %4461 = vmatpush2.bf16.msra.mxu0 0
    %4462 = vmatprep.subr.bf16.mxu0 0
    %4463 = vmatpush2.bf16.msra.mxu0 0
    %4464 = vmatprep.subr.bf16.mxu0 0
    %4465 = vmatpush2.bf16.msra.mxu0 0
    %4466 = vmatprep.subr.bf16.mxu0 0
    %4467 = vmatpush2.bf16.msra.mxu0 0
    %4468 = vmatprep.subr.bf16.mxu0 0
    %4469 = vmatpush2.bf16.msra.mxu0 0
    %4470 = vmatprep.mubr.bf16.mxu0 0
    %4471 = vmatmul.mubr.bf16.gmra.mxu0 %v2213
    %v4472 = vpop.f32.mrf.mxu0
    %v4473 = vadd.f32 0.0, %v4472
    %v4474 = vpop.f32.mrf.mxu0
    %v4475 = vadd.f32 0.0, %v4474
    %v4476 = vpop.f32.mrf.mxu0
    %v4477 = vadd.f32 0.0, %v4476
    %v4478 = vpop.f32.mrf.mxu0
    %v4479 = vadd.f32 0.0, %v4478
    %4480 = vdwg.mxu0
    %v4481 = vpack.c.bf16 %v4477, %v4473
    %v4482 = vpack.c.bf16 %v4479, %v4475
    %4483 = vmatprep.subr.bf16.mxu0 0
    %4484 = vmatpush1.bf16.msra.mxu0 0
    %4485 = vmatprep.subr.bf16.mxu0 0
    %4486 = vmatpush1.bf16.msra.mxu0 0
    %4487 = vmatprep.subr.bf16.mxu0 0
    %4488 = vmatpush1.bf16.msra.mxu0 0
    %4489 = vmatprep.subr.bf16.mxu0 0
    %4490 = vmatpush1.bf16.msra.mxu0 0
    %4491 = vmatprep.subr.bf16.mxu0 0
    %4492 = vmatpush1.bf16.msra.mxu0 0
    %4493 = vmatprep.subr.bf16.mxu0 0
    %4494 = vmatpush1.bf16.msra.mxu0 0
    %4495 = vmatprep.subr.bf16.mxu0 0
    %4496 = vmatpush1.bf16.msra.mxu0 0
    %4497 = vmatprep.subr.bf16.mxu0 %v3102
    %4498 = vmatpush1.bf16.msra.mxu0 %v4437
    %4499 = vmatprep.subr.bf16.mxu0 0
    %4500 = vmatpush2.bf16.msra.mxu0 0
    %4501 = vmatprep.subr.bf16.mxu0 0
    %4502 = vmatpush2.bf16.msra.mxu0 0
    %4503 = vmatprep.subr.bf16.mxu0 0
    %4504 = vmatpush2.bf16.msra.mxu0 0
    %4505 = vmatprep.subr.bf16.mxu0 0
    %4506 = vmatpush2.bf16.msra.mxu0 0
    %4507 = vmatprep.subr.bf16.mxu0 0
    %4508 = vmatpush2.bf16.msra.mxu0 0
    %4509 = vmatprep.subr.bf16.mxu0 0
    %4510 = vmatpush2.bf16.msra.mxu0 0
    %4511 = vmatprep.subr.bf16.mxu0 0
    %4512 = vmatpush2.bf16.msra.mxu0 0
    %4513 = vmatprep.subr.bf16.mxu0 0
    %4514 = vmatpush2.bf16.msra.mxu0 0
    %4515 = vmatprep.mubr.bf16.mxu0 0
    %4516 = vmatmul.mubr.bf16.gmra.mxu0 %v2265
    %v4517 = vpop.f32.mrf.mxu0
    %v4518 = vadd.f32 0.0, %v4517
    %v4519 = vpop.f32.mrf.mxu0
    %v4520 = vadd.f32 0.0, %v4519
    %v4521 = vpop.f32.mrf.mxu0
    %v4522 = vadd.f32 0.0, %v4521
    %v4523 = vpop.f32.mrf.mxu0
    %v4524 = vadd.f32 0.0, %v4523
    %4525 = vdwg.mxu0
    %v4526 = vpack.c.bf16 %v4522, %v4518
    %v4527 = vpack.c.bf16 %v4524, %v4520
    %v4528 = vld [vmem:[%s73] sm:$0xf]
    %v4529 = vld [vmem:[%s73 + $0x4] sm:$0xf]
    %v4530 = vld [vmem:[%s73 + $0x8] sm:$0xf]
    %v4531 = vld [vmem:[%s73 + $0xc] sm:$0xf]
    %v4532 = vld [vmem:[%s73 + $0x10] sm:$0xf]
    %v4533 = vld [vmem:[%s73 + $0x14] sm:$0xf]
    %v4534 = vld [vmem:[%s73 + $0x18] sm:$0xf]
    %v4535 = vld [vmem:[%s73 + $0x1c] sm:$0xf]
    %v4536 = vld [vmem:[%s73 + $0x20] sm:$0xf]
    %v4537 = vld [vmem:[%s73 + $0x24] sm:$0xf]
    %v4538 = vld [vmem:[%s73 + $0x28] sm:$0xf]
    %v4539 = vld [vmem:[%s73 + $0x2c] sm:$0xf]
    %v4540 = vld [vmem:[%s73 + $0x30] sm:$0xf]
    %v4541 = vld [vmem:[%s73 + $0x34] sm:$0xf]
    %v4542 = vld [vmem:[%s73 + $0x38] sm:$0xf]
    %v4543 = vld [vmem:[%s73 + $0x3c] sm:$0xf]
    %v4544 = vld [vmem:[%s73 + $0x40] sm:$0xf]
    %v4545 = vld [vmem:[%s73 + $0x44] sm:$0xf]
    %v4546 = vld [vmem:[%s73 + $0x48] sm:$0xf]
    %v4547 = vld [vmem:[%s73 + $0x4c] sm:$0xf]
    %v4548 = vld [vmem:[%s73 + $0x50] sm:$0xf]
    %v4549 = vld [vmem:[%s73 + $0x54] sm:$0xf]
    %v4550 = vld [vmem:[%s73 + $0x58] sm:$0xf]
    %v4551 = vld [vmem:[%s73 + $0x5c] sm:$0xf]
    %v4552 = vld [vmem:[%s73 + $0x60] sm:$0xf]
    %v4553 = vld [vmem:[%s73 + $0x64] sm:$0xf]
    %v4554 = vld [vmem:[%s73 + $0x68] sm:$0xf]
    %v4555 = vld [vmem:[%s73 + $0x6c] sm:$0xf]
    %v4556 = vld [vmem:[%s73 + $0x70] sm:$0xf]
    %v4557 = vld [vmem:[%s73 + $0x74] sm:$0xf]
    %v4558 = vld [vmem:[%s73 + $0x78] sm:$0xf]
    %v4559 = vld [vmem:[%s73 + $0x7c] sm:$0xf]
    %s4560 = scalar_lea.vmem %s73, 128
    %v4561 = vld [vmem:[%s4560] sm:$0xf]
    %v4562 = vld [vmem:[%s4560 + $0x4] sm:$0xf]
    %v4563 = vld [vmem:[%s4560 + $0x8] sm:$0xf]
    %v4564 = vld [vmem:[%s4560 + $0xc] sm:$0xf]
    %v4565 = vld [vmem:[%s4560 + $0x10] sm:$0xf]
    %v4566 = vld [vmem:[%s4560 + $0x14] sm:$0xf]
    %v4567 = vld [vmem:[%s4560 + $0x18] sm:$0xf]
    %v4568 = vld [vmem:[%s4560 + $0x1c] sm:$0xf]
    %v4569 = vld [vmem:[%s4560 + $0x20] sm:$0xf]
    %v4570 = vld [vmem:[%s4560 + $0x24] sm:$0xf]
    %v4571 = vld [vmem:[%s4560 + $0x28] sm:$0xf]
    %v4572 = vld [vmem:[%s4560 + $0x2c] sm:$0xf]
    %v4573 = vld [vmem:[%s4560 + $0x30] sm:$0xf]
    %v4574 = vld [vmem:[%s4560 + $0x34] sm:$0xf]
    %v4575 = vld [vmem:[%s4560 + $0x38] sm:$0xf]
    %v4576 = vld [vmem:[%s4560 + $0x3c] sm:$0xf]
    %v4577 = vld [vmem:[%s4560 + $0x40] sm:$0xf]
    %v4578 = vld [vmem:[%s4560 + $0x44] sm:$0xf]
    %v4579 = vld [vmem:[%s4560 + $0x48] sm:$0xf]
    %v4580 = vld [vmem:[%s4560 + $0x4c] sm:$0xf]
    %v4581 = vld [vmem:[%s4560 + $0x50] sm:$0xf]
    %v4582 = vld [vmem:[%s4560 + $0x54] sm:$0xf]
    %v4583 = vld [vmem:[%s4560 + $0x58] sm:$0xf]
    %v4584 = vld [vmem:[%s4560 + $0x5c] sm:$0xf]
    %v4585 = vld [vmem:[%s4560 + $0x60] sm:$0xf]
    %v4586 = vld [vmem:[%s4560 + $0x64] sm:$0xf]
    %v4587 = vld [vmem:[%s4560 + $0x68] sm:$0xf]
    %v4588 = vld [vmem:[%s4560 + $0x6c] sm:$0xf]
    %v4589 = vld [vmem:[%s4560 + $0x70] sm:$0xf]
    %v4590 = vld [vmem:[%s4560 + $0x74] sm:$0xf]
    %v4591 = vld [vmem:[%s4560 + $0x78] sm:$0xf]
    %v4592 = vld [vmem:[%s4560 + $0x7c] sm:$0xf]
    %v4625 = vunpack.c.l.b16 %v4561
    %v4626 = vunpack.c.l.b16 %v4562
    %v4627 = vunpack.c.l.b16 %v4563
    %v4628 = vunpack.c.l.b16 %v4564
    %v4629 = vunpack.c.l.b16 %v4565
    %v4630 = vunpack.c.l.b16 %v4566
    %v4631 = vunpack.c.l.b16 %v4567
    %v4632 = vunpack.c.l.b16 %v4568
    %v4633 = vunpack.c.l.b16 %v4569
    %v4634 = vunpack.c.l.b16 %v4570
    %v4635 = vunpack.c.l.b16 %v4571
    %v4636 = vunpack.c.l.b16 %v4572
    %v4637 = vunpack.c.l.b16 %v4573
    %v4638 = vunpack.c.l.b16 %v4574
    %v4639 = vunpack.c.l.b16 %v4575
    %v4640 = vunpack.c.l.b16 %v4576
    %v4641 = vunpack.c.l.b16 %v4577
    %v4642 = vunpack.c.l.b16 %v4578
    %v4643 = vunpack.c.l.b16 %v4579
    %v4644 = vunpack.c.l.b16 %v4580
    %v4645 = vunpack.c.l.b16 %v4581
    %v4646 = vunpack.c.l.b16 %v4582
    %v4647 = vunpack.c.l.b16 %v4583
    %v4648 = vunpack.c.l.b16 %v4584
    %v4649 = vunpack.c.l.b16 %v4585
    %v4650 = vunpack.c.l.b16 %v4586
    %v4651 = vunpack.c.l.b16 %v4587
    %v4652 = vunpack.c.l.b16 %v4588
    %v4653 = vunpack.c.l.b16 %v4589
    %v4654 = vunpack.c.l.b16 %v4590
    %v4655 = vunpack.c.l.b16 %v4591
    %v4656 = vunpack.c.l.b16 %v4592
    %v4657 = vpack.c.b16 %v4626, %v4625
    %v4658 = vpack.c.b16 %v4628, %v4627
    %v4659 = vpack.c.b16 %v4630, %v4629
    %v4660 = vpack.c.b16 %v4632, %v4631
    %v4661 = vpack.c.b16 %v4634, %v4633
    %v4662 = vpack.c.b16 %v4636, %v4635
    %v4663 = vpack.c.b16 %v4638, %v4637
    %v4664 = vpack.c.b16 %v4640, %v4639
    %v4665 = vpack.c.b16 %v4642, %v4641
    %v4666 = vpack.c.b16 %v4644, %v4643
    %v4667 = vpack.c.b16 %v4646, %v4645
    %v4668 = vpack.c.b16 %v4648, %v4647
    %v4669 = vpack.c.b16 %v4650, %v4649
    %v4670 = vpack.c.b16 %v4652, %v4651
    %v4671 = vpack.c.b16 %v4654, %v4653
    %v4672 = vpack.c.b16 %v4656, %v4655
    %4689 = vmatprep.subr.bf16.mxu0 0
    %4690 = vmatpush1.bf16.msra.mxu0 %v4664
    %4691 = vmatprep.subr.bf16.mxu0 0
    %4692 = vmatpush1.bf16.msra.mxu0 %v4663
    %4693 = vmatprep.subr.bf16.mxu0 0
    %4694 = vmatpush1.bf16.msra.mxu0 %v4662
    %4695 = vmatprep.subr.bf16.mxu0 0
    %4696 = vmatpush1.bf16.msra.mxu0 %v4661
    %4697 = vmatprep.subr.bf16.mxu0 0
    %4698 = vmatpush1.bf16.msra.mxu0 %v4660
    %4699 = vmatprep.subr.bf16.mxu0 0
    %4700 = vmatpush1.bf16.msra.mxu0 %v4659
    %4701 = vmatprep.subr.bf16.mxu0 0
    %4702 = vmatpush1.bf16.msra.mxu0 %v4658
    %4703 = vmatprep.subr.bf16.mxu0 0
    %4704 = vmatpush1.bf16.msra.mxu0 %v4657
    %4705 = vmatprep.subr.bf16.mxu0 0
    %4706 = vmatpush2.bf16.msra.mxu0 %v4672
    %4707 = vmatprep.subr.bf16.mxu0 0
    %4708 = vmatpush2.bf16.msra.mxu0 %v4671
    %4709 = vmatprep.subr.bf16.mxu0 0
    %4710 = vmatpush2.bf16.msra.mxu0 %v4670
    %4711 = vmatprep.subr.bf16.mxu0 0
    %4712 = vmatpush2.bf16.msra.mxu0 %v4669
    %4713 = vmatprep.subr.bf16.mxu0 0
    %4714 = vmatpush2.bf16.msra.mxu0 %v4668
    %4715 = vmatprep.subr.bf16.mxu0 0
    %4716 = vmatpush2.bf16.msra.mxu0 %v4667
    %4717 = vmatprep.subr.bf16.mxu0 0
    %4718 = vmatpush2.bf16.msra.mxu0 %v4666
    %4719 = vmatprep.subr.bf16.mxu0 0
    %4720 = vmatpush2.bf16.msra.mxu0 %v4665
    %4721 = vmatprep.mubr.bf16.mxu0 %v3102
    %4722 = vmatmul.mubr.bf16.gmra.mxu0 %v4437
    %v4723 = vpop.f32.mrf.mxu0
    %v4724 = vadd.f32 0.0, %v4723
    %v4725 = vpop.f32.mrf.mxu0
    %v4726 = vpop.f32.mrf.mxu0
    %v4727 = vadd.f32 0.0, %v4726
    %v4728 = vpop.f32.mrf.mxu0
    %4729 = vdwg.mxu0
    %v4762 = vunpack.c.l.b16 %v4528
    %v4763 = vunpack.c.l.b16 %v4529
    %v4764 = vunpack.c.l.b16 %v4530
    %v4765 = vunpack.c.l.b16 %v4531
    %v4766 = vunpack.c.l.b16 %v4532
    %v4767 = vunpack.c.l.b16 %v4533
    %v4768 = vunpack.c.l.b16 %v4534
    %v4769 = vunpack.c.l.b16 %v4535
    %v4770 = vunpack.c.l.b16 %v4536
    %v4771 = vunpack.c.l.b16 %v4537
    %v4772 = vunpack.c.l.b16 %v4538
    %v4773 = vunpack.c.l.b16 %v4539
    %v4774 = vunpack.c.l.b16 %v4540
    %v4775 = vunpack.c.l.b16 %v4541
    %v4776 = vunpack.c.l.b16 %v4542
    %v4777 = vunpack.c.l.b16 %v4543
    %v4778 = vunpack.c.l.b16 %v4544
    %v4779 = vunpack.c.l.b16 %v4545
    %v4780 = vunpack.c.l.b16 %v4546
    %v4781 = vunpack.c.l.b16 %v4547
    %v4782 = vunpack.c.l.b16 %v4548
    %v4783 = vunpack.c.l.b16 %v4549
    %v4784 = vunpack.c.l.b16 %v4550
    %v4785 = vunpack.c.l.b16 %v4551
    %v4786 = vunpack.c.l.b16 %v4552
    %v4787 = vunpack.c.l.b16 %v4553
    %v4788 = vunpack.c.l.b16 %v4554
    %v4789 = vunpack.c.l.b16 %v4555
    %v4790 = vunpack.c.l.b16 %v4556
    %v4791 = vunpack.c.l.b16 %v4557
    %v4792 = vunpack.c.l.b16 %v4558
    %v4793 = vunpack.c.l.b16 %v4559
    %v4794 = vpack.c.b16 %v4763, %v4762
    %v4795 = vpack.c.b16 %v4765, %v4764
    %v4796 = vpack.c.b16 %v4767, %v4766
    %v4797 = vpack.c.b16 %v4769, %v4768
    %v4798 = vpack.c.b16 %v4771, %v4770
    %v4799 = vpack.c.b16 %v4773, %v4772
    %v4800 = vpack.c.b16 %v4775, %v4774
    %v4801 = vpack.c.b16 %v4777, %v4776
    %v4802 = vpack.c.b16 %v4779, %v4778
    %v4803 = vpack.c.b16 %v4781, %v4780
    %v4804 = vpack.c.b16 %v4783, %v4782
    %v4805 = vpack.c.b16 %v4785, %v4784
    %v4806 = vpack.c.b16 %v4787, %v4786
    %v4807 = vpack.c.b16 %v4789, %v4788
    %v4808 = vpack.c.b16 %v4791, %v4790
    %v4809 = vpack.c.b16 %v4793, %v4792
    %4826 = vmatprep.subr.bf16.mxu0 0
    %4827 = vmatpush1.bf16.msra.mxu0 %v4801
    %4828 = vmatprep.subr.bf16.mxu0 0
    %4829 = vmatpush1.bf16.msra.mxu0 %v4800
    %4830 = vmatprep.subr.bf16.mxu0 0
    %4831 = vmatpush1.bf16.msra.mxu0 %v4799
    %4832 = vmatprep.subr.bf16.mxu0 0
    %4833 = vmatpush1.bf16.msra.mxu0 %v4798
    %4834 = vmatprep.subr.bf16.mxu0 0
    %4835 = vmatpush1.bf16.msra.mxu0 %v4797
    %4836 = vmatprep.subr.bf16.mxu0 0
    %4837 = vmatpush1.bf16.msra.mxu0 %v4796
    %4838 = vmatprep.subr.bf16.mxu0 0
    %4839 = vmatpush1.bf16.msra.mxu0 %v4795
    %4840 = vmatprep.subr.bf16.mxu0 0
    %4841 = vmatpush1.bf16.msra.mxu0 %v4794
    %4842 = vmatprep.subr.bf16.mxu0 0
    %4843 = vmatpush2.bf16.msra.mxu0 %v4809
    %4844 = vmatprep.subr.bf16.mxu0 0
    %4845 = vmatpush2.bf16.msra.mxu0 %v4808
    %4846 = vmatprep.subr.bf16.mxu0 0
    %4847 = vmatpush2.bf16.msra.mxu0 %v4807
    %4848 = vmatprep.subr.bf16.mxu0 0
    %4849 = vmatpush2.bf16.msra.mxu0 %v4806
    %4850 = vmatprep.subr.bf16.mxu0 0
    %4851 = vmatpush2.bf16.msra.mxu0 %v4805
    %4852 = vmatprep.subr.bf16.mxu0 0
    %4853 = vmatpush2.bf16.msra.mxu0 %v4804
    %4854 = vmatprep.subr.bf16.mxu0 0
    %4855 = vmatpush2.bf16.msra.mxu0 %v4803
    %4856 = vmatprep.subr.bf16.mxu0 0
    %4857 = vmatpush2.bf16.msra.mxu0 %v4802
    %4858 = vmatprep.mubr.bf16.mxu0 %v4482
    %4859 = vmatmul.mubr.bf16.gmra.mxu0 %v4481
    %v4860 = vpop.f32.mrf.mxu0
    %v4861 = vadd.f32 %v4724, %v4860
    %v4862 = vpop.f32.mrf.mxu0
    %v4863 = vpop.f32.mrf.mxu0
    %v4864 = vadd.f32 %v4727, %v4863
    %v4865 = vpop.f32.mrf.mxu0
    %4866 = vdwg.mxu0
    %s4867 = scalar_lea.vmem %s73, 256
    %v4868 = vld [vmem:[%s4867] sm:$0xf]
    %v4869 = vld [vmem:[%s4867 + $0x4] sm:$0xf]
    %v4870 = vld [vmem:[%s4867 + $0x8] sm:$0xf]
    %v4871 = vld [vmem:[%s4867 + $0xc] sm:$0xf]
    %v4872 = vld [vmem:[%s4867 + $0x10] sm:$0xf]
    %v4873 = vld [vmem:[%s4867 + $0x14] sm:$0xf]
    %v4874 = vld [vmem:[%s4867 + $0x18] sm:$0xf]
    %v4875 = vld [vmem:[%s4867 + $0x1c] sm:$0xf]
    %v4876 = vld [vmem:[%s4867 + $0x20] sm:$0xf]
    %v4877 = vld [vmem:[%s4867 + $0x24] sm:$0xf]
    %v4878 = vld [vmem:[%s4867 + $0x28] sm:$0xf]
    %v4879 = vld [vmem:[%s4867 + $0x2c] sm:$0xf]
    %v4880 = vld [vmem:[%s4867 + $0x30] sm:$0xf]
    %v4881 = vld [vmem:[%s4867 + $0x34] sm:$0xf]
    %v4882 = vld [vmem:[%s4867 + $0x38] sm:$0xf]
    %v4883 = vld [vmem:[%s4867 + $0x3c] sm:$0xf]
    %v4884 = vld [vmem:[%s4867 + $0x40] sm:$0xf]
    %v4885 = vld [vmem:[%s4867 + $0x44] sm:$0xf]
    %v4886 = vld [vmem:[%s4867 + $0x48] sm:$0xf]
    %v4887 = vld [vmem:[%s4867 + $0x4c] sm:$0xf]
    %v4888 = vld [vmem:[%s4867 + $0x50] sm:$0xf]
    %v4889 = vld [vmem:[%s4867 + $0x54] sm:$0xf]
    %v4890 = vld [vmem:[%s4867 + $0x58] sm:$0xf]
    %v4891 = vld [vmem:[%s4867 + $0x5c] sm:$0xf]
    %v4892 = vld [vmem:[%s4867 + $0x60] sm:$0xf]
    %v4893 = vld [vmem:[%s4867 + $0x64] sm:$0xf]
    %v4894 = vld [vmem:[%s4867 + $0x68] sm:$0xf]
    %v4895 = vld [vmem:[%s4867 + $0x6c] sm:$0xf]
    %v4896 = vld [vmem:[%s4867 + $0x70] sm:$0xf]
    %v4897 = vld [vmem:[%s4867 + $0x74] sm:$0xf]
    %v4898 = vld [vmem:[%s4867 + $0x78] sm:$0xf]
    %v4899 = vld [vmem:[%s4867 + $0x7c] sm:$0xf]
    %v4932 = vunpack.c.l.b16 %v4868
    %v4933 = vunpack.c.l.b16 %v4869
    %v4934 = vunpack.c.l.b16 %v4870
    %v4935 = vunpack.c.l.b16 %v4871
    %v4936 = vunpack.c.l.b16 %v4872
    %v4937 = vunpack.c.l.b16 %v4873
    %v4938 = vunpack.c.l.b16 %v4874
    %v4939 = vunpack.c.l.b16 %v4875
    %v4940 = vunpack.c.l.b16 %v4876
    %v4941 = vunpack.c.l.b16 %v4877
    %v4942 = vunpack.c.l.b16 %v4878
    %v4943 = vunpack.c.l.b16 %v4879
    %v4944 = vunpack.c.l.b16 %v4880
    %v4945 = vunpack.c.l.b16 %v4881
    %v4946 = vunpack.c.l.b16 %v4882
    %v4947 = vunpack.c.l.b16 %v4883
    %v4948 = vunpack.c.l.b16 %v4884
    %v4949 = vunpack.c.l.b16 %v4885
    %v4950 = vunpack.c.l.b16 %v4886
    %v4951 = vunpack.c.l.b16 %v4887
    %v4952 = vunpack.c.l.b16 %v4888
    %v4953 = vunpack.c.l.b16 %v4889
    %v4954 = vunpack.c.l.b16 %v4890
    %v4955 = vunpack.c.l.b16 %v4891
    %v4956 = vunpack.c.l.b16 %v4892
    %v4957 = vunpack.c.l.b16 %v4893
    %v4958 = vunpack.c.l.b16 %v4894
    %v4959 = vunpack.c.l.b16 %v4895
    %v4960 = vunpack.c.l.b16 %v4896
    %v4961 = vunpack.c.l.b16 %v4897
    %v4962 = vunpack.c.l.b16 %v4898
    %v4963 = vunpack.c.l.b16 %v4899
    %v4964 = vpack.c.b16 %v4933, %v4932
    %v4965 = vpack.c.b16 %v4935, %v4934
    %v4966 = vpack.c.b16 %v4937, %v4936
    %v4967 = vpack.c.b16 %v4939, %v4938
    %v4968 = vpack.c.b16 %v4941, %v4940
    %v4969 = vpack.c.b16 %v4943, %v4942
    %v4970 = vpack.c.b16 %v4945, %v4944
    %v4971 = vpack.c.b16 %v4947, %v4946
    %v4972 = vpack.c.b16 %v4949, %v4948
    %v4973 = vpack.c.b16 %v4951, %v4950
    %v4974 = vpack.c.b16 %v4953, %v4952
    %v4975 = vpack.c.b16 %v4955, %v4954
    %v4976 = vpack.c.b16 %v4957, %v4956
    %v4977 = vpack.c.b16 %v4959, %v4958
    %v4978 = vpack.c.b16 %v4961, %v4960
    %v4979 = vpack.c.b16 %v4963, %v4962
    %4996 = vmatprep.subr.bf16.mxu0 0
    %4997 = vmatpush1.bf16.msra.mxu0 %v4971
    %4998 = vmatprep.subr.bf16.mxu0 0
    %4999 = vmatpush1.bf16.msra.mxu0 %v4970
    %5000 = vmatprep.subr.bf16.mxu0 0
    %5001 = vmatpush1.bf16.msra.mxu0 %v4969
    %5002 = vmatprep.subr.bf16.mxu0 0
    %5003 = vmatpush1.bf16.msra.mxu0 %v4968
    %5004 = vmatprep.subr.bf16.mxu0 0
    %5005 = vmatpush1.bf16.msra.mxu0 %v4967
    %5006 = vmatprep.subr.bf16.mxu0 0
    %5007 = vmatpush1.bf16.msra.mxu0 %v4966
    %5008 = vmatprep.subr.bf16.mxu0 0
    %5009 = vmatpush1.bf16.msra.mxu0 %v4965
    %5010 = vmatprep.subr.bf16.mxu0 0
    %5011 = vmatpush1.bf16.msra.mxu0 %v4964
    %5012 = vmatprep.subr.bf16.mxu0 0
    %5013 = vmatpush2.bf16.msra.mxu0 %v4979
    %5014 = vmatprep.subr.bf16.mxu0 0
    %5015 = vmatpush2.bf16.msra.mxu0 %v4978
    %5016 = vmatprep.subr.bf16.mxu0 0
    %5017 = vmatpush2.bf16.msra.mxu0 %v4977
    %5018 = vmatprep.subr.bf16.mxu0 0
    %5019 = vmatpush2.bf16.msra.mxu0 %v4976
    %5020 = vmatprep.subr.bf16.mxu0 0
    %5021 = vmatpush2.bf16.msra.mxu0 %v4975
    %5022 = vmatprep.subr.bf16.mxu0 0
    %5023 = vmatpush2.bf16.msra.mxu0 %v4974
    %5024 = vmatprep.subr.bf16.mxu0 0
    %5025 = vmatpush2.bf16.msra.mxu0 %v4973
    %5026 = vmatprep.subr.bf16.mxu0 0
    %5027 = vmatpush2.bf16.msra.mxu0 %v4972
    %5028 = vmatprep.mubr.bf16.mxu0 %v4527
    %5029 = vmatmul.mubr.bf16.gmra.mxu0 %v4526
    %v5030 = vpop.f32.mrf.mxu0
    %v5031 = vadd.f32 0.0, %v5030
    %v5032 = vpop.f32.mrf.mxu0
    %v5033 = vpop.f32.mrf.mxu0
    %v5034 = vadd.f32 0.0, %v5033
    %v5035 = vpop.f32.mrf.mxu0
    %5036 = vdwg.mxu0
    %v5037 = vadd.f32 %v4861, %v5031
    %v5038 = vadd.f32 %v4864, %v5034
    %v5039 = vmul.f32 %v5037, %v2202
    %v5040 = vmul.f32 %v5038, %v2204
    %v5041 = vld [vmem:[#allocation48] sm:$0x1]
    %v5043 = vlaneseq
    %v5044 = vshrl.u32 %v5043, 7
    %v5045 = vsub.s32 0, %v5044
    %v5046 = vrot.slane %v5041, %v5045
    %v5048 = vadd.f32 %v5039, %v5046
    %v5049 = vadd.f32 %v5040, %v5046
    %vm5050 = vcmp.ge.f32.partialorder %v5048, 0.0
    %vm5051 = vcmp.ge.f32.partialorder %v5049, 0.0
    %v5052 = vmul.f32 %v5048, 0.01
    %v5053 = vmul.f32 %v5049, 0.01
    %v5054 = vsel %vm5050, %v5048, %v5052
    %v5055 = vsel %vm5051, %v5049, %v5053
    %v5056 = vadd.f32 %v5054, %v5055
    %v5057 = vrot.slane %v5056, 4
    %v5058 = vadd.f32 %v5056, %v5057
    %v5059 = vrot.slane %v5058, 2
    %v5060 = vadd.f32 %v5058, %v5059
    %v5061 = vrot.slane %v5060, 1
    %v5062 = vadd.f32 %v5060, %v5061
    %v5063 = vmul.f32 %v5054, %v5054
    %v5064 = vmul.f32 %v5055, %v5055
    %v5065 = vadd.f32 %v5063, %v5064
    %v5066 = vrot.slane %v5065, 4
    %v5067 = vadd.f32 %v5065, %v5066
    %v5068 = vrot.slane %v5067, 2
    %v5069 = vadd.f32 %v5067, %v5068
    %v5070 = vrot.slane %v5069, 1
    %v5071 = vadd.f32 %v5069, %v5070
    %5072 = vrot.lane.b32.xlu0 %v5062, 16
    %v5073 = vpop.permute.xlu0 %5072
    %v5074 = vadd.f32 %v5062, %v5073
    %5075 = vrot.lane.b32.xlu0 %v5071, 16
    %v5076 = vpop.permute.xlu0 %5075
    %v5077 = vadd.f32 %v5071, %v5076
    %5078 = vrot.lane.b32.xlu0 %v5074, 32
    %v5079 = vpop.permute.xlu0 %5078
    %v5080 = vadd.f32 %v5074, %v5079
    %5081 = vrot.lane.b32.xlu0 %v5077, 32
    %v5082 = vpop.permute.xlu0 %5081
    %v5083 = vadd.f32 %v5077, %v5082
    %5084 = vrot.lane.b32.xlu0 %v5080, 64
    %v5085 = vpop.permute.xlu0 %5084
    %v5086 = vadd.f32 %v5080, %v5085
    %5087 = vrot.lane.b32.xlu0 %v5083, 64
    %v5088 = vpop.permute.xlu0 %5087
    %v5089 = vadd.f32 %v5083, %v5088
    %v5090 = vmul.f32 %v5086, 0.0078125
    %v5091 = vmul.f32 %v5089, 0.0078125
    %v5092 = vmul.f32 %v5090, %v5090
    %v5093 = vsub.f32 %v5091, %v5092
    %v5094 = vlaneseq
    %v5095 = vshrl.u32 %v5094, 7
    %v5096 = vsub.s32 0, %v5095
    %v5097 = vrot.slane %v5090, %v5096
    %v5098 = vsub.f32 %v5054, %v5097
    %v5099 = vsub.f32 %v5055, %v5097
    %v5100 = vadd.f32 %v5093, 1e-05
    %v5101 = vrsqrt.pop %v5100
    %v5102 = vlaneseq
    %v5103 = vshrl.u32 %v5102, 7
    %v5104 = vsub.s32 0, %v5103
    %v5105 = vrot.slane %v5101, %v5104
    %v5106 = vmul.f32 %v5098, %v5105
    %v5107 = vmul.f32 %v5099, %v5105
    %v5108 = vld [vmem:[#allocation49] sm:$0x1]
    %v5110 = vlaneseq
    %v5111 = vshrl.u32 %v5110, 7
    %v5112 = vsub.s32 0, %v5111
    %v5113 = vrot.slane %v5108, %v5112
    %v5115 = vmul.f32 %v5106, %v5113
    %v5116 = vmul.f32 %v5107, %v5113
    %v5117 = vld [vmem:[#allocation51] sm:$0x1]
    %v5119 = vlaneseq
    %v5120 = vshrl.u32 %v5119, 7
    %v5121 = vsub.s32 0, %v5120
    %v5122 = vrot.slane %v5117, %v5121
    %v5124 = vadd.f32 %v5115, %v5122
    %v5125 = vadd.f32 %v5116, %v5122
    %v5126 = vpack.c.bf16 %v5125, %v5124
    %5127 = vmatprep.subr.bf16.mxu0 0
    %5128 = vmatpush1.bf16.msra.mxu0 0
    %5129 = vmatprep.subr.bf16.mxu0 0
    %5130 = vmatpush1.bf16.msra.mxu0 0
    %5131 = vmatprep.subr.bf16.mxu0 0
    %5132 = vmatpush1.bf16.msra.mxu0 0
    %5133 = vmatprep.subr.bf16.mxu0 0
    %5134 = vmatpush1.bf16.msra.mxu0 0
    %5135 = vmatprep.subr.bf16.mxu0 0
    %5136 = vmatpush1.bf16.msra.mxu0 0
    %5137 = vmatprep.subr.bf16.mxu0 0
    %5138 = vmatpush1.bf16.msra.mxu0 0
    %5139 = vmatprep.subr.bf16.mxu0 0
    %5140 = vmatpush1.bf16.msra.mxu0 0
    %5141 = vmatprep.subr.bf16.mxu0 0
    %5142 = vmatpush1.bf16.msra.mxu0 %v5126
    %5143 = vmatprep.subr.bf16.mxu0 0
    %5144 = vmatpush2.bf16.msra.mxu0 0
    %5145 = vmatprep.subr.bf16.mxu0 0
    %5146 = vmatpush2.bf16.msra.mxu0 0
    %5147 = vmatprep.subr.bf16.mxu0 0
    %5148 = vmatpush2.bf16.msra.mxu0 0
    %5149 = vmatprep.subr.bf16.mxu0 0
    %5150 = vmatpush2.bf16.msra.mxu0 0
    %5151 = vmatprep.subr.bf16.mxu0 0
    %5152 = vmatpush2.bf16.msra.mxu0 0
    %5153 = vmatprep.subr.bf16.mxu0 0
    %5154 = vmatpush2.bf16.msra.mxu0 0
    %5155 = vmatprep.subr.bf16.mxu0 0
    %5156 = vmatpush2.bf16.msra.mxu0 0
    %5157 = vmatprep.subr.bf16.mxu0 0
    %5158 = vmatpush2.bf16.msra.mxu0 0
    %5159 = vmatprep.mubr.bf16.mxu0 0
    %5160 = vmatmul.mubr.bf16.gmra.mxu0 %v2213
    %v5161 = vpop.f32.mrf.mxu0
    %v5162 = vadd.f32 0.0, %v5161
    %v5163 = vpop.f32.mrf.mxu0
    %v5164 = vpop.f32.mrf.mxu0
    %v5165 = vadd.f32 0.0, %v5164
    %v5166 = vpop.f32.mrf.mxu0
    %5167 = vdwg.mxu0
    %v5168 = vpack.c.bf16 %v5165, %v5162
    %5169 = vmatprep.subr.bf16.mxu0 0
    %5170 = vmatpush1.bf16.msra.mxu0 0
    %5171 = vmatprep.subr.bf16.mxu0 0
    %5172 = vmatpush1.bf16.msra.mxu0 0
    %5173 = vmatprep.subr.bf16.mxu0 0
    %5174 = vmatpush1.bf16.msra.mxu0 0
    %5175 = vmatprep.subr.bf16.mxu0 0
    %5176 = vmatpush1.bf16.msra.mxu0 0
    %5177 = vmatprep.subr.bf16.mxu0 0
    %5178 = vmatpush1.bf16.msra.mxu0 0
    %5179 = vmatprep.subr.bf16.mxu0 0
    %5180 = vmatpush1.bf16.msra.mxu0 0
    %5181 = vmatprep.subr.bf16.mxu0 0
    %5182 = vmatpush1.bf16.msra.mxu0 0
    %5183 = vmatprep.subr.bf16.mxu0 0
    %5184 = vmatpush1.bf16.msra.mxu0 %v5126
    %5185 = vmatprep.subr.bf16.mxu0 0
    %5186 = vmatpush2.bf16.msra.mxu0 0
    %5187 = vmatprep.subr.bf16.mxu0 0
    %5188 = vmatpush2.bf16.msra.mxu0 0
    %5189 = vmatprep.subr.bf16.mxu0 0
    %5190 = vmatpush2.bf16.msra.mxu0 0
    %5191 = vmatprep.subr.bf16.mxu0 0
    %5192 = vmatpush2.bf16.msra.mxu0 0
    %5193 = vmatprep.subr.bf16.mxu0 0
    %5194 = vmatpush2.bf16.msra.mxu0 0
    %5195 = vmatprep.subr.bf16.mxu0 0
    %5196 = vmatpush2.bf16.msra.mxu0 0
    %5197 = vmatprep.subr.bf16.mxu0 0
    %5198 = vmatpush2.bf16.msra.mxu0 0
    %5199 = vmatprep.subr.bf16.mxu0 0
    %5200 = vmatpush2.bf16.msra.mxu0 0
    %5201 = vmatprep.mubr.bf16.mxu0 0
    %5202 = vmatmul.mubr.bf16.gmra.mxu0 %v2265
    %v5203 = vpop.f32.mrf.mxu0
    %v5204 = vadd.f32 0.0, %v5203
    %v5205 = vpop.f32.mrf.mxu0
    %v5206 = vpop.f32.mrf.mxu0
    %v5207 = vadd.f32 0.0, %v5206
    %v5208 = vpop.f32.mrf.mxu0
    %5209 = vdwg.mxu0
    %v5210 = vpack.c.bf16 %v5207, %v5204
    %v5211 = vld [vmem:[#allocation52] sm:$0xf]
    %v5212 = vld [vmem:[#allocation52 + $0x4] sm:$0xf]
    %v5213 = vld [vmem:[#allocation52 + $0x8] sm:$0xf]
    %v5214 = vld [vmem:[#allocation52 + $0xc] sm:$0xf]
    %v5215 = vld [vmem:[#allocation52 + $0x10] sm:$0xf]
    %v5216 = vld [vmem:[#allocation52 + $0x14] sm:$0xf]
    %v5217 = vld [vmem:[#allocation52 + $0x18] sm:$0xf]
    %v5218 = vld [vmem:[#allocation52 + $0x1c] sm:$0xf]
    %v5219 = vld [vmem:[#allocation52 + $0x20] sm:$0xf]
    %v5220 = vld [vmem:[#allocation52 + $0x24] sm:$0xf]
    %v5221 = vld [vmem:[#allocation52 + $0x28] sm:$0xf]
    %v5222 = vld [vmem:[#allocation52 + $0x2c] sm:$0xf]
    %v5223 = vld [vmem:[#allocation52 + $0x30] sm:$0xf]
    %v5224 = vld [vmem:[#allocation52 + $0x34] sm:$0xf]
    %v5225 = vld [vmem:[#allocation52 + $0x38] sm:$0xf]
    %v5226 = vld [vmem:[#allocation52 + $0x3c] sm:$0xf]
    %s5227 = scalar_lea.vmem [#allocation52], 64
    %v5228 = vld [vmem:[%s5227] sm:$0xf]
    %v5229 = vld [vmem:[%s5227 + $0x4] sm:$0xf]
    %v5230 = vld [vmem:[%s5227 + $0x8] sm:$0xf]
    %v5231 = vld [vmem:[%s5227 + $0xc] sm:$0xf]
    %v5232 = vld [vmem:[%s5227 + $0x10] sm:$0xf]
    %v5233 = vld [vmem:[%s5227 + $0x14] sm:$0xf]
    %v5234 = vld [vmem:[%s5227 + $0x18] sm:$0xf]
    %v5235 = vld [vmem:[%s5227 + $0x1c] sm:$0xf]
    %v5236 = vld [vmem:[%s5227 + $0x20] sm:$0xf]
    %v5237 = vld [vmem:[%s5227 + $0x24] sm:$0xf]
    %v5238 = vld [vmem:[%s5227 + $0x28] sm:$0xf]
    %v5239 = vld [vmem:[%s5227 + $0x2c] sm:$0xf]
    %v5240 = vld [vmem:[%s5227 + $0x30] sm:$0xf]
    %v5241 = vld [vmem:[%s5227 + $0x34] sm:$0xf]
    %v5242 = vld [vmem:[%s5227 + $0x38] sm:$0xf]
    %v5243 = vld [vmem:[%s5227 + $0x3c] sm:$0xf]
    %v5260 = vunpack.c.l.b16 %v5228
    %v5261 = vunpack.c.l.b16 %v5229
    %v5262 = vunpack.c.l.b16 %v5230
    %v5263 = vunpack.c.l.b16 %v5231
    %v5264 = vunpack.c.l.b16 %v5232
    %v5265 = vunpack.c.l.b16 %v5233
    %v5266 = vunpack.c.l.b16 %v5234
    %v5267 = vunpack.c.l.b16 %v5235
    %v5268 = vunpack.c.l.b16 %v5236
    %v5269 = vunpack.c.l.b16 %v5237
    %v5270 = vunpack.c.l.b16 %v5238
    %v5271 = vunpack.c.l.b16 %v5239
    %v5272 = vunpack.c.l.b16 %v5240
    %v5273 = vunpack.c.l.b16 %v5241
    %v5274 = vunpack.c.l.b16 %v5242
    %v5275 = vunpack.c.l.b16 %v5243
    %v5276 = vpack.c.b16 %v5261, %v5260
    %v5277 = vpack.c.b16 %v5263, %v5262
    %v5278 = vpack.c.b16 %v5265, %v5264
    %v5279 = vpack.c.b16 %v5267, %v5266
    %v5280 = vpack.c.b16 %v5269, %v5268
    %v5281 = vpack.c.b16 %v5271, %v5270
    %v5282 = vpack.c.b16 %v5273, %v5272
    %v5283 = vpack.c.b16 %v5275, %v5274
    %5292 = vmatprep.subr.bf16.mxu0 0
    %5293 = vmatpush1.bf16.msra.mxu0 %v5283
    %5294 = vmatprep.subr.bf16.mxu0 0
    %5295 = vmatpush1.bf16.msra.mxu0 %v5282
    %5296 = vmatprep.subr.bf16.mxu0 0
    %5297 = vmatpush1.bf16.msra.mxu0 %v5281
    %5298 = vmatprep.subr.bf16.mxu0 0
    %5299 = vmatpush1.bf16.msra.mxu0 %v5280
    %5300 = vmatprep.subr.bf16.mxu0 0
    %5301 = vmatpush1.bf16.msra.mxu0 %v5279
    %5302 = vmatprep.subr.bf16.mxu0 0
    %5303 = vmatpush1.bf16.msra.mxu0 %v5278
    %5304 = vmatprep.subr.bf16.mxu0 0
    %5305 = vmatpush1.bf16.msra.mxu0 %v5277
    %5306 = vmatprep.subr.bf16.mxu0 0
    %5307 = vmatpush1.bf16.msra.mxu0 %v5276
    %5308 = vmatprep.subr.bf16.mxu0 0
    %5309 = vmatpush2.bf16.msra.mxu0 0
    %5310 = vmatprep.subr.bf16.mxu0 0
    %5311 = vmatpush2.bf16.msra.mxu0 0
    %5312 = vmatprep.subr.bf16.mxu0 0
    %5313 = vmatpush2.bf16.msra.mxu0 0
    %5314 = vmatprep.subr.bf16.mxu0 0
    %5315 = vmatpush2.bf16.msra.mxu0 0
    %5316 = vmatprep.subr.bf16.mxu0 0
    %5317 = vmatpush2.bf16.msra.mxu0 0
    %5318 = vmatprep.subr.bf16.mxu0 0
    %5319 = vmatpush2.bf16.msra.mxu0 0
    %5320 = vmatprep.subr.bf16.mxu0 0
    %5321 = vmatpush2.bf16.msra.mxu0 0
    %5322 = vmatprep.subr.bf16.mxu0 0
    %5323 = vmatpush2.bf16.msra.mxu0 0
    %5324 = vmatprep.mubr.bf16.mxu0 0
    %5325 = vmatmul.mubr.bf16.gmra.mxu0 %v5126
    %v5326 = vpop.f32.mrf.mxu0
    %v5327 = vadd.f32 0.0, %v5326
    %v5328 = vpop.f32.mrf.mxu0
    %v5329 = vpop.f32.mrf.mxu0
    %v5330 = vadd.f32 0.0, %v5329
    %v5331 = vpop.f32.mrf.mxu0
    %5332 = vdwg.mxu0
    %v5349 = vunpack.c.l.b16 %v5211
    %v5350 = vunpack.c.l.b16 %v5212
    %v5351 = vunpack.c.l.b16 %v5213
    %v5352 = vunpack.c.l.b16 %v5214
    %v5353 = vunpack.c.l.b16 %v5215
    %v5354 = vunpack.c.l.b16 %v5216
    %v5355 = vunpack.c.l.b16 %v5217
    %v5356 = vunpack.c.l.b16 %v5218
    %v5357 = vunpack.c.l.b16 %v5219
    %v5358 = vunpack.c.l.b16 %v5220
    %v5359 = vunpack.c.l.b16 %v5221
    %v5360 = vunpack.c.l.b16 %v5222
    %v5361 = vunpack.c.l.b16 %v5223
    %v5362 = vunpack.c.l.b16 %v5224
    %v5363 = vunpack.c.l.b16 %v5225
    %v5364 = vunpack.c.l.b16 %v5226
    %v5365 = vpack.c.b16 %v5350, %v5349
    %v5366 = vpack.c.b16 %v5352, %v5351
    %v5367 = vpack.c.b16 %v5354, %v5353
    %v5368 = vpack.c.b16 %v5356, %v5355
    %v5369 = vpack.c.b16 %v5358, %v5357
    %v5370 = vpack.c.b16 %v5360, %v5359
    %v5371 = vpack.c.b16 %v5362, %v5361
    %v5372 = vpack.c.b16 %v5364, %v5363
    %5381 = vmatprep.subr.bf16.mxu0 0
    %5382 = vmatpush1.bf16.msra.mxu0 %v5372
    %5383 = vmatprep.subr.bf16.mxu0 0
    %5384 = vmatpush1.bf16.msra.mxu0 %v5371
    %5385 = vmatprep.subr.bf16.mxu0 0
    %5386 = vmatpush1.bf16.msra.mxu0 %v5370
    %5387 = vmatprep.subr.bf16.mxu0 0
    %5388 = vmatpush1.bf16.msra.mxu0 %v5369
    %5389 = vmatprep.subr.bf16.mxu0 0
    %5390 = vmatpush1.bf16.msra.mxu0 %v5368
    %5391 = vmatprep.subr.bf16.mxu0 0
    %5392 = vmatpush1.bf16.msra.mxu0 %v5367
    %5393 = vmatprep.subr.bf16.mxu0 0
    %5394 = vmatpush1.bf16.msra.mxu0 %v5366
    %5395 = vmatprep.subr.bf16.mxu0 0
    %5396 = vmatpush1.bf16.msra.mxu0 %v5365
    %5397 = vmatprep.subr.bf16.mxu0 0
    %5398 = vmatpush2.bf16.msra.mxu0 0
    %5399 = vmatprep.subr.bf16.mxu0 0
    %5400 = vmatpush2.bf16.msra.mxu0 0
    %5401 = vmatprep.subr.bf16.mxu0 0
    %5402 = vmatpush2.bf16.msra.mxu0 0
    %5403 = vmatprep.subr.bf16.mxu0 0
    %5404 = vmatpush2.bf16.msra.mxu0 0
    %5405 = vmatprep.subr.bf16.mxu0 0
    %5406 = vmatpush2.bf16.msra.mxu0 0
    %5407 = vmatprep.subr.bf16.mxu0 0
    %5408 = vmatpush2.bf16.msra.mxu0 0
    %5409 = vmatprep.subr.bf16.mxu0 0
    %5410 = vmatpush2.bf16.msra.mxu0 0
    %5411 = vmatprep.subr.bf16.mxu0 0
    %5412 = vmatpush2.bf16.msra.mxu0 0
    %5413 = vmatprep.mubr.bf16.mxu0 0
    %5414 = vmatmul.mubr.bf16.gmra.mxu0 %v5168
    %v5415 = vpop.f32.mrf.mxu0
    %v5416 = vadd.f32 %v5327, %v5415
    %v5417 = vpop.f32.mrf.mxu0
    %v5418 = vpop.f32.mrf.mxu0
    %v5419 = vadd.f32 %v5330, %v5418
    %v5420 = vpop.f32.mrf.mxu0
    %5421 = vdwg.mxu0
    %s5422 = scalar_lea.vmem [#allocation52], 128
    %v5423 = vld [vmem:[%s5422] sm:$0xf]
    %v5424 = vld [vmem:[%s5422 + $0x4] sm:$0xf]
    %v5425 = vld [vmem:[%s5422 + $0x8] sm:$0xf]
    %v5426 = vld [vmem:[%s5422 + $0xc] sm:$0xf]
    %v5427 = vld [vmem:[%s5422 + $0x10] sm:$0xf]
    %v5428 = vld [vmem:[%s5422 + $0x14] sm:$0xf]
    %v5429 = vld [vmem:[%s5422 + $0x18] sm:$0xf]
    %v5430 = vld [vmem:[%s5422 + $0x1c] sm:$0xf]
    %v5431 = vld [vmem:[%s5422 + $0x20] sm:$0xf]
    %v5432 = vld [vmem:[%s5422 + $0x24] sm:$0xf]
    %v5433 = vld [vmem:[%s5422 + $0x28] sm:$0xf]
    %v5434 = vld [vmem:[%s5422 + $0x2c] sm:$0xf]
    %v5435 = vld [vmem:[%s5422 + $0x30] sm:$0xf]
    %v5436 = vld [vmem:[%s5422 + $0x34] sm:$0xf]
    %v5437 = vld [vmem:[%s5422 + $0x38] sm:$0xf]
    %v5438 = vld [vmem:[%s5422 + $0x3c] sm:$0xf]
    %v5455 = vunpack.c.l.b16 %v5423
    %v5456 = vunpack.c.l.b16 %v5424
    %v5457 = vunpack.c.l.b16 %v5425
    %v5458 = vunpack.c.l.b16 %v5426
    %v5459 = vunpack.c.l.b16 %v5427
    %v5460 = vunpack.c.l.b16 %v5428
    %v5461 = vunpack.c.l.b16 %v5429
    %v5462 = vunpack.c.l.b16 %v5430
    %v5463 = vunpack.c.l.b16 %v5431
    %v5464 = vunpack.c.l.b16 %v5432
    %v5465 = vunpack.c.l.b16 %v5433
    %v5466 = vunpack.c.l.b16 %v5434
    %v5467 = vunpack.c.l.b16 %v5435
    %v5468 = vunpack.c.l.b16 %v5436
    %v5469 = vunpack.c.l.b16 %v5437
    %v5470 = vunpack.c.l.b16 %v5438
    %v5471 = vpack.c.b16 %v5456, %v5455
    %v5472 = vpack.c.b16 %v5458, %v5457
    %v5473 = vpack.c.b16 %v5460, %v5459
    %v5474 = vpack.c.b16 %v5462, %v5461
    %v5475 = vpack.c.b16 %v5464, %v5463
    %v5476 = vpack.c.b16 %v5466, %v5465
    %v5477 = vpack.c.b16 %v5468, %v5467
    %v5478 = vpack.c.b16 %v5470, %v5469
    %5487 = vmatprep.subr.bf16.mxu0 0
    %5488 = vmatpush1.bf16.msra.mxu0 %v5478
    %5489 = vmatprep.subr.bf16.mxu0 0
    %5490 = vmatpush1.bf16.msra.mxu0 %v5477
    %5491 = vmatprep.subr.bf16.mxu0 0
    %5492 = vmatpush1.bf16.msra.mxu0 %v5476
    %5493 = vmatprep.subr.bf16.mxu0 0
    %5494 = vmatpush1.bf16.msra.mxu0 %v5475
    %5495 = vmatprep.subr.bf16.mxu0 0
    %5496 = vmatpush1.bf16.msra.mxu0 %v5474
    %5497 = vmatprep.subr.bf16.mxu0 0
    %5498 = vmatpush1.bf16.msra.mxu0 %v5473
    %5499 = vmatprep.subr.bf16.mxu0 0
    %5500 = vmatpush1.bf16.msra.mxu0 %v5472
    %5501 = vmatprep.subr.bf16.mxu0 0
    %5502 = vmatpush1.bf16.msra.mxu0 %v5471
    %5503 = vmatprep.subr.bf16.mxu0 0
    %5504 = vmatpush2.bf16.msra.mxu0 0
    %5505 = vmatprep.subr.bf16.mxu0 0
    %5506 = vmatpush2.bf16.msra.mxu0 0
    %5507 = vmatprep.subr.bf16.mxu0 0
    %5508 = vmatpush2.bf16.msra.mxu0 0
    %5509 = vmatprep.subr.bf16.mxu0 0
    %5510 = vmatpush2.bf16.msra.mxu0 0
    %5511 = vmatprep.subr.bf16.mxu0 0
    %5512 = vmatpush2.bf16.msra.mxu0 0
    %5513 = vmatprep.subr.bf16.mxu0 0
    %5514 = vmatpush2.bf16.msra.mxu0 0
    %5515 = vmatprep.subr.bf16.mxu0 0
    %5516 = vmatpush2.bf16.msra.mxu0 0
    %5517 = vmatprep.subr.bf16.mxu0 0
    %5518 = vmatpush2.bf16.msra.mxu0 0
    %5519 = vmatprep.mubr.bf16.mxu0 0
    %5520 = vmatmul.mubr.bf16.gmra.mxu0 %v5210
    %v5521 = vpop.f32.mrf.mxu0
    %v5522 = vadd.f32 0.0, %v5521
    %v5523 = vpop.f32.mrf.mxu0
    %v5524 = vpop.f32.mrf.mxu0
    %v5525 = vadd.f32 0.0, %v5524
    %v5526 = vpop.f32.mrf.mxu0
    %5527 = vdwg.mxu0
    %v5528 = vadd.f32 %v5416, %v5522
    %v5529 = vadd.f32 %v5419, %v5525
    %v5530 = vmul.f32 %v5528, %v2202
    %v5531 = vmul.f32 %v5529, %v2204
    %v5532 = vld [vmem:[#allocation54] sm:$0x1]
    %v5534 = vlaneseq
    %v5535 = vshrl.u32 %v5534, 7
    %v5536 = vsub.s32 0, %v5535
    %v5537 = vrot.slane %v5532, %v5536
    %v5539 = vadd.f32 %v5530, %v5537
    %v5540 = vadd.f32 %v5531, %v5537
    %vm5541 = vcmp.ge.f32.partialorder %v5539, 0.0
    %vm5542 = vcmp.ge.f32.partialorder %v5540, 0.0
    %v5543 = vmul.f32 %v5539, 0.01
    %v5544 = vmul.f32 %v5540, 0.01
    %v5545 = vsel %vm5541, %v5539, %v5543
    %v5546 = vsel %vm5542, %v5540, %v5544
    %v5547 = vadd.f32 %v5545, %v5546
    %v5548 = vrot.slane %v5547, 4
    %v5549 = vadd.f32 %v5547, %v5548
    %v5550 = vrot.slane %v5549, 2
    %v5551 = vadd.f32 %v5549, %v5550
    %v5552 = vrot.slane %v5551, 1
    %v5553 = vadd.f32 %v5551, %v5552
    %v5554 = vmul.f32 %v5545, %v5545
    %v5555 = vmul.f32 %v5546, %v5546
    %v5556 = vadd.f32 %v5554, %v5555
    %v5557 = vrot.slane %v5556, 4
    %v5558 = vadd.f32 %v5556, %v5557
    %v5559 = vrot.slane %v5558, 2
    %v5560 = vadd.f32 %v5558, %v5559
    %v5561 = vrot.slane %v5560, 1
    %v5562 = vadd.f32 %v5560, %v5561
    %5563 = vrot.lane.b32.xlu0 %v5553, 16
    %v5564 = vpop.permute.xlu0 %5563
    %v5565 = vadd.f32 %v5553, %v5564
    %5566 = vrot.lane.b32.xlu0 %v5562, 16
    %v5567 = vpop.permute.xlu0 %5566
    %v5568 = vadd.f32 %v5562, %v5567
    %5569 = vrot.lane.b32.xlu0 %v5565, 32
    %v5570 = vpop.permute.xlu0 %5569
    %v5571 = vadd.f32 %v5565, %v5570
    %5572 = vrot.lane.b32.xlu0 %v5568, 32
    %v5573 = vpop.permute.xlu0 %5572
    %v5574 = vadd.f32 %v5568, %v5573
    %5575 = vrot.lane.b32.xlu0 %v5571, 64
    %v5576 = vpop.permute.xlu0 %5575
    %v5577 = vadd.f32 %v5571, %v5576
    %5578 = vrot.lane.b32.xlu0 %v5574, 64
    %v5579 = vpop.permute.xlu0 %5578
    %v5580 = vadd.f32 %v5574, %v5579
    %v5581 = vmul.f32 %v5577, 0.0078125
    %v5582 = vmul.f32 %v5580, 0.0078125
    %v5583 = vmul.f32 %v5581, %v5581
    %v5584 = vsub.f32 %v5582, %v5583
    %v5585 = vlaneseq
    %v5586 = vshrl.u32 %v5585, 7
    %v5587 = vsub.s32 0, %v5586
    %v5588 = vrot.slane %v5581, %v5587
    %v5589 = vsub.f32 %v5545, %v5588
    %v5590 = vsub.f32 %v5546, %v5588
    %v5591 = vadd.f32 %v5584, 1e-05
    %v5592 = vrsqrt.pop %v5591
    %v5593 = vlaneseq
    %v5594 = vshrl.u32 %v5593, 7
    %v5595 = vsub.s32 0, %v5594
    %v5596 = vrot.slane %v5592, %v5595
    %v5597 = vmul.f32 %v5589, %v5596
    %v5598 = vmul.f32 %v5590, %v5596
    %v5599 = vld [vmem:[#allocation55] sm:$0x1]
    %v5601 = vlaneseq
    %v5602 = vshrl.u32 %v5601, 7
    %v5603 = vsub.s32 0, %v5602
    %v5604 = vrot.slane %v5599, %v5603
    %v5606 = vmul.f32 %v5597, %v5604
    %v5607 = vmul.f32 %v5598, %v5604
    %v5608 = vld [vmem:[#allocation57] sm:$0x1]
    %v5610 = vlaneseq
    %v5611 = vshrl.u32 %v5610, 7
    %v5612 = vsub.s32 0, %v5611
    %v5613 = vrot.slane %v5608, %v5612
    %v5615 = vadd.f32 %v5606, %v5613
    %v5616 = vadd.f32 %v5607, %v5613
    %v5617 = vpack.c.bf16 %v5616, %v5615
    %v5618 = vld [vmem:[#allocation58] sm:$0xf]
    %v5619 = vld [vmem:[#allocation58 + $0x4] sm:$0xf]
    %v5620 = vld [vmem:[#allocation58 + $0x8] sm:$0xf]
    %v5621 = vld [vmem:[#allocation58 + $0xc] sm:$0xf]
    %v5622 = vld [vmem:[#allocation58 + $0x10] sm:$0xf]
    %v5623 = vld [vmem:[#allocation58 + $0x14] sm:$0xf]
    %v5624 = vld [vmem:[#allocation58 + $0x18] sm:$0xf]
    %v5625 = vld [vmem:[#allocation58 + $0x1c] sm:$0xf]
    %v5626 = vld [vmem:[#allocation58 + $0x20] sm:$0xf]
    %v5627 = vld [vmem:[#allocation58 + $0x24] sm:$0xf]
    %v5628 = vld [vmem:[#allocation58 + $0x28] sm:$0xf]
    %v5629 = vld [vmem:[#allocation58 + $0x2c] sm:$0xf]
    %v5630 = vld [vmem:[#allocation58 + $0x30] sm:$0xf]
    %v5631 = vld [vmem:[#allocation58 + $0x34] sm:$0xf]
    %v5632 = vld [vmem:[#allocation58 + $0x38] sm:$0xf]
    %v5633 = vld [vmem:[#allocation58 + $0x3c] sm:$0xf]
    %v5650 = vunpack.c.l.b16 %v5618
    %v5651 = vunpack.c.l.b16 %v5619
    %v5652 = vunpack.c.l.b16 %v5620
    %v5653 = vunpack.c.l.b16 %v5621
    %v5654 = vunpack.c.l.b16 %v5622
    %v5655 = vunpack.c.l.b16 %v5623
    %v5656 = vunpack.c.l.b16 %v5624
    %v5657 = vunpack.c.l.b16 %v5625
    %v5658 = vunpack.c.l.b16 %v5626
    %v5659 = vunpack.c.l.b16 %v5627
    %v5660 = vunpack.c.l.b16 %v5628
    %v5661 = vunpack.c.l.b16 %v5629
    %v5662 = vunpack.c.l.b16 %v5630
    %v5663 = vunpack.c.l.b16 %v5631
    %v5664 = vunpack.c.l.b16 %v5632
    %v5665 = vunpack.c.l.b16 %v5633
    %v5666 = vpack.c.b16 %v5651, %v5650
    %v5667 = vpack.c.b16 %v5653, %v5652
    %v5668 = vpack.c.b16 %v5655, %v5654
    %v5669 = vpack.c.b16 %v5657, %v5656
    %v5670 = vpack.c.b16 %v5659, %v5658
    %v5671 = vpack.c.b16 %v5661, %v5660
    %v5672 = vpack.c.b16 %v5663, %v5662
    %v5673 = vpack.c.b16 %v5665, %v5664
    %5682 = vmatprep.subr.bf16.mxu0 0
    %5683 = vmatpush1.bf16.msra.mxu0 %v5673
    %5684 = vmatprep.subr.bf16.mxu0 0
    %5685 = vmatpush1.bf16.msra.mxu0 %v5672
    %5686 = vmatprep.subr.bf16.mxu0 0
    %5687 = vmatpush1.bf16.msra.mxu0 %v5671
    %5688 = vmatprep.subr.bf16.mxu0 0
    %5689 = vmatpush1.bf16.msra.mxu0 %v5670
    %5690 = vmatprep.subr.bf16.mxu0 0
    %5691 = vmatpush1.bf16.msra.mxu0 %v5669
    %5692 = vmatprep.subr.bf16.mxu0 0
    %5693 = vmatpush1.bf16.msra.mxu0 %v5668
    %5694 = vmatprep.subr.bf16.mxu0 0
    %5695 = vmatpush1.bf16.msra.mxu0 %v5667
    %5696 = vmatprep.subr.bf16.mxu0 0
    %5697 = vmatpush1.bf16.msra.mxu0 %v5666
    %5698 = vmatprep.subr.bf16.mxu0 0
    %5699 = vmatpush2.bf16.msra.mxu0 0
    %5700 = vmatprep.subr.bf16.mxu0 0
    %5701 = vmatpush2.bf16.msra.mxu0 0
    %5702 = vmatprep.subr.bf16.mxu0 0
    %5703 = vmatpush2.bf16.msra.mxu0 0
    %5704 = vmatprep.subr.bf16.mxu0 0
    %5705 = vmatpush2.bf16.msra.mxu0 0
    %5706 = vmatprep.subr.bf16.mxu0 0
    %5707 = vmatpush2.bf16.msra.mxu0 0
    %5708 = vmatprep.subr.bf16.mxu0 0
    %5709 = vmatpush2.bf16.msra.mxu0 0
    %5710 = vmatprep.subr.bf16.mxu0 0
    %5711 = vmatpush2.bf16.msra.mxu0 0
    %5712 = vmatprep.subr.bf16.mxu0 0
    %5713 = vmatpush2.bf16.msra.mxu0 0
    %5714 = vmatprep.mubr.bf16.mxu0 0
    %5715 = vmatmul.mubr.bf16.gmra.mxu0 %v5617
    %v5716 = vpop.f32.mrf.mxu0
    %v5717 = vadd.f32 0.0, %v5716
    %v5718 = vpop.f32.mrf.mxu0
    %v5719 = vpop.f32.mrf.mxu0
    %v5720 = vadd.f32 0.0, %v5719
    %v5721 = vpop.f32.mrf.mxu0
    %5722 = vdwg.mxu0
    %v5723 = vld [vmem:[%s91] sm:$0xf]
    %v5724 = vld [vmem:[%s91 + $0x4] sm:$0xf]
    %v5725 = vld [vmem:[%s91 + $0x8] sm:$0xf]
    %v5726 = vld [vmem:[%s91 + $0xc] sm:$0xf]
    %v5727 = vpack.c.bf16 %v5720, %v5717
    %v5728 = vld [vmem:[#allocation60] sm:$0x1]
    %v5730 = vlaneseq
    %v5731 = vshrl.u32 %v5730, 7
    %v5732 = vsub.s32 0, %v5731
    %v5733 = vrot.slane %v5728, %v5732
    %v5739 = vunpack.c.l.b16 %v5723
    %v5740 = vunpack.c.l.b16 %v5724
    %v5741 = vunpack.c.l.b16 %v5725
    %v5742 = vunpack.c.l.b16 %v5726
    %v5743 = vpack.c.b16 %v5740, %v5739
    %v5744 = vpack.c.b16 %v5742, %v5741
    %v5746 = vsel %vm1004, %v5743, 0
    %v5749 = vsel %vm1004, %v5744, 0
    %5751 = vmatprep.subr.bf16.mxu0 0
    %5752 = vmatpush1.bf16.msra.mxu0 0
    %5753 = vmatprep.subr.bf16.mxu0 0
    %5754 = vmatpush1.bf16.msra.mxu0 0
    %5755 = vmatprep.subr.bf16.mxu0 0
    %5756 = vmatpush1.bf16.msra.mxu0 0
    %5757 = vmatprep.subr.bf16.mxu0 0
    %5758 = vmatpush1.bf16.msra.mxu0 0
    %5759 = vmatprep.subr.bf16.mxu0 0
    %5760 = vmatpush1.bf16.msra.mxu0 0
    %5761 = vmatprep.subr.bf16.mxu0 0
    %5762 = vmatpush1.bf16.msra.mxu0 0
    %5763 = vmatprep.subr.bf16.mxu0 0
    %5764 = vmatpush1.bf16.msra.mxu0 0
    %5765 = vmatprep.subr.bf16.mxu0 0
    %5766 = vmatpush1.bf16.msra.mxu0 %v5727
    %5767 = vmatprep.subr.bf16.mxu0 0
    %5768 = vmatpush2.bf16.msra.mxu0 0
    %5769 = vmatprep.subr.bf16.mxu0 0
    %5770 = vmatpush2.bf16.msra.mxu0 0
    %5771 = vmatprep.subr.bf16.mxu0 0
    %5772 = vmatpush2.bf16.msra.mxu0 0
    %5773 = vmatprep.subr.bf16.mxu0 0
    %5774 = vmatpush2.bf16.msra.mxu0 0
    %5775 = vmatprep.subr.bf16.mxu0 0
    %5776 = vmatpush2.bf16.msra.mxu0 0
    %5777 = vmatprep.subr.bf16.mxu0 0
    %5778 = vmatpush2.bf16.msra.mxu0 0
    %5779 = vmatprep.subr.bf16.mxu0 0
    %5780 = vmatpush2.bf16.msra.mxu0 0
    %5781 = vmatprep.subr.bf16.mxu0 0
    %5782 = vmatpush2.bf16.msra.mxu0 0
    %5783 = vmatprep.mubr.bf16.mxu0 0
    %5784 = vmatmul.mubr.bf16.gmra.mxu0 %v5746
    %v5785 = vpop.f32.mrf.mxu0
    %v5786 = vadd.f32 %v5733, %v5785
    %v5787 = vpop.f32.mrf.mxu0
    %v5788 = vpop.f32.mrf.mxu0
    %v5789 = vadd.f32 %v5733, %v5788
    %v5790 = vpop.f32.mrf.mxu0
    %5791 = vmatprep.mubr.bf16.mxu0 0
    %5792 = vmatmul.mubr.bf16.gmra.mxu0 %v5749
    %v5793 = vpop.f32.mrf.mxu0
    %v5794 = vadd.f32 %v5733, %v5793
    %v5795 = vpop.f32.mrf.mxu0
    %v5796 = vpop.f32.mrf.mxu0
    %v5797 = vadd.f32 %v5733, %v5796
    %v5798 = vpop.f32.mrf.mxu0
    %5799 = vdwg.mxu0
    %v5800 = vpack.c.bf16 %v5789, %v5786
    %v5801 = vpack.c.bf16 %v5797, %v5794
    %5802 = vmatprep.subr.bf16.mxu0 0
    %5803 = vmatpush1.bf16.msra.mxu0 0
    %5804 = vmatprep.subr.bf16.mxu0 0
    %5805 = vmatpush1.bf16.msra.mxu0 0
    %5806 = vmatprep.subr.bf16.mxu0 0
    %5807 = vmatpush1.bf16.msra.mxu0 0
    %5808 = vmatprep.subr.bf16.mxu0 0
    %5809 = vmatpush1.bf16.msra.mxu0 0
    %5810 = vmatprep.subr.bf16.mxu0 0
    %5811 = vmatpush1.bf16.msra.mxu0 0
    %5812 = vmatprep.subr.bf16.mxu0 0
    %5813 = vmatpush1.bf16.msra.mxu0 0
    %5814 = vmatprep.subr.bf16.mxu0 %v1851
    %5815 = vmatpush1.bf16.msra.mxu0 %v5801
    %5816 = vmatprep.subr.bf16.mxu0 %v1850
    %5817 = vmatpush1.bf16.msra.mxu0 %v5800
    %5818 = vmatprep.subr.bf16.mxu0 0
    %5819 = vmatpush2.bf16.msra.mxu0 0
    %5820 = vmatprep.subr.bf16.mxu0 0
    %5821 = vmatpush2.bf16.msra.mxu0 0
    %5822 = vmatprep.subr.bf16.mxu0 0
    %5823 = vmatpush2.bf16.msra.mxu0 0
    %5824 = vmatprep.subr.bf16.mxu0 0
    %5825 = vmatpush2.bf16.msra.mxu0 0
    %5826 = vmatprep.subr.bf16.mxu0 0
    %5827 = vmatpush2.bf16.msra.mxu0 0
    %5828 = vmatprep.subr.bf16.mxu0 0
    %5829 = vmatpush2.bf16.msra.mxu0 0
    %5830 = vmatprep.subr.bf16.mxu0 0
    %5831 = vmatpush2.bf16.msra.mxu0 0
    %5832 = vmatprep.subr.bf16.mxu0 0
    %5833 = vmatpush2.bf16.msra.mxu0 0
    %5834 = vmatprep.mubr.bf16.mxu0 0
    %5835 = vmatmul.mubr.bf16.gmra.mxu0 %v866
    %v5836 = vpop.f32.mrf.mxu0
    %v5837 = vadd.f32 0.0, %v5836
    %v5838 = vpop.f32.mrf.mxu0
    %v5839 = vadd.f32 0.0, %v5838
    %v5840 = vpop.f32.mrf.mxu0
    %v5841 = vadd.f32 0.0, %v5840
    %v5842 = vpop.f32.mrf.mxu0
    %v5843 = vadd.f32 0.0, %v5842
    %5844 = vmatprep.mubr.bf16.mxu0 0
    %5845 = vmatmul.mubr.bf16.gmra.mxu0 %v869
    %v5846 = vpop.f32.mrf.mxu0
    %v5847 = vadd.f32 0.0, %v5846
    %v5848 = vpop.f32.mrf.mxu0
    %v5849 = vadd.f32 0.0, %v5848
    %v5850 = vpop.f32.mrf.mxu0
    %v5851 = vadd.f32 0.0, %v5850
    %v5852 = vpop.f32.mrf.mxu0
    %v5853 = vadd.f32 0.0, %v5852
    %5854 = vdwg.mxu0
    %v5855 = vpack.c.bf16 %v5841, %v5837
    %v5856 = vpack.c.bf16 %v5843, %v5839
    %v5857 = vpack.c.bf16 %v5851, %v5847
    %v5858 = vpack.c.bf16 %v5853, %v5849
    %5859 = vmatprep.subr.bf16.mxu0 0
    %5860 = vmatpush1.bf16.msra.mxu0 0
    %5861 = vmatprep.subr.bf16.mxu0 0
    %5862 = vmatpush1.bf16.msra.mxu0 0
    %5863 = vmatprep.subr.bf16.mxu0 0
    %5864 = vmatpush1.bf16.msra.mxu0 0
    %5865 = vmatprep.subr.bf16.mxu0 0
    %5866 = vmatpush1.bf16.msra.mxu0 0
    %5867 = vmatprep.subr.bf16.mxu0 0
    %5868 = vmatpush1.bf16.msra.mxu0 0
    %5869 = vmatprep.subr.bf16.mxu0 0
    %5870 = vmatpush1.bf16.msra.mxu0 0
    %5871 = vmatprep.subr.bf16.mxu0 %v1851
    %5872 = vmatpush1.bf16.msra.mxu0 %v5801
    %5873 = vmatprep.subr.bf16.mxu0 %v1850
    %5874 = vmatpush1.bf16.msra.mxu0 %v5800
    %5875 = vmatprep.subr.bf16.mxu0 0
    %5876 = vmatpush2.bf16.msra.mxu0 0
    %5877 = vmatprep.subr.bf16.mxu0 0
    %5878 = vmatpush2.bf16.msra.mxu0 0
    %5879 = vmatprep.subr.bf16.mxu0 0
    %5880 = vmatpush2.bf16.msra.mxu0 0
    %5881 = vmatprep.subr.bf16.mxu0 0
    %5882 = vmatpush2.bf16.msra.mxu0 0
    %5883 = vmatprep.subr.bf16.mxu0 0
    %5884 = vmatpush2.bf16.msra.mxu0 0
    %5885 = vmatprep.subr.bf16.mxu0 0
    %5886 = vmatpush2.bf16.msra.mxu0 0
    %5887 = vmatprep.subr.bf16.mxu0 0
    %5888 = vmatpush2.bf16.msra.mxu0 0
    %5889 = vmatprep.subr.bf16.mxu0 0
    %5890 = vmatpush2.bf16.msra.mxu0 0
    %5891 = vmatprep.mubr.bf16.mxu0 0
    %5892 = vmatmul.mubr.bf16.gmra.mxu0 %v937
    %v5893 = vpop.f32.mrf.mxu0
    %v5894 = vadd.f32 0.0, %v5893
    %v5895 = vpop.f32.mrf.mxu0
    %v5896 = vadd.f32 0.0, %v5895
    %v5897 = vpop.f32.mrf.mxu0
    %v5898 = vadd.f32 0.0, %v5897
    %v5899 = vpop.f32.mrf.mxu0
    %v5900 = vadd.f32 0.0, %v5899
    %5901 = vmatprep.mubr.bf16.mxu0 0
    %5902 = vmatmul.mubr.bf16.gmra.mxu0 %v940
    %v5903 = vpop.f32.mrf.mxu0
    %v5904 = vadd.f32 0.0, %v5903
    %v5905 = vpop.f32.mrf.mxu0
    %v5906 = vadd.f32 0.0, %v5905
    %v5907 = vpop.f32.mrf.mxu0
    %v5908 = vadd.f32 0.0, %v5907
    %v5909 = vpop.f32.mrf.mxu0
    %v5910 = vadd.f32 0.0, %v5909
    %5911 = vdwg.mxu0
    %v5912 = vpack.c.bf16 %v5898, %v5894
    %v5913 = vpack.c.bf16 %v5900, %v5896
    %v5914 = vpack.c.bf16 %v5908, %v5904
    %v5915 = vpack.c.bf16 %v5910, %v5906
    %v5916 = vld [vmem:[#allocation61] sm:$0xf]
    %v5917 = vld [vmem:[#allocation61 + $0x4] sm:$0xf]
    %v5918 = vld [vmem:[#allocation61 + $0x8] sm:$0xf]
    %v5919 = vld [vmem:[#allocation61 + $0xc] sm:$0xf]
    %v5920 = vld [vmem:[#allocation61 + $0x10] sm:$0xf]
    %v5921 = vld [vmem:[#allocation61 + $0x14] sm:$0xf]
    %v5922 = vld [vmem:[#allocation61 + $0x18] sm:$0xf]
    %v5923 = vld [vmem:[#allocation61 + $0x1c] sm:$0xf]
    %v5924 = vld [vmem:[#allocation61 + $0x20] sm:$0xf]
    %v5925 = vld [vmem:[#allocation61 + $0x24] sm:$0xf]
    %v5926 = vld [vmem:[#allocation61 + $0x28] sm:$0xf]
    %v5927 = vld [vmem:[#allocation61 + $0x2c] sm:$0xf]
    %v5928 = vld [vmem:[#allocation61 + $0x30] sm:$0xf]
    %v5929 = vld [vmem:[#allocation61 + $0x34] sm:$0xf]
    %v5930 = vld [vmem:[#allocation61 + $0x38] sm:$0xf]
    %v5931 = vld [vmem:[#allocation61 + $0x3c] sm:$0xf]
    %v5932 = vld [vmem:[#allocation61 + $0x40] sm:$0xf]
    %v5933 = vld [vmem:[#allocation61 + $0x44] sm:$0xf]
    %v5934 = vld [vmem:[#allocation61 + $0x48] sm:$0xf]
    %v5935 = vld [vmem:[#allocation61 + $0x4c] sm:$0xf]
    %v5936 = vld [vmem:[#allocation61 + $0x50] sm:$0xf]
    %v5937 = vld [vmem:[#allocation61 + $0x54] sm:$0xf]
    %v5938 = vld [vmem:[#allocation61 + $0x58] sm:$0xf]
    %v5939 = vld [vmem:[#allocation61 + $0x5c] sm:$0xf]
    %v5940 = vld [vmem:[#allocation61 + $0x60] sm:$0xf]
    %v5941 = vld [vmem:[#allocation61 + $0x64] sm:$0xf]
    %v5942 = vld [vmem:[#allocation61 + $0x68] sm:$0xf]
    %v5943 = vld [vmem:[#allocation61 + $0x6c] sm:$0xf]
    %v5944 = vld [vmem:[#allocation61 + $0x70] sm:$0xf]
    %v5945 = vld [vmem:[#allocation61 + $0x74] sm:$0xf]
    %v5946 = vld [vmem:[#allocation61 + $0x78] sm:$0xf]
    %v5947 = vld [vmem:[#allocation61 + $0x7c] sm:$0xf]
    %s5948 = scalar_lea.vmem [#allocation61], 128
    %v5949 = vld [vmem:[%s5948] sm:$0xf]
    %v5950 = vld [vmem:[%s5948 + $0x4] sm:$0xf]
    %v5951 = vld [vmem:[%s5948 + $0x8] sm:$0xf]
    %v5952 = vld [vmem:[%s5948 + $0xc] sm:$0xf]
    %v5953 = vld [vmem:[%s5948 + $0x10] sm:$0xf]
    %v5954 = vld [vmem:[%s5948 + $0x14] sm:$0xf]
    %v5955 = vld [vmem:[%s5948 + $0x18] sm:$0xf]
    %v5956 = vld [vmem:[%s5948 + $0x1c] sm:$0xf]
    %v5957 = vld [vmem:[%s5948 + $0x20] sm:$0xf]
    %v5958 = vld [vmem:[%s5948 + $0x24] sm:$0xf]
    %v5959 = vld [vmem:[%s5948 + $0x28] sm:$0xf]
    %v5960 = vld [vmem:[%s5948 + $0x2c] sm:$0xf]
    %v5961 = vld [vmem:[%s5948 + $0x30] sm:$0xf]
    %v5962 = vld [vmem:[%s5948 + $0x34] sm:$0xf]
    %v5963 = vld [vmem:[%s5948 + $0x38] sm:$0xf]
    %v5964 = vld [vmem:[%s5948 + $0x3c] sm:$0xf]
    %v5965 = vld [vmem:[%s5948 + $0x40] sm:$0xf]
    %v5966 = vld [vmem:[%s5948 + $0x44] sm:$0xf]
    %v5967 = vld [vmem:[%s5948 + $0x48] sm:$0xf]
    %v5968 = vld [vmem:[%s5948 + $0x4c] sm:$0xf]
    %v5969 = vld [vmem:[%s5948 + $0x50] sm:$0xf]
    %v5970 = vld [vmem:[%s5948 + $0x54] sm:$0xf]
    %v5971 = vld [vmem:[%s5948 + $0x58] sm:$0xf]
    %v5972 = vld [vmem:[%s5948 + $0x5c] sm:$0xf]
    %v5973 = vld [vmem:[%s5948 + $0x60] sm:$0xf]
    %v5974 = vld [vmem:[%s5948 + $0x64] sm:$0xf]
    %v5975 = vld [vmem:[%s5948 + $0x68] sm:$0xf]
    %v5976 = vld [vmem:[%s5948 + $0x6c] sm:$0xf]
    %v5977 = vld [vmem:[%s5948 + $0x70] sm:$0xf]
    %v5978 = vld [vmem:[%s5948 + $0x74] sm:$0xf]
    %v5979 = vld [vmem:[%s5948 + $0x78] sm:$0xf]
    %v5980 = vld [vmem:[%s5948 + $0x7c] sm:$0xf]
    %v6013 = vunpack.c.l.b16 %v5949
    %v6014 = vunpack.c.l.b16 %v5950
    %v6015 = vunpack.c.l.b16 %v5951
    %v6016 = vunpack.c.l.b16 %v5952
    %v6017 = vunpack.c.l.b16 %v5953
    %v6018 = vunpack.c.l.b16 %v5954
    %v6019 = vunpack.c.l.b16 %v5955
    %v6020 = vunpack.c.l.b16 %v5956
    %v6021 = vunpack.c.l.b16 %v5957
    %v6022 = vunpack.c.l.b16 %v5958
    %v6023 = vunpack.c.l.b16 %v5959
    %v6024 = vunpack.c.l.b16 %v5960
    %v6025 = vunpack.c.l.b16 %v5961
    %v6026 = vunpack.c.l.b16 %v5962
    %v6027 = vunpack.c.l.b16 %v5963
    %v6028 = vunpack.c.l.b16 %v5964
    %v6029 = vunpack.c.l.b16 %v5965
    %v6030 = vunpack.c.l.b16 %v5966
    %v6031 = vunpack.c.l.b16 %v5967
    %v6032 = vunpack.c.l.b16 %v5968
    %v6033 = vunpack.c.l.b16 %v5969
    %v6034 = vunpack.c.l.b16 %v5970
    %v6035 = vunpack.c.l.b16 %v5971
    %v6036 = vunpack.c.l.b16 %v5972
    %v6037 = vunpack.c.l.b16 %v5973
    %v6038 = vunpack.c.l.b16 %v5974
    %v6039 = vunpack.c.l.b16 %v5975
    %v6040 = vunpack.c.l.b16 %v5976
    %v6041 = vunpack.c.l.b16 %v5977
    %v6042 = vunpack.c.l.b16 %v5978
    %v6043 = vunpack.c.l.b16 %v5979
    %v6044 = vunpack.c.l.b16 %v5980
    %v6045 = vpack.c.b16 %v6014, %v6013
    %v6046 = vpack.c.b16 %v6016, %v6015
    %v6047 = vpack.c.b16 %v6018, %v6017
    %v6048 = vpack.c.b16 %v6020, %v6019
    %v6049 = vpack.c.b16 %v6022, %v6021
    %v6050 = vpack.c.b16 %v6024, %v6023
    %v6051 = vpack.c.b16 %v6026, %v6025
    %v6052 = vpack.c.b16 %v6028, %v6027
    %v6053 = vpack.c.b16 %v6030, %v6029
    %v6054 = vpack.c.b16 %v6032, %v6031
    %v6055 = vpack.c.b16 %v6034, %v6033
    %v6056 = vpack.c.b16 %v6036, %v6035
    %v6057 = vpack.c.b16 %v6038, %v6037
    %v6058 = vpack.c.b16 %v6040, %v6039
    %v6059 = vpack.c.b16 %v6042, %v6041
    %v6060 = vpack.c.b16 %v6044, %v6043
    %6077 = vmatprep.subr.bf16.mxu0 0
    %6078 = vmatpush1.bf16.msra.mxu0 %v6052
    %6079 = vmatprep.subr.bf16.mxu0 0
    %6080 = vmatpush1.bf16.msra.mxu0 %v6051
    %6081 = vmatprep.subr.bf16.mxu0 0
    %6082 = vmatpush1.bf16.msra.mxu0 %v6050
    %6083 = vmatprep.subr.bf16.mxu0 0
    %6084 = vmatpush1.bf16.msra.mxu0 %v6049
    %6085 = vmatprep.subr.bf16.mxu0 0
    %6086 = vmatpush1.bf16.msra.mxu0 %v6048
    %6087 = vmatprep.subr.bf16.mxu0 0
    %6088 = vmatpush1.bf16.msra.mxu0 %v6047
    %6089 = vmatprep.subr.bf16.mxu0 0
    %6090 = vmatpush1.bf16.msra.mxu0 %v6046
    %6091 = vmatprep.subr.bf16.mxu0 0
    %6092 = vmatpush1.bf16.msra.mxu0 %v6045
    %6093 = vmatprep.subr.bf16.mxu0 0
    %6094 = vmatpush2.bf16.msra.mxu0 %v6060
    %6095 = vmatprep.subr.bf16.mxu0 0
    %6096 = vmatpush2.bf16.msra.mxu0 %v6059
    %6097 = vmatprep.subr.bf16.mxu0 0
    %6098 = vmatpush2.bf16.msra.mxu0 %v6058
    %6099 = vmatprep.subr.bf16.mxu0 0
    %6100 = vmatpush2.bf16.msra.mxu0 %v6057
    %6101 = vmatprep.subr.bf16.mxu0 0
    %6102 = vmatpush2.bf16.msra.mxu0 %v6056
    %6103 = vmatprep.subr.bf16.mxu0 0
    %6104 = vmatpush2.bf16.msra.mxu0 %v6055
    %6105 = vmatprep.subr.bf16.mxu0 0
    %6106 = vmatpush2.bf16.msra.mxu0 %v6054
    %6107 = vmatprep.subr.bf16.mxu0 0
    %6108 = vmatpush2.bf16.msra.mxu0 %v6053
    %6109 = vmatprep.mubr.bf16.mxu0 %v1850
    %6110 = vmatmul.mubr.bf16.gmra.mxu0 %v5800
    %v6111 = vpop.f32.mrf.mxu0
    %v6112 = vadd.f32 0.0, %v6111
    %v6113 = vpop.f32.mrf.mxu0
    %v6114 = vpop.f32.mrf.mxu0
    %v6115 = vadd.f32 0.0, %v6114
    %v6116 = vpop.f32.mrf.mxu0
    %6117 = vmatprep.mubr.bf16.mxu0 %v1851
    %6118 = vmatmul.mubr.bf16.gmra.mxu0 %v5801
    %v6119 = vpop.f32.mrf.mxu0
    %v6120 = vadd.f32 0.0, %v6119
    %v6121 = vpop.f32.mrf.mxu0
    %v6122 = vpop.f32.mrf.mxu0
    %v6123 = vadd.f32 0.0, %v6122
    %v6124 = vpop.f32.mrf.mxu0
    %6125 = vdwg.mxu0
    %v6158 = vunpack.c.l.b16 %v5916
    %v6159 = vunpack.c.l.b16 %v5917
    %v6160 = vunpack.c.l.b16 %v5918
    %v6161 = vunpack.c.l.b16 %v5919
    %v6162 = vunpack.c.l.b16 %v5920
    %v6163 = vunpack.c.l.b16 %v5921
    %v6164 = vunpack.c.l.b16 %v5922
    %v6165 = vunpack.c.l.b16 %v5923
    %v6166 = vunpack.c.l.b16 %v5924
    %v6167 = vunpack.c.l.b16 %v5925
    %v6168 = vunpack.c.l.b16 %v5926
    %v6169 = vunpack.c.l.b16 %v5927
    %v6170 = vunpack.c.l.b16 %v5928
    %v6171 = vunpack.c.l.b16 %v5929
    %v6172 = vunpack.c.l.b16 %v5930
    %v6173 = vunpack.c.l.b16 %v5931
    %v6174 = vunpack.c.l.b16 %v5932
    %v6175 = vunpack.c.l.b16 %v5933
    %v6176 = vunpack.c.l.b16 %v5934
    %v6177 = vunpack.c.l.b16 %v5935
    %v6178 = vunpack.c.l.b16 %v5936
    %v6179 = vunpack.c.l.b16 %v5937
    %v6180 = vunpack.c.l.b16 %v5938
    %v6181 = vunpack.c.l.b16 %v5939
    %v6182 = vunpack.c.l.b16 %v5940
    %v6183 = vunpack.c.l.b16 %v5941
    %v6184 = vunpack.c.l.b16 %v5942
    %v6185 = vunpack.c.l.b16 %v5943
    %v6186 = vunpack.c.l.b16 %v5944
    %v6187 = vunpack.c.l.b16 %v5945
    %v6188 = vunpack.c.l.b16 %v5946
    %v6189 = vunpack.c.l.b16 %v5947
    %v6190 = vpack.c.b16 %v6159, %v6158
    %v6191 = vpack.c.b16 %v6161, %v6160
    %v6192 = vpack.c.b16 %v6163, %v6162
    %v6193 = vpack.c.b16 %v6165, %v6164
    %v6194 = vpack.c.b16 %v6167, %v6166
    %v6195 = vpack.c.b16 %v6169, %v6168
    %v6196 = vpack.c.b16 %v6171, %v6170
    %v6197 = vpack.c.b16 %v6173, %v6172
    %v6198 = vpack.c.b16 %v6175, %v6174
    %v6199 = vpack.c.b16 %v6177, %v6176
    %v6200 = vpack.c.b16 %v6179, %v6178
    %v6201 = vpack.c.b16 %v6181, %v6180
    %v6202 = vpack.c.b16 %v6183, %v6182
    %v6203 = vpack.c.b16 %v6185, %v6184
    %v6204 = vpack.c.b16 %v6187, %v6186
    %v6205 = vpack.c.b16 %v6189, %v6188
    %6222 = vmatprep.subr.bf16.mxu0 0
    %6223 = vmatpush1.bf16.msra.mxu0 %v6197
    %6224 = vmatprep.subr.bf16.mxu0 0
    %6225 = vmatpush1.bf16.msra.mxu0 %v6196
    %6226 = vmatprep.subr.bf16.mxu0 0
    %6227 = vmatpush1.bf16.msra.mxu0 %v6195
    %6228 = vmatprep.subr.bf16.mxu0 0
    %6229 = vmatpush1.bf16.msra.mxu0 %v6194
    %6230 = vmatprep.subr.bf16.mxu0 0
    %6231 = vmatpush1.bf16.msra.mxu0 %v6193
    %6232 = vmatprep.subr.bf16.mxu0 0
    %6233 = vmatpush1.bf16.msra.mxu0 %v6192
    %6234 = vmatprep.subr.bf16.mxu0 0
    %6235 = vmatpush1.bf16.msra.mxu0 %v6191
    %6236 = vmatprep.subr.bf16.mxu0 0
    %6237 = vmatpush1.bf16.msra.mxu0 %v6190
    %6238 = vmatprep.subr.bf16.mxu0 0
    %6239 = vmatpush2.bf16.msra.mxu0 %v6205
    %6240 = vmatprep.subr.bf16.mxu0 0
    %6241 = vmatpush2.bf16.msra.mxu0 %v6204
    %6242 = vmatprep.subr.bf16.mxu0 0
    %6243 = vmatpush2.bf16.msra.mxu0 %v6203
    %6244 = vmatprep.subr.bf16.mxu0 0
    %6245 = vmatpush2.bf16.msra.mxu0 %v6202
    %6246 = vmatprep.subr.bf16.mxu0 0
    %6247 = vmatpush2.bf16.msra.mxu0 %v6201
    %6248 = vmatprep.subr.bf16.mxu0 0
    %6249 = vmatpush2.bf16.msra.mxu0 %v6200
    %6250 = vmatprep.subr.bf16.mxu0 0
    %6251 = vmatpush2.bf16.msra.mxu0 %v6199
    %6252 = vmatprep.subr.bf16.mxu0 0
    %6253 = vmatpush2.bf16.msra.mxu0 %v6198
    %6254 = vmatprep.mubr.bf16.mxu0 %v5856
    %6255 = vmatmul.mubr.bf16.gmra.mxu0 %v5855
    %v6256 = vpop.f32.mrf.mxu0
    %v6257 = vadd.f32 %v6112, %v6256
    %v6258 = vpop.f32.mrf.mxu0
    %v6259 = vpop.f32.mrf.mxu0
    %v6260 = vadd.f32 %v6115, %v6259
    %v6261 = vpop.f32.mrf.mxu0
    %6262 = vmatprep.mubr.bf16.mxu0 %v5858
    %6263 = vmatmul.mubr.bf16.gmra.mxu0 %v5857
    %v6264 = vpop.f32.mrf.mxu0
    %v6265 = vadd.f32 %v6120, %v6264
    %v6266 = vpop.f32.mrf.mxu0
    %v6267 = vpop.f32.mrf.mxu0
    %v6268 = vadd.f32 %v6123, %v6267
    %v6269 = vpop.f32.mrf.mxu0
    %6270 = vdwg.mxu0
    %s6271 = scalar_lea.vmem [#allocation61], 256
    %v6272 = vld [vmem:[%s6271] sm:$0xf]
    %v6273 = vld [vmem:[%s6271 + $0x4] sm:$0xf]
    %v6274 = vld [vmem:[%s6271 + $0x8] sm:$0xf]
    %v6275 = vld [vmem:[%s6271 + $0xc] sm:$0xf]
    %v6276 = vld [vmem:[%s6271 + $0x10] sm:$0xf]
    %v6277 = vld [vmem:[%s6271 + $0x14] sm:$0xf]
    %v6278 = vld [vmem:[%s6271 + $0x18] sm:$0xf]
    %v6279 = vld [vmem:[%s6271 + $0x1c] sm:$0xf]
    %v6280 = vld [vmem:[%s6271 + $0x20] sm:$0xf]
    %v6281 = vld [vmem:[%s6271 + $0x24] sm:$0xf]
    %v6282 = vld [vmem:[%s6271 + $0x28] sm:$0xf]
    %v6283 = vld [vmem:[%s6271 + $0x2c] sm:$0xf]
    %v6284 = vld [vmem:[%s6271 + $0x30] sm:$0xf]
    %v6285 = vld [vmem:[%s6271 + $0x34] sm:$0xf]
    %v6286 = vld [vmem:[%s6271 + $0x38] sm:$0xf]
    %v6287 = vld [vmem:[%s6271 + $0x3c] sm:$0xf]
    %v6288 = vld [vmem:[%s6271 + $0x40] sm:$0xf]
    %v6289 = vld [vmem:[%s6271 + $0x44] sm:$0xf]
    %v6290 = vld [vmem:[%s6271 + $0x48] sm:$0xf]
    %v6291 = vld [vmem:[%s6271 + $0x4c] sm:$0xf]
    %v6292 = vld [vmem:[%s6271 + $0x50] sm:$0xf]
    %v6293 = vld [vmem:[%s6271 + $0x54] sm:$0xf]
    %v6294 = vld [vmem:[%s6271 + $0x58] sm:$0xf]
    %v6295 = vld [vmem:[%s6271 + $0x5c] sm:$0xf]
    %v6296 = vld [vmem:[%s6271 + $0x60] sm:$0xf]
    %v6297 = vld [vmem:[%s6271 + $0x64] sm:$0xf]
    %v6298 = vld [vmem:[%s6271 + $0x68] sm:$0xf]
    %v6299 = vld [vmem:[%s6271 + $0x6c] sm:$0xf]
    %v6300 = vld [vmem:[%s6271 + $0x70] sm:$0xf]
    %v6301 = vld [vmem:[%s6271 + $0x74] sm:$0xf]
    %v6302 = vld [vmem:[%s6271 + $0x78] sm:$0xf]
    %v6303 = vld [vmem:[%s6271 + $0x7c] sm:$0xf]
    %v6336 = vunpack.c.l.b16 %v6272
    %v6337 = vunpack.c.l.b16 %v6273
    %v6338 = vunpack.c.l.b16 %v6274
    %v6339 = vunpack.c.l.b16 %v6275
    %v6340 = vunpack.c.l.b16 %v6276
    %v6341 = vunpack.c.l.b16 %v6277
    %v6342 = vunpack.c.l.b16 %v6278
    %v6343 = vunpack.c.l.b16 %v6279
    %v6344 = vunpack.c.l.b16 %v6280
    %v6345 = vunpack.c.l.b16 %v6281
    %v6346 = vunpack.c.l.b16 %v6282
    %v6347 = vunpack.c.l.b16 %v6283
    %v6348 = vunpack.c.l.b16 %v6284
    %v6349 = vunpack.c.l.b16 %v6285
    %v6350 = vunpack.c.l.b16 %v6286
    %v6351 = vunpack.c.l.b16 %v6287
    %v6352 = vunpack.c.l.b16 %v6288
    %v6353 = vunpack.c.l.b16 %v6289
    %v6354 = vunpack.c.l.b16 %v6290
    %v6355 = vunpack.c.l.b16 %v6291
    %v6356 = vunpack.c.l.b16 %v6292
    %v6357 = vunpack.c.l.b16 %v6293
    %v6358 = vunpack.c.l.b16 %v6294
    %v6359 = vunpack.c.l.b16 %v6295
    %v6360 = vunpack.c.l.b16 %v6296
    %v6361 = vunpack.c.l.b16 %v6297
    %v6362 = vunpack.c.l.b16 %v6298
    %v6363 = vunpack.c.l.b16 %v6299
    %v6364 = vunpack.c.l.b16 %v6300
    %v6365 = vunpack.c.l.b16 %v6301
    %v6366 = vunpack.c.l.b16 %v6302
    %v6367 = vunpack.c.l.b16 %v6303
    %v6368 = vpack.c.b16 %v6337, %v6336
    %v6369 = vpack.c.b16 %v6339, %v6338
    %v6370 = vpack.c.b16 %v6341, %v6340
    %v6371 = vpack.c.b16 %v6343, %v6342
    %v6372 = vpack.c.b16 %v6345, %v6344
    %v6373 = vpack.c.b16 %v6347, %v6346
    %v6374 = vpack.c.b16 %v6349, %v6348
    %v6375 = vpack.c.b16 %v6351, %v6350
    %v6376 = vpack.c.b16 %v6353, %v6352
    %v6377 = vpack.c.b16 %v6355, %v6354
    %v6378 = vpack.c.b16 %v6357, %v6356
    %v6379 = vpack.c.b16 %v6359, %v6358
    %v6380 = vpack.c.b16 %v6361, %v6360
    %v6381 = vpack.c.b16 %v6363, %v6362
    %v6382 = vpack.c.b16 %v6365, %v6364
    %v6383 = vpack.c.b16 %v6367, %v6366
    %6400 = vmatprep.subr.bf16.mxu0 0
    %6401 = vmatpush1.bf16.msra.mxu0 %v6375
    %6402 = vmatprep.subr.bf16.mxu0 0
    %6403 = vmatpush1.bf16.msra.mxu0 %v6374
    %6404 = vmatprep.subr.bf16.mxu0 0
    %6405 = vmatpush1.bf16.msra.mxu0 %v6373
    %6406 = vmatprep.subr.bf16.mxu0 0
    %6407 = vmatpush1.bf16.msra.mxu0 %v6372
    %6408 = vmatprep.subr.bf16.mxu0 0
    %6409 = vmatpush1.bf16.msra.mxu0 %v6371
    %6410 = vmatprep.subr.bf16.mxu0 0
    %6411 = vmatpush1.bf16.msra.mxu0 %v6370
    %6412 = vmatprep.subr.bf16.mxu0 0
    %6413 = vmatpush1.bf16.msra.mxu0 %v6369
    %6414 = vmatprep.subr.bf16.mxu0 0
    %6415 = vmatpush1.bf16.msra.mxu0 %v6368
    %6416 = vmatprep.subr.bf16.mxu0 0
    %6417 = vmatpush2.bf16.msra.mxu0 %v6383
    %6418 = vmatprep.subr.bf16.mxu0 0
    %6419 = vmatpush2.bf16.msra.mxu0 %v6382
    %6420 = vmatprep.subr.bf16.mxu0 0
    %6421 = vmatpush2.bf16.msra.mxu0 %v6381
    %6422 = vmatprep.subr.bf16.mxu0 0
    %6423 = vmatpush2.bf16.msra.mxu0 %v6380
    %6424 = vmatprep.subr.bf16.mxu0 0
    %6425 = vmatpush2.bf16.msra.mxu0 %v6379
    %6426 = vmatprep.subr.bf16.mxu0 0
    %6427 = vmatpush2.bf16.msra.mxu0 %v6378
    %6428 = vmatprep.subr.bf16.mxu0 0
    %6429 = vmatpush2.bf16.msra.mxu0 %v6377
    %6430 = vmatprep.subr.bf16.mxu0 0
    %6431 = vmatpush2.bf16.msra.mxu0 %v6376
    %6432 = vmatprep.mubr.bf16.mxu0 %v5913
    %6433 = vmatmul.mubr.bf16.gmra.mxu0 %v5912
    %v6434 = vpop.f32.mrf.mxu0
    %v6435 = vadd.f32 0.0, %v6434
    %v6436 = vpop.f32.mrf.mxu0
    %v6437 = vpop.f32.mrf.mxu0
    %v6438 = vadd.f32 0.0, %v6437
    %v6439 = vpop.f32.mrf.mxu0
    %6440 = vmatprep.mubr.bf16.mxu0 %v5915
    %6441 = vmatmul.mubr.bf16.gmra.mxu0 %v5914
    %v6442 = vpop.f32.mrf.mxu0
    %v6443 = vadd.f32 0.0, %v6442
    %v6444 = vpop.f32.mrf.mxu0
    %v6445 = vpop.f32.mrf.mxu0
    %v6446 = vadd.f32 0.0, %v6445
    %v6447 = vpop.f32.mrf.mxu0
    %6448 = vdwg.mxu0
    %v6449 = vadd.f32 %v6257, %v6435
    %v6450 = vadd.f32 %v6260, %v6438
    %v6451 = vadd.f32 %v6265, %v6443
    %v6452 = vadd.f32 %v6268, %v6446
    %v6453 = vmul.f32 %v6449, %v843
    %v6454 = vmul.f32 %v6450, %v845
    %v6455 = vmul.f32 %v6451, %v847
    %v6456 = vmul.f32 %v6452, %v849
    %v6457 = vld [vmem:[#allocation63] sm:$0x1]
    %v6459 = vlaneseq
    %v6460 = vshrl.u32 %v6459, 7
    %v6461 = vsub.s32 0, %v6460
    %v6462 = vrot.slane %v6457, %v6461
    %v6464 = vadd.f32 %v6453, %v6462
    %v6465 = vadd.f32 %v6454, %v6462
    %v6466 = vadd.f32 %v6455, %v6462
    %v6467 = vadd.f32 %v6456, %v6462
    %vm6468 = vcmp.ge.f32.partialorder %v6464, 0.0
    %vm6469 = vcmp.ge.f32.partialorder %v6465, 0.0
    %vm6470 = vcmp.ge.f32.partialorder %v6466, 0.0
    %vm6471 = vcmp.ge.f32.partialorder %v6467, 0.0
    %v6472 = vmul.f32 %v6464, 0.01
    %v6473 = vmul.f32 %v6465, 0.01
    %v6474 = vmul.f32 %v6466, 0.01
    %v6475 = vmul.f32 %v6467, 0.01
    %v6476 = vsel %vm6468, %v6464, %v6472
    %v6477 = vsel %vm6469, %v6465, %v6473
    %v6478 = vsel %vm6470, %v6466, %v6474
    %v6479 = vsel %vm6471, %v6467, %v6475
    %v6480 = vadd.f32 %v6476, %v6477
    %v6481 = vadd.f32 %v6480, %v6478
    %v6482 = vadd.f32 %v6481, %v6479
    %v6483 = vrot.slane %v6482, 4
    %v6484 = vadd.f32 %v6482, %v6483
    %v6485 = vrot.slane %v6484, 2
    %v6486 = vadd.f32 %v6484, %v6485
    %v6487 = vrot.slane %v6486, 1
    %v6488 = vadd.f32 %v6486, %v6487
    %v6489 = vmul.f32 %v6476, %v6476
    %v6490 = vmul.f32 %v6477, %v6477
    %v6491 = vmul.f32 %v6478, %v6478
    %v6492 = vmul.f32 %v6479, %v6479
    %v6493 = vadd.f32 %v6489, %v6490
    %v6494 = vadd.f32 %v6493, %v6491
    %v6495 = vadd.f32 %v6494, %v6492
    %v6496 = vrot.slane %v6495, 4
    %v6497 = vadd.f32 %v6495, %v6496
    %v6498 = vrot.slane %v6497, 2
    %v6499 = vadd.f32 %v6497, %v6498
    %v6500 = vrot.slane %v6499, 1
    %v6501 = vadd.f32 %v6499, %v6500
    %6502 = vrot.lane.b32.xlu0 %v6488, 8
    %v6503 = vpop.permute.xlu0 %6502
    %v6504 = vadd.f32 %v6488, %v6503
    %6505 = vrot.lane.b32.xlu0 %v6501, 8
    %v6506 = vpop.permute.xlu0 %6505
    %v6507 = vadd.f32 %v6501, %v6506
    %6508 = vrot.lane.b32.xlu0 %v6504, 16
    %v6509 = vpop.permute.xlu0 %6508
    %v6510 = vadd.f32 %v6504, %v6509
    %6511 = vrot.lane.b32.xlu0 %v6507, 16
    %v6512 = vpop.permute.xlu0 %6511
    %v6513 = vadd.f32 %v6507, %v6512
    %6514 = vrot.lane.b32.xlu0 %v6510, 32
    %v6515 = vpop.permute.xlu0 %6514
    %v6516 = vadd.f32 %v6510, %v6515
    %6517 = vrot.lane.b32.xlu0 %v6513, 32
    %v6518 = vpop.permute.xlu0 %6517
    %v6519 = vadd.f32 %v6513, %v6518
    %6520 = vrot.lane.b32.xlu0 %v6516, 64
    %v6521 = vpop.permute.xlu0 %6520
    %v6522 = vadd.f32 %v6516, %v6521
    %6523 = vrot.lane.b32.xlu0 %v6519, 64
    %v6524 = vpop.permute.xlu0 %6523
    %v6525 = vadd.f32 %v6519, %v6524
    %v6526 = vmul.f32 %v6522, 0.001953125
    %v6527 = vmul.f32 %v6525, 0.001953125
    %v6528 = vmul.f32 %v6526, %v6526
    %v6529 = vsub.f32 %v6527, %v6528
    %v6530 = vlaneseq
    %v6531 = vshrl.u32 %v6530, 7
    %v6532 = vsub.s32 0, %v6531
    %v6533 = vrot.slane %v6526, %v6532
    %v6534 = vsub.f32 %v6476, %v6533
    %v6535 = vsub.f32 %v6477, %v6533
    %v6536 = vsub.f32 %v6478, %v6533
    %v6537 = vsub.f32 %v6479, %v6533
    %v6538 = vadd.f32 %v6529, 1e-05
    %v6539 = vrsqrt.pop %v6538
    %v6540 = vlaneseq
    %v6541 = vshrl.u32 %v6540, 7
    %v6542 = vsub.s32 0, %v6541
    %v6543 = vrot.slane %v6539, %v6542
    %v6544 = vmul.f32 %v6534, %v6543
    %v6545 = vmul.f32 %v6535, %v6543
    %v6546 = vmul.f32 %v6536, %v6543
    %v6547 = vmul.f32 %v6537, %v6543
    %v6548 = vld [vmem:[#allocation64] sm:$0x1]
    %v6550 = vlaneseq
    %v6551 = vshrl.u32 %v6550, 7
    %v6552 = vsub.s32 0, %v6551
    %v6553 = vrot.slane %v6548, %v6552
    %v6555 = vmul.f32 %v6544, %v6553
    %v6556 = vmul.f32 %v6545, %v6553
    %v6557 = vmul.f32 %v6546, %v6553
    %v6558 = vmul.f32 %v6547, %v6553
    %v6559 = vld [vmem:[#allocation66] sm:$0x1]
    %v6561 = vlaneseq
    %v6562 = vshrl.u32 %v6561, 7
    %v6563 = vsub.s32 0, %v6562
    %v6564 = vrot.slane %v6559, %v6563
    %v6566 = vadd.f32 %v6555, %v6564
    %v6567 = vadd.f32 %v6556, %v6564
    %v6568 = vadd.f32 %v6557, %v6564
    %v6569 = vadd.f32 %v6558, %v6564
    %v6570 = vpack.c.bf16 %v6567, %v6566
    %v6571 = vpack.c.bf16 %v6569, %v6568
    %6572 = vmatprep.subr.bf16.mxu0 0
    %6573 = vmatpush1.bf16.msra.mxu0 0
    %6574 = vmatprep.subr.bf16.mxu0 0
    %6575 = vmatpush1.bf16.msra.mxu0 0
    %6576 = vmatprep.subr.bf16.mxu0 0
    %6577 = vmatpush1.bf16.msra.mxu0 0
    %6578 = vmatprep.subr.bf16.mxu0 0
    %6579 = vmatpush1.bf16.msra.mxu0 0
    %6580 = vmatprep.subr.bf16.mxu0 0
    %6581 = vmatpush1.bf16.msra.mxu0 0
    %6582 = vmatprep.subr.bf16.mxu0 0
    %6583 = vmatpush1.bf16.msra.mxu0 0
    %6584 = vmatprep.subr.bf16.mxu0 0
    %6585 = vmatpush1.bf16.msra.mxu0 %v6571
    %6586 = vmatprep.subr.bf16.mxu0 0
    %6587 = vmatpush1.bf16.msra.mxu0 %v6570
    %6588 = vmatprep.subr.bf16.mxu0 0
    %6589 = vmatpush2.bf16.msra.mxu0 0
    %6590 = vmatprep.subr.bf16.mxu0 0
    %6591 = vmatpush2.bf16.msra.mxu0 0
    %6592 = vmatprep.subr.bf16.mxu0 0
    %6593 = vmatpush2.bf16.msra.mxu0 0
    %6594 = vmatprep.subr.bf16.mxu0 0
    %6595 = vmatpush2.bf16.msra.mxu0 0
    %6596 = vmatprep.subr.bf16.mxu0 0
    %6597 = vmatpush2.bf16.msra.mxu0 0
    %6598 = vmatprep.subr.bf16.mxu0 0
    %6599 = vmatpush2.bf16.msra.mxu0 0
    %6600 = vmatprep.subr.bf16.mxu0 0
    %6601 = vmatpush2.bf16.msra.mxu0 0
    %6602 = vmatprep.subr.bf16.mxu0 0
    %6603 = vmatpush2.bf16.msra.mxu0 0
    %6604 = vmatprep.mubr.bf16.mxu0 0
    %6605 = vmatmul.mubr.bf16.gmra.mxu0 %v866
    %v6606 = vpop.f32.mrf.mxu0
    %v6607 = vadd.f32 0.0, %v6606
    %v6608 = vpop.f32.mrf.mxu0
    %v6609 = vpop.f32.mrf.mxu0
    %v6610 = vadd.f32 0.0, %v6609
    %v6611 = vpop.f32.mrf.mxu0
    %6612 = vmatprep.mubr.bf16.mxu0 0
    %6613 = vmatmul.mubr.bf16.gmra.mxu0 %v869
    %v6614 = vpop.f32.mrf.mxu0
    %v6615 = vadd.f32 0.0, %v6614
    %v6616 = vpop.f32.mrf.mxu0
    %v6617 = vpop.f32.mrf.mxu0
    %v6618 = vadd.f32 0.0, %v6617
    %v6619 = vpop.f32.mrf.mxu0
    %6620 = vdwg.mxu0
    %v6621 = vpack.c.bf16 %v6610, %v6607
    %v6622 = vpack.c.bf16 %v6618, %v6615
    %6623 = vmatprep.subr.bf16.mxu0 0
    %6624 = vmatpush1.bf16.msra.mxu0 0
    %6625 = vmatprep.subr.bf16.mxu0 0
    %6626 = vmatpush1.bf16.msra.mxu0 0
    %6627 = vmatprep.subr.bf16.mxu0 0
    %6628 = vmatpush1.bf16.msra.mxu0 0
    %6629 = vmatprep.subr.bf16.mxu0 0
    %6630 = vmatpush1.bf16.msra.mxu0 0
    %6631 = vmatprep.subr.bf16.mxu0 0
    %6632 = vmatpush1.bf16.msra.mxu0 0
    %6633 = vmatprep.subr.bf16.mxu0 0
    %6634 = vmatpush1.bf16.msra.mxu0 0
    %6635 = vmatprep.subr.bf16.mxu0 0
    %6636 = vmatpush1.bf16.msra.mxu0 %v6571
    %6637 = vmatprep.subr.bf16.mxu0 0
    %6638 = vmatpush1.bf16.msra.mxu0 %v6570
    %6639 = vmatprep.subr.bf16.mxu0 0
    %6640 = vmatpush2.bf16.msra.mxu0 0
    %6641 = vmatprep.subr.bf16.mxu0 0
    %6642 = vmatpush2.bf16.msra.mxu0 0
    %6643 = vmatprep.subr.bf16.mxu0 0
    %6644 = vmatpush2.bf16.msra.mxu0 0
    %6645 = vmatprep.subr.bf16.mxu0 0
    %6646 = vmatpush2.bf16.msra.mxu0 0
    %6647 = vmatprep.subr.bf16.mxu0 0
    %6648 = vmatpush2.bf16.msra.mxu0 0
    %6649 = vmatprep.subr.bf16.mxu0 0
    %6650 = vmatpush2.bf16.msra.mxu0 0
    %6651 = vmatprep.subr.bf16.mxu0 0
    %6652 = vmatpush2.bf16.msra.mxu0 0
    %6653 = vmatprep.subr.bf16.mxu0 0
    %6654 = vmatpush2.bf16.msra.mxu0 0
    %6655 = vmatprep.mubr.bf16.mxu0 0
    %6656 = vmatmul.mubr.bf16.gmra.mxu0 %v937
    %v6657 = vpop.f32.mrf.mxu0
    %v6658 = vadd.f32 0.0, %v6657
    %v6659 = vpop.f32.mrf.mxu0
    %v6660 = vpop.f32.mrf.mxu0
    %v6661 = vadd.f32 0.0, %v6660
    %v6662 = vpop.f32.mrf.mxu0
    %6663 = vmatprep.mubr.bf16.mxu0 0
    %6664 = vmatmul.mubr.bf16.gmra.mxu0 %v940
    %v6665 = vpop.f32.mrf.mxu0
    %v6666 = vadd.f32 0.0, %v6665
    %v6667 = vpop.f32.mrf.mxu0
    %v6668 = vpop.f32.mrf.mxu0
    %v6669 = vadd.f32 0.0, %v6668
    %v6670 = vpop.f32.mrf.mxu0
    %6671 = vdwg.mxu0
    %v6672 = vpack.c.bf16 %v6661, %v6658
    %v6673 = vpack.c.bf16 %v6669, %v6666
    %v6674 = vld [vmem:[%s103] sm:$0xf]
    %v6675 = vld [vmem:[%s103 + $0x4] sm:$0xf]
    %v6676 = vld [vmem:[%s103 + $0x8] sm:$0xf]
    %v6677 = vld [vmem:[%s103 + $0xc] sm:$0xf]
    %v6678 = vld [vmem:[%s103 + $0x10] sm:$0xf]
    %v6679 = vld [vmem:[%s103 + $0x14] sm:$0xf]
    %v6680 = vld [vmem:[%s103 + $0x18] sm:$0xf]
    %v6681 = vld [vmem:[%s103 + $0x1c] sm:$0xf]
    %v6682 = vld [vmem:[%s103 + $0x20] sm:$0xf]
    %v6683 = vld [vmem:[%s103 + $0x24] sm:$0xf]
    %v6684 = vld [vmem:[%s103 + $0x28] sm:$0xf]
    %v6685 = vld [vmem:[%s103 + $0x2c] sm:$0xf]
    %v6686 = vld [vmem:[%s103 + $0x30] sm:$0xf]
    %v6687 = vld [vmem:[%s103 + $0x34] sm:$0xf]
    %v6688 = vld [vmem:[%s103 + $0x38] sm:$0xf]
    %v6689 = vld [vmem:[%s103 + $0x3c] sm:$0xf]
    %s6690 = scalar_lea.vmem %s103, 64
    %v6691 = vld [vmem:[%s6690] sm:$0xf]
    %v6692 = vld [vmem:[%s6690 + $0x4] sm:$0xf]
    %v6693 = vld [vmem:[%s6690 + $0x8] sm:$0xf]
    %v6694 = vld [vmem:[%s6690 + $0xc] sm:$0xf]
    %v6695 = vld [vmem:[%s6690 + $0x10] sm:$0xf]
    %v6696 = vld [vmem:[%s6690 + $0x14] sm:$0xf]
    %v6697 = vld [vmem:[%s6690 + $0x18] sm:$0xf]
    %v6698 = vld [vmem:[%s6690 + $0x1c] sm:$0xf]
    %v6699 = vld [vmem:[%s6690 + $0x20] sm:$0xf]
    %v6700 = vld [vmem:[%s6690 + $0x24] sm:$0xf]
    %v6701 = vld [vmem:[%s6690 + $0x28] sm:$0xf]
    %v6702 = vld [vmem:[%s6690 + $0x2c] sm:$0xf]
    %v6703 = vld [vmem:[%s6690 + $0x30] sm:$0xf]
    %v6704 = vld [vmem:[%s6690 + $0x34] sm:$0xf]
    %v6705 = vld [vmem:[%s6690 + $0x38] sm:$0xf]
    %v6706 = vld [vmem:[%s6690 + $0x3c] sm:$0xf]
    %v6723 = vunpack.c.l.b16 %v6691
    %v6724 = vunpack.c.l.b16 %v6692
    %v6725 = vunpack.c.l.b16 %v6693
    %v6726 = vunpack.c.l.b16 %v6694
    %v6727 = vunpack.c.l.b16 %v6695
    %v6728 = vunpack.c.l.b16 %v6696
    %v6729 = vunpack.c.l.b16 %v6697
    %v6730 = vunpack.c.l.b16 %v6698
    %v6731 = vunpack.c.l.b16 %v6699
    %v6732 = vunpack.c.l.b16 %v6700
    %v6733 = vunpack.c.l.b16 %v6701
    %v6734 = vunpack.c.l.b16 %v6702
    %v6735 = vunpack.c.l.b16 %v6703
    %v6736 = vunpack.c.l.b16 %v6704
    %v6737 = vunpack.c.l.b16 %v6705
    %v6738 = vunpack.c.l.b16 %v6706
    %v6739 = vpack.c.b16 %v6724, %v6723
    %v6740 = vpack.c.b16 %v6726, %v6725
    %v6741 = vpack.c.b16 %v6728, %v6727
    %v6742 = vpack.c.b16 %v6730, %v6729
    %v6743 = vpack.c.b16 %v6732, %v6731
    %v6744 = vpack.c.b16 %v6734, %v6733
    %v6745 = vpack.c.b16 %v6736, %v6735
    %v6746 = vpack.c.b16 %v6738, %v6737
    %6755 = vmatprep.subr.bf16.mxu0 0
    %6756 = vmatpush1.bf16.msra.mxu0 %v6746
    %6757 = vmatprep.subr.bf16.mxu0 0
    %6758 = vmatpush1.bf16.msra.mxu0 %v6745
    %6759 = vmatprep.subr.bf16.mxu0 0
    %6760 = vmatpush1.bf16.msra.mxu0 %v6744
    %6761 = vmatprep.subr.bf16.mxu0 0
    %6762 = vmatpush1.bf16.msra.mxu0 %v6743
    %6763 = vmatprep.subr.bf16.mxu0 0
    %6764 = vmatpush1.bf16.msra.mxu0 %v6742
    %6765 = vmatprep.subr.bf16.mxu0 0
    %6766 = vmatpush1.bf16.msra.mxu0 %v6741
    %6767 = vmatprep.subr.bf16.mxu0 0
    %6768 = vmatpush1.bf16.msra.mxu0 %v6740
    %6769 = vmatprep.subr.bf16.mxu0 0
    %6770 = vmatpush1.bf16.msra.mxu0 %v6739
    %6771 = vmatprep.subr.bf16.mxu0 0
    %6772 = vmatpush2.bf16.msra.mxu0 0
    %6773 = vmatprep.subr.bf16.mxu0 0
    %6774 = vmatpush2.bf16.msra.mxu0 0
    %6775 = vmatprep.subr.bf16.mxu0 0
    %6776 = vmatpush2.bf16.msra.mxu0 0
    %6777 = vmatprep.subr.bf16.mxu0 0
    %6778 = vmatpush2.bf16.msra.mxu0 0
    %6779 = vmatprep.subr.bf16.mxu0 0
    %6780 = vmatpush2.bf16.msra.mxu0 0
    %6781 = vmatprep.subr.bf16.mxu0 0
    %6782 = vmatpush2.bf16.msra.mxu0 0
    %6783 = vmatprep.subr.bf16.mxu0 0
    %6784 = vmatpush2.bf16.msra.mxu0 0
    %6785 = vmatprep.subr.bf16.mxu0 0
    %6786 = vmatpush2.bf16.msra.mxu0 0
    %6787 = vmatprep.mubr.bf16.mxu0 0
    %6788 = vmatmul.mubr.bf16.gmra.mxu0 %v6570
    %v6789 = vpop.f32.mrf.mxu0
    %v6790 = vadd.f32 0.0, %v6789
    %v6791 = vpop.f32.mrf.mxu0
    %v6792 = vpop.f32.mrf.mxu0
    %v6793 = vadd.f32 0.0, %v6792
    %v6794 = vpop.f32.mrf.mxu0
    %6795 = vmatprep.mubr.bf16.mxu0 0
    %6796 = vmatmul.mubr.bf16.gmra.mxu0 %v6571
    %v6797 = vpop.f32.mrf.mxu0
    %v6798 = vadd.f32 0.0, %v6797
    %v6799 = vpop.f32.mrf.mxu0
    %v6800 = vpop.f32.mrf.mxu0
    %v6801 = vadd.f32 0.0, %v6800
    %v6802 = vpop.f32.mrf.mxu0
    %6803 = vdwg.mxu0
    %v6820 = vunpack.c.l.b16 %v6674
    %v6821 = vunpack.c.l.b16 %v6675
    %v6822 = vunpack.c.l.b16 %v6676
    %v6823 = vunpack.c.l.b16 %v6677
    %v6824 = vunpack.c.l.b16 %v6678
    %v6825 = vunpack.c.l.b16 %v6679
    %v6826 = vunpack.c.l.b16 %v6680
    %v6827 = vunpack.c.l.b16 %v6681
    %v6828 = vunpack.c.l.b16 %v6682
    %v6829 = vunpack.c.l.b16 %v6683
    %v6830 = vunpack.c.l.b16 %v6684
    %v6831 = vunpack.c.l.b16 %v6685
    %v6832 = vunpack.c.l.b16 %v6686
    %v6833 = vunpack.c.l.b16 %v6687
    %v6834 = vunpack.c.l.b16 %v6688
    %v6835 = vunpack.c.l.b16 %v6689
    %v6836 = vpack.c.b16 %v6821, %v6820
    %v6837 = vpack.c.b16 %v6823, %v6822
    %v6838 = vpack.c.b16 %v6825, %v6824
    %v6839 = vpack.c.b16 %v6827, %v6826
    %v6840 = vpack.c.b16 %v6829, %v6828
    %v6841 = vpack.c.b16 %v6831, %v6830
    %v6842 = vpack.c.b16 %v6833, %v6832
    %v6843 = vpack.c.b16 %v6835, %v6834
    %6852 = vmatprep.subr.bf16.mxu0 0
    %6853 = vmatpush1.bf16.msra.mxu0 %v6843
    %6854 = vmatprep.subr.bf16.mxu0 0
    %6855 = vmatpush1.bf16.msra.mxu0 %v6842
    %6856 = vmatprep.subr.bf16.mxu0 0
    %6857 = vmatpush1.bf16.msra.mxu0 %v6841
    %6858 = vmatprep.subr.bf16.mxu0 0
    %6859 = vmatpush1.bf16.msra.mxu0 %v6840
    %6860 = vmatprep.subr.bf16.mxu0 0
    %6861 = vmatpush1.bf16.msra.mxu0 %v6839
    %6862 = vmatprep.subr.bf16.mxu0 0
    %6863 = vmatpush1.bf16.msra.mxu0 %v6838
    %6864 = vmatprep.subr.bf16.mxu0 0
    %6865 = vmatpush1.bf16.msra.mxu0 %v6837
    %6866 = vmatprep.subr.bf16.mxu0 0
    %6867 = vmatpush1.bf16.msra.mxu0 %v6836
    %6868 = vmatprep.subr.bf16.mxu0 0
    %6869 = vmatpush2.bf16.msra.mxu0 0
    %6870 = vmatprep.subr.bf16.mxu0 0
    %6871 = vmatpush2.bf16.msra.mxu0 0
    %6872 = vmatprep.subr.bf16.mxu0 0
    %6873 = vmatpush2.bf16.msra.mxu0 0
    %6874 = vmatprep.subr.bf16.mxu0 0
    %6875 = vmatpush2.bf16.msra.mxu0 0
    %6876 = vmatprep.subr.bf16.mxu0 0
    %6877 = vmatpush2.bf16.msra.mxu0 0
    %6878 = vmatprep.subr.bf16.mxu0 0
    %6879 = vmatpush2.bf16.msra.mxu0 0
    %6880 = vmatprep.subr.bf16.mxu0 0
    %6881 = vmatpush2.bf16.msra.mxu0 0
    %6882 = vmatprep.subr.bf16.mxu0 0
    %6883 = vmatpush2.bf16.msra.mxu0 0
    %6884 = vmatprep.mubr.bf16.mxu0 0
    %6885 = vmatmul.mubr.bf16.gmra.mxu0 %v6621
    %v6886 = vpop.f32.mrf.mxu0
    %v6887 = vadd.f32 %v6790, %v6886
    %v6888 = vpop.f32.mrf.mxu0
    %v6889 = vpop.f32.mrf.mxu0
    %v6890 = vadd.f32 %v6793, %v6889
    %v6891 = vpop.f32.mrf.mxu0
    %6892 = vmatprep.mubr.bf16.mxu0 0
    %6893 = vmatmul.mubr.bf16.gmra.mxu0 %v6622
    %v6894 = vpop.f32.mrf.mxu0
    %v6895 = vadd.f32 %v6798, %v6894
    %v6896 = vpop.f32.mrf.mxu0
    %v6897 = vpop.f32.mrf.mxu0
    %v6898 = vadd.f32 %v6801, %v6897
    %v6899 = vpop.f32.mrf.mxu0
    %6900 = vdwg.mxu0
    %s6901 = scalar_lea.vmem %s103, 128
    %v6902 = vld [vmem:[%s6901] sm:$0xf]
    %v6903 = vld [vmem:[%s6901 + $0x4] sm:$0xf]
    %v6904 = vld [vmem:[%s6901 + $0x8] sm:$0xf]
    %v6905 = vld [vmem:[%s6901 + $0xc] sm:$0xf]
    %v6906 = vld [vmem:[%s6901 + $0x10] sm:$0xf]
    %v6907 = vld [vmem:[%s6901 + $0x14] sm:$0xf]
    %v6908 = vld [vmem:[%s6901 + $0x18] sm:$0xf]
    %v6909 = vld [vmem:[%s6901 + $0x1c] sm:$0xf]
    %v6910 = vld [vmem:[%s6901 + $0x20] sm:$0xf]
    %v6911 = vld [vmem:[%s6901 + $0x24] sm:$0xf]
    %v6912 = vld [vmem:[%s6901 + $0x28] sm:$0xf]
    %v6913 = vld [vmem:[%s6901 + $0x2c] sm:$0xf]
    %v6914 = vld [vmem:[%s6901 + $0x30] sm:$0xf]
    %v6915 = vld [vmem:[%s6901 + $0x34] sm:$0xf]
    %v6916 = vld [vmem:[%s6901 + $0x38] sm:$0xf]
    %v6917 = vld [vmem:[%s6901 + $0x3c] sm:$0xf]
    %v6934 = vunpack.c.l.b16 %v6902
    %v6935 = vunpack.c.l.b16 %v6903
    %v6936 = vunpack.c.l.b16 %v6904
    %v6937 = vunpack.c.l.b16 %v6905
    %v6938 = vunpack.c.l.b16 %v6906
    %v6939 = vunpack.c.l.b16 %v6907
    %v6940 = vunpack.c.l.b16 %v6908
    %v6941 = vunpack.c.l.b16 %v6909
    %v6942 = vunpack.c.l.b16 %v6910
    %v6943 = vunpack.c.l.b16 %v6911
    %v6944 = vunpack.c.l.b16 %v6912
    %v6945 = vunpack.c.l.b16 %v6913
    %v6946 = vunpack.c.l.b16 %v6914
    %v6947 = vunpack.c.l.b16 %v6915
    %v6948 = vunpack.c.l.b16 %v6916
    %v6949 = vunpack.c.l.b16 %v6917
    %v6950 = vpack.c.b16 %v6935, %v6934
    %v6951 = vpack.c.b16 %v6937, %v6936
    %v6952 = vpack.c.b16 %v6939, %v6938
    %v6953 = vpack.c.b16 %v6941, %v6940
    %v6954 = vpack.c.b16 %v6943, %v6942
    %v6955 = vpack.c.b16 %v6945, %v6944
    %v6956 = vpack.c.b16 %v6947, %v6946
    %v6957 = vpack.c.b16 %v6949, %v6948
    %6966 = vmatprep.subr.bf16.mxu0 0
    %6967 = vmatpush1.bf16.msra.mxu0 %v6957
    %6968 = vmatprep.subr.bf16.mxu0 0
    %6969 = vmatpush1.bf16.msra.mxu0 %v6956
    %6970 = vmatprep.subr.bf16.mxu0 0
    %6971 = vmatpush1.bf16.msra.mxu0 %v6955
    %6972 = vmatprep.subr.bf16.mxu0 0
    %6973 = vmatpush1.bf16.msra.mxu0 %v6954
    %6974 = vmatprep.subr.bf16.mxu0 0
    %6975 = vmatpush1.bf16.msra.mxu0 %v6953
    %6976 = vmatprep.subr.bf16.mxu0 0
    %6977 = vmatpush1.bf16.msra.mxu0 %v6952
    %6978 = vmatprep.subr.bf16.mxu0 0
    %6979 = vmatpush1.bf16.msra.mxu0 %v6951
    %6980 = vmatprep.subr.bf16.mxu0 0
    %6981 = vmatpush1.bf16.msra.mxu0 %v6950
    %6982 = vmatprep.subr.bf16.mxu0 0
    %6983 = vmatpush2.bf16.msra.mxu0 0
    %6984 = vmatprep.subr.bf16.mxu0 0
    %6985 = vmatpush2.bf16.msra.mxu0 0
    %6986 = vmatprep.subr.bf16.mxu0 0
    %6987 = vmatpush2.bf16.msra.mxu0 0
    %6988 = vmatprep.subr.bf16.mxu0 0
    %6989 = vmatpush2.bf16.msra.mxu0 0
    %6990 = vmatprep.subr.bf16.mxu0 0
    %6991 = vmatpush2.bf16.msra.mxu0 0
    %6992 = vmatprep.subr.bf16.mxu0 0
    %6993 = vmatpush2.bf16.msra.mxu0 0
    %6994 = vmatprep.subr.bf16.mxu0 0
    %6995 = vmatpush2.bf16.msra.mxu0 0
    %6996 = vmatprep.subr.bf16.mxu0 0
    %6997 = vmatpush2.bf16.msra.mxu0 0
    %6998 = vmatprep.mubr.bf16.mxu0 0
    %6999 = vmatmul.mubr.bf16.gmra.mxu0 %v6672
    %v7000 = vpop.f32.mrf.mxu0
    %v7001 = vadd.f32 0.0, %v7000
    %v7002 = vpop.f32.mrf.mxu0
    %v7003 = vpop.f32.mrf.mxu0
    %v7004 = vadd.f32 0.0, %v7003
    %v7005 = vpop.f32.mrf.mxu0
    %7006 = vmatprep.mubr.bf16.mxu0 0
    %7007 = vmatmul.mubr.bf16.gmra.mxu0 %v6673
    %v7008 = vpop.f32.mrf.mxu0
    %v7009 = vadd.f32 0.0, %v7008
    %v7010 = vpop.f32.mrf.mxu0
    %v7011 = vpop.f32.mrf.mxu0
    %v7012 = vadd.f32 0.0, %v7011
    %v7013 = vpop.f32.mrf.mxu0
    %7014 = vdwg.mxu0
    %v7015 = vadd.f32 %v6887, %v7001
    %v7016 = vadd.f32 %v6890, %v7004
    %v7017 = vadd.f32 %v6895, %v7009
    %v7018 = vadd.f32 %v6898, %v7012
    %v7019 = vmul.f32 %v7015, %v843
    %v7020 = vmul.f32 %v7016, %v845
    %v7021 = vmul.f32 %v7017, %v847
    %v7022 = vmul.f32 %v7018, %v849
    %v7023 = vld [vmem:[%s105] sm:$0x1]
    %v7025 = vlaneseq
    %v7026 = vshrl.u32 %v7025, 7
    %v7027 = vsub.s32 0, %v7026
    %v7028 = vrot.slane %v7023, %v7027
    %v7030 = vadd.f32 %v7019, %v7028
    %v7031 = vadd.f32 %v7020, %v7028
    %v7032 = vadd.f32 %v7021, %v7028
    %v7033 = vadd.f32 %v7022, %v7028
    %vm7034 = vcmp.ge.f32.partialorder %v7030, 0.0
    %vm7035 = vcmp.ge.f32.partialorder %v7031, 0.0
    %vm7036 = vcmp.ge.f32.partialorder %v7032, 0.0
    %vm7037 = vcmp.ge.f32.partialorder %v7033, 0.0
    %v7038 = vmul.f32 %v7030, 0.01
    %v7039 = vmul.f32 %v7031, 0.01
    %v7040 = vmul.f32 %v7032, 0.01
    %v7041 = vmul.f32 %v7033, 0.01
    %v7042 = vsel %vm7034, %v7030, %v7038
    %v7043 = vsel %vm7035, %v7031, %v7039
    %v7044 = vsel %vm7036, %v7032, %v7040
    %v7045 = vsel %vm7037, %v7033, %v7041
    %v7046 = vadd.f32 %v7042, %v7043
    %v7047 = vadd.f32 %v7046, %v7044
    %v7048 = vadd.f32 %v7047, %v7045
    %v7049 = vrot.slane %v7048, 4
    %v7050 = vadd.f32 %v7048, %v7049
    %v7051 = vrot.slane %v7050, 2
    %v7052 = vadd.f32 %v7050, %v7051
    %v7053 = vrot.slane %v7052, 1
    %v7054 = vadd.f32 %v7052, %v7053
    %v7055 = vmul.f32 %v7042, %v7042
    %v7056 = vmul.f32 %v7043, %v7043
    %v7057 = vmul.f32 %v7044, %v7044
    %v7058 = vmul.f32 %v7045, %v7045
    %v7059 = vadd.f32 %v7055, %v7056
    %v7060 = vadd.f32 %v7059, %v7057
    %v7061 = vadd.f32 %v7060, %v7058
    %v7062 = vrot.slane %v7061, 4
    %v7063 = vadd.f32 %v7061, %v7062
    %v7064 = vrot.slane %v7063, 2
    %v7065 = vadd.f32 %v7063, %v7064
    %v7066 = vrot.slane %v7065, 1
    %v7067 = vadd.f32 %v7065, %v7066
    %7068 = vrot.lane.b32.xlu0 %v7054, 8
    %v7069 = vpop.permute.xlu0 %7068
    %v7070 = vadd.f32 %v7054, %v7069
    %7071 = vrot.lane.b32.xlu0 %v7067, 8
    %v7072 = vpop.permute.xlu0 %7071
    %v7073 = vadd.f32 %v7067, %v7072
    %7074 = vrot.lane.b32.xlu0 %v7070, 16
    %v7075 = vpop.permute.xlu0 %7074
    %v7076 = vadd.f32 %v7070, %v7075
    %7077 = vrot.lane.b32.xlu0 %v7073, 16
    %v7078 = vpop.permute.xlu0 %7077
    %v7079 = vadd.f32 %v7073, %v7078
    %7080 = vrot.lane.b32.xlu0 %v7076, 32
    %v7081 = vpop.permute.xlu0 %7080
    %v7082 = vadd.f32 %v7076, %v7081
    %7083 = vrot.lane.b32.xlu0 %v7079, 32
    %v7084 = vpop.permute.xlu0 %7083
    %v7085 = vadd.f32 %v7079, %v7084
    %7086 = vrot.lane.b32.xlu0 %v7082, 64
    %v7087 = vpop.permute.xlu0 %7086
    %v7088 = vadd.f32 %v7082, %v7087
    %7089 = vrot.lane.b32.xlu0 %v7085, 64
    %v7090 = vpop.permute.xlu0 %7089
    %v7091 = vadd.f32 %v7085, %v7090
    %v7092 = vmul.f32 %v7088, 0.001953125
    %v7093 = vmul.f32 %v7091, 0.001953125
    %v7094 = vmul.f32 %v7092, %v7092
    %v7095 = vsub.f32 %v7093, %v7094
    %v7096 = vlaneseq
    %v7097 = vshrl.u32 %v7096, 7
    %v7098 = vsub.s32 0, %v7097
    %v7099 = vrot.slane %v7092, %v7098
    %v7100 = vsub.f32 %v7042, %v7099
    %v7101 = vsub.f32 %v7043, %v7099
    %v7102 = vsub.f32 %v7044, %v7099
    %v7103 = vsub.f32 %v7045, %v7099
    %v7104 = vadd.f32 %v7095, 1e-05
    %v7105 = vrsqrt.pop %v7104
    %v7106 = vlaneseq
    %v7107 = vshrl.u32 %v7106, 7
    %v7108 = vsub.s32 0, %v7107
    %v7109 = vrot.slane %v7105, %v7108
    %v7110 = vmul.f32 %v7100, %v7109
    %v7111 = vmul.f32 %v7101, %v7109
    %v7112 = vmul.f32 %v7102, %v7109
    %v7113 = vmul.f32 %v7103, %v7109
    %v7114 = vld [vmem:[%s107] sm:$0x1]
    %v7116 = vlaneseq
    %v7117 = vshrl.u32 %v7116, 7
    %v7118 = vsub.s32 0, %v7117
    %v7119 = vrot.slane %v7114, %v7118
    %v7121 = vmul.f32 %v7110, %v7119
    %v7122 = vmul.f32 %v7111, %v7119
    %v7123 = vmul.f32 %v7112, %v7119
    %v7124 = vmul.f32 %v7113, %v7119
    %v7125 = vld [vmem:[#allocation67] sm:$0x1]
    %v7127 = vlaneseq
    %v7128 = vshrl.u32 %v7127, 7
    %v7129 = vsub.s32 0, %v7128
    %v7130 = vrot.slane %v7125, %v7129
    %v7132 = vadd.f32 %v7121, %v7130
    %v7133 = vadd.f32 %v7122, %v7130
    %v7134 = vadd.f32 %v7123, %v7130
    %v7135 = vadd.f32 %v7124, %v7130
    %v7136 = vpack.c.bf16 %v7133, %v7132
    %v7137 = vpack.c.bf16 %v7135, %v7134
    %v7138 = vld [vmem:[%s111] sm:$0xf]
    %v7139 = vld [vmem:[%s111 + $0x4] sm:$0xf]
    %v7140 = vld [vmem:[%s111 + $0x8] sm:$0xf]
    %v7141 = vld [vmem:[%s111 + $0xc] sm:$0xf]
    %v7142 = vld [vmem:[%s111 + $0x10] sm:$0xf]
    %v7143 = vld [vmem:[%s111 + $0x14] sm:$0xf]
    %v7144 = vld [vmem:[%s111 + $0x18] sm:$0xf]
    %v7145 = vld [vmem:[%s111 + $0x1c] sm:$0xf]
    %v7146 = vld [vmem:[%s111 + $0x20] sm:$0xf]
    %v7147 = vld [vmem:[%s111 + $0x24] sm:$0xf]
    %v7148 = vld [vmem:[%s111 + $0x28] sm:$0xf]
    %v7149 = vld [vmem:[%s111 + $0x2c] sm:$0xf]
    %v7150 = vld [vmem:[%s111 + $0x30] sm:$0xf]
    %v7151 = vld [vmem:[%s111 + $0x34] sm:$0xf]
    %v7152 = vld [vmem:[%s111 + $0x38] sm:$0xf]
    %v7153 = vld [vmem:[%s111 + $0x3c] sm:$0xf]
    %v7154 = vld [vmem:[%s113] sm:$0x1]
    %v7156 = vlaneseq
    %v7157 = vshrl.u32 %v7156, 7
    %v7158 = vsub.s32 0, %v7157
    %v7159 = vrot.slane %v7154, %v7158
    %v7177 = vunpack.c.l.b16 %v7138
    %v7178 = vunpack.c.l.b16 %v7139
    %v7179 = vunpack.c.l.b16 %v7140
    %v7180 = vunpack.c.l.b16 %v7141
    %v7181 = vunpack.c.l.b16 %v7142
    %v7182 = vunpack.c.l.b16 %v7143
    %v7183 = vunpack.c.l.b16 %v7144
    %v7184 = vunpack.c.l.b16 %v7145
    %v7185 = vunpack.c.l.b16 %v7146
    %v7186 = vunpack.c.l.b16 %v7147
    %v7187 = vunpack.c.l.b16 %v7148
    %v7188 = vunpack.c.l.b16 %v7149
    %v7189 = vunpack.c.l.b16 %v7150
    %v7190 = vunpack.c.l.b16 %v7151
    %v7191 = vunpack.c.l.b16 %v7152
    %v7192 = vunpack.c.l.b16 %v7153
    %v7193 = vpack.c.b16 %v7178, %v7177
    %v7194 = vpack.c.b16 %v7180, %v7179
    %v7195 = vpack.c.b16 %v7182, %v7181
    %v7196 = vpack.c.b16 %v7184, %v7183
    %v7197 = vpack.c.b16 %v7186, %v7185
    %v7198 = vpack.c.b16 %v7188, %v7187
    %v7199 = vpack.c.b16 %v7190, %v7189
    %v7200 = vpack.c.b16 %v7192, %v7191
    %7209 = vmatprep.subr.bf16.mxu0 0
    %7210 = vmatpush1.bf16.msra.mxu0 %v7200
    %7211 = vmatprep.subr.bf16.mxu0 0
    %7212 = vmatpush1.bf16.msra.mxu0 %v7199
    %7213 = vmatprep.subr.bf16.mxu0 0
    %7214 = vmatpush1.bf16.msra.mxu0 %v7198
    %7215 = vmatprep.subr.bf16.mxu0 0
    %7216 = vmatpush1.bf16.msra.mxu0 %v7197
    %7217 = vmatprep.subr.bf16.mxu0 0
    %7218 = vmatpush1.bf16.msra.mxu0 %v7196
    %7219 = vmatprep.subr.bf16.mxu0 0
    %7220 = vmatpush1.bf16.msra.mxu0 %v7195
    %7221 = vmatprep.subr.bf16.mxu0 0
    %7222 = vmatpush1.bf16.msra.mxu0 %v7194
    %7223 = vmatprep.subr.bf16.mxu0 0
    %7224 = vmatpush1.bf16.msra.mxu0 %v7193
    %7225 = vmatprep.subr.bf16.mxu0 0
    %7226 = vmatpush2.bf16.msra.mxu0 0
    %7227 = vmatprep.subr.bf16.mxu0 0
    %7228 = vmatpush2.bf16.msra.mxu0 0
    %7229 = vmatprep.subr.bf16.mxu0 0
    %7230 = vmatpush2.bf16.msra.mxu0 0
    %7231 = vmatprep.subr.bf16.mxu0 0
    %7232 = vmatpush2.bf16.msra.mxu0 0
    %7233 = vmatprep.subr.bf16.mxu0 0
    %7234 = vmatpush2.bf16.msra.mxu0 0
    %7235 = vmatprep.subr.bf16.mxu0 0
    %7236 = vmatpush2.bf16.msra.mxu0 0
    %7237 = vmatprep.subr.bf16.mxu0 0
    %7238 = vmatpush2.bf16.msra.mxu0 0
    %7239 = vmatprep.subr.bf16.mxu0 0
    %7240 = vmatpush2.bf16.msra.mxu0 0
    %7241 = vmatprep.mubr.bf16.mxu0 0
    %7242 = vmatmul.mubr.bf16.gmra.mxu0 %v7136
    %v7243 = vpop.f32.mrf.mxu0
    %v7244 = vadd.f32 %v7159, %v7243
    %v7245 = vpop.f32.mrf.mxu0
    %v7246 = vpop.f32.mrf.mxu0
    %v7247 = vadd.f32 %v7159, %v7246
    %v7248 = vpop.f32.mrf.mxu0
    %7249 = vmatprep.mubr.bf16.mxu0 0
    %7250 = vmatmul.mubr.bf16.gmra.mxu0 %v7137
    %v7251 = vpop.f32.mrf.mxu0
    %v7252 = vadd.f32 %v7159, %v7251
    %v7253 = vpop.f32.mrf.mxu0
    %v7254 = vpop.f32.mrf.mxu0
    %v7255 = vadd.f32 %v7159, %v7254
    %v7256 = vpop.f32.mrf.mxu0
    %7257 = vdwg.mxu0
    %7258 = vst.msk [vmem:[%s115] sm:$0xff] %vm864, %v7244
    %7259 = vst.msk [vmem:[%s115 + $0x8] sm:$0xff] %vm864, %v7247
    %7260 = vst.msk [vmem:[%s115 + $0x10] sm:$0xff] %vm864, %v7252
    %7261 = vst.msk [vmem:[%s115 + $0x18] sm:$0xff] %vm864, %v7255
    // Predicated region
    $region406: #{unet_forward.1} parent=1 // pred_check
      _
    $region407: #{unet_forward.1} parent=1 // pred_check_branch
      %7263 = sbr.rel (0) target = $region409
    $region408: #{unet_forward.1} parent=1 // pred_region
      _
    $region409: #{unet_forward.1} parent=1 // pred_fallthru
      _
    // Predicated region
    $region410: #{unet_forward.1} parent=1 // pred_check
      _
    $region411: #{unet_forward.1} parent=1 // pred_check_branch
      %7265 = sbr.rel (0) target = $region413
    $region412: #{unet_forward.1} parent=1 // pred_region
      _
    $region413: #{unet_forward.1} parent=1 // pred_fallthru
      _
    %7266 = vsyncpa [#allocation3], 1
    %7267 = vsyncpa [#allocation5], 1
    %7268 = vsyncpa [#allocation8], 1
    %7269 = vsyncpa [#allocation11], 1
    %7270 = vsyncpa [#allocation14], 1
    %7271 = vsyncpa [#allocation17], 1
    %7272 = vsyncpa [#allocation20], 1
    %7273 = vsyncpa [#allocation23], 1
    %7274 = vsyncpa [#allocation26], 1
    %7275 = vsyncpa [#allocation29], 1
    %7276 = vsyncpa [#allocation32], 1
    %7277 = vsyncpa [#allocation35], 1
    %7278 = vsyncpa [#allocation38], 1
    %7279 = vsyncpa [#allocation41], 1
    %7280 = vsyncpa [#allocation44], 1
    %7281 = vsyncpa [#allocation47], 1
    %7282 = vsyncpa [#allocation50], 1
    %7283 = vsyncpa [#allocation53], 1
    %7284 = vsyncpa [#allocation56], 1
    %7285 = vsyncpa [#allocation59], 1
    %7286 = vsyncpa [#allocation62], 1
    %7287 = vsyncpa [#allocation65], 1
    %7288 = vsyncpa [#allocation68], 1

</llo_original>
